<compile_context>
chip_gen: v5e
topology: v5e:2x2
jax: 0.10.0
libtpu: 0.0.40
codegen_flags: <defaults>
</compile_context>

<pallas_src>
from functools import partial

import numpy as np
import jax
import jax.numpy as jnp
from jax.experimental import pallas as pl
from jax.experimental.pallas import tpu as pltpu

VMEM_SPEC = pl.BlockSpec(memory_space=pltpu.MemorySpace.VMEM)
NUM_CLASSES = 10


# ---------------------------------------------------------------------------
# The fused kernel: whole forward pass, all operands resident in VMEM.
# ---------------------------------------------------------------------------
def _cnn_cifar_kernel(pat_ref, w1_ref, b1_ref, w2_ref, b2_ref, g2_ref,
                      wf1_ref, bf1_ref, wf2_ref, bf2_ref, wf3_ref, bf3_ref,
                      out_ref, y_scr):
    f32, bf16 = jnp.float32, jnp.bfloat16
    nb = out_ref.shape[0]                 # batch
    p1_rows = nb * 100                    # pool1 output rows, ordered (n, ph, pw)
    n_taps = w2_ref.shape[0]              # 25
    blk2 = g2_ref.shape[0] // 4           # padded rows per 2x2-corner block of conv2 out
    n_fc1 = wf1_ref.shape[0]              # 9 spatial positions after pool2

    # ---- conv1: ONE MXU matmul over wrapper-built im2col patches -----------
    h1 = jnp.dot(pat_ref[...], w1_ref[...], preferred_element_type=f32)
    h1 = jnp.maximum(h1 + b1_ref[...], 0.0)          # (4*nb*100, 64), f32 epilogue

    # ---- pool1: rows pre-ordered (dh, dw, n, ph, pw) => elementwise max of
    #      four aligned 200-row blocks (no gathers, no matmuls) --------------
    p1 = jnp.maximum(
        jnp.maximum(h1[0 * p1_rows:1 * p1_rows], h1[1 * p1_rows:2 * p1_rows]),
        jnp.maximum(h1[2 * p1_rows:3 * p1_rows], h1[3 * p1_rows:4 * p1_rows]))
    p1_bf = p1.astype(bf16)                           # (nb*100, 64)

    # ---- conv2: 25 tall per-tap dots into scratch, then one one-hot
    #      gather+sum matmul (no reshapes / rolls / lane concats) ------------
    for t in range(n_taps):
        y_scr[pl.ds(t * p1_rows, p1_rows), :] = jnp.dot(
            p1_bf, w2_ref[t], preferred_element_type=f32).astype(bf16)
    acc2 = jnp.dot(g2_ref[...], y_scr[...], preferred_element_type=f32)  # (4*blk2, 64)
    h2 = jnp.maximum(acc2 + b2_ref[...], 0.0)         # f32 epilogue

    # ---- pool2: output rows ordered (dh, dw, qh, qw, n) (padded to blk2) =>
    #      again an elementwise max of four aligned row blocks ---------------
    p2 = jnp.maximum(
        jnp.maximum(h2[0 * blk2:1 * blk2], h2[1 * blk2:2 * blk2]),
        jnp.maximum(h2[2 * blk2:3 * blk2], h2[3 * blk2:4 * blk2]))
    p2_bf = p2.astype(bf16)                            # rows (qh*3+qw)*nb + n

    # ---- fc1 as a sum of 9 (nb,64)x(64,384) dots (no lane-axis flatten) ----
    acc = jnp.zeros((nb, wf1_ref.shape[2]), f32)
    for s in range(n_fc1):
        acc = acc + jnp.dot(p2_bf[s * nb:(s + 1) * nb, :], wf1_ref[s],
                            preferred_element_type=f32)
    h3 = jnp.maximum(acc + bf1_ref[...], 0.0)

    # ---- fc2 -> ReLU -> fc3 (output padded to 128 lanes: lane-dense store) -
    h4 = jnp.maximum(
        jnp.dot(h3.astype(bf16), wf2_ref[...], preferred_element_type=f32)
        + bf2_ref[...], 0.0)
    out_ref[...] = (jnp.dot(h4.astype(bf16), wf3_ref[...],
                            preferred_element_type=f32) + bf3_ref[...])


# ---------------------------------------------------------------------------
# Wrapper-side im2col for conv1 (XLA glue, subsumes the NCHW->NHWC transpose).
# Rows ordered (dh, dw, n, ph, pw) so pool1 is an aligned block max in-kernel.
# ---------------------------------------------------------------------------
def _im2col_conv1(x_nchw):
    n = x_nchw.shape[0]
    x = jnp.transpose(x_nchw, (0, 2, 3, 1))                    # (N,24,24,3)
    cols = [x[:, kh:kh + 20, kw:kw + 20, :]
            for kh in range(5) for kw in range(5)]
    pat = jnp.concatenate(cols, axis=-1)                        # (N,20,20,75)
    pat = pat.reshape(n, 10, 2, 10, 2, 75)                      # h=(ph,dh), w=(pw,dw)
    pat = jnp.transpose(pat, (2, 4, 0, 1, 3, 5))                # (dh,dw,N,ph,pw,75)
    return pat.reshape(4 * n * 100, 75).astype(jnp.bfloat16)


# ---------------------------------------------------------------------------
# Precomputed one-hot conv2 "gather + sum over taps" matrix.
#   row i   = (dh*2+dw)*blk2 + (qh*3+qw)*nb + n   (conv2 output, pool2-ready order)
#   col     = t*(nb*100) + n*100 + (2*qh+dh+kh)*10 + (2*qw+dw+kw),  t = kh*5+kw
# ---------------------------------------------------------------------------
def _conv2_gather_matrix(nb):
    blk2 = ((9 * nb + 7) // 8) * 8
    n_in = nb * 100
    g = np.zeros((4 * blk2, 25 * n_in), np.float32)
    for dh in range(2):
        for dw in range(2):
            j = dh * 2 + dw
            for qh in range(3):
                for qw in range(3):
                    for n in range(nb):
                        i = j * blk2 + (qh * 3 + qw) * nb + n
                        oh, ow = 2 * qh + dh, 2 * qw + dw
                        for kh in range(5):
                            for kw in range(5):
                                t = kh * 5 + kw
                                r = n * 100 + (oh + kh) * 10 + (ow + kw)
                                g[i, t * n_in + r] = 1.0
    return g


# ---------------------------------------------------------------------------
# One-time parameter re-layout: bf16 matmul operands, f32 biases, padded fc3.
# ---------------------------------------------------------------------------
def prepare_params(params, batch_size):
    bf16, f32 = jnp.bfloat16, jnp.float32
    c1 = params["conv1_w"].shape[0]                 # 64
    c2 = params["conv2_w"].shape[0]                 # 64
    # conv1 taps -> (75, 64), feature order (kh, kw, cin) matching the im2col.
    w1 = jnp.transpose(params["conv1_w"], (2, 3, 1, 0)).reshape(75, c1)
    # conv2 taps -> (25, cin, cout), tap index t = kh*5 + kw.
    w2 = jnp.transpose(params["conv2_w"], (2, 3, 1, 0)).reshape(25, c1, c2)
    # fc1 -> (9, 64, 384): one (cin, out) block per pooled spatial position.
    f1 = params["fc1_w"].shape[0]
    wf1 = jnp.transpose(params["fc1_w"].reshape(f1, c2, 3, 3),
                        (2, 3, 1, 0)).reshape(9, c2, f1)
    # fc3 zero-padded to 128 output columns (lane-dense final store).
    f3 = params["fc3_w"].shape[0]
    wf3 = jnp.zeros((params["fc3_w"].shape[1], 128), f32).at[:, :f3].set(
        params["fc3_w"].T)
    bf3 = jnp.zeros((1, 128), f32).at[:, :f3].set(params["fc3_b"].reshape(1, -1))
    return {
        "w1": w1.astype(bf16), "b1": params["conv1_b"].reshape(1, c1).astype(f32),
        "w2": w2.astype(bf16), "b2": params["conv2_b"].reshape(1, c2).astype(f32),
        "g2": jnp.asarray(_conv2_gather_matrix(batch_size), bf16),
        "wf1": wf1.astype(bf16), "bf1": params["fc1_b"].reshape(1, -1).astype(f32),
        "wf2": params["fc2_w"].T.astype(bf16),
        "bf2": params["fc2_b"].reshape(1, -1).astype(f32),
        "wf3": wf3.astype(bf16), "bf3": bf3,
    }


@partial(jax.jit, static_argnames=("num_classes",))
def cnn_cifar_forward(x_nchw, prep, num_classes=NUM_CLASSES):
    n = x_nchw.shape[0]
    pat = _im2col_conv1(x_nchw)                      # (4*n*100, 75) bf16
    out_padded = pl.pallas_call(
        _cnn_cifar_kernel,
        out_shape=jax.ShapeDtypeStruct((n, 128), jnp.float32),
        in_specs=[VMEM_SPEC] * 12,
        out_specs=VMEM_SPEC,
        scratch_shapes=[pltpu.VMEM((25 * n * 100, 64), jnp.bfloat16)],
    )(pat, prep["w1"], prep["b1"], prep["w2"], prep["b2"], prep["g2"],
      prep["wf1"], prep["bf1"], prep["wf2"], prep["bf2"],
      prep["wf3"], prep["bf3"])
    return out_padded[:, :num_classes]


# ---------------------------------------------------------------------------
# Parameter init (deterministic, PyTorch-default-style uniform bounds).
# ---------------------------------------------------------------------------
def init_params(key, num_classes=NUM_CLASSES):
    ks = jax.random.split(key, 10)

    def u(kk, shape, fan_in):
        bound = 1.0 / jnp.sqrt(float(fan_in))
        return jax.random.uniform(kk, shape, jnp.float32, -bound, bound)

    return {
        "conv1_w": u(ks[0], (64, 3, 5, 5), 3 * 25),
        "conv1_b": u(ks[1], (64,), 3 * 25),
        "conv2_w": u(ks[2], (64, 64, 5, 5), 64 * 25),
        "conv2_b": u(ks[3], (64,), 64 * 25),
        "fc1_w": u(ks[4], (384, 576), 576),
        "fc1_b": u(ks[5], (384,), 576),
        "fc2_w": u(ks[6], (192, 384), 384),
        "fc2_b": u(ks[7], (192,), 384),
        "fc3_w": u(ks[8], (num_classes, 192), 192),
        "fc3_b": u(ks[9], (num_classes,), 192),
    }


# Pure-XLA (f32) mirror of the PyTorch module, used only to validate the kernel.
def reference_forward(x, params):
    def conv(y, w, b):
        y = jax.lax.conv_general_dilated(
            y, w, window_strides=(1, 1), padding="VALID",
            dimension_numbers=("NCHW", "OIHW", "NCHW"))
        return y + b.reshape(1, -1, 1, 1)

    def pool(y):
        return jax.lax.reduce_window(y, -jnp.inf, jax.lax.max,
                                     (1, 1, 2, 2), (1, 1, 2, 2), "VALID")

    y = pool(jax.nn.relu(conv(x, params["conv1_w"], params["conv1_b"])))
    y = pool(jax.nn.relu(conv(y, params["conv2_w"], params["conv2_b"])))
    y = y.reshape(y.shape[0], -1)
    y = jax.nn.relu(y @ params["fc1_w"].T + params["fc1_b"])
    y = jax.nn.relu(y @ params["fc2_w"].T + params["fc2_b"])
    return y @ params["fc3_w"].T + params["fc3_b"]


if __name__ == "__main__":
    key = jax.random.PRNGKey(0)
    k_x, k_p = jax.random.split(key)
    x = jax.random.normal(k_x, (2, 3, 24, 24), jnp.float32)
    params = init_params(k_p, num_classes=NUM_CLASSES)
    prep = prepare_params(params, batch_size=x.shape[0])   # one-time re-layout

    out = jax.block_until_ready(cnn_cifar_forward(x, prep))
    assert out.shape == (2, NUM_CLASSES), out.shape
    assert bool(jnp.all(jnp.isfinite(out)))

    # Numerical check against the f32 XLA reference.  The kernel uses bf16
    # matmul operands with f32 accumulation, so a ~5%-of-output-scale bound is
    # the appropriate tolerance here; real bugs differ by ~the output scale.
    ref = jax.block_until_ready(reference_forward(x, params))
    max_err = float(jnp.max(jnp.abs(out - ref)))
    scale = float(jnp.max(jnp.abs(ref)))
    assert max_err <= 0.05 * scale + 1e-3, (max_err, scale)

    print("KERNEL_OK")
</pallas_src>

<mosaic_0001>
module attributes {stable_mosaic.version = 11 : i64} {
  func.func @_cnn_cifar_kernel(%arg0: memref<800x75xbf16, #tpu.memory_space<vmem>>, %arg1: memref<75x64xbf16, #tpu.memory_space<vmem>>, %arg2: memref<1x64xf32, #tpu.memory_space<vmem>>, %arg3: memref<25x64x64xbf16, #tpu.memory_space<vmem>>, %arg4: memref<1x64xf32, #tpu.memory_space<vmem>>, %arg5: memref<96x5000xbf16, #tpu.memory_space<vmem>>, %arg6: memref<9x64x384xbf16, #tpu.memory_space<vmem>>, %arg7: memref<1x384xf32, #tpu.memory_space<vmem>>, %arg8: memref<384x192xbf16, #tpu.memory_space<vmem>>, %arg9: memref<1x192xf32, #tpu.memory_space<vmem>>, %arg10: memref<192x128xbf16, #tpu.memory_space<vmem>>, %arg11: memref<1x128xf32, #tpu.memory_space<vmem>>, %arg12: memref<2x128xf32, #tpu.memory_space<vmem>>, %arg13: memref<5000x64xbf16, #tpu.memory_space<vmem>>) attributes {dimension_semantics = [], scalar_prefetch = 0 : i64, scratch_operands = 1 : i64, tpu.core_type = #tpu.core_type<tc>} {
    %c0 = arith.constant 0 : index
    %c0_0 = arith.constant 0 : index
    %0 = vector.load %arg0[%c0, %c0_0] : memref<800x75xbf16, #tpu.memory_space<vmem>>, vector<800x75xbf16>
    %c0_1 = arith.constant 0 : index
    %c0_2 = arith.constant 0 : index
    %1 = vector.load %arg1[%c0_1, %c0_2] : memref<75x64xbf16, #tpu.memory_space<vmem>>, vector<75x64xbf16>
    %cst = arith.constant dense<0.000000e+00> : vector<800x64xf32>
    %2 = tpu.matmul %0, %1, %cst {dimension_numbers = #tpu.dot_dimension_numbers<[1], [0], [0], [1], [0, 0, 1, 1], [], []>} : vector<800x75xbf16>, vector<75x64xbf16>, vector<800x64xf32> -> vector<800x64xf32>
    %c0_3 = arith.constant 0 : index
    %c0_4 = arith.constant 0 : index
    %3 = vector.load %arg2[%c0_3, %c0_4] : memref<1x64xf32, #tpu.memory_space<vmem>>, vector<1x64xf32>
    %4 = vector.broadcast %3 : vector<1x64xf32> to vector<800x64xf32>
    %5 = arith.addf %2, %4 : vector<800x64xf32>
    %cst_5 = arith.constant 0.000000e+00 : f32
    %6 = vector.broadcast %cst_5 : f32 to vector<800x64xf32>
    %7 = arith.maximumf %5, %6 : vector<800x64xf32>
    %8 = vector.extract_strided_slice %7 {offsets = [0, 0], sizes = [200, 64], strides = [1, 1]} : vector<800x64xf32> to vector<200x64xf32>
    %9 = vector.extract_strided_slice %7 {offsets = [200, 0], sizes = [200, 64], strides = [1, 1]} : vector<800x64xf32> to vector<200x64xf32>
    %10 = arith.maximumf %8, %9 : vector<200x64xf32>
    %11 = vector.extract_strided_slice %7 {offsets = [400, 0], sizes = [200, 64], strides = [1, 1]} : vector<800x64xf32> to vector<200x64xf32>
    %12 = vector.extract_strided_slice %7 {offsets = [600, 0], sizes = [200, 64], strides = [1, 1]} : vector<800x64xf32> to vector<200x64xf32>
    %13 = arith.maximumf %11, %12 : vector<200x64xf32>
    %14 = arith.maximumf %10, %13 : vector<200x64xf32>
    %15 = arith.truncf %14 : vector<200x64xf32> to vector<200x64xbf16>
    %c0_6 = arith.constant 0 : index
    %c0_7 = arith.constant 0 : index
    %c0_8 = arith.constant 0 : index
    %16 = vector.load %arg3[%c0_6, %c0_7, %c0_8] : memref<25x64x64xbf16, #tpu.memory_space<vmem>>, vector<1x64x64xbf16>
    %17 = vector.shape_cast %16 : vector<1x64x64xbf16> to vector<64x64xbf16>
    %cst_9 = arith.constant dense<0.000000e+00> : vector<200x64xf32>
    %18 = tpu.matmul %15, %17, %cst_9 {dimension_numbers = #tpu.dot_dimension_numbers<[1], [0], [0], [1], [0, 0, 1, 1], [], []>} : vector<200x64xbf16>, vector<64x64xbf16>, vector<200x64xf32> -> vector<200x64xf32>
    %19 = arith.truncf %18 : vector<200x64xf32> to vector<200x64xbf16>
    %c0_10 = arith.constant 0 : index
    %c0_11 = arith.constant 0 : index
    %20 = vector.load %arg13[%c0_10, %c0_11] : memref<5000x64xbf16, #tpu.memory_space<vmem>>, vector<200x64xbf16>
    tpu.vector_store %arg13[%c0_10, %c0_11], %19 {strides = array<i32>} : memref<5000x64xbf16, #tpu.memory_space<vmem>>, vector<200x64xbf16>,
    %c1 = arith.constant 1 : index
    %c0_12 = arith.constant 0 : index
    %c0_13 = arith.constant 0 : index
    %21 = vector.load %arg3[%c1, %c0_12, %c0_13] : memref<25x64x64xbf16, #tpu.memory_space<vmem>>, vector<1x64x64xbf16>
    %22 = vector.shape_cast %21 : vector<1x64x64xbf16> to vector<64x64xbf16>
    %cst_14 = arith.constant dense<0.000000e+00> : vector<200x64xf32>
    %23 = tpu.matmul %15, %22, %cst_14 {dimension_numbers = #tpu.dot_dimension_numbers<[1], [0], [0], [1], [0, 0, 1, 1], [], []>} : vector<200x64xbf16>, vector<64x64xbf16>, vector<200x64xf32> -> vector<200x64xf32>
    %24 = arith.truncf %23 : vector<200x64xf32> to vector<200x64xbf16>
    %c200 = arith.constant 200 : index
    %c0_15 = arith.constant 0 : index
    %25 = vector.load %arg13[%c200, %c0_15] : memref<5000x64xbf16, #tpu.memory_space<vmem>>, vector<200x64xbf16>
    tpu.vector_store %arg13[%c200, %c0_15], %24 {strides = array<i32>} : memref<5000x64xbf16, #tpu.memory_space<vmem>>, vector<200x64xbf16>,
    %c2 = arith.constant 2 : index
    %c0_16 = arith.constant 0 : index
    %c0_17 = arith.constant 0 : index
    %26 = vector.load %arg3[%c2, %c0_16, %c0_17] : memref<25x64x64xbf16, #tpu.memory_space<vmem>>, vector<1x64x64xbf16>
    %27 = vector.shape_cast %26 : vector<1x64x64xbf16> to vector<64x64xbf16>
    %cst_18 = arith.constant dense<0.000000e+00> : vector<200x64xf32>
    %28 = tpu.matmul %15, %27, %cst_18 {dimension_numbers = #tpu.dot_dimension_numbers<[1], [0], [0], [1], [0, 0, 1, 1], [], []>} : vector<200x64xbf16>, vector<64x64xbf16>, vector<200x64xf32> -> vector<200x64xf32>
    %29 = arith.truncf %28 : vector<200x64xf32> to vector<200x64xbf16>
    %c400 = arith.constant 400 : index
    %c0_19 = arith.constant 0 : index
    %30 = vector.load %arg13[%c400, %c0_19] : memref<5000x64xbf16, #tpu.memory_space<vmem>>, vector<200x64xbf16>
    tpu.vector_store %arg13[%c400, %c0_19], %29 {strides = array<i32>} : memref<5000x64xbf16, #tpu.memory_space<vmem>>, vector<200x64xbf16>,
    %c3 = arith.constant 3 : index
    %c0_20 = arith.constant 0 : index
    %c0_21 = arith.constant 0 : index
    %31 = vector.load %arg3[%c3, %c0_20, %c0_21] : memref<25x64x64xbf16, #tpu.memory_space<vmem>>, vector<1x64x64xbf16>
    %32 = vector.shape_cast %31 : vector<1x64x64xbf16> to vector<64x64xbf16>
    %cst_22 = arith.constant dense<0.000000e+00> : vector<200x64xf32>
    %33 = tpu.matmul %15, %32, %cst_22 {dimension_numbers = #tpu.dot_dimension_numbers<[1], [0], [0], [1], [0, 0, 1, 1], [], []>} : vector<200x64xbf16>, vector<64x64xbf16>, vector<200x64xf32> -> vector<200x64xf32>
    %34 = arith.truncf %33 : vector<200x64xf32> to vector<200x64xbf16>
    %c600 = arith.constant 600 : index
    %c0_23 = arith.constant 0 : index
    %35 = vector.load %arg13[%c600, %c0_23] : memref<5000x64xbf16, #tpu.memory_space<vmem>>, vector<200x64xbf16>
    tpu.vector_store %arg13[%c600, %c0_23], %34 {strides = array<i32>} : memref<5000x64xbf16, #tpu.memory_space<vmem>>, vector<200x64xbf16>,
    %c4 = arith.constant 4 : index
    %c0_24 = arith.constant 0 : index
    %c0_25 = arith.constant 0 : index
    %36 = vector.load %arg3[%c4, %c0_24, %c0_25] : memref<25x64x64xbf16, #tpu.memory_space<vmem>>, vector<1x64x64xbf16>
    %37 = vector.shape_cast %36 : vector<1x64x64xbf16> to vector<64x64xbf16>
    %cst_26 = arith.constant dense<0.000000e+00> : vector<200x64xf32>
    %38 = tpu.matmul %15, %37, %cst_26 {dimension_numbers = #tpu.dot_dimension_numbers<[1], [0], [0], [1], [0, 0, 1, 1], [], []>} : vector<200x64xbf16>, vector<64x64xbf16>, vector<200x64xf32> -> vector<200x64xf32>
    %39 = arith.truncf %38 : vector<200x64xf32> to vector<200x64xbf16>
    %c800 = arith.constant 800 : index
    %c0_27 = arith.constant 0 : index
    %40 = vector.load %arg13[%c800, %c0_27] : memref<5000x64xbf16, #tpu.memory_space<vmem>>, vector<200x64xbf16>
    tpu.vector_store %arg13[%c800, %c0_27], %39 {strides = array<i32>} : memref<5000x64xbf16, #tpu.memory_space<vmem>>, vector<200x64xbf16>,
    %c5 = arith.constant 5 : index
    %c0_28 = arith.constant 0 : index
    %c0_29 = arith.constant 0 : index
    %41 = vector.load %arg3[%c5, %c0_28, %c0_29] : memref<25x64x64xbf16, #tpu.memory_space<vmem>>, vector<1x64x64xbf16>
    %42 = vector.shape_cast %41 : vector<1x64x64xbf16> to vector<64x64xbf16>
    %cst_30 = arith.constant dense<0.000000e+00> : vector<200x64xf32>
    %43 = tpu.matmul %15, %42, %cst_30 {dimension_numbers = #tpu.dot_dimension_numbers<[1], [0], [0], [1], [0, 0, 1, 1], [], []>} : vector<200x64xbf16>, vector<64x64xbf16>, vector<200x64xf32> -> vector<200x64xf32>
    %44 = arith.truncf %43 : vector<200x64xf32> to vector<200x64xbf16>
    %c1000 = arith.constant 1000 : index
    %c0_31 = arith.constant 0 : index
    %45 = vector.load %arg13[%c1000, %c0_31] : memref<5000x64xbf16, #tpu.memory_space<vmem>>, vector<200x64xbf16>
    tpu.vector_store %arg13[%c1000, %c0_31], %44 {strides = array<i32>} : memref<5000x64xbf16, #tpu.memory_space<vmem>>, vector<200x64xbf16>,
    %c6 = arith.constant 6 : index
    %c0_32 = arith.constant 0 : index
    %c0_33 = arith.constant 0 : index
    %46 = vector.load %arg3[%c6, %c0_32, %c0_33] : memref<25x64x64xbf16, #tpu.memory_space<vmem>>, vector<1x64x64xbf16>
    %47 = vector.shape_cast %46 : vector<1x64x64xbf16> to vector<64x64xbf16>
    %cst_34 = arith.constant dense<0.000000e+00> : vector<200x64xf32>
    %48 = tpu.matmul %15, %47, %cst_34 {dimension_numbers = #tpu.dot_dimension_numbers<[1], [0], [0], [1], [0, 0, 1, 1], [], []>} : vector<200x64xbf16>, vector<64x64xbf16>, vector<200x64xf32> -> vector<200x64xf32>
    %49 = arith.truncf %48 : vector<200x64xf32> to vector<200x64xbf16>
    %c1200 = arith.constant 1200 : index
    %c0_35 = arith.constant 0 : index
    %50 = vector.load %arg13[%c1200, %c0_35] : memref<5000x64xbf16, #tpu.memory_space<vmem>>, vector<200x64xbf16>
    tpu.vector_store %arg13[%c1200, %c0_35], %49 {strides = array<i32>} : memref<5000x64xbf16, #tpu.memory_space<vmem>>, vector<200x64xbf16>,
    %c7 = arith.constant 7 : index
    %c0_36 = arith.constant 0 : index
    %c0_37 = arith.constant 0 : index
    %51 = vector.load %arg3[%c7, %c0_36, %c0_37] : memref<25x64x64xbf16, #tpu.memory_space<vmem>>, vector<1x64x64xbf16>
    %52 = vector.shape_cast %51 : vector<1x64x64xbf16> to vector<64x64xbf16>
    %cst_38 = arith.constant dense<0.000000e+00> : vector<200x64xf32>
    %53 = tpu.matmul %15, %52, %cst_38 {dimension_numbers = #tpu.dot_dimension_numbers<[1], [0], [0], [1], [0, 0, 1, 1], [], []>} : vector<200x64xbf16>, vector<64x64xbf16>, vector<200x64xf32> -> vector<200x64xf32>
    %54 = arith.truncf %53 : vector<200x64xf32> to vector<200x64xbf16>
    %c1400 = arith.constant 1400 : index
    %c0_39 = arith.constant 0 : index
    %55 = vector.load %arg13[%c1400, %c0_39] : memref<5000x64xbf16, #tpu.memory_space<vmem>>, vector<200x64xbf16>
    tpu.vector_store %arg13[%c1400, %c0_39], %54 {strides = array<i32>} : memref<5000x64xbf16, #tpu.memory_space<vmem>>, vector<200x64xbf16>,
    %c8 = arith.constant 8 : index
    %c0_40 = arith.constant 0 : index
    %c0_41 = arith.constant 0 : index
    %56 = vector.load %arg3[%c8, %c0_40, %c0_41] : memref<25x64x64xbf16, #tpu.memory_space<vmem>>, vector<1x64x64xbf16>
    %57 = vector.shape_cast %56 : vector<1x64x64xbf16> to vector<64x64xbf16>
    %cst_42 = arith.constant dense<0.000000e+00> : vector<200x64xf32>
    %58 = tpu.matmul %15, %57, %cst_42 {dimension_numbers = #tpu.dot_dimension_numbers<[1], [0], [0], [1], [0, 0, 1, 1], [], []>} : vector<200x64xbf16>, vector<64x64xbf16>, vector<200x64xf32> -> vector<200x64xf32>
    %59 = arith.truncf %58 : vector<200x64xf32> to vector<200x64xbf16>
    %c1600 = arith.constant 1600 : index
    %c0_43 = arith.constant 0 : index
    %60 = vector.load %arg13[%c1600, %c0_43] : memref<5000x64xbf16, #tpu.memory_space<vmem>>, vector<200x64xbf16>
    tpu.vector_store %arg13[%c1600, %c0_43], %59 {strides = array<i32>} : memref<5000x64xbf16, #tpu.memory_space<vmem>>, vector<200x64xbf16>,
    %c9 = arith.constant 9 : index
    %c0_44 = arith.constant 0 : index
    %c0_45 = arith.constant 0 : index
    %61 = vector.load %arg3[%c9, %c0_44, %c0_45] : memref<25x64x64xbf16, #tpu.memory_space<vmem>>, vector<1x64x64xbf16>
    %62 = vector.shape_cast %61 : vector<1x64x64xbf16> to vector<64x64xbf16>
    %cst_46 = arith.constant dense<0.000000e+00> : vector<200x64xf32>
    %63 = tpu.matmul %15, %62, %cst_46 {dimension_numbers = #tpu.dot_dimension_numbers<[1], [0], [0], [1], [0, 0, 1, 1], [], []>} : vector<200x64xbf16>, vector<64x64xbf16>, vector<200x64xf32> -> vector<200x64xf32>
    %64 = arith.truncf %63 : vector<200x64xf32> to vector<200x64xbf16>
    %c1800 = arith.constant 1800 : index
    %c0_47 = arith.constant 0 : index
    %65 = vector.load %arg13[%c1800, %c0_47] : memref<5000x64xbf16, #tpu.memory_space<vmem>>, vector<200x64xbf16>
    tpu.vector_store %arg13[%c1800, %c0_47], %64 {strides = array<i32>} : memref<5000x64xbf16, #tpu.memory_space<vmem>>, vector<200x64xbf16>,
    %c10 = arith.constant 10 : index
    %c0_48 = arith.constant 0 : index
    %c0_49 = arith.constant 0 : index
    %66 = vector.load %arg3[%c10, %c0_48, %c0_49] : memref<25x64x64xbf16, #tpu.memory_space<vmem>>, vector<1x64x64xbf16>
    %67 = vector.shape_cast %66 : vector<1x64x64xbf16> to vector<64x64xbf16>
    %cst_50 = arith.constant dense<0.000000e+00> : vector<200x64xf32>
    %68 = tpu.matmul %15, %67, %cst_50 {dimension_numbers = #tpu.dot_dimension_numbers<[1], [0], [0], [1], [0, 0, 1, 1], [], []>} : vector<200x64xbf16>, vector<64x64xbf16>, vector<200x64xf32> -> vector<200x64xf32>
    %69 = arith.truncf %68 : vector<200x64xf32> to vector<200x64xbf16>
    %c2000 = arith.constant 2000 : index
    %c0_51 = arith.constant 0 : index
    %70 = vector.load %arg13[%c2000, %c0_51] : memref<5000x64xbf16, #tpu.memory_space<vmem>>, vector<200x64xbf16>
    tpu.vector_store %arg13[%c2000, %c0_51], %69 {strides = array<i32>} : memref<5000x64xbf16, #tpu.memory_space<vmem>>, vector<200x64xbf16>,
    %c11 = arith.constant 11 : index
    %c0_52 = arith.constant 0 : index
    %c0_53 = arith.constant 0 : index
    %71 = vector.load %arg3[%c11, %c0_52, %c0_53] : memref<25x64x64xbf16, #tpu.memory_space<vmem>>, vector<1x64x64xbf16>
    %72 = vector.shape_cast %71 : vector<1x64x64xbf16> to vector<64x64xbf16>
    %cst_54 = arith.constant dense<0.000000e+00> : vector<200x64xf32>
    %73 = tpu.matmul %15, %72, %cst_54 {dimension_numbers = #tpu.dot_dimension_numbers<[1], [0], [0], [1], [0, 0, 1, 1], [], []>} : vector<200x64xbf16>, vector<64x64xbf16>, vector<200x64xf32> -> vector<200x64xf32>
    %74 = arith.truncf %73 : vector<200x64xf32> to vector<200x64xbf16>
    %c2200 = arith.constant 2200 : index
    %c0_55 = arith.constant 0 : index
    %75 = vector.load %arg13[%c2200, %c0_55] : memref<5000x64xbf16, #tpu.memory_space<vmem>>, vector<200x64xbf16>
    tpu.vector_store %arg13[%c2200, %c0_55], %74 {strides = array<i32>} : memref<5000x64xbf16, #tpu.memory_space<vmem>>, vector<200x64xbf16>,
    %c12 = arith.constant 12 : index
    %c0_56 = arith.constant 0 : index
    %c0_57 = arith.constant 0 : index
    %76 = vector.load %arg3[%c12, %c0_56, %c0_57] : memref<25x64x64xbf16, #tpu.memory_space<vmem>>, vector<1x64x64xbf16>
    %77 = vector.shape_cast %76 : vector<1x64x64xbf16> to vector<64x64xbf16>
    %cst_58 = arith.constant dense<0.000000e+00> : vector<200x64xf32>
    %78 = tpu.matmul %15, %77, %cst_58 {dimension_numbers = #tpu.dot_dimension_numbers<[1], [0], [0], [1], [0, 0, 1, 1], [], []>} : vector<200x64xbf16>, vector<64x64xbf16>, vector<200x64xf32> -> vector<200x64xf32>
    %79 = arith.truncf %78 : vector<200x64xf32> to vector<200x64xbf16>
    %c2400 = arith.constant 2400 : index
    %c0_59 = arith.constant 0 : index
    %80 = vector.load %arg13[%c2400, %c0_59] : memref<5000x64xbf16, #tpu.memory_space<vmem>>, vector<200x64xbf16>
    tpu.vector_store %arg13[%c2400, %c0_59], %79 {strides = array<i32>} : memref<5000x64xbf16, #tpu.memory_space<vmem>>, vector<200x64xbf16>,
    %c13 = arith.constant 13 : index
    %c0_60 = arith.constant 0 : index
    %c0_61 = arith.constant 0 : index
    %81 = vector.load %arg3[%c13, %c0_60, %c0_61] : memref<25x64x64xbf16, #tpu.memory_space<vmem>>, vector<1x64x64xbf16>
    %82 = vector.shape_cast %81 : vector<1x64x64xbf16> to vector<64x64xbf16>
    %cst_62 = arith.constant dense<0.000000e+00> : vector<200x64xf32>
    %83 = tpu.matmul %15, %82, %cst_62 {dimension_numbers = #tpu.dot_dimension_numbers<[1], [0], [0], [1], [0, 0, 1, 1], [], []>} : vector<200x64xbf16>, vector<64x64xbf16>, vector<200x64xf32> -> vector<200x64xf32>
    %84 = arith.truncf %83 : vector<200x64xf32> to vector<200x64xbf16>
    %c2600 = arith.constant 2600 : index
    %c0_63 = arith.constant 0 : index
    %85 = vector.load %arg13[%c2600, %c0_63] : memref<5000x64xbf16, #tpu.memory_space<vmem>>, vector<200x64xbf16>
    tpu.vector_store %arg13[%c2600, %c0_63], %84 {strides = array<i32>} : memref<5000x64xbf16, #tpu.memory_space<vmem>>, vector<200x64xbf16>,
    %c14 = arith.constant 14 : index
    %c0_64 = arith.constant 0 : index
    %c0_65 = arith.constant 0 : index
    %86 = vector.load %arg3[%c14, %c0_64, %c0_65] : memref<25x64x64xbf16, #tpu.memory_space<vmem>>, vector<1x64x64xbf16>
    %87 = vector.shape_cast %86 : vector<1x64x64xbf16> to vector<64x64xbf16>
    %cst_66 = arith.constant dense<0.000000e+00> : vector<200x64xf32>
    %88 = tpu.matmul %15, %87, %cst_66 {dimension_numbers = #tpu.dot_dimension_numbers<[1], [0], [0], [1], [0, 0, 1, 1], [], []>} : vector<200x64xbf16>, vector<64x64xbf16>, vector<200x64xf32> -> vector<200x64xf32>
    %89 = arith.truncf %88 : vector<200x64xf32> to vector<200x64xbf16>
    %c2800 = arith.constant 2800 : index
    %c0_67 = arith.constant 0 : index
    %90 = vector.load %arg13[%c2800, %c0_67] : memref<5000x64xbf16, #tpu.memory_space<vmem>>, vector<200x64xbf16>
    tpu.vector_store %arg13[%c2800, %c0_67], %89 {strides = array<i32>} : memref<5000x64xbf16, #tpu.memory_space<vmem>>, vector<200x64xbf16>,
    %c15 = arith.constant 15 : index
    %c0_68 = arith.constant 0 : index
    %c0_69 = arith.constant 0 : index
    %91 = vector.load %arg3[%c15, %c0_68, %c0_69] : memref<25x64x64xbf16, #tpu.memory_space<vmem>>, vector<1x64x64xbf16>
    %92 = vector.shape_cast %91 : vector<1x64x64xbf16> to vector<64x64xbf16>
    %cst_70 = arith.constant dense<0.000000e+00> : vector<200x64xf32>
    %93 = tpu.matmul %15, %92, %cst_70 {dimension_numbers = #tpu.dot_dimension_numbers<[1], [0], [0], [1], [0, 0, 1, 1], [], []>} : vector<200x64xbf16>, vector<64x64xbf16>, vector<200x64xf32> -> vector<200x64xf32>
    %94 = arith.truncf %93 : vector<200x64xf32> to vector<200x64xbf16>
    %c3000 = arith.constant 3000 : index
    %c0_71 = arith.constant 0 : index
    %95 = vector.load %arg13[%c3000, %c0_71] : memref<5000x64xbf16, #tpu.memory_space<vmem>>, vector<200x64xbf16>
    tpu.vector_store %arg13[%c3000, %c0_71], %94 {strides = array<i32>} : memref<5000x64xbf16, #tpu.memory_space<vmem>>, vector<200x64xbf16>,
    %c16 = arith.constant 16 : index
    %c0_72 = arith.constant 0 : index
    %c0_73 = arith.constant 0 : index
    %96 = vector.load %arg3[%c16, %c0_72, %c0_73] : memref<25x64x64xbf16, #tpu.memory_space<vmem>>, vector<1x64x64xbf16>
    %97 = vector.shape_cast %96 : vector<1x64x64xbf16> to vector<64x64xbf16>
    %cst_74 = arith.constant dense<0.000000e+00> : vector<200x64xf32>
    %98 = tpu.matmul %15, %97, %cst_74 {dimension_numbers = #tpu.dot_dimension_numbers<[1], [0], [0], [1], [0, 0, 1, 1], [], []>} : vector<200x64xbf16>, vector<64x64xbf16>, vector<200x64xf32> -> vector<200x64xf32>
    %99 = arith.truncf %98 : vector<200x64xf32> to vector<200x64xbf16>
    %c3200 = arith.constant 3200 : index
    %c0_75 = arith.constant 0 : index
    %100 = vector.load %arg13[%c3200, %c0_75] : memref<5000x64xbf16, #tpu.memory_space<vmem>>, vector<200x64xbf16>
    tpu.vector_store %arg13[%c3200, %c0_75], %99 {strides = array<i32>} : memref<5000x64xbf16, #tpu.memory_space<vmem>>, vector<200x64xbf16>,
    %c17 = arith.constant 17 : index
    %c0_76 = arith.constant 0 : index
    %c0_77 = arith.constant 0 : index
    %101 = vector.load %arg3[%c17, %c0_76, %c0_77] : memref<25x64x64xbf16, #tpu.memory_space<vmem>>, vector<1x64x64xbf16>
    %102 = vector.shape_cast %101 : vector<1x64x64xbf16> to vector<64x64xbf16>
    %cst_78 = arith.constant dense<0.000000e+00> : vector<200x64xf32>
    %103 = tpu.matmul %15, %102, %cst_78 {dimension_numbers = #tpu.dot_dimension_numbers<[1], [0], [0], [1], [0, 0, 1, 1], [], []>} : vector<200x64xbf16>, vector<64x64xbf16>, vector<200x64xf32> -> vector<200x64xf32>
    %104 = arith.truncf %103 : vector<200x64xf32> to vector<200x64xbf16>
    %c3400 = arith.constant 3400 : index
    %c0_79 = arith.constant 0 : index
    %105 = vector.load %arg13[%c3400, %c0_79] : memref<5000x64xbf16, #tpu.memory_space<vmem>>, vector<200x64xbf16>
    tpu.vector_store %arg13[%c3400, %c0_79], %104 {strides = array<i32>} : memref<5000x64xbf16, #tpu.memory_space<vmem>>, vector<200x64xbf16>,
    %c18 = arith.constant 18 : index
    %c0_80 = arith.constant 0 : index
    %c0_81 = arith.constant 0 : index
    %106 = vector.load %arg3[%c18, %c0_80, %c0_81] : memref<25x64x64xbf16, #tpu.memory_space<vmem>>, vector<1x64x64xbf16>
    %107 = vector.shape_cast %106 : vector<1x64x64xbf16> to vector<64x64xbf16>
    %cst_82 = arith.constant dense<0.000000e+00> : vector<200x64xf32>
    %108 = tpu.matmul %15, %107, %cst_82 {dimension_numbers = #tpu.dot_dimension_numbers<[1], [0], [0], [1], [0, 0, 1, 1], [], []>} : vector<200x64xbf16>, vector<64x64xbf16>, vector<200x64xf32> -> vector<200x64xf32>
    %109 = arith.truncf %108 : vector<200x64xf32> to vector<200x64xbf16>
    %c3600 = arith.constant 3600 : index
    %c0_83 = arith.constant 0 : index
    %110 = vector.load %arg13[%c3600, %c0_83] : memref<5000x64xbf16, #tpu.memory_space<vmem>>, vector<200x64xbf16>
    tpu.vector_store %arg13[%c3600, %c0_83], %109 {strides = array<i32>} : memref<5000x64xbf16, #tpu.memory_space<vmem>>, vector<200x64xbf16>,
    %c19 = arith.constant 19 : index
    %c0_84 = arith.constant 0 : index
    %c0_85 = arith.constant 0 : index
    %111 = vector.load %arg3[%c19, %c0_84, %c0_85] : memref<25x64x64xbf16, #tpu.memory_space<vmem>>, vector<1x64x64xbf16>
    %112 = vector.shape_cast %111 : vector<1x64x64xbf16> to vector<64x64xbf16>
    %cst_86 = arith.constant dense<0.000000e+00> : vector<200x64xf32>
    %113 = tpu.matmul %15, %112, %cst_86 {dimension_numbers = #tpu.dot_dimension_numbers<[1], [0], [0], [1], [0, 0, 1, 1], [], []>} : vector<200x64xbf16>, vector<64x64xbf16>, vector<200x64xf32> -> vector<200x64xf32>
    %114 = arith.truncf %113 : vector<200x64xf32> to vector<200x64xbf16>
    %c3800 = arith.constant 3800 : index
    %c0_87 = arith.constant 0 : index
    %115 = vector.load %arg13[%c3800, %c0_87] : memref<5000x64xbf16, #tpu.memory_space<vmem>>, vector<200x64xbf16>
    tpu.vector_store %arg13[%c3800, %c0_87], %114 {strides = array<i32>} : memref<5000x64xbf16, #tpu.memory_space<vmem>>, vector<200x64xbf16>,
    %c20 = arith.constant 20 : index
    %c0_88 = arith.constant 0 : index
    %c0_89 = arith.constant 0 : index
    %116 = vector.load %arg3[%c20, %c0_88, %c0_89] : memref<25x64x64xbf16, #tpu.memory_space<vmem>>, vector<1x64x64xbf16>
    %117 = vector.shape_cast %116 : vector<1x64x64xbf16> to vector<64x64xbf16>
    %cst_90 = arith.constant dense<0.000000e+00> : vector<200x64xf32>
    %118 = tpu.matmul %15, %117, %cst_90 {dimension_numbers = #tpu.dot_dimension_numbers<[1], [0], [0], [1], [0, 0, 1, 1], [], []>} : vector<200x64xbf16>, vector<64x64xbf16>, vector<200x64xf32> -> vector<200x64xf32>
    %119 = arith.truncf %118 : vector<200x64xf32> to vector<200x64xbf16>
    %c4000 = arith.constant 4000 : index
    %c0_91 = arith.constant 0 : index
    %120 = vector.load %arg13[%c4000, %c0_91] : memref<5000x64xbf16, #tpu.memory_space<vmem>>, vector<200x64xbf16>
    tpu.vector_store %arg13[%c4000, %c0_91], %119 {strides = array<i32>} : memref<5000x64xbf16, #tpu.memory_space<vmem>>, vector<200x64xbf16>,
    %c21 = arith.constant 21 : index
    %c0_92 = arith.constant 0 : index
    %c0_93 = arith.constant 0 : index
    %121 = vector.load %arg3[%c21, %c0_92, %c0_93] : memref<25x64x64xbf16, #tpu.memory_space<vmem>>, vector<1x64x64xbf16>
    %122 = vector.shape_cast %121 : vector<1x64x64xbf16> to vector<64x64xbf16>
    %cst_94 = arith.constant dense<0.000000e+00> : vector<200x64xf32>
    %123 = tpu.matmul %15, %122, %cst_94 {dimension_numbers = #tpu.dot_dimension_numbers<[1], [0], [0], [1], [0, 0, 1, 1], [], []>} : vector<200x64xbf16>, vector<64x64xbf16>, vector<200x64xf32> -> vector<200x64xf32>
    %124 = arith.truncf %123 : vector<200x64xf32> to vector<200x64xbf16>
    %c4200 = arith.constant 4200 : index
    %c0_95 = arith.constant 0 : index
    %125 = vector.load %arg13[%c4200, %c0_95] : memref<5000x64xbf16, #tpu.memory_space<vmem>>, vector<200x64xbf16>
    tpu.vector_store %arg13[%c4200, %c0_95], %124 {strides = array<i32>} : memref<5000x64xbf16, #tpu.memory_space<vmem>>, vector<200x64xbf16>,
    %c22 = arith.constant 22 : index
    %c0_96 = arith.constant 0 : index
    %c0_97 = arith.constant 0 : index
    %126 = vector.load %arg3[%c22, %c0_96, %c0_97] : memref<25x64x64xbf16, #tpu.memory_space<vmem>>, vector<1x64x64xbf16>
    %127 = vector.shape_cast %126 : vector<1x64x64xbf16> to vector<64x64xbf16>
    %cst_98 = arith.constant dense<0.000000e+00> : vector<200x64xf32>
    %128 = tpu.matmul %15, %127, %cst_98 {dimension_numbers = #tpu.dot_dimension_numbers<[1], [0], [0], [1], [0, 0, 1, 1], [], []>} : vector<200x64xbf16>, vector<64x64xbf16>, vector<200x64xf32> -> vector<200x64xf32>
    %129 = arith.truncf %128 : vector<200x64xf32> to vector<200x64xbf16>
    %c4400 = arith.constant 4400 : index
    %c0_99 = arith.constant 0 : index
    %130 = vector.load %arg13[%c4400, %c0_99] : memref<5000x64xbf16, #tpu.memory_space<vmem>>, vector<200x64xbf16>
    tpu.vector_store %arg13[%c4400, %c0_99], %129 {strides = array<i32>} : memref<5000x64xbf16, #tpu.memory_space<vmem>>, vector<200x64xbf16>,
    %c23 = arith.constant 23 : index
    %c0_100 = arith.constant 0 : index
    %c0_101 = arith.constant 0 : index
    %131 = vector.load %arg3[%c23, %c0_100, %c0_101] : memref<25x64x64xbf16, #tpu.memory_space<vmem>>, vector<1x64x64xbf16>
    %132 = vector.shape_cast %131 : vector<1x64x64xbf16> to vector<64x64xbf16>
    %cst_102 = arith.constant dense<0.000000e+00> : vector<200x64xf32>
    %133 = tpu.matmul %15, %132, %cst_102 {dimension_numbers = #tpu.dot_dimension_numbers<[1], [0], [0], [1], [0, 0, 1, 1], [], []>} : vector<200x64xbf16>, vector<64x64xbf16>, vector<200x64xf32> -> vector<200x64xf32>
    %134 = arith.truncf %133 : vector<200x64xf32> to vector<200x64xbf16>
    %c4600 = arith.constant 4600 : index
    %c0_103 = arith.constant 0 : index
    %135 = vector.load %arg13[%c4600, %c0_103] : memref<5000x64xbf16, #tpu.memory_space<vmem>>, vector<200x64xbf16>
    tpu.vector_store %arg13[%c4600, %c0_103], %134 {strides = array<i32>} : memref<5000x64xbf16, #tpu.memory_space<vmem>>, vector<200x64xbf16>,
    %c24 = arith.constant 24 : index
    %c0_104 = arith.constant 0 : index
    %c0_105 = arith.constant 0 : index
    %136 = vector.load %arg3[%c24, %c0_104, %c0_105] : memref<25x64x64xbf16, #tpu.memory_space<vmem>>, vector<1x64x64xbf16>
    %137 = vector.shape_cast %136 : vector<1x64x64xbf16> to vector<64x64xbf16>
    %cst_106 = arith.constant dense<0.000000e+00> : vector<200x64xf32>
    %138 = tpu.matmul %15, %137, %cst_106 {dimension_numbers = #tpu.dot_dimension_numbers<[1], [0], [0], [1], [0, 0, 1, 1], [], []>} : vector<200x64xbf16>, vector<64x64xbf16>, vector<200x64xf32> -> vector<200x64xf32>
    %139 = arith.truncf %138 : vector<200x64xf32> to vector<200x64xbf16>
    %c4800 = arith.constant 4800 : index
    %c0_107 = arith.constant 0 : index
    %140 = vector.load %arg13[%c4800, %c0_107] : memref<5000x64xbf16, #tpu.memory_space<vmem>>, vector<200x64xbf16>
    tpu.vector_store %arg13[%c4800, %c0_107], %139 {strides = array<i32>} : memref<5000x64xbf16, #tpu.memory_space<vmem>>, vector<200x64xbf16>,
    %c0_108 = arith.constant 0 : index
    %c0_109 = arith.constant 0 : index
    %141 = vector.load %arg5[%c0_108, %c0_109] : memref<96x5000xbf16, #tpu.memory_space<vmem>>, vector<96x5000xbf16>
    %c0_110 = arith.constant 0 : index
    %c0_111 = arith.constant 0 : index
    %142 = vector.load %arg13[%c0_110, %c0_111] : memref<5000x64xbf16, #tpu.memory_space<vmem>>, vector<5000x64xbf16>
    %cst_112 = arith.constant dense<0.000000e+00> : vector<96x64xf32>
    %143 = tpu.matmul %141, %142, %cst_112 {dimension_numbers = #tpu.dot_dimension_numbers<[1], [0], [0], [1], [0, 0, 1, 1], [], []>} : vector<96x5000xbf16>, vector<5000x64xbf16>, vector<96x64xf32> -> vector<96x64xf32>
    %c0_113 = arith.constant 0 : index
    %c0_114 = arith.constant 0 : index
    %144 = vector.load %arg4[%c0_113, %c0_114] : memref<1x64xf32, #tpu.memory_space<vmem>>, vector<1x64xf32>
    %145 = vector.broadcast %144 : vector<1x64xf32> to vector<96x64xf32>
    %146 = arith.addf %143, %145 : vector<96x64xf32>
    %cst_115 = arith.constant 0.000000e+00 : f32
    %147 = vector.broadcast %cst_115 : f32 to vector<96x64xf32>
    %148 = arith.maximumf %146, %147 : vector<96x64xf32>
    %149 = vector.extract_strided_slice %148 {offsets = [0, 0], sizes = [24, 64], strides = [1, 1]} : vector<96x64xf32> to vector<24x64xf32>
    %150 = vector.extract_strided_slice %148 {offsets = [24, 0], sizes = [24, 64], strides = [1, 1]} : vector<96x64xf32> to vector<24x64xf32>
    %151 = arith.maximumf %149, %150 : vector<24x64xf32>
    %152 = vector.extract_strided_slice %148 {offsets = [48, 0], sizes = [24, 64], strides = [1, 1]} : vector<96x64xf32> to vector<24x64xf32>
    %153 = vector.extract_strided_slice %148 {offsets = [72, 0], sizes = [24, 64], strides = [1, 1]} : vector<96x64xf32> to vector<24x64xf32>
    %154 = arith.maximumf %152, %153 : vector<24x64xf32>
    %155 = arith.maximumf %151, %154 : vector<24x64xf32>
    %156 = arith.truncf %155 : vector<24x64xf32> to vector<24x64xbf16>
    %cst_116 = arith.constant 0.000000e+00 : f32
    %157 = vector.broadcast %cst_116 : f32 to vector<2x384xf32>
    %158 = vector.extract_strided_slice %156 {offsets = [0, 0], sizes = [2, 64], strides = [1, 1]} : vector<24x64xbf16> to vector<2x64xbf16>
    %c0_117 = arith.constant 0 : index
    %c0_118 = arith.constant 0 : index
    %c0_119 = arith.constant 0 : index
    %159 = vector.load %arg6[%c0_117, %c0_118, %c0_119] : memref<9x64x384xbf16, #tpu.memory_space<vmem>>, vector<1x64x384xbf16>
    %160 = vector.shape_cast %159 : vector<1x64x384xbf16> to vector<64x384xbf16>
    %cst_120 = arith.constant dense<0.000000e+00> : vector<2x384xf32>
    %161 = tpu.matmul %158, %160, %cst_120 {dimension_numbers = #tpu.dot_dimension_numbers<[1], [0], [0], [1], [0, 0, 1, 1], [], []>} : vector<2x64xbf16>, vector<64x384xbf16>, vector<2x384xf32> -> vector<2x384xf32>
    %162 = arith.addf %157, %161 : vector<2x384xf32>
    %163 = vector.extract_strided_slice %156 {offsets = [2, 0], sizes = [2, 64], strides = [1, 1]} : vector<24x64xbf16> to vector<2x64xbf16>
    %c1_121 = arith.constant 1 : index
    %c0_122 = arith.constant 0 : index
    %c0_123 = arith.constant 0 : index
    %164 = vector.load %arg6[%c1_121, %c0_122, %c0_123] : memref<9x64x384xbf16, #tpu.memory_space<vmem>>, vector<1x64x384xbf16>
    %165 = vector.shape_cast %164 : vector<1x64x384xbf16> to vector<64x384xbf16>
    %cst_124 = arith.constant dense<0.000000e+00> : vector<2x384xf32>
    %166 = tpu.matmul %163, %165, %cst_124 {dimension_numbers = #tpu.dot_dimension_numbers<[1], [0], [0], [1], [0, 0, 1, 1], [], []>} : vector<2x64xbf16>, vector<64x384xbf16>, vector<2x384xf32> -> vector<2x384xf32>
    %167 = arith.addf %162, %166 : vector<2x384xf32>
    %168 = vector.extract_strided_slice %156 {offsets = [4, 0], sizes = [2, 64], strides = [1, 1]} : vector<24x64xbf16> to vector<2x64xbf16>
    %c2_125 = arith.constant 2 : index
    %c0_126 = arith.constant 0 : index
    %c0_127 = arith.constant 0 : index
    %169 = vector.load %arg6[%c2_125, %c0_126, %c0_127] : memref<9x64x384xbf16, #tpu.memory_space<vmem>>, vector<1x64x384xbf16>
    %170 = vector.shape_cast %169 : vector<1x64x384xbf16> to vector<64x384xbf16>
    %cst_128 = arith.constant dense<0.000000e+00> : vector<2x384xf32>
    %171 = tpu.matmul %168, %170, %cst_128 {dimension_numbers = #tpu.dot_dimension_numbers<[1], [0], [0], [1], [0, 0, 1, 1], [], []>} : vector<2x64xbf16>, vector<64x384xbf16>, vector<2x384xf32> -> vector<2x384xf32>
    %172 = arith.addf %167, %171 : vector<2x384xf32>
    %173 = vector.extract_strided_slice %156 {offsets = [6, 0], sizes = [2, 64], strides = [1, 1]} : vector<24x64xbf16> to vector<2x64xbf16>
    %c3_129 = arith.constant 3 : index
    %c0_130 = arith.constant 0 : index
    %c0_131 = arith.constant 0 : index
    %174 = vector.load %arg6[%c3_129, %c0_130, %c0_131] : memref<9x64x384xbf16, #tpu.memory_space<vmem>>, vector<1x64x384xbf16>
    %175 = vector.shape_cast %174 : vector<1x64x384xbf16> to vector<64x384xbf16>
    %cst_132 = arith.constant dense<0.000000e+00> : vector<2x384xf32>
    %176 = tpu.matmul %173, %175, %cst_132 {dimension_numbers = #tpu.dot_dimension_numbers<[1], [0], [0], [1], [0, 0, 1, 1], [], []>} : vector<2x64xbf16>, vector<64x384xbf16>, vector<2x384xf32> -> vector<2x384xf32>
    %177 = arith.addf %172, %176 : vector<2x384xf32>
    %178 = vector.extract_strided_slice %156 {offsets = [8, 0], sizes = [2, 64], strides = [1, 1]} : vector<24x64xbf16> to vector<2x64xbf16>
    %c4_133 = arith.constant 4 : index
    %c0_134 = arith.constant 0 : index
    %c0_135 = arith.constant 0 : index
    %179 = vector.load %arg6[%c4_133, %c0_134, %c0_135] : memref<9x64x384xbf16, #tpu.memory_space<vmem>>, vector<1x64x384xbf16>
    %180 = vector.shape_cast %179 : vector<1x64x384xbf16> to vector<64x384xbf16>
    %cst_136 = arith.constant dense<0.000000e+00> : vector<2x384xf32>
    %181 = tpu.matmul %178, %180, %cst_136 {dimension_numbers = #tpu.dot_dimension_numbers<[1], [0], [0], [1], [0, 0, 1, 1], [], []>} : vector<2x64xbf16>, vector<64x384xbf16>, vector<2x384xf32> -> vector<2x384xf32>
    %182 = arith.addf %177, %181 : vector<2x384xf32>
    %183 = vector.extract_strided_slice %156 {offsets = [10, 0], sizes = [2, 64], strides = [1, 1]} : vector<24x64xbf16> to vector<2x64xbf16>
    %c5_137 = arith.constant 5 : index
    %c0_138 = arith.constant 0 : index
    %c0_139 = arith.constant 0 : index
    %184 = vector.load %arg6[%c5_137, %c0_138, %c0_139] : memref<9x64x384xbf16, #tpu.memory_space<vmem>>, vector<1x64x384xbf16>
    %185 = vector.shape_cast %184 : vector<1x64x384xbf16> to vector<64x384xbf16>
    %cst_140 = arith.constant dense<0.000000e+00> : vector<2x384xf32>
    %186 = tpu.matmul %183, %185, %cst_140 {dimension_numbers = #tpu.dot_dimension_numbers<[1], [0], [0], [1], [0, 0, 1, 1], [], []>} : vector<2x64xbf16>, vector<64x384xbf16>, vector<2x384xf32> -> vector<2x384xf32>
    %187 = arith.addf %182, %186 : vector<2x384xf32>
    %188 = vector.extract_strided_slice %156 {offsets = [12, 0], sizes = [2, 64], strides = [1, 1]} : vector<24x64xbf16> to vector<2x64xbf16>
    %c6_141 = arith.constant 6 : index
    %c0_142 = arith.constant 0 : index
    %c0_143 = arith.constant 0 : index
    %189 = vector.load %arg6[%c6_141, %c0_142, %c0_143] : memref<9x64x384xbf16, #tpu.memory_space<vmem>>, vector<1x64x384xbf16>
    %190 = vector.shape_cast %189 : vector<1x64x384xbf16> to vector<64x384xbf16>
    %cst_144 = arith.constant dense<0.000000e+00> : vector<2x384xf32>
    %191 = tpu.matmul %188, %190, %cst_144 {dimension_numbers = #tpu.dot_dimension_numbers<[1], [0], [0], [1], [0, 0, 1, 1], [], []>} : vector<2x64xbf16>, vector<64x384xbf16>, vector<2x384xf32> -> vector<2x384xf32>
    %192 = arith.addf %187, %191 : vector<2x384xf32>
    %193 = vector.extract_strided_slice %156 {offsets = [14, 0], sizes = [2, 64], strides = [1, 1]} : vector<24x64xbf16> to vector<2x64xbf16>
    %c7_145 = arith.constant 7 : index
    %c0_146 = arith.constant 0 : index
    %c0_147 = arith.constant 0 : index
    %194 = vector.load %arg6[%c7_145, %c0_146, %c0_147] : memref<9x64x384xbf16, #tpu.memory_space<vmem>>, vector<1x64x384xbf16>
    %195 = vector.shape_cast %194 : vector<1x64x384xbf16> to vector<64x384xbf16>
    %cst_148 = arith.constant dense<0.000000e+00> : vector<2x384xf32>
    %196 = tpu.matmul %193, %195, %cst_148 {dimension_numbers = #tpu.dot_dimension_numbers<[1], [0], [0], [1], [0, 0, 1, 1], [], []>} : vector<2x64xbf16>, vector<64x384xbf16>, vector<2x384xf32> -> vector<2x384xf32>
    %197 = arith.addf %192, %196 : vector<2x384xf32>
    %198 = vector.extract_strided_slice %156 {offsets = [16, 0], sizes = [2, 64], strides = [1, 1]} : vector<24x64xbf16> to vector<2x64xbf16>
    %c8_149 = arith.constant 8 : index
    %c0_150 = arith.constant 0 : index
    %c0_151 = arith.constant 0 : index
    %199 = vector.load %arg6[%c8_149, %c0_150, %c0_151] : memref<9x64x384xbf16, #tpu.memory_space<vmem>>, vector<1x64x384xbf16>
    %200 = vector.shape_cast %199 : vector<1x64x384xbf16> to vector<64x384xbf16>
    %cst_152 = arith.constant dense<0.000000e+00> : vector<2x384xf32>
    %201 = tpu.matmul %198, %200, %cst_152 {dimension_numbers = #tpu.dot_dimension_numbers<[1], [0], [0], [1], [0, 0, 1, 1], [], []>} : vector<2x64xbf16>, vector<64x384xbf16>, vector<2x384xf32> -> vector<2x384xf32>
    %202 = arith.addf %197, %201 : vector<2x384xf32>
    %c0_153 = arith.constant 0 : index
    %c0_154 = arith.constant 0 : index
    %203 = vector.load %arg7[%c0_153, %c0_154] : memref<1x384xf32, #tpu.memory_space<vmem>>, vector<1x384xf32>
    %204 = vector.broadcast %203 : vector<1x384xf32> to vector<2x384xf32>
    %205 = arith.addf %202, %204 : vector<2x384xf32>
    %cst_155 = arith.constant 0.000000e+00 : f32
    %206 = vector.broadcast %cst_155 : f32 to vector<2x384xf32>
    %207 = arith.maximumf %205, %206 : vector<2x384xf32>
    %208 = arith.truncf %207 : vector<2x384xf32> to vector<2x384xbf16>
    %c0_156 = arith.constant 0 : index
    %c0_157 = arith.constant 0 : index
    %209 = vector.load %arg8[%c0_156, %c0_157] : memref<384x192xbf16, #tpu.memory_space<vmem>>, vector<384x192xbf16>
    %cst_158 = arith.constant dense<0.000000e+00> : vector<2x192xf32>
    %210 = tpu.matmul %208, %209, %cst_158 {dimension_numbers = #tpu.dot_dimension_numbers<[1], [0], [0], [1], [0, 0, 1, 1], [], []>} : vector<2x384xbf16>, vector<384x192xbf16>, vector<2x192xf32> -> vector<2x192xf32>
    %c0_159 = arith.constant 0 : index
    %c0_160 = arith.constant 0 : index
    %211 = vector.load %arg9[%c0_159, %c0_160] : memref<1x192xf32, #tpu.memory_space<vmem>>, vector<1x192xf32>
    %212 = vector.broadcast %211 : vector<1x192xf32> to vector<2x192xf32>
    %213 = arith.addf %210, %212 : vector<2x192xf32>
    %cst_161 = arith.constant 0.000000e+00 : f32
    %214 = vector.broadcast %cst_161 : f32 to vector<2x192xf32>
    %215 = arith.maximumf %213, %214 : vector<2x192xf32>
    %216 = arith.truncf %215 : vector<2x192xf32> to vector<2x192xbf16>
    %c0_162 = arith.constant 0 : index
    %c0_163 = arith.constant 0 : index
    %217 = vector.load %arg10[%c0_162, %c0_163] : memref<192x128xbf16, #tpu.memory_space<vmem>>, vector<192x128xbf16>
    %cst_164 = arith.constant dense<0.000000e+00> : vector<2x128xf32>
    %218 = tpu.matmul %216, %217, %cst_164 {dimension_numbers = #tpu.dot_dimension_numbers<[1], [0], [0], [1], [0, 0, 1, 1], [], []>} : vector<2x192xbf16>, vector<192x128xbf16>, vector<2x128xf32> -> vector<2x128xf32>
    %c0_165 = arith.constant 0 : index
    %c0_166 = arith.constant 0 : index
    %219 = vector.load %arg11[%c0_165, %c0_166] : memref<1x128xf32, #tpu.memory_space<vmem>>, vector<1x128xf32>
    %220 = vector.broadcast %219 : vector<1x128xf32> to vector<2x128xf32>
    %221 = arith.addf %218, %220 : vector<2x128xf32>
    %c0_167 = arith.constant 0 : index
    %c0_168 = arith.constant 0 : index
    %222 = vector.load %arg12[%c0_167, %c0_168] : memref<2x128xf32, #tpu.memory_space<vmem>>, vector<2x128xf32>
    tpu.vector_store %arg12[%c0_167, %c0_168], %221 {strides = array<i32>} : memref<2x128xf32, #tpu.memory_space<vmem>>, vector<2x128xf32>,
    return
  }
}

</mosaic_0001>

<llo_original>
// kernel: cnn_cifar_forward.1
$region0: #{cnn_cifar_forward.1}
  #allocation0 [shape = 'u32[]', space=smem, size = 0x4, offset = 0x4, fixed_abs, tag = 'smem constant byte address 0x4 - core index']
  #allocation1 [shape = 'u32[72,128]{1,0:T(1,128)}', space=vmem, size = 0x9000, scoped, tag = 'internal scratch']
  #allocation2 [shape = 'bf16[5000,64]{1,0:T(8,128)(2,1)}', space=vmem, size = 0x138800, scoped, tag = 'scratch operand']
  %s0 = inlined_call_operand.vmem [shape: bf16[800,75], index: 0, kind: input, shape index: {}]
  %s1 = inlined_call_operand.vmem [shape: bf16[75,64], index: 1, kind: input, shape index: {}]
  %s2 = inlined_call_operand.vmem [shape: f32[1,64], index: 2, kind: input, shape index: {}]
  %s3 = inlined_call_operand.vmem [shape: bf16[25,64,64], index: 3, kind: input, shape index: {}]
  %s4 = inlined_call_operand.vmem [shape: f32[1,64], index: 4, kind: input, shape index: {}]
  %s5 = inlined_call_operand.vmem [shape: bf16[96,5000], index: 5, kind: input, shape index: {}]
  %s6 = inlined_call_operand.vmem [shape: bf16[9,64,384], index: 6, kind: input, shape index: {}]
  %s7 = inlined_call_operand.vmem [shape: f32[1,384], index: 7, kind: input, shape index: {}]
  %s8 = inlined_call_operand.vmem [shape: bf16[384,192], index: 8, kind: input, shape index: {}]
  %s9 = inlined_call_operand.vmem [shape: f32[1,192], index: 9, kind: input, shape index: {}]
  %s10 = inlined_call_operand.vmem [shape: bf16[192,128], index: 10, kind: input, shape index: {}]
  %s11 = inlined_call_operand.vmem [shape: f32[1,128], index: 11, kind: input, shape index: {}]
  %s12 = inlined_call_operand.hbm [shape: f32[2,128], index: 12, kind: output, shape index: {}]
  %s13 = sld [smem:[#allocation0]]
  $region58: #{cnn_cifar_forward.1} parent=0
    _
  %s15 = ssub.s32 1, %s13
  %s16 = scalar_select 0, %s15, %s13
  $region1: #{cnn_cifar_forward.1} parent=0
    #allocation3 [shape = 'u8[1024]{0}', space=vmem, size = 0x400, scoped, tag = 'output window, operand 0, single buffered']
    #allocation4 [shape = 's32[1]{0}', space=sflag, size = 0x4, scoped, tag = 'scoped memory for cnn_cifar_forward.1']
    %17 = vsyncpa [#allocation4], 0
    // Predicated region
    $region2: #{cnn_cifar_forward.1} parent=1 // pred_check
      _
    $region3: #{cnn_cifar_forward.1} parent=1 // pred_check_branch
      %19 = sbr.rel (0) target = $region5
    $region4: #{cnn_cifar_forward.1} parent=1 // pred_region
      _
    $region5: #{cnn_cifar_forward.1} parent=1 // pred_fallthru
      _
    // Predicated region
    $region6: #{cnn_cifar_forward.1} parent=1 // pred_check
      _
    $region7: #{cnn_cifar_forward.1} parent=1 // pred_check_branch
      %21 = sbr.rel (0) target = $region9
    $region8: #{cnn_cifar_forward.1} parent=1 // pred_region
      _
    $region9: #{cnn_cifar_forward.1} parent=1 // pred_fallthru
      _
    // Predicated region
    $region10: #{cnn_cifar_forward.1} parent=1 // pred_check
      _
    $region11: #{cnn_cifar_forward.1} parent=1 // pred_check_branch
      %23 = sbr.rel (0) target = $region13
    $region12: #{cnn_cifar_forward.1} parent=1 // pred_region
      _
    $region13: #{cnn_cifar_forward.1} parent=1 // pred_fallthru
      _
    // Predicated region
    $region14: #{cnn_cifar_forward.1} parent=1 // pred_check
      _
    $region15: #{cnn_cifar_forward.1} parent=1 // pred_check_branch
      %25 = sbr.rel (0) target = $region17
    $region16: #{cnn_cifar_forward.1} parent=1 // pred_region
      _
    $region17: #{cnn_cifar_forward.1} parent=1 // pred_fallthru
      _
    // Predicated region
    $region18: #{cnn_cifar_forward.1} parent=1 // pred_check
      _
    $region19: #{cnn_cifar_forward.1} parent=1 // pred_check_branch
      %27 = sbr.rel (0) target = $region21
    $region20: #{cnn_cifar_forward.1} parent=1 // pred_region
      _
    $region21: #{cnn_cifar_forward.1} parent=1 // pred_fallthru
      _
    // Predicated region
    $region22: #{cnn_cifar_forward.1} parent=1 // pred_check
      _
    $region23: #{cnn_cifar_forward.1} parent=1 // pred_check_branch
      %29 = sbr.rel (0) target = $region25
    $region24: #{cnn_cifar_forward.1} parent=1 // pred_region
      _
    $region25: #{cnn_cifar_forward.1} parent=1 // pred_fallthru
      _
    // Predicated region
    $region26: #{cnn_cifar_forward.1} parent=1 // pred_check
      _
    $region27: #{cnn_cifar_forward.1} parent=1 // pred_check_branch
      %31 = sbr.rel (0) target = $region29
    $region28: #{cnn_cifar_forward.1} parent=1 // pred_region
      _
    $region29: #{cnn_cifar_forward.1} parent=1 // pred_fallthru
      _
    // Predicated region
    $region30: #{cnn_cifar_forward.1} parent=1 // pred_check
      _
    $region31: #{cnn_cifar_forward.1} parent=1 // pred_check_branch
      %33 = sbr.rel (0) target = $region33
    $region32: #{cnn_cifar_forward.1} parent=1 // pred_region
      _
    $region33: #{cnn_cifar_forward.1} parent=1 // pred_fallthru
      _
    // Predicated region
    $region34: #{cnn_cifar_forward.1} parent=1 // pred_check
      _
    $region35: #{cnn_cifar_forward.1} parent=1 // pred_check_branch
      %35 = sbr.rel (0) target = $region37
    $region36: #{cnn_cifar_forward.1} parent=1 // pred_region
      _
    $region37: #{cnn_cifar_forward.1} parent=1 // pred_fallthru
      _
    // Predicated region
    $region38: #{cnn_cifar_forward.1} parent=1 // pred_check
      _
    $region39: #{cnn_cifar_forward.1} parent=1 // pred_check_branch
      %37 = sbr.rel (0) target = $region41
    $region40: #{cnn_cifar_forward.1} parent=1 // pred_region
      _
    $region41: #{cnn_cifar_forward.1} parent=1 // pred_fallthru
      _
    // Predicated region
    $region42: #{cnn_cifar_forward.1} parent=1 // pred_check
      _
    $region43: #{cnn_cifar_forward.1} parent=1 // pred_check_branch
      %39 = sbr.rel (0) target = $region45
    $region44: #{cnn_cifar_forward.1} parent=1 // pred_region
      _
    $region45: #{cnn_cifar_forward.1} parent=1 // pred_fallthru
      _
    // Predicated region
    $region46: #{cnn_cifar_forward.1} parent=1 // pred_check
      _
    $region47: #{cnn_cifar_forward.1} parent=1 // pred_check_branch
      %41 = sbr.rel (0) target = $region49
    $region48: #{cnn_cifar_forward.1} parent=1 // pred_region
      _
    $region49: #{cnn_cifar_forward.1} parent=1 // pred_fallthru
      _
    %v43 = vld [vmem:[%s0] sm:$0xf]
    %v44 = vld [vmem:[%s0 + $0x4] sm:$0xf]
    %v45 = vld [vmem:[%s0 + $0x8] sm:$0xf]
    %v46 = vld [vmem:[%s0 + $0xc] sm:$0xf]
    %v47 = vld [vmem:[%s0 + $0x10] sm:$0xf]
    %v48 = vld [vmem:[%s0 + $0x14] sm:$0xf]
    %v49 = vld [vmem:[%s0 + $0x18] sm:$0xf]
    %v50 = vld [vmem:[%s0 + $0x1c] sm:$0xf]
    %v51 = vld [vmem:[%s0 + $0x20] sm:$0xf]
    %v52 = vld [vmem:[%s0 + $0x24] sm:$0xf]
    %v53 = vld [vmem:[%s0 + $0x28] sm:$0xf]
    %v54 = vld [vmem:[%s0 + $0x2c] sm:$0xf]
    %v55 = vld [vmem:[%s0 + $0x30] sm:$0xf]
    %v56 = vld [vmem:[%s0 + $0x34] sm:$0xf]
    %v57 = vld [vmem:[%s0 + $0x38] sm:$0xf]
    %v58 = vld [vmem:[%s0 + $0x3c] sm:$0xf]
    %v59 = vld [vmem:[%s0 + $0x40] sm:$0xf]
    %v60 = vld [vmem:[%s0 + $0x44] sm:$0xf]
    %v61 = vld [vmem:[%s0 + $0x48] sm:$0xf]
    %v62 = vld [vmem:[%s0 + $0x4c] sm:$0xf]
    %v63 = vld [vmem:[%s0 + $0x50] sm:$0xf]
    %v64 = vld [vmem:[%s0 + $0x54] sm:$0xf]
    %v65 = vld [vmem:[%s0 + $0x58] sm:$0xf]
    %v66 = vld [vmem:[%s0 + $0x5c] sm:$0xf]
    %v67 = vld [vmem:[%s0 + $0x60] sm:$0xf]
    %v68 = vld [vmem:[%s0 + $0x64] sm:$0xf]
    %v69 = vld [vmem:[%s0 + $0x68] sm:$0xf]
    %v70 = vld [vmem:[%s0 + $0x6c] sm:$0xf]
    %v71 = vld [vmem:[%s0 + $0x70] sm:$0xf]
    %v72 = vld [vmem:[%s0 + $0x74] sm:$0xf]
    %v73 = vld [vmem:[%s0 + $0x78] sm:$0xf]
    %v74 = vld [vmem:[%s0 + $0x7c] sm:$0xf]
    %v75 = vld [vmem:[%s0 + $0x80] sm:$0xf]
    %v76 = vld [vmem:[%s0 + $0x84] sm:$0xf]
    %v77 = vld [vmem:[%s0 + $0x88] sm:$0xf]
    %v78 = vld [vmem:[%s0 + $0x8c] sm:$0xf]
    %v79 = vld [vmem:[%s0 + $0x90] sm:$0xf]
    %v80 = vld [vmem:[%s0 + $0x94] sm:$0xf]
    %v81 = vld [vmem:[%s0 + $0x98] sm:$0xf]
    %v82 = vld [vmem:[%s0 + $0x9c] sm:$0xf]
    %v83 = vld [vmem:[%s0 + $0xa0] sm:$0xf]
    %v84 = vld [vmem:[%s0 + $0xa4] sm:$0xf]
    %v85 = vld [vmem:[%s0 + $0xa8] sm:$0xf]
    %v86 = vld [vmem:[%s0 + $0xac] sm:$0xf]
    %v87 = vld [vmem:[%s0 + $0xb0] sm:$0xf]
    %v88 = vld [vmem:[%s0 + $0xb4] sm:$0xf]
    %v89 = vld [vmem:[%s0 + $0xb8] sm:$0xf]
    %v90 = vld [vmem:[%s0 + $0xbc] sm:$0xf]
    %v91 = vld [vmem:[%s0 + $0xc0] sm:$0xf]
    %v92 = vld [vmem:[%s0 + $0xc4] sm:$0xf]
    %v93 = vld [vmem:[%s0 + $0xc8] sm:$0xf]
    %v94 = vld [vmem:[%s0 + $0xcc] sm:$0xf]
    %v95 = vld [vmem:[%s0 + $0xd0] sm:$0xf]
    %v96 = vld [vmem:[%s0 + $0xd4] sm:$0xf]
    %v97 = vld [vmem:[%s0 + $0xd8] sm:$0xf]
    %v98 = vld [vmem:[%s0 + $0xdc] sm:$0xf]
    %v99 = vld [vmem:[%s0 + $0xe0] sm:$0xf]
    %v100 = vld [vmem:[%s0 + $0xe4] sm:$0xf]
    %v101 = vld [vmem:[%s0 + $0xe8] sm:$0xf]
    %v102 = vld [vmem:[%s0 + $0xec] sm:$0xf]
    %v103 = vld [vmem:[%s0 + $0xf0] sm:$0xf]
    %v104 = vld [vmem:[%s0 + $0xf4] sm:$0xf]
    %v105 = vld [vmem:[%s0 + $0xf8] sm:$0xf]
    %v106 = vld [vmem:[%s0 + $0xfc] sm:$0xf]
    %v107 = vld [vmem:[%s0 + $0x100] sm:$0xf]
    %v108 = vld [vmem:[%s0 + $0x104] sm:$0xf]
    %v109 = vld [vmem:[%s0 + $0x108] sm:$0xf]
    %v110 = vld [vmem:[%s0 + $0x10c] sm:$0xf]
    %v111 = vld [vmem:[%s0 + $0x110] sm:$0xf]
    %v112 = vld [vmem:[%s0 + $0x114] sm:$0xf]
    %v113 = vld [vmem:[%s0 + $0x118] sm:$0xf]
    %v114 = vld [vmem:[%s0 + $0x11c] sm:$0xf]
    %v115 = vld [vmem:[%s0 + $0x120] sm:$0xf]
    %v116 = vld [vmem:[%s0 + $0x124] sm:$0xf]
    %v117 = vld [vmem:[%s0 + $0x128] sm:$0xf]
    %v118 = vld [vmem:[%s0 + $0x12c] sm:$0xf]
    %v119 = vld [vmem:[%s0 + $0x130] sm:$0xf]
    %v120 = vld [vmem:[%s0 + $0x134] sm:$0xf]
    %v121 = vld [vmem:[%s0 + $0x138] sm:$0xf]
    %v122 = vld [vmem:[%s0 + $0x13c] sm:$0xf]
    %v123 = vld [vmem:[%s0 + $0x140] sm:$0xf]
    %v124 = vld [vmem:[%s0 + $0x144] sm:$0xf]
    %v125 = vld [vmem:[%s0 + $0x148] sm:$0xf]
    %v126 = vld [vmem:[%s0 + $0x14c] sm:$0xf]
    %v127 = vld [vmem:[%s0 + $0x150] sm:$0xf]
    %v128 = vld [vmem:[%s0 + $0x154] sm:$0xf]
    %v129 = vld [vmem:[%s0 + $0x158] sm:$0xf]
    %v130 = vld [vmem:[%s0 + $0x15c] sm:$0xf]
    %v131 = vld [vmem:[%s0 + $0x160] sm:$0xf]
    %v132 = vld [vmem:[%s0 + $0x164] sm:$0xf]
    %v133 = vld [vmem:[%s0 + $0x168] sm:$0xf]
    %v134 = vld [vmem:[%s0 + $0x16c] sm:$0xf]
    %v135 = vld [vmem:[%s0 + $0x170] sm:$0xf]
    %v136 = vld [vmem:[%s0 + $0x174] sm:$0xf]
    %v137 = vld [vmem:[%s0 + $0x178] sm:$0xf]
    %v138 = vld [vmem:[%s0 + $0x17c] sm:$0xf]
    %v139 = vld [vmem:[%s0 + $0x180] sm:$0xf]
    %v140 = vld [vmem:[%s0 + $0x184] sm:$0xf]
    %v141 = vld [vmem:[%s0 + $0x188] sm:$0xf]
    %v142 = vld [vmem:[%s0 + $0x18c] sm:$0xf]
    %v143 = vld [vmem:[%s1] sm:$0xf]
    %v144 = vld [vmem:[%s1 + $0x4] sm:$0xf]
    %v145 = vld [vmem:[%s1 + $0x8] sm:$0xf]
    %v146 = vld [vmem:[%s1 + $0xc] sm:$0xf]
    %v147 = vld [vmem:[%s1 + $0x10] sm:$0xf]
    %v148 = vld [vmem:[%s1 + $0x14] sm:$0xf]
    %v149 = vld [vmem:[%s1 + $0x18] sm:$0xf]
    %v150 = vld [vmem:[%s1 + $0x1c] sm:$0xf]
    %v151 = vld [vmem:[%s1 + $0x20] sm:$0xf]
    %v152 = vld [vmem:[%s1 + $0x24] sm:$0x3]
    %v153 = vld [vmem:[%s2] sm:$0x1]
    %v155 = vperm.slane %v153, 0
    %v257 = vunpack.c.l.b16 %v43
    %v258 = vunpack.c.l.b16 %v44
    %v259 = vunpack.c.l.b16 %v45
    %v260 = vunpack.c.l.b16 %v46
    %v261 = vunpack.c.l.b16 %v47
    %v262 = vunpack.c.l.b16 %v48
    %v263 = vunpack.c.l.b16 %v49
    %v264 = vunpack.c.l.b16 %v50
    %v265 = vunpack.c.l.b16 %v51
    %v266 = vunpack.c.l.b16 %v52
    %v267 = vunpack.c.l.b16 %v53
    %v268 = vunpack.c.l.b16 %v54
    %v269 = vunpack.c.l.b16 %v55
    %v270 = vunpack.c.l.b16 %v56
    %v271 = vunpack.c.l.b16 %v57
    %v272 = vunpack.c.l.b16 %v58
    %v273 = vunpack.c.l.b16 %v59
    %v274 = vunpack.c.l.b16 %v60
    %v275 = vunpack.c.l.b16 %v61
    %v276 = vunpack.c.l.b16 %v62
    %v277 = vunpack.c.l.b16 %v63
    %v278 = vunpack.c.l.b16 %v64
    %v279 = vunpack.c.l.b16 %v65
    %v280 = vunpack.c.l.b16 %v66
    %v281 = vunpack.c.l.b16 %v67
    %v282 = vunpack.c.l.b16 %v68
    %v283 = vunpack.c.l.b16 %v69
    %v284 = vunpack.c.l.b16 %v70
    %v285 = vunpack.c.l.b16 %v71
    %v286 = vunpack.c.l.b16 %v72
    %v287 = vunpack.c.l.b16 %v73
    %v288 = vunpack.c.l.b16 %v74
    %v289 = vunpack.c.l.b16 %v75
    %v290 = vunpack.c.l.b16 %v76
    %v291 = vunpack.c.l.b16 %v77
    %v292 = vunpack.c.l.b16 %v78
    %v293 = vunpack.c.l.b16 %v79
    %v294 = vunpack.c.l.b16 %v80
    %v295 = vunpack.c.l.b16 %v81
    %v296 = vunpack.c.l.b16 %v82
    %v297 = vunpack.c.l.b16 %v83
    %v298 = vunpack.c.l.b16 %v84
    %v299 = vunpack.c.l.b16 %v85
    %v300 = vunpack.c.l.b16 %v86
    %v301 = vunpack.c.l.b16 %v87
    %v302 = vunpack.c.l.b16 %v88
    %v303 = vunpack.c.l.b16 %v89
    %v304 = vunpack.c.l.b16 %v90
    %v305 = vunpack.c.l.b16 %v91
    %v306 = vunpack.c.l.b16 %v92
    %v307 = vunpack.c.l.b16 %v93
    %v308 = vunpack.c.l.b16 %v94
    %v309 = vunpack.c.l.b16 %v95
    %v310 = vunpack.c.l.b16 %v96
    %v311 = vunpack.c.l.b16 %v97
    %v312 = vunpack.c.l.b16 %v98
    %v313 = vunpack.c.l.b16 %v99
    %v314 = vunpack.c.l.b16 %v100
    %v315 = vunpack.c.l.b16 %v101
    %v316 = vunpack.c.l.b16 %v102
    %v317 = vunpack.c.l.b16 %v103
    %v318 = vunpack.c.l.b16 %v104
    %v319 = vunpack.c.l.b16 %v105
    %v320 = vunpack.c.l.b16 %v106
    %v321 = vunpack.c.l.b16 %v107
    %v322 = vunpack.c.l.b16 %v108
    %v323 = vunpack.c.l.b16 %v109
    %v324 = vunpack.c.l.b16 %v110
    %v325 = vunpack.c.l.b16 %v111
    %v326 = vunpack.c.l.b16 %v112
    %v327 = vunpack.c.l.b16 %v113
    %v328 = vunpack.c.l.b16 %v114
    %v329 = vunpack.c.l.b16 %v115
    %v330 = vunpack.c.l.b16 %v116
    %v331 = vunpack.c.l.b16 %v117
    %v332 = vunpack.c.l.b16 %v118
    %v333 = vunpack.c.l.b16 %v119
    %v334 = vunpack.c.l.b16 %v120
    %v335 = vunpack.c.l.b16 %v121
    %v336 = vunpack.c.l.b16 %v122
    %v337 = vunpack.c.l.b16 %v123
    %v338 = vunpack.c.l.b16 %v124
    %v339 = vunpack.c.l.b16 %v125
    %v340 = vunpack.c.l.b16 %v126
    %v341 = vunpack.c.l.b16 %v127
    %v342 = vunpack.c.l.b16 %v128
    %v343 = vunpack.c.l.b16 %v129
    %v344 = vunpack.c.l.b16 %v130
    %v345 = vunpack.c.l.b16 %v131
    %v346 = vunpack.c.l.b16 %v132
    %v347 = vunpack.c.l.b16 %v133
    %v348 = vunpack.c.l.b16 %v134
    %v349 = vunpack.c.l.b16 %v135
    %v350 = vunpack.c.l.b16 %v136
    %v351 = vunpack.c.l.b16 %v137
    %v352 = vunpack.c.l.b16 %v138
    %v353 = vunpack.c.l.b16 %v139
    %v354 = vunpack.c.l.b16 %v140
    %v355 = vunpack.c.l.b16 %v141
    %v356 = vunpack.c.l.b16 %v142
    %v357 = vpack.c.b16 %v258, %v257
    %v358 = vpack.c.b16 %v260, %v259
    %v359 = vpack.c.b16 %v262, %v261
    %v360 = vpack.c.b16 %v264, %v263
    %v361 = vpack.c.b16 %v266, %v265
    %v362 = vpack.c.b16 %v268, %v267
    %v363 = vpack.c.b16 %v270, %v269
    %v364 = vpack.c.b16 %v272, %v271
    %v365 = vpack.c.b16 %v274, %v273
    %v366 = vpack.c.b16 %v276, %v275
    %v367 = vpack.c.b16 %v278, %v277
    %v368 = vpack.c.b16 %v280, %v279
    %v369 = vpack.c.b16 %v282, %v281
    %v370 = vpack.c.b16 %v284, %v283
    %v371 = vpack.c.b16 %v286, %v285
    %v372 = vpack.c.b16 %v288, %v287
    %v373 = vpack.c.b16 %v290, %v289
    %v374 = vpack.c.b16 %v292, %v291
    %v375 = vpack.c.b16 %v294, %v293
    %v376 = vpack.c.b16 %v296, %v295
    %v377 = vpack.c.b16 %v298, %v297
    %v378 = vpack.c.b16 %v300, %v299
    %v379 = vpack.c.b16 %v302, %v301
    %v380 = vpack.c.b16 %v304, %v303
    %v381 = vpack.c.b16 %v306, %v305
    %v382 = vpack.c.b16 %v308, %v307
    %v383 = vpack.c.b16 %v310, %v309
    %v384 = vpack.c.b16 %v312, %v311
    %v385 = vpack.c.b16 %v314, %v313
    %v386 = vpack.c.b16 %v316, %v315
    %v387 = vpack.c.b16 %v318, %v317
    %v388 = vpack.c.b16 %v320, %v319
    %v389 = vpack.c.b16 %v322, %v321
    %v390 = vpack.c.b16 %v324, %v323
    %v391 = vpack.c.b16 %v326, %v325
    %v392 = vpack.c.b16 %v328, %v327
    %v393 = vpack.c.b16 %v330, %v329
    %v394 = vpack.c.b16 %v332, %v331
    %v395 = vpack.c.b16 %v334, %v333
    %v396 = vpack.c.b16 %v336, %v335
    %v397 = vpack.c.b16 %v338, %v337
    %v398 = vpack.c.b16 %v340, %v339
    %v399 = vpack.c.b16 %v342, %v341
    %v400 = vpack.c.b16 %v344, %v343
    %v401 = vpack.c.b16 %v346, %v345
    %v402 = vpack.c.b16 %v348, %v347
    %v403 = vpack.c.b16 %v350, %v349
    %v404 = vpack.c.b16 %v352, %v351
    %v405 = vpack.c.b16 %v354, %v353
    %v406 = vpack.c.b16 %v356, %v355
    %v417 = vunpack.c.l.b16 %v143
    %v418 = vunpack.c.l.b16 %v144
    %v419 = vunpack.c.l.b16 %v145
    %v420 = vunpack.c.l.b16 %v146
    %v421 = vunpack.c.l.b16 %v147
    %v422 = vunpack.c.l.b16 %v148
    %v423 = vunpack.c.l.b16 %v149
    %v424 = vunpack.c.l.b16 %v150
    %v425 = vunpack.c.l.b16 %v151
    %v426 = vunpack.c.l.b16 %v152
    %v427 = vpack.c.b16 %v418, %v417
    %v428 = vpack.c.b16 %v420, %v419
    %v429 = vpack.c.b16 %v422, %v421
    %v430 = vpack.c.b16 %v424, %v423
    %v431 = vpack.c.b16 %v426, %v425
    %vm436 = vcmask 613376
    %v438 = vsel %vm436, %v357, 0
    %v441 = vsel %vm436, %v358, 0
    %v444 = vsel %vm436, %v359, 0
    %v447 = vsel %vm436, %v360, 0
    %v450 = vsel %vm436, %v361, 0
    %v453 = vsel %vm436, %v362, 0
    %v456 = vsel %vm436, %v363, 0
    %v459 = vsel %vm436, %v364, 0
    %v462 = vsel %vm436, %v365, 0
    %v465 = vsel %vm436, %v366, 0
    %v468 = vsel %vm436, %v367, 0
    %v471 = vsel %vm436, %v368, 0
    %v474 = vsel %vm436, %v369, 0
    %v477 = vsel %vm436, %v370, 0
    %v480 = vsel %vm436, %v371, 0
    %v483 = vsel %vm436, %v372, 0
    %v486 = vsel %vm436, %v373, 0
    %v489 = vsel %vm436, %v374, 0
    %v492 = vsel %vm436, %v375, 0
    %v495 = vsel %vm436, %v376, 0
    %v498 = vsel %vm436, %v377, 0
    %v501 = vsel %vm436, %v378, 0
    %v504 = vsel %vm436, %v379, 0
    %v507 = vsel %vm436, %v380, 0
    %v510 = vsel %vm436, %v381, 0
    %v513 = vsel %vm436, %v382, 0
    %v516 = vsel %vm436, %v383, 0
    %v519 = vsel %vm436, %v384, 0
    %v522 = vsel %vm436, %v385, 0
    %v525 = vsel %vm436, %v386, 0
    %v528 = vsel %vm436, %v387, 0
    %v531 = vsel %vm436, %v388, 0
    %v534 = vsel %vm436, %v389, 0
    %v537 = vsel %vm436, %v390, 0
    %v540 = vsel %vm436, %v391, 0
    %v543 = vsel %vm436, %v392, 0
    %v546 = vsel %vm436, %v393, 0
    %v549 = vsel %vm436, %v394, 0
    %v552 = vsel %vm436, %v395, 0
    %v555 = vsel %vm436, %v396, 0
    %v558 = vsel %vm436, %v397, 0
    %v561 = vsel %vm436, %v398, 0
    %v564 = vsel %vm436, %v399, 0
    %v567 = vsel %vm436, %v400, 0
    %v570 = vsel %vm436, %v401, 0
    %v573 = vsel %vm436, %v402, 0
    %v576 = vsel %vm436, %v403, 0
    %v579 = vsel %vm436, %v404, 0
    %v582 = vsel %vm436, %v405, 0
    %v585 = vsel %vm436, %v406, 0
    %vm587 = vcmask 1044480
    %vm588 = vcmask 1045504
    %v589 = vsel %vm587, 4294967295, 65535
    %v590 = vsel %vm588, %v589, 0
    %v592 = vand.u32 %v431, %v590
    %594 = vmatpush.bf16.msra.mxu0 0
    %595 = vmatpush.bf16.msra.mxu0 0
    %596 = vmatpush.bf16.msra.mxu0 0
    %597 = vmatpush.bf16.msra.mxu0 %v592
    %598 = vmatpush.bf16.msra.mxu0 %v430
    %599 = vmatpush.bf16.msra.mxu0 %v429
    %600 = vmatpush.bf16.msra.mxu0 %v428
    %601 = vmatpush.bf16.msra.mxu0 %v427
    %602 = vmatmul.bf16.gmra.mxu0 %v438
    %v603 = vpop.f32.mrf.mxu0
    %v604 = vadd.f32 %v155, %v603
    %v605 = vpop.f32.mrf.mxu0
    %v606 = vadd.f32 %v155, %v605
    %607 = vmatmul.bf16.gmra.mxu0 %v441
    %v608 = vpop.f32.mrf.mxu0
    %v609 = vadd.f32 %v155, %v608
    %v610 = vpop.f32.mrf.mxu0
    %v611 = vadd.f32 %v155, %v610
    %612 = vmatmul.bf16.gmra.mxu0 %v444
    %v613 = vpop.f32.mrf.mxu0
    %v614 = vadd.f32 %v155, %v613
    %v615 = vpop.f32.mrf.mxu0
    %v616 = vadd.f32 %v155, %v615
    %617 = vmatmul.bf16.gmra.mxu0 %v447
    %v618 = vpop.f32.mrf.mxu0
    %v619 = vadd.f32 %v155, %v618
    %v620 = vpop.f32.mrf.mxu0
    %v621 = vadd.f32 %v155, %v620
    %622 = vmatmul.bf16.gmra.mxu0 %v450
    %v623 = vpop.f32.mrf.mxu0
    %v624 = vadd.f32 %v155, %v623
    %v625 = vpop.f32.mrf.mxu0
    %v626 = vadd.f32 %v155, %v625
    %627 = vmatmul.bf16.gmra.mxu0 %v453
    %v628 = vpop.f32.mrf.mxu0
    %v629 = vadd.f32 %v155, %v628
    %v630 = vpop.f32.mrf.mxu0
    %v631 = vadd.f32 %v155, %v630
    %632 = vmatmul.bf16.gmra.mxu0 %v456
    %v633 = vpop.f32.mrf.mxu0
    %v634 = vadd.f32 %v155, %v633
    %v635 = vpop.f32.mrf.mxu0
    %v636 = vadd.f32 %v155, %v635
    %637 = vmatmul.bf16.gmra.mxu0 %v459
    %v638 = vpop.f32.mrf.mxu0
    %v639 = vadd.f32 %v155, %v638
    %v640 = vpop.f32.mrf.mxu0
    %v641 = vadd.f32 %v155, %v640
    %642 = vmatmul.bf16.gmra.mxu0 %v462
    %v643 = vpop.f32.mrf.mxu0
    %v644 = vadd.f32 %v155, %v643
    %v645 = vpop.f32.mrf.mxu0
    %v646 = vadd.f32 %v155, %v645
    %647 = vmatmul.bf16.gmra.mxu0 %v465
    %v648 = vpop.f32.mrf.mxu0
    %v649 = vadd.f32 %v155, %v648
    %v650 = vpop.f32.mrf.mxu0
    %v651 = vadd.f32 %v155, %v650
    %652 = vmatmul.bf16.gmra.mxu0 %v468
    %v653 = vpop.f32.mrf.mxu0
    %v654 = vadd.f32 %v155, %v653
    %v655 = vpop.f32.mrf.mxu0
    %v656 = vadd.f32 %v155, %v655
    %657 = vmatmul.bf16.gmra.mxu0 %v471
    %v658 = vpop.f32.mrf.mxu0
    %v659 = vadd.f32 %v155, %v658
    %v660 = vpop.f32.mrf.mxu0
    %v661 = vadd.f32 %v155, %v660
    %662 = vmatmul.bf16.gmra.mxu0 %v474
    %v663 = vpop.f32.mrf.mxu0
    %v664 = vadd.f32 %v155, %v663
    %v665 = vpop.f32.mrf.mxu0
    %v666 = vadd.f32 %v155, %v665
    %667 = vmatmul.bf16.gmra.mxu0 %v477
    %v668 = vpop.f32.mrf.mxu0
    %v669 = vadd.f32 %v155, %v668
    %v670 = vpop.f32.mrf.mxu0
    %v671 = vadd.f32 %v155, %v670
    %672 = vmatmul.bf16.gmra.mxu0 %v480
    %v673 = vpop.f32.mrf.mxu0
    %v674 = vadd.f32 %v155, %v673
    %v675 = vpop.f32.mrf.mxu0
    %v676 = vadd.f32 %v155, %v675
    %677 = vmatmul.bf16.gmra.mxu0 %v483
    %v678 = vpop.f32.mrf.mxu0
    %v679 = vadd.f32 %v155, %v678
    %v680 = vpop.f32.mrf.mxu0
    %v681 = vadd.f32 %v155, %v680
    %682 = vmatmul.bf16.gmra.mxu0 %v486
    %v683 = vpop.f32.mrf.mxu0
    %v684 = vadd.f32 %v155, %v683
    %v685 = vpop.f32.mrf.mxu0
    %v686 = vadd.f32 %v155, %v685
    %687 = vmatmul.bf16.gmra.mxu0 %v489
    %v688 = vpop.f32.mrf.mxu0
    %v689 = vadd.f32 %v155, %v688
    %v690 = vpop.f32.mrf.mxu0
    %v691 = vadd.f32 %v155, %v690
    %692 = vmatmul.bf16.gmra.mxu0 %v492
    %v693 = vpop.f32.mrf.mxu0
    %v694 = vadd.f32 %v155, %v693
    %v695 = vpop.f32.mrf.mxu0
    %v696 = vadd.f32 %v155, %v695
    %697 = vmatmul.bf16.gmra.mxu0 %v495
    %v698 = vpop.f32.mrf.mxu0
    %v699 = vadd.f32 %v155, %v698
    %v700 = vpop.f32.mrf.mxu0
    %v701 = vadd.f32 %v155, %v700
    %702 = vmatmul.bf16.gmra.mxu0 %v498
    %v703 = vpop.f32.mrf.mxu0
    %v704 = vadd.f32 %v155, %v703
    %v705 = vpop.f32.mrf.mxu0
    %v706 = vadd.f32 %v155, %v705
    %707 = vmatmul.bf16.gmra.mxu0 %v501
    %v708 = vpop.f32.mrf.mxu0
    %v709 = vadd.f32 %v155, %v708
    %v710 = vpop.f32.mrf.mxu0
    %v711 = vadd.f32 %v155, %v710
    %712 = vmatmul.bf16.gmra.mxu0 %v504
    %v713 = vpop.f32.mrf.mxu0
    %v714 = vadd.f32 %v155, %v713
    %v715 = vpop.f32.mrf.mxu0
    %v716 = vadd.f32 %v155, %v715
    %717 = vmatmul.bf16.gmra.mxu0 %v507
    %v718 = vpop.f32.mrf.mxu0
    %v719 = vadd.f32 %v155, %v718
    %v720 = vpop.f32.mrf.mxu0
    %v721 = vadd.f32 %v155, %v720
    %722 = vmatmul.bf16.gmra.mxu0 %v510
    %v723 = vpop.f32.mrf.mxu0
    %v724 = vadd.f32 %v155, %v723
    %v725 = vpop.f32.mrf.mxu0
    %v726 = vadd.f32 %v155, %v725
    %727 = vmatmul.bf16.gmra.mxu0 %v513
    %v728 = vpop.f32.mrf.mxu0
    %v729 = vadd.f32 %v155, %v728
    %v730 = vpop.f32.mrf.mxu0
    %v731 = vadd.f32 %v155, %v730
    %732 = vmatmul.bf16.gmra.mxu0 %v516
    %v733 = vpop.f32.mrf.mxu0
    %v734 = vadd.f32 %v155, %v733
    %v735 = vpop.f32.mrf.mxu0
    %v736 = vadd.f32 %v155, %v735
    %737 = vmatmul.bf16.gmra.mxu0 %v519
    %v738 = vpop.f32.mrf.mxu0
    %v739 = vadd.f32 %v155, %v738
    %v740 = vpop.f32.mrf.mxu0
    %v741 = vadd.f32 %v155, %v740
    %742 = vmatmul.bf16.gmra.mxu0 %v522
    %v743 = vpop.f32.mrf.mxu0
    %v744 = vadd.f32 %v155, %v743
    %v745 = vpop.f32.mrf.mxu0
    %v746 = vadd.f32 %v155, %v745
    %747 = vmatmul.bf16.gmra.mxu0 %v525
    %v748 = vpop.f32.mrf.mxu0
    %v749 = vadd.f32 %v155, %v748
    %v750 = vpop.f32.mrf.mxu0
    %v751 = vadd.f32 %v155, %v750
    %752 = vmatmul.bf16.gmra.mxu0 %v528
    %v753 = vpop.f32.mrf.mxu0
    %v754 = vadd.f32 %v155, %v753
    %v755 = vpop.f32.mrf.mxu0
    %v756 = vadd.f32 %v155, %v755
    %757 = vmatmul.bf16.gmra.mxu0 %v531
    %v758 = vpop.f32.mrf.mxu0
    %v759 = vadd.f32 %v155, %v758
    %v760 = vpop.f32.mrf.mxu0
    %v761 = vadd.f32 %v155, %v760
    %762 = vmatmul.bf16.gmra.mxu0 %v534
    %v763 = vpop.f32.mrf.mxu0
    %v764 = vadd.f32 %v155, %v763
    %v765 = vpop.f32.mrf.mxu0
    %v766 = vadd.f32 %v155, %v765
    %767 = vmatmul.bf16.gmra.mxu0 %v537
    %v768 = vpop.f32.mrf.mxu0
    %v769 = vadd.f32 %v155, %v768
    %v770 = vpop.f32.mrf.mxu0
    %v771 = vadd.f32 %v155, %v770
    %772 = vmatmul.bf16.gmra.mxu0 %v540
    %v773 = vpop.f32.mrf.mxu0
    %v774 = vadd.f32 %v155, %v773
    %v775 = vpop.f32.mrf.mxu0
    %v776 = vadd.f32 %v155, %v775
    %777 = vmatmul.bf16.gmra.mxu0 %v543
    %v778 = vpop.f32.mrf.mxu0
    %v779 = vadd.f32 %v155, %v778
    %v780 = vpop.f32.mrf.mxu0
    %v781 = vadd.f32 %v155, %v780
    %782 = vmatmul.bf16.gmra.mxu0 %v546
    %v783 = vpop.f32.mrf.mxu0
    %v784 = vadd.f32 %v155, %v783
    %v785 = vpop.f32.mrf.mxu0
    %v786 = vadd.f32 %v155, %v785
    %787 = vmatmul.bf16.gmra.mxu0 %v549
    %v788 = vpop.f32.mrf.mxu0
    %v789 = vadd.f32 %v155, %v788
    %v790 = vpop.f32.mrf.mxu0
    %v791 = vadd.f32 %v155, %v790
    %792 = vmatmul.bf16.gmra.mxu0 %v552
    %v793 = vpop.f32.mrf.mxu0
    %v794 = vadd.f32 %v155, %v793
    %v795 = vpop.f32.mrf.mxu0
    %v796 = vadd.f32 %v155, %v795
    %797 = vmatmul.bf16.gmra.mxu0 %v555
    %v798 = vpop.f32.mrf.mxu0
    %v799 = vadd.f32 %v155, %v798
    %v800 = vpop.f32.mrf.mxu0
    %v801 = vadd.f32 %v155, %v800
    %802 = vmatmul.bf16.gmra.mxu0 %v558
    %v803 = vpop.f32.mrf.mxu0
    %v804 = vadd.f32 %v155, %v803
    %v805 = vpop.f32.mrf.mxu0
    %v806 = vadd.f32 %v155, %v805
    %807 = vmatmul.bf16.gmra.mxu0 %v561
    %v808 = vpop.f32.mrf.mxu0
    %v809 = vadd.f32 %v155, %v808
    %v810 = vpop.f32.mrf.mxu0
    %v811 = vadd.f32 %v155, %v810
    %812 = vmatmul.bf16.gmra.mxu0 %v564
    %v813 = vpop.f32.mrf.mxu0
    %v814 = vadd.f32 %v155, %v813
    %v815 = vpop.f32.mrf.mxu0
    %v816 = vadd.f32 %v155, %v815
    %817 = vmatmul.bf16.gmra.mxu0 %v567
    %v818 = vpop.f32.mrf.mxu0
    %v819 = vadd.f32 %v155, %v818
    %v820 = vpop.f32.mrf.mxu0
    %v821 = vadd.f32 %v155, %v820
    %822 = vmatmul.bf16.gmra.mxu0 %v570
    %v823 = vpop.f32.mrf.mxu0
    %v824 = vadd.f32 %v155, %v823
    %v825 = vpop.f32.mrf.mxu0
    %v826 = vadd.f32 %v155, %v825
    %827 = vmatmul.bf16.gmra.mxu0 %v573
    %v828 = vpop.f32.mrf.mxu0
    %v829 = vadd.f32 %v155, %v828
    %v830 = vpop.f32.mrf.mxu0
    %v831 = vadd.f32 %v155, %v830
    %832 = vmatmul.bf16.gmra.mxu0 %v576
    %v833 = vpop.f32.mrf.mxu0
    %v834 = vadd.f32 %v155, %v833
    %v835 = vpop.f32.mrf.mxu0
    %v836 = vadd.f32 %v155, %v835
    %837 = vmatmul.bf16.gmra.mxu0 %v579
    %v838 = vpop.f32.mrf.mxu0
    %v839 = vadd.f32 %v155, %v838
    %v840 = vpop.f32.mrf.mxu0
    %v841 = vadd.f32 %v155, %v840
    %842 = vmatmul.bf16.gmra.mxu0 %v582
    %v843 = vpop.f32.mrf.mxu0
    %v844 = vadd.f32 %v155, %v843
    %v845 = vpop.f32.mrf.mxu0
    %v846 = vadd.f32 %v155, %v845
    %847 = vmatmul.bf16.gmra.mxu0 %v585
    %v848 = vpop.f32.mrf.mxu0
    %v849 = vadd.f32 %v155, %v848
    %v850 = vpop.f32.mrf.mxu0
    %v851 = vadd.f32 %v155, %v850
    %852 = vdwg.mxu0
    %v853 = vmax.f32 %v604, 0.0
    %v854 = vmax.f32 %v606, 0.0
    %v855 = vmax.f32 %v609, 0.0
    %v856 = vmax.f32 %v611, 0.0
    %v857 = vmax.f32 %v614, 0.0
    %v858 = vmax.f32 %v616, 0.0
    %v859 = vmax.f32 %v619, 0.0
    %v860 = vmax.f32 %v621, 0.0
    %v861 = vmax.f32 %v624, 0.0
    %v862 = vmax.f32 %v626, 0.0
    %v863 = vmax.f32 %v629, 0.0
    %v864 = vmax.f32 %v631, 0.0
    %v865 = vmax.f32 %v634, 0.0
    %v866 = vmax.f32 %v636, 0.0
    %v867 = vmax.f32 %v639, 0.0
    %v868 = vmax.f32 %v641, 0.0
    %v869 = vmax.f32 %v644, 0.0
    %v870 = vmax.f32 %v646, 0.0
    %v871 = vmax.f32 %v649, 0.0
    %v872 = vmax.f32 %v651, 0.0
    %v873 = vmax.f32 %v654, 0.0
    %v874 = vmax.f32 %v656, 0.0
    %v875 = vmax.f32 %v659, 0.0
    %v876 = vmax.f32 %v661, 0.0
    %v877 = vmax.f32 %v664, 0.0
    %v878 = vmax.f32 %v666, 0.0
    %v879 = vmax.f32 %v669, 0.0
    %v880 = vmax.f32 %v671, 0.0
    %v881 = vmax.f32 %v674, 0.0
    %v882 = vmax.f32 %v676, 0.0
    %v883 = vmax.f32 %v679, 0.0
    %v884 = vmax.f32 %v681, 0.0
    %v885 = vmax.f32 %v684, 0.0
    %v886 = vmax.f32 %v686, 0.0
    %v887 = vmax.f32 %v689, 0.0
    %v888 = vmax.f32 %v691, 0.0
    %v889 = vmax.f32 %v694, 0.0
    %v890 = vmax.f32 %v696, 0.0
    %v891 = vmax.f32 %v699, 0.0
    %v892 = vmax.f32 %v701, 0.0
    %v893 = vmax.f32 %v704, 0.0
    %v894 = vmax.f32 %v706, 0.0
    %v895 = vmax.f32 %v709, 0.0
    %v896 = vmax.f32 %v711, 0.0
    %v897 = vmax.f32 %v714, 0.0
    %v898 = vmax.f32 %v716, 0.0
    %v899 = vmax.f32 %v719, 0.0
    %v900 = vmax.f32 %v721, 0.0
    %v901 = vmax.f32 %v724, 0.0
    %v902 = vmax.f32 %v726, 0.0
    %v903 = vmax.f32 %v729, 0.0
    %v904 = vmax.f32 %v731, 0.0
    %v905 = vmax.f32 %v734, 0.0
    %v906 = vmax.f32 %v736, 0.0
    %v907 = vmax.f32 %v739, 0.0
    %v908 = vmax.f32 %v741, 0.0
    %v909 = vmax.f32 %v744, 0.0
    %v910 = vmax.f32 %v746, 0.0
    %v911 = vmax.f32 %v749, 0.0
    %v912 = vmax.f32 %v751, 0.0
    %v913 = vmax.f32 %v754, 0.0
    %v914 = vmax.f32 %v756, 0.0
    %v915 = vmax.f32 %v759, 0.0
    %v916 = vmax.f32 %v761, 0.0
    %v917 = vmax.f32 %v764, 0.0
    %v918 = vmax.f32 %v766, 0.0
    %v919 = vmax.f32 %v769, 0.0
    %v920 = vmax.f32 %v771, 0.0
    %v921 = vmax.f32 %v774, 0.0
    %v922 = vmax.f32 %v776, 0.0
    %v923 = vmax.f32 %v779, 0.0
    %v924 = vmax.f32 %v781, 0.0
    %v925 = vmax.f32 %v784, 0.0
    %v926 = vmax.f32 %v786, 0.0
    %v927 = vmax.f32 %v789, 0.0
    %v928 = vmax.f32 %v791, 0.0
    %v929 = vmax.f32 %v794, 0.0
    %v930 = vmax.f32 %v796, 0.0
    %v931 = vmax.f32 %v799, 0.0
    %v932 = vmax.f32 %v801, 0.0
    %v933 = vmax.f32 %v804, 0.0
    %v934 = vmax.f32 %v806, 0.0
    %v935 = vmax.f32 %v809, 0.0
    %v936 = vmax.f32 %v811, 0.0
    %v937 = vmax.f32 %v814, 0.0
    %v938 = vmax.f32 %v816, 0.0
    %v939 = vmax.f32 %v819, 0.0
    %v940 = vmax.f32 %v821, 0.0
    %v941 = vmax.f32 %v824, 0.0
    %v942 = vmax.f32 %v826, 0.0
    %v943 = vmax.f32 %v829, 0.0
    %v944 = vmax.f32 %v831, 0.0
    %v945 = vmax.f32 %v834, 0.0
    %v946 = vmax.f32 %v836, 0.0
    %v947 = vmax.f32 %v839, 0.0
    %v948 = vmax.f32 %v841, 0.0
    %v949 = vmax.f32 %v844, 0.0
    %v950 = vmax.f32 %v846, 0.0
    %v951 = vmax.f32 %v849, 0.0
    %v952 = vmax.f32 %v851, 0.0
    %v953 = vmax.f32 %v853, %v878
    %v954 = vmax.f32 %v854, %v879
    %v955 = vmax.f32 %v855, %v880
    %v956 = vmax.f32 %v856, %v881
    %v957 = vmax.f32 %v857, %v882
    %v958 = vmax.f32 %v858, %v883
    %v959 = vmax.f32 %v859, %v884
    %v960 = vmax.f32 %v860, %v885
    %v961 = vmax.f32 %v861, %v886
    %v962 = vmax.f32 %v862, %v887
    %v963 = vmax.f32 %v863, %v888
    %v964 = vmax.f32 %v864, %v889
    %v965 = vmax.f32 %v865, %v890
    %v966 = vmax.f32 %v866, %v891
    %v967 = vmax.f32 %v867, %v892
    %v968 = vmax.f32 %v868, %v893
    %v969 = vmax.f32 %v869, %v894
    %v970 = vmax.f32 %v870, %v895
    %v971 = vmax.f32 %v871, %v896
    %v972 = vmax.f32 %v872, %v897
    %v973 = vmax.f32 %v873, %v898
    %v974 = vmax.f32 %v874, %v899
    %v975 = vmax.f32 %v875, %v900
    %v976 = vmax.f32 %v876, %v901
    %v977 = vmax.f32 %v877, %v902
    %v978 = vmax.f32 %v903, %v928
    %v979 = vmax.f32 %v904, %v929
    %v980 = vmax.f32 %v905, %v930
    %v981 = vmax.f32 %v906, %v931
    %v982 = vmax.f32 %v907, %v932
    %v983 = vmax.f32 %v908, %v933
    %v984 = vmax.f32 %v909, %v934
    %v985 = vmax.f32 %v910, %v935
    %v986 = vmax.f32 %v911, %v936
    %v987 = vmax.f32 %v912, %v937
    %v988 = vmax.f32 %v913, %v938
    %v989 = vmax.f32 %v914, %v939
    %v990 = vmax.f32 %v915, %v940
    %v991 = vmax.f32 %v916, %v941
    %v992 = vmax.f32 %v917, %v942
    %v993 = vmax.f32 %v918, %v943
    %v994 = vmax.f32 %v919, %v944
    %v995 = vmax.f32 %v920, %v945
    %v996 = vmax.f32 %v921, %v946
    %v997 = vmax.f32 %v922, %v947
    %v998 = vmax.f32 %v923, %v948
    %v999 = vmax.f32 %v924, %v949
    %v1000 = vmax.f32 %v925, %v950
    %v1001 = vmax.f32 %v926, %v951
    %v1002 = vmax.f32 %v927, %v952
    %v1003 = vmax.f32 %v953, %v978
    %v1004 = vmax.f32 %v954, %v979
    %v1005 = vmax.f32 %v955, %v980
    %v1006 = vmax.f32 %v956, %v981
    %v1007 = vmax.f32 %v957, %v982
    %v1008 = vmax.f32 %v958, %v983
    %v1009 = vmax.f32 %v959, %v984
    %v1010 = vmax.f32 %v960, %v985
    %v1011 = vmax.f32 %v961, %v986
    %v1012 = vmax.f32 %v962, %v987
    %v1013 = vmax.f32 %v963, %v988
    %v1014 = vmax.f32 %v964, %v989
    %v1015 = vmax.f32 %v965, %v990
    %v1016 = vmax.f32 %v966, %v991
    %v1017 = vmax.f32 %v967, %v992
    %v1018 = vmax.f32 %v968, %v993
    %v1019 = vmax.f32 %v969, %v994
    %v1020 = vmax.f32 %v970, %v995
    %v1021 = vmax.f32 %v971, %v996
    %v1022 = vmax.f32 %v972, %v997
    %v1023 = vmax.f32 %v973, %v998
    %v1024 = vmax.f32 %v974, %v999
    %v1025 = vmax.f32 %v975, %v1000
    %v1026 = vmax.f32 %v976, %v1001
    %v1027 = vmax.f32 %v977, %v1002
    %v1028 = vpack.c.bf16 %v1004, %v1003
    %v1029 = vpack.c.bf16 %v1006, %v1005
    %v1030 = vpack.c.bf16 %v1008, %v1007
    %v1031 = vpack.c.bf16 %v1010, %v1009
    %v1032 = vpack.c.bf16 %v1012, %v1011
    %v1033 = vpack.c.bf16 %v1014, %v1013
    %v1034 = vpack.c.bf16 %v1016, %v1015
    %v1035 = vpack.c.bf16 %v1018, %v1017
    %v1036 = vpack.c.bf16 %v1020, %v1019
    %v1037 = vpack.c.bf16 %v1022, %v1021
    %v1038 = vpack.c.bf16 %v1024, %v1023
    %v1039 = vpack.c.bf16 %v1026, %v1025
    %v1040 = vpack.c.bf16 %v1027, %v1027
    %v1041 = vld [vmem:[%s3] sm:$0xf]
    %v1042 = vld [vmem:[%s3 + $0x4] sm:$0xf]
    %v1043 = vld [vmem:[%s3 + $0x8] sm:$0xf]
    %v1044 = vld [vmem:[%s3 + $0xc] sm:$0xf]
    %v1045 = vld [vmem:[%s3 + $0x10] sm:$0xf]
    %v1046 = vld [vmem:[%s3 + $0x14] sm:$0xf]
    %v1047 = vld [vmem:[%s3 + $0x18] sm:$0xf]
    %v1048 = vld [vmem:[%s3 + $0x1c] sm:$0xf]
    %v1057 = vunpack.c.l.b16 %v1041
    %v1058 = vunpack.c.l.b16 %v1042
    %v1059 = vunpack.c.l.b16 %v1043
    %v1060 = vunpack.c.l.b16 %v1044
    %v1061 = vunpack.c.l.b16 %v1045
    %v1062 = vunpack.c.l.b16 %v1046
    %v1063 = vunpack.c.l.b16 %v1047
    %v1064 = vunpack.c.l.b16 %v1048
    %v1065 = vpack.c.b16 %v1058, %v1057
    %v1066 = vpack.c.b16 %v1060, %v1059
    %v1067 = vpack.c.b16 %v1062, %v1061
    %v1068 = vpack.c.b16 %v1064, %v1063
    %vm1073 = vcmask 523264
    %v1075 = vsel %vm1073, %v1028, 0
    %v1078 = vsel %vm1073, %v1029, 0
    %v1081 = vsel %vm1073, %v1030, 0
    %v1084 = vsel %vm1073, %v1031, 0
    %v1087 = vsel %vm1073, %v1032, 0
    %v1090 = vsel %vm1073, %v1033, 0
    %v1093 = vsel %vm1073, %v1034, 0
    %v1096 = vsel %vm1073, %v1035, 0
    %v1099 = vsel %vm1073, %v1036, 0
    %v1102 = vsel %vm1073, %v1037, 0
    %v1105 = vsel %vm1073, %v1038, 0
    %v1108 = vsel %vm1073, %v1039, 0
    %v1111 = vsel %vm1073, %v1040, 0
    %1113 = vmatpush.bf16.msra.mxu0 0
    %1114 = vmatpush.bf16.msra.mxu0 0
    %1115 = vmatpush.bf16.msra.mxu0 0
    %1116 = vmatpush.bf16.msra.mxu0 0
    %1117 = vmatpush.bf16.msra.mxu0 %v1068
    %1118 = vmatpush.bf16.msra.mxu0 %v1067
    %1119 = vmatpush.bf16.msra.mxu0 %v1066
    %1120 = vmatpush.bf16.msra.mxu0 %v1065
    %1121 = vmatmul.bf16.gmra.mxu0 %v1075
    %v1122 = vpop.f32.mrf.mxu0
    %v1123 = vadd.f32 0.0, %v1122
    %v1124 = vpop.f32.mrf.mxu0
    %v1125 = vadd.f32 0.0, %v1124
    %1126 = vmatmul.bf16.gmra.mxu0 %v1078
    %v1127 = vpop.f32.mrf.mxu0
    %v1128 = vadd.f32 0.0, %v1127
    %v1129 = vpop.f32.mrf.mxu0
    %v1130 = vadd.f32 0.0, %v1129
    %1131 = vmatmul.bf16.gmra.mxu0 %v1081
    %v1132 = vpop.f32.mrf.mxu0
    %v1133 = vadd.f32 0.0, %v1132
    %v1134 = vpop.f32.mrf.mxu0
    %v1135 = vadd.f32 0.0, %v1134
    %1136 = vmatmul.bf16.gmra.mxu0 %v1084
    %v1137 = vpop.f32.mrf.mxu0
    %v1138 = vadd.f32 0.0, %v1137
    %v1139 = vpop.f32.mrf.mxu0
    %v1140 = vadd.f32 0.0, %v1139
    %1141 = vmatmul.bf16.gmra.mxu0 %v1087
    %v1142 = vpop.f32.mrf.mxu0
    %v1143 = vadd.f32 0.0, %v1142
    %v1144 = vpop.f32.mrf.mxu0
    %v1145 = vadd.f32 0.0, %v1144
    %1146 = vmatmul.bf16.gmra.mxu0 %v1090
    %v1147 = vpop.f32.mrf.mxu0
    %v1148 = vadd.f32 0.0, %v1147
    %v1149 = vpop.f32.mrf.mxu0
    %v1150 = vadd.f32 0.0, %v1149
    %1151 = vmatmul.bf16.gmra.mxu0 %v1093
    %v1152 = vpop.f32.mrf.mxu0
    %v1153 = vadd.f32 0.0, %v1152
    %v1154 = vpop.f32.mrf.mxu0
    %v1155 = vadd.f32 0.0, %v1154
    %1156 = vmatmul.bf16.gmra.mxu0 %v1096
    %v1157 = vpop.f32.mrf.mxu0
    %v1158 = vadd.f32 0.0, %v1157
    %v1159 = vpop.f32.mrf.mxu0
    %v1160 = vadd.f32 0.0, %v1159
    %1161 = vmatmul.bf16.gmra.mxu0 %v1099
    %v1162 = vpop.f32.mrf.mxu0
    %v1163 = vadd.f32 0.0, %v1162
    %v1164 = vpop.f32.mrf.mxu0
    %v1165 = vadd.f32 0.0, %v1164
    %1166 = vmatmul.bf16.gmra.mxu0 %v1102
    %v1167 = vpop.f32.mrf.mxu0
    %v1168 = vadd.f32 0.0, %v1167
    %v1169 = vpop.f32.mrf.mxu0
    %v1170 = vadd.f32 0.0, %v1169
    %1171 = vmatmul.bf16.gmra.mxu0 %v1105
    %v1172 = vpop.f32.mrf.mxu0
    %v1173 = vadd.f32 0.0, %v1172
    %v1174 = vpop.f32.mrf.mxu0
    %v1175 = vadd.f32 0.0, %v1174
    %1176 = vmatmul.bf16.gmra.mxu0 %v1108
    %v1177 = vpop.f32.mrf.mxu0
    %v1178 = vadd.f32 0.0, %v1177
    %v1179 = vpop.f32.mrf.mxu0
    %v1180 = vadd.f32 0.0, %v1179
    %1181 = vmatmul.bf16.gmra.mxu0 %v1111
    %v1182 = vpop.f32.mrf.mxu0
    %v1183 = vadd.f32 0.0, %v1182
    %v1184 = vpop.f32.mrf.mxu0
    %1185 = vdwg.mxu0
    %v1186 = vpack.c.bf16 %v1123, %v1123
    %v1187 = vpack.c.bf16 %v1125, %v1125
    %v1188 = vpack.c.bf16 %v1128, %v1128
    %v1189 = vpack.c.bf16 %v1130, %v1130
    %v1190 = vpack.c.bf16 %v1133, %v1133
    %v1191 = vpack.c.bf16 %v1135, %v1135
    %v1192 = vpack.c.bf16 %v1138, %v1138
    %v1193 = vpack.c.bf16 %v1140, %v1140
    %v1194 = vpack.c.bf16 %v1143, %v1143
    %v1195 = vpack.c.bf16 %v1145, %v1145
    %v1196 = vpack.c.bf16 %v1148, %v1148
    %v1197 = vpack.c.bf16 %v1150, %v1150
    %v1198 = vpack.c.bf16 %v1153, %v1153
    %v1199 = vpack.c.bf16 %v1155, %v1155
    %v1200 = vpack.c.bf16 %v1158, %v1158
    %v1201 = vpack.c.bf16 %v1160, %v1160
    %v1202 = vpack.c.bf16 %v1163, %v1163
    %v1203 = vpack.c.bf16 %v1165, %v1165
    %v1204 = vpack.c.bf16 %v1168, %v1168
    %v1205 = vpack.c.bf16 %v1170, %v1170
    %v1206 = vpack.c.bf16 %v1173, %v1173
    %v1207 = vpack.c.bf16 %v1175, %v1175
    %v1208 = vpack.c.bf16 %v1178, %v1178
    %v1209 = vpack.c.bf16 %v1180, %v1180
    %v1210 = vpack.c.bf16 %v1183, %v1183
    %vm1211 = vcmask 519168
    %1212 = vst.msk [vmem:[#allocation2] sm:$0xf] %vm1211, %v1186
    %1213 = vst.msk [vmem:[#allocation2 + $0x4] sm:$0xf] %vm1211, %v1187
    %1214 = vst.msk [vmem:[#allocation2 + $0x8] sm:$0xf] %vm1211, %v1188
    %1215 = vst.msk [vmem:[#allocation2 + $0xc] sm:$0xf] %vm1211, %v1189
    %1216 = vst.msk [vmem:[#allocation2 + $0x10] sm:$0xf] %vm1211, %v1190
    %1217 = vst.msk [vmem:[#allocation2 + $0x14] sm:$0xf] %vm1211, %v1191
    %1218 = vst.msk [vmem:[#allocation2 + $0x18] sm:$0xf] %vm1211, %v1192
    %1219 = vst.msk [vmem:[#allocation2 + $0x1c] sm:$0xf] %vm1211, %v1193
    %1220 = vst.msk [vmem:[#allocation2 + $0x20] sm:$0xf] %vm1211, %v1194
    %1221 = vst.msk [vmem:[#allocation2 + $0x24] sm:$0xf] %vm1211, %v1195
    %1222 = vst.msk [vmem:[#allocation2 + $0x28] sm:$0xf] %vm1211, %v1196
    %1223 = vst.msk [vmem:[#allocation2 + $0x2c] sm:$0xf] %vm1211, %v1197
    %1224 = vst.msk [vmem:[#allocation2 + $0x30] sm:$0xf] %vm1211, %v1198
    %1225 = vst.msk [vmem:[#allocation2 + $0x34] sm:$0xf] %vm1211, %v1199
    %1226 = vst.msk [vmem:[#allocation2 + $0x38] sm:$0xf] %vm1211, %v1200
    %1227 = vst.msk [vmem:[#allocation2 + $0x3c] sm:$0xf] %vm1211, %v1201
    %1228 = vst.msk [vmem:[#allocation2 + $0x40] sm:$0xf] %vm1211, %v1202
    %1229 = vst.msk [vmem:[#allocation2 + $0x44] sm:$0xf] %vm1211, %v1203
    %1230 = vst.msk [vmem:[#allocation2 + $0x48] sm:$0xf] %vm1211, %v1204
    %1231 = vst.msk [vmem:[#allocation2 + $0x4c] sm:$0xf] %vm1211, %v1205
    %1232 = vst.msk [vmem:[#allocation2 + $0x50] sm:$0xf] %vm1211, %v1206
    %1233 = vst.msk [vmem:[#allocation2 + $0x54] sm:$0xf] %vm1211, %v1207
    %1234 = vst.msk [vmem:[#allocation2 + $0x58] sm:$0xf] %vm1211, %v1208
    %1235 = vst.msk [vmem:[#allocation2 + $0x5c] sm:$0xf] %vm1211, %v1209
    %1236 = vst.msk [vmem:[#allocation2 + $0x60] sm:$0xf] %vm1211, %v1210
    %s1237 = scalar_lea.vmem %s3, 32
    %v1238 = vld [vmem:[%s1237] sm:$0xf]
    %v1239 = vld [vmem:[%s1237 + $0x4] sm:$0xf]
    %v1240 = vld [vmem:[%s1237 + $0x8] sm:$0xf]
    %v1241 = vld [vmem:[%s1237 + $0xc] sm:$0xf]
    %v1242 = vld [vmem:[%s1237 + $0x10] sm:$0xf]
    %v1243 = vld [vmem:[%s1237 + $0x14] sm:$0xf]
    %v1244 = vld [vmem:[%s1237 + $0x18] sm:$0xf]
    %v1245 = vld [vmem:[%s1237 + $0x1c] sm:$0xf]
    %v1254 = vunpack.c.l.b16 %v1238
    %v1255 = vunpack.c.l.b16 %v1239
    %v1256 = vunpack.c.l.b16 %v1240
    %v1257 = vunpack.c.l.b16 %v1241
    %v1258 = vunpack.c.l.b16 %v1242
    %v1259 = vunpack.c.l.b16 %v1243
    %v1260 = vunpack.c.l.b16 %v1244
    %v1261 = vunpack.c.l.b16 %v1245
    %v1262 = vpack.c.b16 %v1255, %v1254
    %v1263 = vpack.c.b16 %v1257, %v1256
    %v1264 = vpack.c.b16 %v1259, %v1258
    %v1265 = vpack.c.b16 %v1261, %v1260
    %1270 = vmatpush.bf16.msra.mxu0 0
    %1271 = vmatpush.bf16.msra.mxu0 0
    %1272 = vmatpush.bf16.msra.mxu0 0
    %1273 = vmatpush.bf16.msra.mxu0 0
    %1274 = vmatpush.bf16.msra.mxu0 %v1265
    %1275 = vmatpush.bf16.msra.mxu0 %v1264
    %1276 = vmatpush.bf16.msra.mxu0 %v1263
    %1277 = vmatpush.bf16.msra.mxu0 %v1262
    %1278 = vmatmul.bf16.gmra.mxu0 %v1075
    %v1279 = vpop.f32.mrf.mxu0
    %v1280 = vadd.f32 0.0, %v1279
    %v1281 = vpop.f32.mrf.mxu0
    %v1282 = vadd.f32 0.0, %v1281
    %1283 = vmatmul.bf16.gmra.mxu0 %v1078
    %v1284 = vpop.f32.mrf.mxu0
    %v1285 = vadd.f32 0.0, %v1284
    %v1286 = vpop.f32.mrf.mxu0
    %v1287 = vadd.f32 0.0, %v1286
    %1288 = vmatmul.bf16.gmra.mxu0 %v1081
    %v1289 = vpop.f32.mrf.mxu0
    %v1290 = vadd.f32 0.0, %v1289
    %v1291 = vpop.f32.mrf.mxu0
    %v1292 = vadd.f32 0.0, %v1291
    %1293 = vmatmul.bf16.gmra.mxu0 %v1084
    %v1294 = vpop.f32.mrf.mxu0
    %v1295 = vadd.f32 0.0, %v1294
    %v1296 = vpop.f32.mrf.mxu0
    %v1297 = vadd.f32 0.0, %v1296
    %1298 = vmatmul.bf16.gmra.mxu0 %v1087
    %v1299 = vpop.f32.mrf.mxu0
    %v1300 = vadd.f32 0.0, %v1299
    %v1301 = vpop.f32.mrf.mxu0
    %v1302 = vadd.f32 0.0, %v1301
    %1303 = vmatmul.bf16.gmra.mxu0 %v1090
    %v1304 = vpop.f32.mrf.mxu0
    %v1305 = vadd.f32 0.0, %v1304
    %v1306 = vpop.f32.mrf.mxu0
    %v1307 = vadd.f32 0.0, %v1306
    %1308 = vmatmul.bf16.gmra.mxu0 %v1093
    %v1309 = vpop.f32.mrf.mxu0
    %v1310 = vadd.f32 0.0, %v1309
    %v1311 = vpop.f32.mrf.mxu0
    %v1312 = vadd.f32 0.0, %v1311
    %1313 = vmatmul.bf16.gmra.mxu0 %v1096
    %v1314 = vpop.f32.mrf.mxu0
    %v1315 = vadd.f32 0.0, %v1314
    %v1316 = vpop.f32.mrf.mxu0
    %v1317 = vadd.f32 0.0, %v1316
    %1318 = vmatmul.bf16.gmra.mxu0 %v1099
    %v1319 = vpop.f32.mrf.mxu0
    %v1320 = vadd.f32 0.0, %v1319
    %v1321 = vpop.f32.mrf.mxu0
    %v1322 = vadd.f32 0.0, %v1321
    %1323 = vmatmul.bf16.gmra.mxu0 %v1102
    %v1324 = vpop.f32.mrf.mxu0
    %v1325 = vadd.f32 0.0, %v1324
    %v1326 = vpop.f32.mrf.mxu0
    %v1327 = vadd.f32 0.0, %v1326
    %1328 = vmatmul.bf16.gmra.mxu0 %v1105
    %v1329 = vpop.f32.mrf.mxu0
    %v1330 = vadd.f32 0.0, %v1329
    %v1331 = vpop.f32.mrf.mxu0
    %v1332 = vadd.f32 0.0, %v1331
    %1333 = vmatmul.bf16.gmra.mxu0 %v1108
    %v1334 = vpop.f32.mrf.mxu0
    %v1335 = vadd.f32 0.0, %v1334
    %v1336 = vpop.f32.mrf.mxu0
    %v1337 = vadd.f32 0.0, %v1336
    %1338 = vmatmul.bf16.gmra.mxu0 %v1111
    %v1339 = vpop.f32.mrf.mxu0
    %v1340 = vadd.f32 0.0, %v1339
    %v1341 = vpop.f32.mrf.mxu0
    %1342 = vdwg.mxu0
    %v1343 = vpack.c.bf16 %v1280, %v1280
    %v1344 = vpack.c.bf16 %v1282, %v1282
    %v1345 = vpack.c.bf16 %v1285, %v1285
    %v1346 = vpack.c.bf16 %v1287, %v1287
    %v1347 = vpack.c.bf16 %v1290, %v1290
    %v1348 = vpack.c.bf16 %v1292, %v1292
    %v1349 = vpack.c.bf16 %v1295, %v1295
    %v1350 = vpack.c.bf16 %v1297, %v1297
    %v1351 = vpack.c.bf16 %v1300, %v1300
    %v1352 = vpack.c.bf16 %v1302, %v1302
    %v1353 = vpack.c.bf16 %v1305, %v1305
    %v1354 = vpack.c.bf16 %v1307, %v1307
    %v1355 = vpack.c.bf16 %v1310, %v1310
    %v1356 = vpack.c.bf16 %v1312, %v1312
    %v1357 = vpack.c.bf16 %v1315, %v1315
    %v1358 = vpack.c.bf16 %v1317, %v1317
    %v1359 = vpack.c.bf16 %v1320, %v1320
    %v1360 = vpack.c.bf16 %v1322, %v1322
    %v1361 = vpack.c.bf16 %v1325, %v1325
    %v1362 = vpack.c.bf16 %v1327, %v1327
    %v1363 = vpack.c.bf16 %v1330, %v1330
    %v1364 = vpack.c.bf16 %v1332, %v1332
    %v1365 = vpack.c.bf16 %v1335, %v1335
    %v1366 = vpack.c.bf16 %v1337, %v1337
    %v1367 = vpack.c.bf16 %v1340, %v1340
    %1368 = vst.msk [vmem:[#allocation2 + $0x64] sm:$0xf] %vm1211, %v1343
    %1369 = vst.msk [vmem:[#allocation2 + $0x68] sm:$0xf] %vm1211, %v1344
    %1370 = vst.msk [vmem:[#allocation2 + $0x6c] sm:$0xf] %vm1211, %v1345
    %1371 = vst.msk [vmem:[#allocation2 + $0x70] sm:$0xf] %vm1211, %v1346
    %1372 = vst.msk [vmem:[#allocation2 + $0x74] sm:$0xf] %vm1211, %v1347
    %1373 = vst.msk [vmem:[#allocation2 + $0x78] sm:$0xf] %vm1211, %v1348
    %1374 = vst.msk [vmem:[#allocation2 + $0x7c] sm:$0xf] %vm1211, %v1349
    %1375 = vst.msk [vmem:[#allocation2 + $0x80] sm:$0xf] %vm1211, %v1350
    %1376 = vst.msk [vmem:[#allocation2 + $0x84] sm:$0xf] %vm1211, %v1351
    %1377 = vst.msk [vmem:[#allocation2 + $0x88] sm:$0xf] %vm1211, %v1352
    %1378 = vst.msk [vmem:[#allocation2 + $0x8c] sm:$0xf] %vm1211, %v1353
    %1379 = vst.msk [vmem:[#allocation2 + $0x90] sm:$0xf] %vm1211, %v1354
    %1380 = vst.msk [vmem:[#allocation2 + $0x94] sm:$0xf] %vm1211, %v1355
    %1381 = vst.msk [vmem:[#allocation2 + $0x98] sm:$0xf] %vm1211, %v1356
    %1382 = vst.msk [vmem:[#allocation2 + $0x9c] sm:$0xf] %vm1211, %v1357
    %1383 = vst.msk [vmem:[#allocation2 + $0xa0] sm:$0xf] %vm1211, %v1358
    %1384 = vst.msk [vmem:[#allocation2 + $0xa4] sm:$0xf] %vm1211, %v1359
    %1385 = vst.msk [vmem:[#allocation2 + $0xa8] sm:$0xf] %vm1211, %v1360
    %1386 = vst.msk [vmem:[#allocation2 + $0xac] sm:$0xf] %vm1211, %v1361
    %1387 = vst.msk [vmem:[#allocation2 + $0xb0] sm:$0xf] %vm1211, %v1362
    %1388 = vst.msk [vmem:[#allocation2 + $0xb4] sm:$0xf] %vm1211, %v1363
    %1389 = vst.msk [vmem:[#allocation2 + $0xb8] sm:$0xf] %vm1211, %v1364
    %1390 = vst.msk [vmem:[#allocation2 + $0xbc] sm:$0xf] %vm1211, %v1365
    %1391 = vst.msk [vmem:[#allocation2 + $0xc0] sm:$0xf] %vm1211, %v1366
    %1392 = vst.msk [vmem:[#allocation2 + $0xc4] sm:$0xf] %vm1211, %v1367
    %s1393 = scalar_lea.vmem %s3, 64
    %v1394 = vld [vmem:[%s1393] sm:$0xf]
    %v1395 = vld [vmem:[%s1393 + $0x4] sm:$0xf]
    %v1396 = vld [vmem:[%s1393 + $0x8] sm:$0xf]
    %v1397 = vld [vmem:[%s1393 + $0xc] sm:$0xf]
    %v1398 = vld [vmem:[%s1393 + $0x10] sm:$0xf]
    %v1399 = vld [vmem:[%s1393 + $0x14] sm:$0xf]
    %v1400 = vld [vmem:[%s1393 + $0x18] sm:$0xf]
    %v1401 = vld [vmem:[%s1393 + $0x1c] sm:$0xf]
    %v1410 = vunpack.c.l.b16 %v1394
    %v1411 = vunpack.c.l.b16 %v1395
    %v1412 = vunpack.c.l.b16 %v1396
    %v1413 = vunpack.c.l.b16 %v1397
    %v1414 = vunpack.c.l.b16 %v1398
    %v1415 = vunpack.c.l.b16 %v1399
    %v1416 = vunpack.c.l.b16 %v1400
    %v1417 = vunpack.c.l.b16 %v1401
    %v1418 = vpack.c.b16 %v1411, %v1410
    %v1419 = vpack.c.b16 %v1413, %v1412
    %v1420 = vpack.c.b16 %v1415, %v1414
    %v1421 = vpack.c.b16 %v1417, %v1416
    %1426 = vmatpush.bf16.msra.mxu0 0
    %1427 = vmatpush.bf16.msra.mxu0 0
    %1428 = vmatpush.bf16.msra.mxu0 0
    %1429 = vmatpush.bf16.msra.mxu0 0
    %1430 = vmatpush.bf16.msra.mxu0 %v1421
    %1431 = vmatpush.bf16.msra.mxu0 %v1420
    %1432 = vmatpush.bf16.msra.mxu0 %v1419
    %1433 = vmatpush.bf16.msra.mxu0 %v1418
    %1434 = vmatmul.bf16.gmra.mxu0 %v1075
    %v1435 = vpop.f32.mrf.mxu0
    %v1436 = vadd.f32 0.0, %v1435
    %v1437 = vpop.f32.mrf.mxu0
    %v1438 = vadd.f32 0.0, %v1437
    %1439 = vmatmul.bf16.gmra.mxu0 %v1078
    %v1440 = vpop.f32.mrf.mxu0
    %v1441 = vadd.f32 0.0, %v1440
    %v1442 = vpop.f32.mrf.mxu0
    %v1443 = vadd.f32 0.0, %v1442
    %1444 = vmatmul.bf16.gmra.mxu0 %v1081
    %v1445 = vpop.f32.mrf.mxu0
    %v1446 = vadd.f32 0.0, %v1445
    %v1447 = vpop.f32.mrf.mxu0
    %v1448 = vadd.f32 0.0, %v1447
    %1449 = vmatmul.bf16.gmra.mxu0 %v1084
    %v1450 = vpop.f32.mrf.mxu0
    %v1451 = vadd.f32 0.0, %v1450
    %v1452 = vpop.f32.mrf.mxu0
    %v1453 = vadd.f32 0.0, %v1452
    %1454 = vmatmul.bf16.gmra.mxu0 %v1087
    %v1455 = vpop.f32.mrf.mxu0
    %v1456 = vadd.f32 0.0, %v1455
    %v1457 = vpop.f32.mrf.mxu0
    %v1458 = vadd.f32 0.0, %v1457
    %1459 = vmatmul.bf16.gmra.mxu0 %v1090
    %v1460 = vpop.f32.mrf.mxu0
    %v1461 = vadd.f32 0.0, %v1460
    %v1462 = vpop.f32.mrf.mxu0
    %v1463 = vadd.f32 0.0, %v1462
    %1464 = vmatmul.bf16.gmra.mxu0 %v1093
    %v1465 = vpop.f32.mrf.mxu0
    %v1466 = vadd.f32 0.0, %v1465
    %v1467 = vpop.f32.mrf.mxu0
    %v1468 = vadd.f32 0.0, %v1467
    %1469 = vmatmul.bf16.gmra.mxu0 %v1096
    %v1470 = vpop.f32.mrf.mxu0
    %v1471 = vadd.f32 0.0, %v1470
    %v1472 = vpop.f32.mrf.mxu0
    %v1473 = vadd.f32 0.0, %v1472
    %1474 = vmatmul.bf16.gmra.mxu0 %v1099
    %v1475 = vpop.f32.mrf.mxu0
    %v1476 = vadd.f32 0.0, %v1475
    %v1477 = vpop.f32.mrf.mxu0
    %v1478 = vadd.f32 0.0, %v1477
    %1479 = vmatmul.bf16.gmra.mxu0 %v1102
    %v1480 = vpop.f32.mrf.mxu0
    %v1481 = vadd.f32 0.0, %v1480
    %v1482 = vpop.f32.mrf.mxu0
    %v1483 = vadd.f32 0.0, %v1482
    %1484 = vmatmul.bf16.gmra.mxu0 %v1105
    %v1485 = vpop.f32.mrf.mxu0
    %v1486 = vadd.f32 0.0, %v1485
    %v1487 = vpop.f32.mrf.mxu0
    %v1488 = vadd.f32 0.0, %v1487
    %1489 = vmatmul.bf16.gmra.mxu0 %v1108
    %v1490 = vpop.f32.mrf.mxu0
    %v1491 = vadd.f32 0.0, %v1490
    %v1492 = vpop.f32.mrf.mxu0
    %v1493 = vadd.f32 0.0, %v1492
    %1494 = vmatmul.bf16.gmra.mxu0 %v1111
    %v1495 = vpop.f32.mrf.mxu0
    %v1496 = vadd.f32 0.0, %v1495
    %v1497 = vpop.f32.mrf.mxu0
    %1498 = vdwg.mxu0
    %v1499 = vpack.c.bf16 %v1436, %v1436
    %v1500 = vpack.c.bf16 %v1438, %v1438
    %v1501 = vpack.c.bf16 %v1441, %v1441
    %v1502 = vpack.c.bf16 %v1443, %v1443
    %v1503 = vpack.c.bf16 %v1446, %v1446
    %v1504 = vpack.c.bf16 %v1448, %v1448
    %v1505 = vpack.c.bf16 %v1451, %v1451
    %v1506 = vpack.c.bf16 %v1453, %v1453
    %v1507 = vpack.c.bf16 %v1456, %v1456
    %v1508 = vpack.c.bf16 %v1458, %v1458
    %v1509 = vpack.c.bf16 %v1461, %v1461
    %v1510 = vpack.c.bf16 %v1463, %v1463
    %v1511 = vpack.c.bf16 %v1466, %v1466
    %v1512 = vpack.c.bf16 %v1468, %v1468
    %v1513 = vpack.c.bf16 %v1471, %v1471
    %v1514 = vpack.c.bf16 %v1473, %v1473
    %v1515 = vpack.c.bf16 %v1476, %v1476
    %v1516 = vpack.c.bf16 %v1478, %v1478
    %v1517 = vpack.c.bf16 %v1481, %v1481
    %v1518 = vpack.c.bf16 %v1483, %v1483
    %v1519 = vpack.c.bf16 %v1486, %v1486
    %v1520 = vpack.c.bf16 %v1488, %v1488
    %v1521 = vpack.c.bf16 %v1491, %v1491
    %v1522 = vpack.c.bf16 %v1493, %v1493
    %v1523 = vpack.c.bf16 %v1496, %v1496
    %1524 = vst.msk [vmem:[#allocation2 + $0xc8] sm:$0xf] %vm1211, %v1499
    %1525 = vst.msk [vmem:[#allocation2 + $0xcc] sm:$0xf] %vm1211, %v1500
    %1526 = vst.msk [vmem:[#allocation2 + $0xd0] sm:$0xf] %vm1211, %v1501
    %1527 = vst.msk [vmem:[#allocation2 + $0xd4] sm:$0xf] %vm1211, %v1502
    %1528 = vst.msk [vmem:[#allocation2 + $0xd8] sm:$0xf] %vm1211, %v1503
    %1529 = vst.msk [vmem:[#allocation2 + $0xdc] sm:$0xf] %vm1211, %v1504
    %1530 = vst.msk [vmem:[#allocation2 + $0xe0] sm:$0xf] %vm1211, %v1505
    %1531 = vst.msk [vmem:[#allocation2 + $0xe4] sm:$0xf] %vm1211, %v1506
    %1532 = vst.msk [vmem:[#allocation2 + $0xe8] sm:$0xf] %vm1211, %v1507
    %1533 = vst.msk [vmem:[#allocation2 + $0xec] sm:$0xf] %vm1211, %v1508
    %1534 = vst.msk [vmem:[#allocation2 + $0xf0] sm:$0xf] %vm1211, %v1509
    %1535 = vst.msk [vmem:[#allocation2 + $0xf4] sm:$0xf] %vm1211, %v1510
    %1536 = vst.msk [vmem:[#allocation2 + $0xf8] sm:$0xf] %vm1211, %v1511
    %1537 = vst.msk [vmem:[#allocation2 + $0xfc] sm:$0xf] %vm1211, %v1512
    %1538 = vst.msk [vmem:[#allocation2 + $0x100] sm:$0xf] %vm1211, %v1513
    %1539 = vst.msk [vmem:[#allocation2 + $0x104] sm:$0xf] %vm1211, %v1514
    %1540 = vst.msk [vmem:[#allocation2 + $0x108] sm:$0xf] %vm1211, %v1515
    %1541 = vst.msk [vmem:[#allocation2 + $0x10c] sm:$0xf] %vm1211, %v1516
    %1542 = vst.msk [vmem:[#allocation2 + $0x110] sm:$0xf] %vm1211, %v1517
    %1543 = vst.msk [vmem:[#allocation2 + $0x114] sm:$0xf] %vm1211, %v1518
    %1544 = vst.msk [vmem:[#allocation2 + $0x118] sm:$0xf] %vm1211, %v1519
    %1545 = vst.msk [vmem:[#allocation2 + $0x11c] sm:$0xf] %vm1211, %v1520
    %1546 = vst.msk [vmem:[#allocation2 + $0x120] sm:$0xf] %vm1211, %v1521
    %1547 = vst.msk [vmem:[#allocation2 + $0x124] sm:$0xf] %vm1211, %v1522
    %1548 = vst.msk [vmem:[#allocation2 + $0x128] sm:$0xf] %vm1211, %v1523
    %s1549 = scalar_lea.vmem %s3, 96
    %v1550 = vld [vmem:[%s1549] sm:$0xf]
    %v1551 = vld [vmem:[%s1549 + $0x4] sm:$0xf]
    %v1552 = vld [vmem:[%s1549 + $0x8] sm:$0xf]
    %v1553 = vld [vmem:[%s1549 + $0xc] sm:$0xf]
    %v1554 = vld [vmem:[%s1549 + $0x10] sm:$0xf]
    %v1555 = vld [vmem:[%s1549 + $0x14] sm:$0xf]
    %v1556 = vld [vmem:[%s1549 + $0x18] sm:$0xf]
    %v1557 = vld [vmem:[%s1549 + $0x1c] sm:$0xf]
    %v1566 = vunpack.c.l.b16 %v1550
    %v1567 = vunpack.c.l.b16 %v1551
    %v1568 = vunpack.c.l.b16 %v1552
    %v1569 = vunpack.c.l.b16 %v1553
    %v1570 = vunpack.c.l.b16 %v1554
    %v1571 = vunpack.c.l.b16 %v1555
    %v1572 = vunpack.c.l.b16 %v1556
    %v1573 = vunpack.c.l.b16 %v1557
    %v1574 = vpack.c.b16 %v1567, %v1566
    %v1575 = vpack.c.b16 %v1569, %v1568
    %v1576 = vpack.c.b16 %v1571, %v1570
    %v1577 = vpack.c.b16 %v1573, %v1572
    %1582 = vmatpush.bf16.msra.mxu0 0
    %1583 = vmatpush.bf16.msra.mxu0 0
    %1584 = vmatpush.bf16.msra.mxu0 0
    %1585 = vmatpush.bf16.msra.mxu0 0
    %1586 = vmatpush.bf16.msra.mxu0 %v1577
    %1587 = vmatpush.bf16.msra.mxu0 %v1576
    %1588 = vmatpush.bf16.msra.mxu0 %v1575
    %1589 = vmatpush.bf16.msra.mxu0 %v1574
    %1590 = vmatmul.bf16.gmra.mxu0 %v1075
    %v1591 = vpop.f32.mrf.mxu0
    %v1592 = vadd.f32 0.0, %v1591
    %v1593 = vpop.f32.mrf.mxu0
    %v1594 = vadd.f32 0.0, %v1593
    %1595 = vmatmul.bf16.gmra.mxu0 %v1078
    %v1596 = vpop.f32.mrf.mxu0
    %v1597 = vadd.f32 0.0, %v1596
    %v1598 = vpop.f32.mrf.mxu0
    %v1599 = vadd.f32 0.0, %v1598
    %1600 = vmatmul.bf16.gmra.mxu0 %v1081
    %v1601 = vpop.f32.mrf.mxu0
    %v1602 = vadd.f32 0.0, %v1601
    %v1603 = vpop.f32.mrf.mxu0
    %v1604 = vadd.f32 0.0, %v1603
    %1605 = vmatmul.bf16.gmra.mxu0 %v1084
    %v1606 = vpop.f32.mrf.mxu0
    %v1607 = vadd.f32 0.0, %v1606
    %v1608 = vpop.f32.mrf.mxu0
    %v1609 = vadd.f32 0.0, %v1608
    %1610 = vmatmul.bf16.gmra.mxu0 %v1087
    %v1611 = vpop.f32.mrf.mxu0
    %v1612 = vadd.f32 0.0, %v1611
    %v1613 = vpop.f32.mrf.mxu0
    %v1614 = vadd.f32 0.0, %v1613
    %1615 = vmatmul.bf16.gmra.mxu0 %v1090
    %v1616 = vpop.f32.mrf.mxu0
    %v1617 = vadd.f32 0.0, %v1616
    %v1618 = vpop.f32.mrf.mxu0
    %v1619 = vadd.f32 0.0, %v1618
    %1620 = vmatmul.bf16.gmra.mxu0 %v1093
    %v1621 = vpop.f32.mrf.mxu0
    %v1622 = vadd.f32 0.0, %v1621
    %v1623 = vpop.f32.mrf.mxu0
    %v1624 = vadd.f32 0.0, %v1623
    %1625 = vmatmul.bf16.gmra.mxu0 %v1096
    %v1626 = vpop.f32.mrf.mxu0
    %v1627 = vadd.f32 0.0, %v1626
    %v1628 = vpop.f32.mrf.mxu0
    %v1629 = vadd.f32 0.0, %v1628
    %1630 = vmatmul.bf16.gmra.mxu0 %v1099
    %v1631 = vpop.f32.mrf.mxu0
    %v1632 = vadd.f32 0.0, %v1631
    %v1633 = vpop.f32.mrf.mxu0
    %v1634 = vadd.f32 0.0, %v1633
    %1635 = vmatmul.bf16.gmra.mxu0 %v1102
    %v1636 = vpop.f32.mrf.mxu0
    %v1637 = vadd.f32 0.0, %v1636
    %v1638 = vpop.f32.mrf.mxu0
    %v1639 = vadd.f32 0.0, %v1638
    %1640 = vmatmul.bf16.gmra.mxu0 %v1105
    %v1641 = vpop.f32.mrf.mxu0
    %v1642 = vadd.f32 0.0, %v1641
    %v1643 = vpop.f32.mrf.mxu0
    %v1644 = vadd.f32 0.0, %v1643
    %1645 = vmatmul.bf16.gmra.mxu0 %v1108
    %v1646 = vpop.f32.mrf.mxu0
    %v1647 = vadd.f32 0.0, %v1646
    %v1648 = vpop.f32.mrf.mxu0
    %v1649 = vadd.f32 0.0, %v1648
    %1650 = vmatmul.bf16.gmra.mxu0 %v1111
    %v1651 = vpop.f32.mrf.mxu0
    %v1652 = vadd.f32 0.0, %v1651
    %v1653 = vpop.f32.mrf.mxu0
    %1654 = vdwg.mxu0
    %v1655 = vpack.c.bf16 %v1592, %v1592
    %v1656 = vpack.c.bf16 %v1594, %v1594
    %v1657 = vpack.c.bf16 %v1597, %v1597
    %v1658 = vpack.c.bf16 %v1599, %v1599
    %v1659 = vpack.c.bf16 %v1602, %v1602
    %v1660 = vpack.c.bf16 %v1604, %v1604
    %v1661 = vpack.c.bf16 %v1607, %v1607
    %v1662 = vpack.c.bf16 %v1609, %v1609
    %v1663 = vpack.c.bf16 %v1612, %v1612
    %v1664 = vpack.c.bf16 %v1614, %v1614
    %v1665 = vpack.c.bf16 %v1617, %v1617
    %v1666 = vpack.c.bf16 %v1619, %v1619
    %v1667 = vpack.c.bf16 %v1622, %v1622
    %v1668 = vpack.c.bf16 %v1624, %v1624
    %v1669 = vpack.c.bf16 %v1627, %v1627
    %v1670 = vpack.c.bf16 %v1629, %v1629
    %v1671 = vpack.c.bf16 %v1632, %v1632
    %v1672 = vpack.c.bf16 %v1634, %v1634
    %v1673 = vpack.c.bf16 %v1637, %v1637
    %v1674 = vpack.c.bf16 %v1639, %v1639
    %v1675 = vpack.c.bf16 %v1642, %v1642
    %v1676 = vpack.c.bf16 %v1644, %v1644
    %v1677 = vpack.c.bf16 %v1647, %v1647
    %v1678 = vpack.c.bf16 %v1649, %v1649
    %v1679 = vpack.c.bf16 %v1652, %v1652
    %1680 = vst.msk [vmem:[#allocation2 + $0x12c] sm:$0xf] %vm1211, %v1655
    %1681 = vst.msk [vmem:[#allocation2 + $0x130] sm:$0xf] %vm1211, %v1656
    %1682 = vst.msk [vmem:[#allocation2 + $0x134] sm:$0xf] %vm1211, %v1657
    %1683 = vst.msk [vmem:[#allocation2 + $0x138] sm:$0xf] %vm1211, %v1658
    %1684 = vst.msk [vmem:[#allocation2 + $0x13c] sm:$0xf] %vm1211, %v1659
    %1685 = vst.msk [vmem:[#allocation2 + $0x140] sm:$0xf] %vm1211, %v1660
    %1686 = vst.msk [vmem:[#allocation2 + $0x144] sm:$0xf] %vm1211, %v1661
    %1687 = vst.msk [vmem:[#allocation2 + $0x148] sm:$0xf] %vm1211, %v1662
    %1688 = vst.msk [vmem:[#allocation2 + $0x14c] sm:$0xf] %vm1211, %v1663
    %1689 = vst.msk [vmem:[#allocation2 + $0x150] sm:$0xf] %vm1211, %v1664
    %1690 = vst.msk [vmem:[#allocation2 + $0x154] sm:$0xf] %vm1211, %v1665
    %1691 = vst.msk [vmem:[#allocation2 + $0x158] sm:$0xf] %vm1211, %v1666
    %1692 = vst.msk [vmem:[#allocation2 + $0x15c] sm:$0xf] %vm1211, %v1667
    %1693 = vst.msk [vmem:[#allocation2 + $0x160] sm:$0xf] %vm1211, %v1668
    %1694 = vst.msk [vmem:[#allocation2 + $0x164] sm:$0xf] %vm1211, %v1669
    %1695 = vst.msk [vmem:[#allocation2 + $0x168] sm:$0xf] %vm1211, %v1670
    %1696 = vst.msk [vmem:[#allocation2 + $0x16c] sm:$0xf] %vm1211, %v1671
    %1697 = vst.msk [vmem:[#allocation2 + $0x170] sm:$0xf] %vm1211, %v1672
    %1698 = vst.msk [vmem:[#allocation2 + $0x174] sm:$0xf] %vm1211, %v1673
    %1699 = vst.msk [vmem:[#allocation2 + $0x178] sm:$0xf] %vm1211, %v1674
    %1700 = vst.msk [vmem:[#allocation2 + $0x17c] sm:$0xf] %vm1211, %v1675
    %1701 = vst.msk [vmem:[#allocation2 + $0x180] sm:$0xf] %vm1211, %v1676
    %1702 = vst.msk [vmem:[#allocation2 + $0x184] sm:$0xf] %vm1211, %v1677
    %1703 = vst.msk [vmem:[#allocation2 + $0x188] sm:$0xf] %vm1211, %v1678
    %1704 = vst.msk [vmem:[#allocation2 + $0x18c] sm:$0xf] %vm1211, %v1679
    %s1705 = scalar_lea.vmem %s3, 128
    %v1706 = vld [vmem:[%s1705] sm:$0xf]
    %v1707 = vld [vmem:[%s1705 + $0x4] sm:$0xf]
    %v1708 = vld [vmem:[%s1705 + $0x8] sm:$0xf]
    %v1709 = vld [vmem:[%s1705 + $0xc] sm:$0xf]
    %v1710 = vld [vmem:[%s1705 + $0x10] sm:$0xf]
    %v1711 = vld [vmem:[%s1705 + $0x14] sm:$0xf]
    %v1712 = vld [vmem:[%s1705 + $0x18] sm:$0xf]
    %v1713 = vld [vmem:[%s1705 + $0x1c] sm:$0xf]
    %v1722 = vunpack.c.l.b16 %v1706
    %v1723 = vunpack.c.l.b16 %v1707
    %v1724 = vunpack.c.l.b16 %v1708
    %v1725 = vunpack.c.l.b16 %v1709
    %v1726 = vunpack.c.l.b16 %v1710
    %v1727 = vunpack.c.l.b16 %v1711
    %v1728 = vunpack.c.l.b16 %v1712
    %v1729 = vunpack.c.l.b16 %v1713
    %v1730 = vpack.c.b16 %v1723, %v1722
    %v1731 = vpack.c.b16 %v1725, %v1724
    %v1732 = vpack.c.b16 %v1727, %v1726
    %v1733 = vpack.c.b16 %v1729, %v1728
    %1738 = vmatpush.bf16.msra.mxu0 0
    %1739 = vmatpush.bf16.msra.mxu0 0
    %1740 = vmatpush.bf16.msra.mxu0 0
    %1741 = vmatpush.bf16.msra.mxu0 0
    %1742 = vmatpush.bf16.msra.mxu0 %v1733
    %1743 = vmatpush.bf16.msra.mxu0 %v1732
    %1744 = vmatpush.bf16.msra.mxu0 %v1731
    %1745 = vmatpush.bf16.msra.mxu0 %v1730
    %1746 = vmatmul.bf16.gmra.mxu0 %v1075
    %v1747 = vpop.f32.mrf.mxu0
    %v1748 = vadd.f32 0.0, %v1747
    %v1749 = vpop.f32.mrf.mxu0
    %v1750 = vadd.f32 0.0, %v1749
    %1751 = vmatmul.bf16.gmra.mxu0 %v1078
    %v1752 = vpop.f32.mrf.mxu0
    %v1753 = vadd.f32 0.0, %v1752
    %v1754 = vpop.f32.mrf.mxu0
    %v1755 = vadd.f32 0.0, %v1754
    %1756 = vmatmul.bf16.gmra.mxu0 %v1081
    %v1757 = vpop.f32.mrf.mxu0
    %v1758 = vadd.f32 0.0, %v1757
    %v1759 = vpop.f32.mrf.mxu0
    %v1760 = vadd.f32 0.0, %v1759
    %1761 = vmatmul.bf16.gmra.mxu0 %v1084
    %v1762 = vpop.f32.mrf.mxu0
    %v1763 = vadd.f32 0.0, %v1762
    %v1764 = vpop.f32.mrf.mxu0
    %v1765 = vadd.f32 0.0, %v1764
    %1766 = vmatmul.bf16.gmra.mxu0 %v1087
    %v1767 = vpop.f32.mrf.mxu0
    %v1768 = vadd.f32 0.0, %v1767
    %v1769 = vpop.f32.mrf.mxu0
    %v1770 = vadd.f32 0.0, %v1769
    %1771 = vmatmul.bf16.gmra.mxu0 %v1090
    %v1772 = vpop.f32.mrf.mxu0
    %v1773 = vadd.f32 0.0, %v1772
    %v1774 = vpop.f32.mrf.mxu0
    %v1775 = vadd.f32 0.0, %v1774
    %1776 = vmatmul.bf16.gmra.mxu0 %v1093
    %v1777 = vpop.f32.mrf.mxu0
    %v1778 = vadd.f32 0.0, %v1777
    %v1779 = vpop.f32.mrf.mxu0
    %v1780 = vadd.f32 0.0, %v1779
    %1781 = vmatmul.bf16.gmra.mxu0 %v1096
    %v1782 = vpop.f32.mrf.mxu0
    %v1783 = vadd.f32 0.0, %v1782
    %v1784 = vpop.f32.mrf.mxu0
    %v1785 = vadd.f32 0.0, %v1784
    %1786 = vmatmul.bf16.gmra.mxu0 %v1099
    %v1787 = vpop.f32.mrf.mxu0
    %v1788 = vadd.f32 0.0, %v1787
    %v1789 = vpop.f32.mrf.mxu0
    %v1790 = vadd.f32 0.0, %v1789
    %1791 = vmatmul.bf16.gmra.mxu0 %v1102
    %v1792 = vpop.f32.mrf.mxu0
    %v1793 = vadd.f32 0.0, %v1792
    %v1794 = vpop.f32.mrf.mxu0
    %v1795 = vadd.f32 0.0, %v1794
    %1796 = vmatmul.bf16.gmra.mxu0 %v1105
    %v1797 = vpop.f32.mrf.mxu0
    %v1798 = vadd.f32 0.0, %v1797
    %v1799 = vpop.f32.mrf.mxu0
    %v1800 = vadd.f32 0.0, %v1799
    %1801 = vmatmul.bf16.gmra.mxu0 %v1108
    %v1802 = vpop.f32.mrf.mxu0
    %v1803 = vadd.f32 0.0, %v1802
    %v1804 = vpop.f32.mrf.mxu0
    %v1805 = vadd.f32 0.0, %v1804
    %1806 = vmatmul.bf16.gmra.mxu0 %v1111
    %v1807 = vpop.f32.mrf.mxu0
    %v1808 = vadd.f32 0.0, %v1807
    %v1809 = vpop.f32.mrf.mxu0
    %1810 = vdwg.mxu0
    %v1811 = vpack.c.bf16 %v1748, %v1748
    %v1812 = vpack.c.bf16 %v1750, %v1750
    %v1813 = vpack.c.bf16 %v1753, %v1753
    %v1814 = vpack.c.bf16 %v1755, %v1755
    %v1815 = vpack.c.bf16 %v1758, %v1758
    %v1816 = vpack.c.bf16 %v1760, %v1760
    %v1817 = vpack.c.bf16 %v1763, %v1763
    %v1818 = vpack.c.bf16 %v1765, %v1765
    %v1819 = vpack.c.bf16 %v1768, %v1768
    %v1820 = vpack.c.bf16 %v1770, %v1770
    %v1821 = vpack.c.bf16 %v1773, %v1773
    %v1822 = vpack.c.bf16 %v1775, %v1775
    %v1823 = vpack.c.bf16 %v1778, %v1778
    %v1824 = vpack.c.bf16 %v1780, %v1780
    %v1825 = vpack.c.bf16 %v1783, %v1783
    %v1826 = vpack.c.bf16 %v1785, %v1785
    %v1827 = vpack.c.bf16 %v1788, %v1788
    %v1828 = vpack.c.bf16 %v1790, %v1790
    %v1829 = vpack.c.bf16 %v1793, %v1793
    %v1830 = vpack.c.bf16 %v1795, %v1795
    %v1831 = vpack.c.bf16 %v1798, %v1798
    %v1832 = vpack.c.bf16 %v1800, %v1800
    %v1833 = vpack.c.bf16 %v1803, %v1803
    %v1834 = vpack.c.bf16 %v1805, %v1805
    %v1835 = vpack.c.bf16 %v1808, %v1808
    %1836 = vst.msk [vmem:[#allocation2 + $0x190] sm:$0xf] %vm1211, %v1811
    %1837 = vst.msk [vmem:[#allocation2 + $0x194] sm:$0xf] %vm1211, %v1812
    %1838 = vst.msk [vmem:[#allocation2 + $0x198] sm:$0xf] %vm1211, %v1813
    %1839 = vst.msk [vmem:[#allocation2 + $0x19c] sm:$0xf] %vm1211, %v1814
    %1840 = vst.msk [vmem:[#allocation2 + $0x1a0] sm:$0xf] %vm1211, %v1815
    %1841 = vst.msk [vmem:[#allocation2 + $0x1a4] sm:$0xf] %vm1211, %v1816
    %1842 = vst.msk [vmem:[#allocation2 + $0x1a8] sm:$0xf] %vm1211, %v1817
    %1843 = vst.msk [vmem:[#allocation2 + $0x1ac] sm:$0xf] %vm1211, %v1818
    %1844 = vst.msk [vmem:[#allocation2 + $0x1b0] sm:$0xf] %vm1211, %v1819
    %1845 = vst.msk [vmem:[#allocation2 + $0x1b4] sm:$0xf] %vm1211, %v1820
    %1846 = vst.msk [vmem:[#allocation2 + $0x1b8] sm:$0xf] %vm1211, %v1821
    %1847 = vst.msk [vmem:[#allocation2 + $0x1bc] sm:$0xf] %vm1211, %v1822
    %1848 = vst.msk [vmem:[#allocation2 + $0x1c0] sm:$0xf] %vm1211, %v1823
    %1849 = vst.msk [vmem:[#allocation2 + $0x1c4] sm:$0xf] %vm1211, %v1824
    %1850 = vst.msk [vmem:[#allocation2 + $0x1c8] sm:$0xf] %vm1211, %v1825
    %1851 = vst.msk [vmem:[#allocation2 + $0x1cc] sm:$0xf] %vm1211, %v1826
    %1852 = vst.msk [vmem:[#allocation2 + $0x1d0] sm:$0xf] %vm1211, %v1827
    %1853 = vst.msk [vmem:[#allocation2 + $0x1d4] sm:$0xf] %vm1211, %v1828
    %1854 = vst.msk [vmem:[#allocation2 + $0x1d8] sm:$0xf] %vm1211, %v1829
    %1855 = vst.msk [vmem:[#allocation2 + $0x1dc] sm:$0xf] %vm1211, %v1830
    %1856 = vst.msk [vmem:[#allocation2 + $0x1e0] sm:$0xf] %vm1211, %v1831
    %1857 = vst.msk [vmem:[#allocation2 + $0x1e4] sm:$0xf] %vm1211, %v1832
    %1858 = vst.msk [vmem:[#allocation2 + $0x1e8] sm:$0xf] %vm1211, %v1833
    %1859 = vst.msk [vmem:[#allocation2 + $0x1ec] sm:$0xf] %vm1211, %v1834
    %1860 = vst.msk [vmem:[#allocation2 + $0x1f0] sm:$0xf] %vm1211, %v1835
    %s1861 = scalar_lea.vmem %s3, 160
    %v1862 = vld [vmem:[%s1861] sm:$0xf]
    %v1863 = vld [vmem:[%s1861 + $0x4] sm:$0xf]
    %v1864 = vld [vmem:[%s1861 + $0x8] sm:$0xf]
    %v1865 = vld [vmem:[%s1861 + $0xc] sm:$0xf]
    %v1866 = vld [vmem:[%s1861 + $0x10] sm:$0xf]
    %v1867 = vld [vmem:[%s1861 + $0x14] sm:$0xf]
    %v1868 = vld [vmem:[%s1861 + $0x18] sm:$0xf]
    %v1869 = vld [vmem:[%s1861 + $0x1c] sm:$0xf]
    %v1878 = vunpack.c.l.b16 %v1862
    %v1879 = vunpack.c.l.b16 %v1863
    %v1880 = vunpack.c.l.b16 %v1864
    %v1881 = vunpack.c.l.b16 %v1865
    %v1882 = vunpack.c.l.b16 %v1866
    %v1883 = vunpack.c.l.b16 %v1867
    %v1884 = vunpack.c.l.b16 %v1868
    %v1885 = vunpack.c.l.b16 %v1869
    %v1886 = vpack.c.b16 %v1879, %v1878
    %v1887 = vpack.c.b16 %v1881, %v1880
    %v1888 = vpack.c.b16 %v1883, %v1882
    %v1889 = vpack.c.b16 %v1885, %v1884
    %1894 = vmatpush.bf16.msra.mxu0 0
    %1895 = vmatpush.bf16.msra.mxu0 0
    %1896 = vmatpush.bf16.msra.mxu0 0
    %1897 = vmatpush.bf16.msra.mxu0 0
    %1898 = vmatpush.bf16.msra.mxu0 %v1889
    %1899 = vmatpush.bf16.msra.mxu0 %v1888
    %1900 = vmatpush.bf16.msra.mxu0 %v1887
    %1901 = vmatpush.bf16.msra.mxu0 %v1886
    %1902 = vmatmul.bf16.gmra.mxu0 %v1075
    %v1903 = vpop.f32.mrf.mxu0
    %v1904 = vadd.f32 0.0, %v1903
    %v1905 = vpop.f32.mrf.mxu0
    %v1906 = vadd.f32 0.0, %v1905
    %1907 = vmatmul.bf16.gmra.mxu0 %v1078
    %v1908 = vpop.f32.mrf.mxu0
    %v1909 = vadd.f32 0.0, %v1908
    %v1910 = vpop.f32.mrf.mxu0
    %v1911 = vadd.f32 0.0, %v1910
    %1912 = vmatmul.bf16.gmra.mxu0 %v1081
    %v1913 = vpop.f32.mrf.mxu0
    %v1914 = vadd.f32 0.0, %v1913
    %v1915 = vpop.f32.mrf.mxu0
    %v1916 = vadd.f32 0.0, %v1915
    %1917 = vmatmul.bf16.gmra.mxu0 %v1084
    %v1918 = vpop.f32.mrf.mxu0
    %v1919 = vadd.f32 0.0, %v1918
    %v1920 = vpop.f32.mrf.mxu0
    %v1921 = vadd.f32 0.0, %v1920
    %1922 = vmatmul.bf16.gmra.mxu0 %v1087
    %v1923 = vpop.f32.mrf.mxu0
    %v1924 = vadd.f32 0.0, %v1923
    %v1925 = vpop.f32.mrf.mxu0
    %v1926 = vadd.f32 0.0, %v1925
    %1927 = vmatmul.bf16.gmra.mxu0 %v1090
    %v1928 = vpop.f32.mrf.mxu0
    %v1929 = vadd.f32 0.0, %v1928
    %v1930 = vpop.f32.mrf.mxu0
    %v1931 = vadd.f32 0.0, %v1930
    %1932 = vmatmul.bf16.gmra.mxu0 %v1093
    %v1933 = vpop.f32.mrf.mxu0
    %v1934 = vadd.f32 0.0, %v1933
    %v1935 = vpop.f32.mrf.mxu0
    %v1936 = vadd.f32 0.0, %v1935
    %1937 = vmatmul.bf16.gmra.mxu0 %v1096
    %v1938 = vpop.f32.mrf.mxu0
    %v1939 = vadd.f32 0.0, %v1938
    %v1940 = vpop.f32.mrf.mxu0
    %v1941 = vadd.f32 0.0, %v1940
    %1942 = vmatmul.bf16.gmra.mxu0 %v1099
    %v1943 = vpop.f32.mrf.mxu0
    %v1944 = vadd.f32 0.0, %v1943
    %v1945 = vpop.f32.mrf.mxu0
    %v1946 = vadd.f32 0.0, %v1945
    %1947 = vmatmul.bf16.gmra.mxu0 %v1102
    %v1948 = vpop.f32.mrf.mxu0
    %v1949 = vadd.f32 0.0, %v1948
    %v1950 = vpop.f32.mrf.mxu0
    %v1951 = vadd.f32 0.0, %v1950
    %1952 = vmatmul.bf16.gmra.mxu0 %v1105
    %v1953 = vpop.f32.mrf.mxu0
    %v1954 = vadd.f32 0.0, %v1953
    %v1955 = vpop.f32.mrf.mxu0
    %v1956 = vadd.f32 0.0, %v1955
    %1957 = vmatmul.bf16.gmra.mxu0 %v1108
    %v1958 = vpop.f32.mrf.mxu0
    %v1959 = vadd.f32 0.0, %v1958
    %v1960 = vpop.f32.mrf.mxu0
    %v1961 = vadd.f32 0.0, %v1960
    %1962 = vmatmul.bf16.gmra.mxu0 %v1111
    %v1963 = vpop.f32.mrf.mxu0
    %v1964 = vadd.f32 0.0, %v1963
    %v1965 = vpop.f32.mrf.mxu0
    %1966 = vdwg.mxu0
    %v1967 = vpack.c.bf16 %v1904, %v1904
    %v1968 = vpack.c.bf16 %v1906, %v1906
    %v1969 = vpack.c.bf16 %v1909, %v1909
    %v1970 = vpack.c.bf16 %v1911, %v1911
    %v1971 = vpack.c.bf16 %v1914, %v1914
    %v1972 = vpack.c.bf16 %v1916, %v1916
    %v1973 = vpack.c.bf16 %v1919, %v1919
    %v1974 = vpack.c.bf16 %v1921, %v1921
    %v1975 = vpack.c.bf16 %v1924, %v1924
    %v1976 = vpack.c.bf16 %v1926, %v1926
    %v1977 = vpack.c.bf16 %v1929, %v1929
    %v1978 = vpack.c.bf16 %v1931, %v1931
    %v1979 = vpack.c.bf16 %v1934, %v1934
    %v1980 = vpack.c.bf16 %v1936, %v1936
    %v1981 = vpack.c.bf16 %v1939, %v1939
    %v1982 = vpack.c.bf16 %v1941, %v1941
    %v1983 = vpack.c.bf16 %v1944, %v1944
    %v1984 = vpack.c.bf16 %v1946, %v1946
    %v1985 = vpack.c.bf16 %v1949, %v1949
    %v1986 = vpack.c.bf16 %v1951, %v1951
    %v1987 = vpack.c.bf16 %v1954, %v1954
    %v1988 = vpack.c.bf16 %v1956, %v1956
    %v1989 = vpack.c.bf16 %v1959, %v1959
    %v1990 = vpack.c.bf16 %v1961, %v1961
    %v1991 = vpack.c.bf16 %v1964, %v1964
    %1992 = vst.msk [vmem:[#allocation2 + $0x1f4] sm:$0xf] %vm1211, %v1967
    %1993 = vst.msk [vmem:[#allocation2 + $0x1f8] sm:$0xf] %vm1211, %v1968
    %1994 = vst.msk [vmem:[#allocation2 + $0x1fc] sm:$0xf] %vm1211, %v1969
    %1995 = vst.msk [vmem:[#allocation2 + $0x200] sm:$0xf] %vm1211, %v1970
    %1996 = vst.msk [vmem:[#allocation2 + $0x204] sm:$0xf] %vm1211, %v1971
    %1997 = vst.msk [vmem:[#allocation2 + $0x208] sm:$0xf] %vm1211, %v1972
    %1998 = vst.msk [vmem:[#allocation2 + $0x20c] sm:$0xf] %vm1211, %v1973
    %1999 = vst.msk [vmem:[#allocation2 + $0x210] sm:$0xf] %vm1211, %v1974
    %2000 = vst.msk [vmem:[#allocation2 + $0x214] sm:$0xf] %vm1211, %v1975
    %2001 = vst.msk [vmem:[#allocation2 + $0x218] sm:$0xf] %vm1211, %v1976
    %2002 = vst.msk [vmem:[#allocation2 + $0x21c] sm:$0xf] %vm1211, %v1977
    %2003 = vst.msk [vmem:[#allocation2 + $0x220] sm:$0xf] %vm1211, %v1978
    %2004 = vst.msk [vmem:[#allocation2 + $0x224] sm:$0xf] %vm1211, %v1979
    %2005 = vst.msk [vmem:[#allocation2 + $0x228] sm:$0xf] %vm1211, %v1980
    %2006 = vst.msk [vmem:[#allocation2 + $0x22c] sm:$0xf] %vm1211, %v1981
    %2007 = vst.msk [vmem:[#allocation2 + $0x230] sm:$0xf] %vm1211, %v1982
    %2008 = vst.msk [vmem:[#allocation2 + $0x234] sm:$0xf] %vm1211, %v1983
    %2009 = vst.msk [vmem:[#allocation2 + $0x238] sm:$0xf] %vm1211, %v1984
    %2010 = vst.msk [vmem:[#allocation2 + $0x23c] sm:$0xf] %vm1211, %v1985
    %2011 = vst.msk [vmem:[#allocation2 + $0x240] sm:$0xf] %vm1211, %v1986
    %2012 = vst.msk [vmem:[#allocation2 + $0x244] sm:$0xf] %vm1211, %v1987
    %2013 = vst.msk [vmem:[#allocation2 + $0x248] sm:$0xf] %vm1211, %v1988
    %2014 = vst.msk [vmem:[#allocation2 + $0x24c] sm:$0xf] %vm1211, %v1989
    %2015 = vst.msk [vmem:[#allocation2 + $0x250] sm:$0xf] %vm1211, %v1990
    %2016 = vst.msk [vmem:[#allocation2 + $0x254] sm:$0xf] %vm1211, %v1991
    %s2017 = scalar_lea.vmem %s3, 192
    %v2018 = vld [vmem:[%s2017] sm:$0xf]
    %v2019 = vld [vmem:[%s2017 + $0x4] sm:$0xf]
    %v2020 = vld [vmem:[%s2017 + $0x8] sm:$0xf]
    %v2021 = vld [vmem:[%s2017 + $0xc] sm:$0xf]
    %v2022 = vld [vmem:[%s2017 + $0x10] sm:$0xf]
    %v2023 = vld [vmem:[%s2017 + $0x14] sm:$0xf]
    %v2024 = vld [vmem:[%s2017 + $0x18] sm:$0xf]
    %v2025 = vld [vmem:[%s2017 + $0x1c] sm:$0xf]
    %v2034 = vunpack.c.l.b16 %v2018
    %v2035 = vunpack.c.l.b16 %v2019
    %v2036 = vunpack.c.l.b16 %v2020
    %v2037 = vunpack.c.l.b16 %v2021
    %v2038 = vunpack.c.l.b16 %v2022
    %v2039 = vunpack.c.l.b16 %v2023
    %v2040 = vunpack.c.l.b16 %v2024
    %v2041 = vunpack.c.l.b16 %v2025
    %v2042 = vpack.c.b16 %v2035, %v2034
    %v2043 = vpack.c.b16 %v2037, %v2036
    %v2044 = vpack.c.b16 %v2039, %v2038
    %v2045 = vpack.c.b16 %v2041, %v2040
    %2050 = vmatpush.bf16.msra.mxu0 0
    %2051 = vmatpush.bf16.msra.mxu0 0
    %2052 = vmatpush.bf16.msra.mxu0 0
    %2053 = vmatpush.bf16.msra.mxu0 0
    %2054 = vmatpush.bf16.msra.mxu0 %v2045
    %2055 = vmatpush.bf16.msra.mxu0 %v2044
    %2056 = vmatpush.bf16.msra.mxu0 %v2043
    %2057 = vmatpush.bf16.msra.mxu0 %v2042
    %2058 = vmatmul.bf16.gmra.mxu0 %v1075
    %v2059 = vpop.f32.mrf.mxu0
    %v2060 = vadd.f32 0.0, %v2059
    %v2061 = vpop.f32.mrf.mxu0
    %v2062 = vadd.f32 0.0, %v2061
    %2063 = vmatmul.bf16.gmra.mxu0 %v1078
    %v2064 = vpop.f32.mrf.mxu0
    %v2065 = vadd.f32 0.0, %v2064
    %v2066 = vpop.f32.mrf.mxu0
    %v2067 = vadd.f32 0.0, %v2066
    %2068 = vmatmul.bf16.gmra.mxu0 %v1081
    %v2069 = vpop.f32.mrf.mxu0
    %v2070 = vadd.f32 0.0, %v2069
    %v2071 = vpop.f32.mrf.mxu0
    %v2072 = vadd.f32 0.0, %v2071
    %2073 = vmatmul.bf16.gmra.mxu0 %v1084
    %v2074 = vpop.f32.mrf.mxu0
    %v2075 = vadd.f32 0.0, %v2074
    %v2076 = vpop.f32.mrf.mxu0
    %v2077 = vadd.f32 0.0, %v2076
    %2078 = vmatmul.bf16.gmra.mxu0 %v1087
    %v2079 = vpop.f32.mrf.mxu0
    %v2080 = vadd.f32 0.0, %v2079
    %v2081 = vpop.f32.mrf.mxu0
    %v2082 = vadd.f32 0.0, %v2081
    %2083 = vmatmul.bf16.gmra.mxu0 %v1090
    %v2084 = vpop.f32.mrf.mxu0
    %v2085 = vadd.f32 0.0, %v2084
    %v2086 = vpop.f32.mrf.mxu0
    %v2087 = vadd.f32 0.0, %v2086
    %2088 = vmatmul.bf16.gmra.mxu0 %v1093
    %v2089 = vpop.f32.mrf.mxu0
    %v2090 = vadd.f32 0.0, %v2089
    %v2091 = vpop.f32.mrf.mxu0
    %v2092 = vadd.f32 0.0, %v2091
    %2093 = vmatmul.bf16.gmra.mxu0 %v1096
    %v2094 = vpop.f32.mrf.mxu0
    %v2095 = vadd.f32 0.0, %v2094
    %v2096 = vpop.f32.mrf.mxu0
    %v2097 = vadd.f32 0.0, %v2096
    %2098 = vmatmul.bf16.gmra.mxu0 %v1099
    %v2099 = vpop.f32.mrf.mxu0
    %v2100 = vadd.f32 0.0, %v2099
    %v2101 = vpop.f32.mrf.mxu0
    %v2102 = vadd.f32 0.0, %v2101
    %2103 = vmatmul.bf16.gmra.mxu0 %v1102
    %v2104 = vpop.f32.mrf.mxu0
    %v2105 = vadd.f32 0.0, %v2104
    %v2106 = vpop.f32.mrf.mxu0
    %v2107 = vadd.f32 0.0, %v2106
    %2108 = vmatmul.bf16.gmra.mxu0 %v1105
    %v2109 = vpop.f32.mrf.mxu0
    %v2110 = vadd.f32 0.0, %v2109
    %v2111 = vpop.f32.mrf.mxu0
    %v2112 = vadd.f32 0.0, %v2111
    %2113 = vmatmul.bf16.gmra.mxu0 %v1108
    %v2114 = vpop.f32.mrf.mxu0
    %v2115 = vadd.f32 0.0, %v2114
    %v2116 = vpop.f32.mrf.mxu0
    %v2117 = vadd.f32 0.0, %v2116
    %2118 = vmatmul.bf16.gmra.mxu0 %v1111
    %v2119 = vpop.f32.mrf.mxu0
    %v2120 = vadd.f32 0.0, %v2119
    %v2121 = vpop.f32.mrf.mxu0
    %2122 = vdwg.mxu0
    %v2123 = vpack.c.bf16 %v2060, %v2060
    %v2124 = vpack.c.bf16 %v2062, %v2062
    %v2125 = vpack.c.bf16 %v2065, %v2065
    %v2126 = vpack.c.bf16 %v2067, %v2067
    %v2127 = vpack.c.bf16 %v2070, %v2070
    %v2128 = vpack.c.bf16 %v2072, %v2072
    %v2129 = vpack.c.bf16 %v2075, %v2075
    %v2130 = vpack.c.bf16 %v2077, %v2077
    %v2131 = vpack.c.bf16 %v2080, %v2080
    %v2132 = vpack.c.bf16 %v2082, %v2082
    %v2133 = vpack.c.bf16 %v2085, %v2085
    %v2134 = vpack.c.bf16 %v2087, %v2087
    %v2135 = vpack.c.bf16 %v2090, %v2090
    %v2136 = vpack.c.bf16 %v2092, %v2092
    %v2137 = vpack.c.bf16 %v2095, %v2095
    %v2138 = vpack.c.bf16 %v2097, %v2097
    %v2139 = vpack.c.bf16 %v2100, %v2100
    %v2140 = vpack.c.bf16 %v2102, %v2102
    %v2141 = vpack.c.bf16 %v2105, %v2105
    %v2142 = vpack.c.bf16 %v2107, %v2107
    %v2143 = vpack.c.bf16 %v2110, %v2110
    %v2144 = vpack.c.bf16 %v2112, %v2112
    %v2145 = vpack.c.bf16 %v2115, %v2115
    %v2146 = vpack.c.bf16 %v2117, %v2117
    %v2147 = vpack.c.bf16 %v2120, %v2120
    %2148 = vst.msk [vmem:[#allocation2 + $0x258] sm:$0xf] %vm1211, %v2123
    %2149 = vst.msk [vmem:[#allocation2 + $0x25c] sm:$0xf] %vm1211, %v2124
    %2150 = vst.msk [vmem:[#allocation2 + $0x260] sm:$0xf] %vm1211, %v2125
    %2151 = vst.msk [vmem:[#allocation2 + $0x264] sm:$0xf] %vm1211, %v2126
    %2152 = vst.msk [vmem:[#allocation2 + $0x268] sm:$0xf] %vm1211, %v2127
    %2153 = vst.msk [vmem:[#allocation2 + $0x26c] sm:$0xf] %vm1211, %v2128
    %2154 = vst.msk [vmem:[#allocation2 + $0x270] sm:$0xf] %vm1211, %v2129
    %2155 = vst.msk [vmem:[#allocation2 + $0x274] sm:$0xf] %vm1211, %v2130
    %2156 = vst.msk [vmem:[#allocation2 + $0x278] sm:$0xf] %vm1211, %v2131
    %2157 = vst.msk [vmem:[#allocation2 + $0x27c] sm:$0xf] %vm1211, %v2132
    %2158 = vst.msk [vmem:[#allocation2 + $0x280] sm:$0xf] %vm1211, %v2133
    %2159 = vst.msk [vmem:[#allocation2 + $0x284] sm:$0xf] %vm1211, %v2134
    %2160 = vst.msk [vmem:[#allocation2 + $0x288] sm:$0xf] %vm1211, %v2135
    %2161 = vst.msk [vmem:[#allocation2 + $0x28c] sm:$0xf] %vm1211, %v2136
    %2162 = vst.msk [vmem:[#allocation2 + $0x290] sm:$0xf] %vm1211, %v2137
    %2163 = vst.msk [vmem:[#allocation2 + $0x294] sm:$0xf] %vm1211, %v2138
    %2164 = vst.msk [vmem:[#allocation2 + $0x298] sm:$0xf] %vm1211, %v2139
    %2165 = vst.msk [vmem:[#allocation2 + $0x29c] sm:$0xf] %vm1211, %v2140
    %2166 = vst.msk [vmem:[#allocation2 + $0x2a0] sm:$0xf] %vm1211, %v2141
    %2167 = vst.msk [vmem:[#allocation2 + $0x2a4] sm:$0xf] %vm1211, %v2142
    %2168 = vst.msk [vmem:[#allocation2 + $0x2a8] sm:$0xf] %vm1211, %v2143
    %2169 = vst.msk [vmem:[#allocation2 + $0x2ac] sm:$0xf] %vm1211, %v2144
    %2170 = vst.msk [vmem:[#allocation2 + $0x2b0] sm:$0xf] %vm1211, %v2145
    %2171 = vst.msk [vmem:[#allocation2 + $0x2b4] sm:$0xf] %vm1211, %v2146
    %2172 = vst.msk [vmem:[#allocation2 + $0x2b8] sm:$0xf] %vm1211, %v2147
    %s2173 = scalar_lea.vmem %s3, 224
    %v2174 = vld [vmem:[%s2173] sm:$0xf]
    %v2175 = vld [vmem:[%s2173 + $0x4] sm:$0xf]
    %v2176 = vld [vmem:[%s2173 + $0x8] sm:$0xf]
    %v2177 = vld [vmem:[%s2173 + $0xc] sm:$0xf]
    %v2178 = vld [vmem:[%s2173 + $0x10] sm:$0xf]
    %v2179 = vld [vmem:[%s2173 + $0x14] sm:$0xf]
    %v2180 = vld [vmem:[%s2173 + $0x18] sm:$0xf]
    %v2181 = vld [vmem:[%s2173 + $0x1c] sm:$0xf]
    %v2190 = vunpack.c.l.b16 %v2174
    %v2191 = vunpack.c.l.b16 %v2175
    %v2192 = vunpack.c.l.b16 %v2176
    %v2193 = vunpack.c.l.b16 %v2177
    %v2194 = vunpack.c.l.b16 %v2178
    %v2195 = vunpack.c.l.b16 %v2179
    %v2196 = vunpack.c.l.b16 %v2180
    %v2197 = vunpack.c.l.b16 %v2181
    %v2198 = vpack.c.b16 %v2191, %v2190
    %v2199 = vpack.c.b16 %v2193, %v2192
    %v2200 = vpack.c.b16 %v2195, %v2194
    %v2201 = vpack.c.b16 %v2197, %v2196
    %2206 = vmatpush.bf16.msra.mxu0 0
    %2207 = vmatpush.bf16.msra.mxu0 0
    %2208 = vmatpush.bf16.msra.mxu0 0
    %2209 = vmatpush.bf16.msra.mxu0 0
    %2210 = vmatpush.bf16.msra.mxu0 %v2201
    %2211 = vmatpush.bf16.msra.mxu0 %v2200
    %2212 = vmatpush.bf16.msra.mxu0 %v2199
    %2213 = vmatpush.bf16.msra.mxu0 %v2198
    %2214 = vmatmul.bf16.gmra.mxu0 %v1075
    %v2215 = vpop.f32.mrf.mxu0
    %v2216 = vadd.f32 0.0, %v2215
    %v2217 = vpop.f32.mrf.mxu0
    %v2218 = vadd.f32 0.0, %v2217
    %2219 = vmatmul.bf16.gmra.mxu0 %v1078
    %v2220 = vpop.f32.mrf.mxu0
    %v2221 = vadd.f32 0.0, %v2220
    %v2222 = vpop.f32.mrf.mxu0
    %v2223 = vadd.f32 0.0, %v2222
    %2224 = vmatmul.bf16.gmra.mxu0 %v1081
    %v2225 = vpop.f32.mrf.mxu0
    %v2226 = vadd.f32 0.0, %v2225
    %v2227 = vpop.f32.mrf.mxu0
    %v2228 = vadd.f32 0.0, %v2227
    %2229 = vmatmul.bf16.gmra.mxu0 %v1084
    %v2230 = vpop.f32.mrf.mxu0
    %v2231 = vadd.f32 0.0, %v2230
    %v2232 = vpop.f32.mrf.mxu0
    %v2233 = vadd.f32 0.0, %v2232
    %2234 = vmatmul.bf16.gmra.mxu0 %v1087
    %v2235 = vpop.f32.mrf.mxu0
    %v2236 = vadd.f32 0.0, %v2235
    %v2237 = vpop.f32.mrf.mxu0
    %v2238 = vadd.f32 0.0, %v2237
    %2239 = vmatmul.bf16.gmra.mxu0 %v1090
    %v2240 = vpop.f32.mrf.mxu0
    %v2241 = vadd.f32 0.0, %v2240
    %v2242 = vpop.f32.mrf.mxu0
    %v2243 = vadd.f32 0.0, %v2242
    %2244 = vmatmul.bf16.gmra.mxu0 %v1093
    %v2245 = vpop.f32.mrf.mxu0
    %v2246 = vadd.f32 0.0, %v2245
    %v2247 = vpop.f32.mrf.mxu0
    %v2248 = vadd.f32 0.0, %v2247
    %2249 = vmatmul.bf16.gmra.mxu0 %v1096
    %v2250 = vpop.f32.mrf.mxu0
    %v2251 = vadd.f32 0.0, %v2250
    %v2252 = vpop.f32.mrf.mxu0
    %v2253 = vadd.f32 0.0, %v2252
    %2254 = vmatmul.bf16.gmra.mxu0 %v1099
    %v2255 = vpop.f32.mrf.mxu0
    %v2256 = vadd.f32 0.0, %v2255
    %v2257 = vpop.f32.mrf.mxu0
    %v2258 = vadd.f32 0.0, %v2257
    %2259 = vmatmul.bf16.gmra.mxu0 %v1102
    %v2260 = vpop.f32.mrf.mxu0
    %v2261 = vadd.f32 0.0, %v2260
    %v2262 = vpop.f32.mrf.mxu0
    %v2263 = vadd.f32 0.0, %v2262
    %2264 = vmatmul.bf16.gmra.mxu0 %v1105
    %v2265 = vpop.f32.mrf.mxu0
    %v2266 = vadd.f32 0.0, %v2265
    %v2267 = vpop.f32.mrf.mxu0
    %v2268 = vadd.f32 0.0, %v2267
    %2269 = vmatmul.bf16.gmra.mxu0 %v1108
    %v2270 = vpop.f32.mrf.mxu0
    %v2271 = vadd.f32 0.0, %v2270
    %v2272 = vpop.f32.mrf.mxu0
    %v2273 = vadd.f32 0.0, %v2272
    %2274 = vmatmul.bf16.gmra.mxu0 %v1111
    %v2275 = vpop.f32.mrf.mxu0
    %v2276 = vadd.f32 0.0, %v2275
    %v2277 = vpop.f32.mrf.mxu0
    %2278 = vdwg.mxu0
    %v2279 = vpack.c.bf16 %v2216, %v2216
    %v2280 = vpack.c.bf16 %v2218, %v2218
    %v2281 = vpack.c.bf16 %v2221, %v2221
    %v2282 = vpack.c.bf16 %v2223, %v2223
    %v2283 = vpack.c.bf16 %v2226, %v2226
    %v2284 = vpack.c.bf16 %v2228, %v2228
    %v2285 = vpack.c.bf16 %v2231, %v2231
    %v2286 = vpack.c.bf16 %v2233, %v2233
    %v2287 = vpack.c.bf16 %v2236, %v2236
    %v2288 = vpack.c.bf16 %v2238, %v2238
    %v2289 = vpack.c.bf16 %v2241, %v2241
    %v2290 = vpack.c.bf16 %v2243, %v2243
    %v2291 = vpack.c.bf16 %v2246, %v2246
    %v2292 = vpack.c.bf16 %v2248, %v2248
    %v2293 = vpack.c.bf16 %v2251, %v2251
    %v2294 = vpack.c.bf16 %v2253, %v2253
    %v2295 = vpack.c.bf16 %v2256, %v2256
    %v2296 = vpack.c.bf16 %v2258, %v2258
    %v2297 = vpack.c.bf16 %v2261, %v2261
    %v2298 = vpack.c.bf16 %v2263, %v2263
    %v2299 = vpack.c.bf16 %v2266, %v2266
    %v2300 = vpack.c.bf16 %v2268, %v2268
    %v2301 = vpack.c.bf16 %v2271, %v2271
    %v2302 = vpack.c.bf16 %v2273, %v2273
    %v2303 = vpack.c.bf16 %v2276, %v2276
    %2304 = vst.msk [vmem:[#allocation2 + $0x2bc] sm:$0xf] %vm1211, %v2279
    %2305 = vst.msk [vmem:[#allocation2 + $0x2c0] sm:$0xf] %vm1211, %v2280
    %2306 = vst.msk [vmem:[#allocation2 + $0x2c4] sm:$0xf] %vm1211, %v2281
    %2307 = vst.msk [vmem:[#allocation2 + $0x2c8] sm:$0xf] %vm1211, %v2282
    %2308 = vst.msk [vmem:[#allocation2 + $0x2cc] sm:$0xf] %vm1211, %v2283
    %2309 = vst.msk [vmem:[#allocation2 + $0x2d0] sm:$0xf] %vm1211, %v2284
    %2310 = vst.msk [vmem:[#allocation2 + $0x2d4] sm:$0xf] %vm1211, %v2285
    %2311 = vst.msk [vmem:[#allocation2 + $0x2d8] sm:$0xf] %vm1211, %v2286
    %2312 = vst.msk [vmem:[#allocation2 + $0x2dc] sm:$0xf] %vm1211, %v2287
    %2313 = vst.msk [vmem:[#allocation2 + $0x2e0] sm:$0xf] %vm1211, %v2288
    %2314 = vst.msk [vmem:[#allocation2 + $0x2e4] sm:$0xf] %vm1211, %v2289
    %2315 = vst.msk [vmem:[#allocation2 + $0x2e8] sm:$0xf] %vm1211, %v2290
    %2316 = vst.msk [vmem:[#allocation2 + $0x2ec] sm:$0xf] %vm1211, %v2291
    %2317 = vst.msk [vmem:[#allocation2 + $0x2f0] sm:$0xf] %vm1211, %v2292
    %2318 = vst.msk [vmem:[#allocation2 + $0x2f4] sm:$0xf] %vm1211, %v2293
    %2319 = vst.msk [vmem:[#allocation2 + $0x2f8] sm:$0xf] %vm1211, %v2294
    %2320 = vst.msk [vmem:[#allocation2 + $0x2fc] sm:$0xf] %vm1211, %v2295
    %2321 = vst.msk [vmem:[#allocation2 + $0x300] sm:$0xf] %vm1211, %v2296
    %2322 = vst.msk [vmem:[#allocation2 + $0x304] sm:$0xf] %vm1211, %v2297
    %2323 = vst.msk [vmem:[#allocation2 + $0x308] sm:$0xf] %vm1211, %v2298
    %2324 = vst.msk [vmem:[#allocation2 + $0x30c] sm:$0xf] %vm1211, %v2299
    %2325 = vst.msk [vmem:[#allocation2 + $0x310] sm:$0xf] %vm1211, %v2300
    %2326 = vst.msk [vmem:[#allocation2 + $0x314] sm:$0xf] %vm1211, %v2301
    %2327 = vst.msk [vmem:[#allocation2 + $0x318] sm:$0xf] %vm1211, %v2302
    %2328 = vst.msk [vmem:[#allocation2 + $0x31c] sm:$0xf] %vm1211, %v2303
    %s2329 = scalar_lea.vmem %s3, 256
    %v2330 = vld [vmem:[%s2329] sm:$0xf]
    %v2331 = vld [vmem:[%s2329 + $0x4] sm:$0xf]
    %v2332 = vld [vmem:[%s2329 + $0x8] sm:$0xf]
    %v2333 = vld [vmem:[%s2329 + $0xc] sm:$0xf]
    %v2334 = vld [vmem:[%s2329 + $0x10] sm:$0xf]
    %v2335 = vld [vmem:[%s2329 + $0x14] sm:$0xf]
    %v2336 = vld [vmem:[%s2329 + $0x18] sm:$0xf]
    %v2337 = vld [vmem:[%s2329 + $0x1c] sm:$0xf]
    %v2346 = vunpack.c.l.b16 %v2330
    %v2347 = vunpack.c.l.b16 %v2331
    %v2348 = vunpack.c.l.b16 %v2332
    %v2349 = vunpack.c.l.b16 %v2333
    %v2350 = vunpack.c.l.b16 %v2334
    %v2351 = vunpack.c.l.b16 %v2335
    %v2352 = vunpack.c.l.b16 %v2336
    %v2353 = vunpack.c.l.b16 %v2337
    %v2354 = vpack.c.b16 %v2347, %v2346
    %v2355 = vpack.c.b16 %v2349, %v2348
    %v2356 = vpack.c.b16 %v2351, %v2350
    %v2357 = vpack.c.b16 %v2353, %v2352
    %2362 = vmatpush.bf16.msra.mxu0 0
    %2363 = vmatpush.bf16.msra.mxu0 0
    %2364 = vmatpush.bf16.msra.mxu0 0
    %2365 = vmatpush.bf16.msra.mxu0 0
    %2366 = vmatpush.bf16.msra.mxu0 %v2357
    %2367 = vmatpush.bf16.msra.mxu0 %v2356
    %2368 = vmatpush.bf16.msra.mxu0 %v2355
    %2369 = vmatpush.bf16.msra.mxu0 %v2354
    %2370 = vmatmul.bf16.gmra.mxu0 %v1075
    %v2371 = vpop.f32.mrf.mxu0
    %v2372 = vadd.f32 0.0, %v2371
    %v2373 = vpop.f32.mrf.mxu0
    %v2374 = vadd.f32 0.0, %v2373
    %2375 = vmatmul.bf16.gmra.mxu0 %v1078
    %v2376 = vpop.f32.mrf.mxu0
    %v2377 = vadd.f32 0.0, %v2376
    %v2378 = vpop.f32.mrf.mxu0
    %v2379 = vadd.f32 0.0, %v2378
    %2380 = vmatmul.bf16.gmra.mxu0 %v1081
    %v2381 = vpop.f32.mrf.mxu0
    %v2382 = vadd.f32 0.0, %v2381
    %v2383 = vpop.f32.mrf.mxu0
    %v2384 = vadd.f32 0.0, %v2383
    %2385 = vmatmul.bf16.gmra.mxu0 %v1084
    %v2386 = vpop.f32.mrf.mxu0
    %v2387 = vadd.f32 0.0, %v2386
    %v2388 = vpop.f32.mrf.mxu0
    %v2389 = vadd.f32 0.0, %v2388
    %2390 = vmatmul.bf16.gmra.mxu0 %v1087
    %v2391 = vpop.f32.mrf.mxu0
    %v2392 = vadd.f32 0.0, %v2391
    %v2393 = vpop.f32.mrf.mxu0
    %v2394 = vadd.f32 0.0, %v2393
    %2395 = vmatmul.bf16.gmra.mxu0 %v1090
    %v2396 = vpop.f32.mrf.mxu0
    %v2397 = vadd.f32 0.0, %v2396
    %v2398 = vpop.f32.mrf.mxu0
    %v2399 = vadd.f32 0.0, %v2398
    %2400 = vmatmul.bf16.gmra.mxu0 %v1093
    %v2401 = vpop.f32.mrf.mxu0
    %v2402 = vadd.f32 0.0, %v2401
    %v2403 = vpop.f32.mrf.mxu0
    %v2404 = vadd.f32 0.0, %v2403
    %2405 = vmatmul.bf16.gmra.mxu0 %v1096
    %v2406 = vpop.f32.mrf.mxu0
    %v2407 = vadd.f32 0.0, %v2406
    %v2408 = vpop.f32.mrf.mxu0
    %v2409 = vadd.f32 0.0, %v2408
    %2410 = vmatmul.bf16.gmra.mxu0 %v1099
    %v2411 = vpop.f32.mrf.mxu0
    %v2412 = vadd.f32 0.0, %v2411
    %v2413 = vpop.f32.mrf.mxu0
    %v2414 = vadd.f32 0.0, %v2413
    %2415 = vmatmul.bf16.gmra.mxu0 %v1102
    %v2416 = vpop.f32.mrf.mxu0
    %v2417 = vadd.f32 0.0, %v2416
    %v2418 = vpop.f32.mrf.mxu0
    %v2419 = vadd.f32 0.0, %v2418
    %2420 = vmatmul.bf16.gmra.mxu0 %v1105
    %v2421 = vpop.f32.mrf.mxu0
    %v2422 = vadd.f32 0.0, %v2421
    %v2423 = vpop.f32.mrf.mxu0
    %v2424 = vadd.f32 0.0, %v2423
    %2425 = vmatmul.bf16.gmra.mxu0 %v1108
    %v2426 = vpop.f32.mrf.mxu0
    %v2427 = vadd.f32 0.0, %v2426
    %v2428 = vpop.f32.mrf.mxu0
    %v2429 = vadd.f32 0.0, %v2428
    %2430 = vmatmul.bf16.gmra.mxu0 %v1111
    %v2431 = vpop.f32.mrf.mxu0
    %v2432 = vadd.f32 0.0, %v2431
    %v2433 = vpop.f32.mrf.mxu0
    %2434 = vdwg.mxu0
    %v2435 = vpack.c.bf16 %v2372, %v2372
    %v2436 = vpack.c.bf16 %v2374, %v2374
    %v2437 = vpack.c.bf16 %v2377, %v2377
    %v2438 = vpack.c.bf16 %v2379, %v2379
    %v2439 = vpack.c.bf16 %v2382, %v2382
    %v2440 = vpack.c.bf16 %v2384, %v2384
    %v2441 = vpack.c.bf16 %v2387, %v2387
    %v2442 = vpack.c.bf16 %v2389, %v2389
    %v2443 = vpack.c.bf16 %v2392, %v2392
    %v2444 = vpack.c.bf16 %v2394, %v2394
    %v2445 = vpack.c.bf16 %v2397, %v2397
    %v2446 = vpack.c.bf16 %v2399, %v2399
    %v2447 = vpack.c.bf16 %v2402, %v2402
    %v2448 = vpack.c.bf16 %v2404, %v2404
    %v2449 = vpack.c.bf16 %v2407, %v2407
    %v2450 = vpack.c.bf16 %v2409, %v2409
    %v2451 = vpack.c.bf16 %v2412, %v2412
    %v2452 = vpack.c.bf16 %v2414, %v2414
    %v2453 = vpack.c.bf16 %v2417, %v2417
    %v2454 = vpack.c.bf16 %v2419, %v2419
    %v2455 = vpack.c.bf16 %v2422, %v2422
    %v2456 = vpack.c.bf16 %v2424, %v2424
    %v2457 = vpack.c.bf16 %v2427, %v2427
    %v2458 = vpack.c.bf16 %v2429, %v2429
    %v2459 = vpack.c.bf16 %v2432, %v2432
    %2460 = vst.msk [vmem:[#allocation2 + $0x320] sm:$0xf] %vm1211, %v2435
    %2461 = vst.msk [vmem:[#allocation2 + $0x324] sm:$0xf] %vm1211, %v2436
    %2462 = vst.msk [vmem:[#allocation2 + $0x328] sm:$0xf] %vm1211, %v2437
    %2463 = vst.msk [vmem:[#allocation2 + $0x32c] sm:$0xf] %vm1211, %v2438
    %2464 = vst.msk [vmem:[#allocation2 + $0x330] sm:$0xf] %vm1211, %v2439
    %2465 = vst.msk [vmem:[#allocation2 + $0x334] sm:$0xf] %vm1211, %v2440
    %2466 = vst.msk [vmem:[#allocation2 + $0x338] sm:$0xf] %vm1211, %v2441
    %2467 = vst.msk [vmem:[#allocation2 + $0x33c] sm:$0xf] %vm1211, %v2442
    %2468 = vst.msk [vmem:[#allocation2 + $0x340] sm:$0xf] %vm1211, %v2443
    %2469 = vst.msk [vmem:[#allocation2 + $0x344] sm:$0xf] %vm1211, %v2444
    %2470 = vst.msk [vmem:[#allocation2 + $0x348] sm:$0xf] %vm1211, %v2445
    %2471 = vst.msk [vmem:[#allocation2 + $0x34c] sm:$0xf] %vm1211, %v2446
    %2472 = vst.msk [vmem:[#allocation2 + $0x350] sm:$0xf] %vm1211, %v2447
    %2473 = vst.msk [vmem:[#allocation2 + $0x354] sm:$0xf] %vm1211, %v2448
    %2474 = vst.msk [vmem:[#allocation2 + $0x358] sm:$0xf] %vm1211, %v2449
    %2475 = vst.msk [vmem:[#allocation2 + $0x35c] sm:$0xf] %vm1211, %v2450
    %2476 = vst.msk [vmem:[#allocation2 + $0x360] sm:$0xf] %vm1211, %v2451
    %2477 = vst.msk [vmem:[#allocation2 + $0x364] sm:$0xf] %vm1211, %v2452
    %2478 = vst.msk [vmem:[#allocation2 + $0x368] sm:$0xf] %vm1211, %v2453
    %2479 = vst.msk [vmem:[#allocation2 + $0x36c] sm:$0xf] %vm1211, %v2454
    %2480 = vst.msk [vmem:[#allocation2 + $0x370] sm:$0xf] %vm1211, %v2455
    %2481 = vst.msk [vmem:[#allocation2 + $0x374] sm:$0xf] %vm1211, %v2456
    %2482 = vst.msk [vmem:[#allocation2 + $0x378] sm:$0xf] %vm1211, %v2457
    %2483 = vst.msk [vmem:[#allocation2 + $0x37c] sm:$0xf] %vm1211, %v2458
    %2484 = vst.msk [vmem:[#allocation2 + $0x380] sm:$0xf] %vm1211, %v2459
    %s2485 = scalar_lea.vmem %s3, 288
    %v2486 = vld [vmem:[%s2485] sm:$0xf]
    %v2487 = vld [vmem:[%s2485 + $0x4] sm:$0xf]
    %v2488 = vld [vmem:[%s2485 + $0x8] sm:$0xf]
    %v2489 = vld [vmem:[%s2485 + $0xc] sm:$0xf]
    %v2490 = vld [vmem:[%s2485 + $0x10] sm:$0xf]
    %v2491 = vld [vmem:[%s2485 + $0x14] sm:$0xf]
    %v2492 = vld [vmem:[%s2485 + $0x18] sm:$0xf]
    %v2493 = vld [vmem:[%s2485 + $0x1c] sm:$0xf]
    %v2502 = vunpack.c.l.b16 %v2486
    %v2503 = vunpack.c.l.b16 %v2487
    %v2504 = vunpack.c.l.b16 %v2488
    %v2505 = vunpack.c.l.b16 %v2489
    %v2506 = vunpack.c.l.b16 %v2490
    %v2507 = vunpack.c.l.b16 %v2491
    %v2508 = vunpack.c.l.b16 %v2492
    %v2509 = vunpack.c.l.b16 %v2493
    %v2510 = vpack.c.b16 %v2503, %v2502
    %v2511 = vpack.c.b16 %v2505, %v2504
    %v2512 = vpack.c.b16 %v2507, %v2506
    %v2513 = vpack.c.b16 %v2509, %v2508
    %2518 = vmatpush.bf16.msra.mxu0 0
    %2519 = vmatpush.bf16.msra.mxu0 0
    %2520 = vmatpush.bf16.msra.mxu0 0
    %2521 = vmatpush.bf16.msra.mxu0 0
    %2522 = vmatpush.bf16.msra.mxu0 %v2513
    %2523 = vmatpush.bf16.msra.mxu0 %v2512
    %2524 = vmatpush.bf16.msra.mxu0 %v2511
    %2525 = vmatpush.bf16.msra.mxu0 %v2510
    %2526 = vmatmul.bf16.gmra.mxu0 %v1075
    %v2527 = vpop.f32.mrf.mxu0
    %v2528 = vadd.f32 0.0, %v2527
    %v2529 = vpop.f32.mrf.mxu0
    %v2530 = vadd.f32 0.0, %v2529
    %2531 = vmatmul.bf16.gmra.mxu0 %v1078
    %v2532 = vpop.f32.mrf.mxu0
    %v2533 = vadd.f32 0.0, %v2532
    %v2534 = vpop.f32.mrf.mxu0
    %v2535 = vadd.f32 0.0, %v2534
    %2536 = vmatmul.bf16.gmra.mxu0 %v1081
    %v2537 = vpop.f32.mrf.mxu0
    %v2538 = vadd.f32 0.0, %v2537
    %v2539 = vpop.f32.mrf.mxu0
    %v2540 = vadd.f32 0.0, %v2539
    %2541 = vmatmul.bf16.gmra.mxu0 %v1084
    %v2542 = vpop.f32.mrf.mxu0
    %v2543 = vadd.f32 0.0, %v2542
    %v2544 = vpop.f32.mrf.mxu0
    %v2545 = vadd.f32 0.0, %v2544
    %2546 = vmatmul.bf16.gmra.mxu0 %v1087
    %v2547 = vpop.f32.mrf.mxu0
    %v2548 = vadd.f32 0.0, %v2547
    %v2549 = vpop.f32.mrf.mxu0
    %v2550 = vadd.f32 0.0, %v2549
    %2551 = vmatmul.bf16.gmra.mxu0 %v1090
    %v2552 = vpop.f32.mrf.mxu0
    %v2553 = vadd.f32 0.0, %v2552
    %v2554 = vpop.f32.mrf.mxu0
    %v2555 = vadd.f32 0.0, %v2554
    %2556 = vmatmul.bf16.gmra.mxu0 %v1093
    %v2557 = vpop.f32.mrf.mxu0
    %v2558 = vadd.f32 0.0, %v2557
    %v2559 = vpop.f32.mrf.mxu0
    %v2560 = vadd.f32 0.0, %v2559
    %2561 = vmatmul.bf16.gmra.mxu0 %v1096
    %v2562 = vpop.f32.mrf.mxu0
    %v2563 = vadd.f32 0.0, %v2562
    %v2564 = vpop.f32.mrf.mxu0
    %v2565 = vadd.f32 0.0, %v2564
    %2566 = vmatmul.bf16.gmra.mxu0 %v1099
    %v2567 = vpop.f32.mrf.mxu0
    %v2568 = vadd.f32 0.0, %v2567
    %v2569 = vpop.f32.mrf.mxu0
    %v2570 = vadd.f32 0.0, %v2569
    %2571 = vmatmul.bf16.gmra.mxu0 %v1102
    %v2572 = vpop.f32.mrf.mxu0
    %v2573 = vadd.f32 0.0, %v2572
    %v2574 = vpop.f32.mrf.mxu0
    %v2575 = vadd.f32 0.0, %v2574
    %2576 = vmatmul.bf16.gmra.mxu0 %v1105
    %v2577 = vpop.f32.mrf.mxu0
    %v2578 = vadd.f32 0.0, %v2577
    %v2579 = vpop.f32.mrf.mxu0
    %v2580 = vadd.f32 0.0, %v2579
    %2581 = vmatmul.bf16.gmra.mxu0 %v1108
    %v2582 = vpop.f32.mrf.mxu0
    %v2583 = vadd.f32 0.0, %v2582
    %v2584 = vpop.f32.mrf.mxu0
    %v2585 = vadd.f32 0.0, %v2584
    %2586 = vmatmul.bf16.gmra.mxu0 %v1111
    %v2587 = vpop.f32.mrf.mxu0
    %v2588 = vadd.f32 0.0, %v2587
    %v2589 = vpop.f32.mrf.mxu0
    %2590 = vdwg.mxu0
    %v2591 = vpack.c.bf16 %v2528, %v2528
    %v2592 = vpack.c.bf16 %v2530, %v2530
    %v2593 = vpack.c.bf16 %v2533, %v2533
    %v2594 = vpack.c.bf16 %v2535, %v2535
    %v2595 = vpack.c.bf16 %v2538, %v2538
    %v2596 = vpack.c.bf16 %v2540, %v2540
    %v2597 = vpack.c.bf16 %v2543, %v2543
    %v2598 = vpack.c.bf16 %v2545, %v2545
    %v2599 = vpack.c.bf16 %v2548, %v2548
    %v2600 = vpack.c.bf16 %v2550, %v2550
    %v2601 = vpack.c.bf16 %v2553, %v2553
    %v2602 = vpack.c.bf16 %v2555, %v2555
    %v2603 = vpack.c.bf16 %v2558, %v2558
    %v2604 = vpack.c.bf16 %v2560, %v2560
    %v2605 = vpack.c.bf16 %v2563, %v2563
    %v2606 = vpack.c.bf16 %v2565, %v2565
    %v2607 = vpack.c.bf16 %v2568, %v2568
    %v2608 = vpack.c.bf16 %v2570, %v2570
    %v2609 = vpack.c.bf16 %v2573, %v2573
    %v2610 = vpack.c.bf16 %v2575, %v2575
    %v2611 = vpack.c.bf16 %v2578, %v2578
    %v2612 = vpack.c.bf16 %v2580, %v2580
    %v2613 = vpack.c.bf16 %v2583, %v2583
    %v2614 = vpack.c.bf16 %v2585, %v2585
    %v2615 = vpack.c.bf16 %v2588, %v2588
    %2616 = vst.msk [vmem:[#allocation2 + $0x384] sm:$0xf] %vm1211, %v2591
    %2617 = vst.msk [vmem:[#allocation2 + $0x388] sm:$0xf] %vm1211, %v2592
    %2618 = vst.msk [vmem:[#allocation2 + $0x38c] sm:$0xf] %vm1211, %v2593
    %2619 = vst.msk [vmem:[#allocation2 + $0x390] sm:$0xf] %vm1211, %v2594
    %2620 = vst.msk [vmem:[#allocation2 + $0x394] sm:$0xf] %vm1211, %v2595
    %2621 = vst.msk [vmem:[#allocation2 + $0x398] sm:$0xf] %vm1211, %v2596
    %2622 = vst.msk [vmem:[#allocation2 + $0x39c] sm:$0xf] %vm1211, %v2597
    %2623 = vst.msk [vmem:[#allocation2 + $0x3a0] sm:$0xf] %vm1211, %v2598
    %2624 = vst.msk [vmem:[#allocation2 + $0x3a4] sm:$0xf] %vm1211, %v2599
    %2625 = vst.msk [vmem:[#allocation2 + $0x3a8] sm:$0xf] %vm1211, %v2600
    %2626 = vst.msk [vmem:[#allocation2 + $0x3ac] sm:$0xf] %vm1211, %v2601
    %2627 = vst.msk [vmem:[#allocation2 + $0x3b0] sm:$0xf] %vm1211, %v2602
    %2628 = vst.msk [vmem:[#allocation2 + $0x3b4] sm:$0xf] %vm1211, %v2603
    %2629 = vst.msk [vmem:[#allocation2 + $0x3b8] sm:$0xf] %vm1211, %v2604
    %2630 = vst.msk [vmem:[#allocation2 + $0x3bc] sm:$0xf] %vm1211, %v2605
    %2631 = vst.msk [vmem:[#allocation2 + $0x3c0] sm:$0xf] %vm1211, %v2606
    %2632 = vst.msk [vmem:[#allocation2 + $0x3c4] sm:$0xf] %vm1211, %v2607
    %2633 = vst.msk [vmem:[#allocation2 + $0x3c8] sm:$0xf] %vm1211, %v2608
    %2634 = vst.msk [vmem:[#allocation2 + $0x3cc] sm:$0xf] %vm1211, %v2609
    %2635 = vst.msk [vmem:[#allocation2 + $0x3d0] sm:$0xf] %vm1211, %v2610
    %2636 = vst.msk [vmem:[#allocation2 + $0x3d4] sm:$0xf] %vm1211, %v2611
    %2637 = vst.msk [vmem:[#allocation2 + $0x3d8] sm:$0xf] %vm1211, %v2612
    %2638 = vst.msk [vmem:[#allocation2 + $0x3dc] sm:$0xf] %vm1211, %v2613
    %2639 = vst.msk [vmem:[#allocation2 + $0x3e0] sm:$0xf] %vm1211, %v2614
    %2640 = vst.msk [vmem:[#allocation2 + $0x3e4] sm:$0xf] %vm1211, %v2615
    %s2641 = scalar_lea.vmem %s3, 320
    %v2642 = vld [vmem:[%s2641] sm:$0xf]
    %v2643 = vld [vmem:[%s2641 + $0x4] sm:$0xf]
    %v2644 = vld [vmem:[%s2641 + $0x8] sm:$0xf]
    %v2645 = vld [vmem:[%s2641 + $0xc] sm:$0xf]
    %v2646 = vld [vmem:[%s2641 + $0x10] sm:$0xf]
    %v2647 = vld [vmem:[%s2641 + $0x14] sm:$0xf]
    %v2648 = vld [vmem:[%s2641 + $0x18] sm:$0xf]
    %v2649 = vld [vmem:[%s2641 + $0x1c] sm:$0xf]
    %v2658 = vunpack.c.l.b16 %v2642
    %v2659 = vunpack.c.l.b16 %v2643
    %v2660 = vunpack.c.l.b16 %v2644
    %v2661 = vunpack.c.l.b16 %v2645
    %v2662 = vunpack.c.l.b16 %v2646
    %v2663 = vunpack.c.l.b16 %v2647
    %v2664 = vunpack.c.l.b16 %v2648
    %v2665 = vunpack.c.l.b16 %v2649
    %v2666 = vpack.c.b16 %v2659, %v2658
    %v2667 = vpack.c.b16 %v2661, %v2660
    %v2668 = vpack.c.b16 %v2663, %v2662
    %v2669 = vpack.c.b16 %v2665, %v2664
    %2674 = vmatpush.bf16.msra.mxu0 0
    %2675 = vmatpush.bf16.msra.mxu0 0
    %2676 = vmatpush.bf16.msra.mxu0 0
    %2677 = vmatpush.bf16.msra.mxu0 0
    %2678 = vmatpush.bf16.msra.mxu0 %v2669
    %2679 = vmatpush.bf16.msra.mxu0 %v2668
    %2680 = vmatpush.bf16.msra.mxu0 %v2667
    %2681 = vmatpush.bf16.msra.mxu0 %v2666
    %2682 = vmatmul.bf16.gmra.mxu0 %v1075
    %v2683 = vpop.f32.mrf.mxu0
    %v2684 = vadd.f32 0.0, %v2683
    %v2685 = vpop.f32.mrf.mxu0
    %v2686 = vadd.f32 0.0, %v2685
    %2687 = vmatmul.bf16.gmra.mxu0 %v1078
    %v2688 = vpop.f32.mrf.mxu0
    %v2689 = vadd.f32 0.0, %v2688
    %v2690 = vpop.f32.mrf.mxu0
    %v2691 = vadd.f32 0.0, %v2690
    %2692 = vmatmul.bf16.gmra.mxu0 %v1081
    %v2693 = vpop.f32.mrf.mxu0
    %v2694 = vadd.f32 0.0, %v2693
    %v2695 = vpop.f32.mrf.mxu0
    %v2696 = vadd.f32 0.0, %v2695
    %2697 = vmatmul.bf16.gmra.mxu0 %v1084
    %v2698 = vpop.f32.mrf.mxu0
    %v2699 = vadd.f32 0.0, %v2698
    %v2700 = vpop.f32.mrf.mxu0
    %v2701 = vadd.f32 0.0, %v2700
    %2702 = vmatmul.bf16.gmra.mxu0 %v1087
    %v2703 = vpop.f32.mrf.mxu0
    %v2704 = vadd.f32 0.0, %v2703
    %v2705 = vpop.f32.mrf.mxu0
    %v2706 = vadd.f32 0.0, %v2705
    %2707 = vmatmul.bf16.gmra.mxu0 %v1090
    %v2708 = vpop.f32.mrf.mxu0
    %v2709 = vadd.f32 0.0, %v2708
    %v2710 = vpop.f32.mrf.mxu0
    %v2711 = vadd.f32 0.0, %v2710
    %2712 = vmatmul.bf16.gmra.mxu0 %v1093
    %v2713 = vpop.f32.mrf.mxu0
    %v2714 = vadd.f32 0.0, %v2713
    %v2715 = vpop.f32.mrf.mxu0
    %v2716 = vadd.f32 0.0, %v2715
    %2717 = vmatmul.bf16.gmra.mxu0 %v1096
    %v2718 = vpop.f32.mrf.mxu0
    %v2719 = vadd.f32 0.0, %v2718
    %v2720 = vpop.f32.mrf.mxu0
    %v2721 = vadd.f32 0.0, %v2720
    %2722 = vmatmul.bf16.gmra.mxu0 %v1099
    %v2723 = vpop.f32.mrf.mxu0
    %v2724 = vadd.f32 0.0, %v2723
    %v2725 = vpop.f32.mrf.mxu0
    %v2726 = vadd.f32 0.0, %v2725
    %2727 = vmatmul.bf16.gmra.mxu0 %v1102
    %v2728 = vpop.f32.mrf.mxu0
    %v2729 = vadd.f32 0.0, %v2728
    %v2730 = vpop.f32.mrf.mxu0
    %v2731 = vadd.f32 0.0, %v2730
    %2732 = vmatmul.bf16.gmra.mxu0 %v1105
    %v2733 = vpop.f32.mrf.mxu0
    %v2734 = vadd.f32 0.0, %v2733
    %v2735 = vpop.f32.mrf.mxu0
    %v2736 = vadd.f32 0.0, %v2735
    %2737 = vmatmul.bf16.gmra.mxu0 %v1108
    %v2738 = vpop.f32.mrf.mxu0
    %v2739 = vadd.f32 0.0, %v2738
    %v2740 = vpop.f32.mrf.mxu0
    %v2741 = vadd.f32 0.0, %v2740
    %2742 = vmatmul.bf16.gmra.mxu0 %v1111
    %v2743 = vpop.f32.mrf.mxu0
    %v2744 = vadd.f32 0.0, %v2743
    %v2745 = vpop.f32.mrf.mxu0
    %2746 = vdwg.mxu0
    %v2747 = vpack.c.bf16 %v2684, %v2684
    %v2748 = vpack.c.bf16 %v2686, %v2686
    %v2749 = vpack.c.bf16 %v2689, %v2689
    %v2750 = vpack.c.bf16 %v2691, %v2691
    %v2751 = vpack.c.bf16 %v2694, %v2694
    %v2752 = vpack.c.bf16 %v2696, %v2696
    %v2753 = vpack.c.bf16 %v2699, %v2699
    %v2754 = vpack.c.bf16 %v2701, %v2701
    %v2755 = vpack.c.bf16 %v2704, %v2704
    %v2756 = vpack.c.bf16 %v2706, %v2706
    %v2757 = vpack.c.bf16 %v2709, %v2709
    %v2758 = vpack.c.bf16 %v2711, %v2711
    %v2759 = vpack.c.bf16 %v2714, %v2714
    %v2760 = vpack.c.bf16 %v2716, %v2716
    %v2761 = vpack.c.bf16 %v2719, %v2719
    %v2762 = vpack.c.bf16 %v2721, %v2721
    %v2763 = vpack.c.bf16 %v2724, %v2724
    %v2764 = vpack.c.bf16 %v2726, %v2726
    %v2765 = vpack.c.bf16 %v2729, %v2729
    %v2766 = vpack.c.bf16 %v2731, %v2731
    %v2767 = vpack.c.bf16 %v2734, %v2734
    %v2768 = vpack.c.bf16 %v2736, %v2736
    %v2769 = vpack.c.bf16 %v2739, %v2739
    %v2770 = vpack.c.bf16 %v2741, %v2741
    %v2771 = vpack.c.bf16 %v2744, %v2744
    %2772 = vst.msk [vmem:[#allocation2 + $0x3e8] sm:$0xf] %vm1211, %v2747
    %2773 = vst.msk [vmem:[#allocation2 + $0x3ec] sm:$0xf] %vm1211, %v2748
    %2774 = vst.msk [vmem:[#allocation2 + $0x3f0] sm:$0xf] %vm1211, %v2749
    %2775 = vst.msk [vmem:[#allocation2 + $0x3f4] sm:$0xf] %vm1211, %v2750
    %2776 = vst.msk [vmem:[#allocation2 + $0x3f8] sm:$0xf] %vm1211, %v2751
    %2777 = vst.msk [vmem:[#allocation2 + $0x3fc] sm:$0xf] %vm1211, %v2752
    %2778 = vst.msk [vmem:[#allocation2 + $0x400] sm:$0xf] %vm1211, %v2753
    %2779 = vst.msk [vmem:[#allocation2 + $0x404] sm:$0xf] %vm1211, %v2754
    %2780 = vst.msk [vmem:[#allocation2 + $0x408] sm:$0xf] %vm1211, %v2755
    %2781 = vst.msk [vmem:[#allocation2 + $0x40c] sm:$0xf] %vm1211, %v2756
    %2782 = vst.msk [vmem:[#allocation2 + $0x410] sm:$0xf] %vm1211, %v2757
    %2783 = vst.msk [vmem:[#allocation2 + $0x414] sm:$0xf] %vm1211, %v2758
    %2784 = vst.msk [vmem:[#allocation2 + $0x418] sm:$0xf] %vm1211, %v2759
    %2785 = vst.msk [vmem:[#allocation2 + $0x41c] sm:$0xf] %vm1211, %v2760
    %2786 = vst.msk [vmem:[#allocation2 + $0x420] sm:$0xf] %vm1211, %v2761
    %2787 = vst.msk [vmem:[#allocation2 + $0x424] sm:$0xf] %vm1211, %v2762
    %2788 = vst.msk [vmem:[#allocation2 + $0x428] sm:$0xf] %vm1211, %v2763
    %2789 = vst.msk [vmem:[#allocation2 + $0x42c] sm:$0xf] %vm1211, %v2764
    %2790 = vst.msk [vmem:[#allocation2 + $0x430] sm:$0xf] %vm1211, %v2765
    %2791 = vst.msk [vmem:[#allocation2 + $0x434] sm:$0xf] %vm1211, %v2766
    %2792 = vst.msk [vmem:[#allocation2 + $0x438] sm:$0xf] %vm1211, %v2767
    %2793 = vst.msk [vmem:[#allocation2 + $0x43c] sm:$0xf] %vm1211, %v2768
    %2794 = vst.msk [vmem:[#allocation2 + $0x440] sm:$0xf] %vm1211, %v2769
    %2795 = vst.msk [vmem:[#allocation2 + $0x444] sm:$0xf] %vm1211, %v2770
    %2796 = vst.msk [vmem:[#allocation2 + $0x448] sm:$0xf] %vm1211, %v2771
    %s2797 = scalar_lea.vmem %s3, 352
    %v2798 = vld [vmem:[%s2797] sm:$0xf]
    %v2799 = vld [vmem:[%s2797 + $0x4] sm:$0xf]
    %v2800 = vld [vmem:[%s2797 + $0x8] sm:$0xf]
    %v2801 = vld [vmem:[%s2797 + $0xc] sm:$0xf]
    %v2802 = vld [vmem:[%s2797 + $0x10] sm:$0xf]
    %v2803 = vld [vmem:[%s2797 + $0x14] sm:$0xf]
    %v2804 = vld [vmem:[%s2797 + $0x18] sm:$0xf]
    %v2805 = vld [vmem:[%s2797 + $0x1c] sm:$0xf]
    %v2814 = vunpack.c.l.b16 %v2798
    %v2815 = vunpack.c.l.b16 %v2799
    %v2816 = vunpack.c.l.b16 %v2800
    %v2817 = vunpack.c.l.b16 %v2801
    %v2818 = vunpack.c.l.b16 %v2802
    %v2819 = vunpack.c.l.b16 %v2803
    %v2820 = vunpack.c.l.b16 %v2804
    %v2821 = vunpack.c.l.b16 %v2805
    %v2822 = vpack.c.b16 %v2815, %v2814
    %v2823 = vpack.c.b16 %v2817, %v2816
    %v2824 = vpack.c.b16 %v2819, %v2818
    %v2825 = vpack.c.b16 %v2821, %v2820
    %2830 = vmatpush.bf16.msra.mxu0 0
    %2831 = vmatpush.bf16.msra.mxu0 0
    %2832 = vmatpush.bf16.msra.mxu0 0
    %2833 = vmatpush.bf16.msra.mxu0 0
    %2834 = vmatpush.bf16.msra.mxu0 %v2825
    %2835 = vmatpush.bf16.msra.mxu0 %v2824
    %2836 = vmatpush.bf16.msra.mxu0 %v2823
    %2837 = vmatpush.bf16.msra.mxu0 %v2822
    %2838 = vmatmul.bf16.gmra.mxu0 %v1075
    %v2839 = vpop.f32.mrf.mxu0
    %v2840 = vadd.f32 0.0, %v2839
    %v2841 = vpop.f32.mrf.mxu0
    %v2842 = vadd.f32 0.0, %v2841
    %2843 = vmatmul.bf16.gmra.mxu0 %v1078
    %v2844 = vpop.f32.mrf.mxu0
    %v2845 = vadd.f32 0.0, %v2844
    %v2846 = vpop.f32.mrf.mxu0
    %v2847 = vadd.f32 0.0, %v2846
    %2848 = vmatmul.bf16.gmra.mxu0 %v1081
    %v2849 = vpop.f32.mrf.mxu0
    %v2850 = vadd.f32 0.0, %v2849
    %v2851 = vpop.f32.mrf.mxu0
    %v2852 = vadd.f32 0.0, %v2851
    %2853 = vmatmul.bf16.gmra.mxu0 %v1084
    %v2854 = vpop.f32.mrf.mxu0
    %v2855 = vadd.f32 0.0, %v2854
    %v2856 = vpop.f32.mrf.mxu0
    %v2857 = vadd.f32 0.0, %v2856
    %2858 = vmatmul.bf16.gmra.mxu0 %v1087
    %v2859 = vpop.f32.mrf.mxu0
    %v2860 = vadd.f32 0.0, %v2859
    %v2861 = vpop.f32.mrf.mxu0
    %v2862 = vadd.f32 0.0, %v2861
    %2863 = vmatmul.bf16.gmra.mxu0 %v1090
    %v2864 = vpop.f32.mrf.mxu0
    %v2865 = vadd.f32 0.0, %v2864
    %v2866 = vpop.f32.mrf.mxu0
    %v2867 = vadd.f32 0.0, %v2866
    %2868 = vmatmul.bf16.gmra.mxu0 %v1093
    %v2869 = vpop.f32.mrf.mxu0
    %v2870 = vadd.f32 0.0, %v2869
    %v2871 = vpop.f32.mrf.mxu0
    %v2872 = vadd.f32 0.0, %v2871
    %2873 = vmatmul.bf16.gmra.mxu0 %v1096
    %v2874 = vpop.f32.mrf.mxu0
    %v2875 = vadd.f32 0.0, %v2874
    %v2876 = vpop.f32.mrf.mxu0
    %v2877 = vadd.f32 0.0, %v2876
    %2878 = vmatmul.bf16.gmra.mxu0 %v1099
    %v2879 = vpop.f32.mrf.mxu0
    %v2880 = vadd.f32 0.0, %v2879
    %v2881 = vpop.f32.mrf.mxu0
    %v2882 = vadd.f32 0.0, %v2881
    %2883 = vmatmul.bf16.gmra.mxu0 %v1102
    %v2884 = vpop.f32.mrf.mxu0
    %v2885 = vadd.f32 0.0, %v2884
    %v2886 = vpop.f32.mrf.mxu0
    %v2887 = vadd.f32 0.0, %v2886
    %2888 = vmatmul.bf16.gmra.mxu0 %v1105
    %v2889 = vpop.f32.mrf.mxu0
    %v2890 = vadd.f32 0.0, %v2889
    %v2891 = vpop.f32.mrf.mxu0
    %v2892 = vadd.f32 0.0, %v2891
    %2893 = vmatmul.bf16.gmra.mxu0 %v1108
    %v2894 = vpop.f32.mrf.mxu0
    %v2895 = vadd.f32 0.0, %v2894
    %v2896 = vpop.f32.mrf.mxu0
    %v2897 = vadd.f32 0.0, %v2896
    %2898 = vmatmul.bf16.gmra.mxu0 %v1111
    %v2899 = vpop.f32.mrf.mxu0
    %v2900 = vadd.f32 0.0, %v2899
    %v2901 = vpop.f32.mrf.mxu0
    %2902 = vdwg.mxu0
    %v2903 = vpack.c.bf16 %v2840, %v2840
    %v2904 = vpack.c.bf16 %v2842, %v2842
    %v2905 = vpack.c.bf16 %v2845, %v2845
    %v2906 = vpack.c.bf16 %v2847, %v2847
    %v2907 = vpack.c.bf16 %v2850, %v2850
    %v2908 = vpack.c.bf16 %v2852, %v2852
    %v2909 = vpack.c.bf16 %v2855, %v2855
    %v2910 = vpack.c.bf16 %v2857, %v2857
    %v2911 = vpack.c.bf16 %v2860, %v2860
    %v2912 = vpack.c.bf16 %v2862, %v2862
    %v2913 = vpack.c.bf16 %v2865, %v2865
    %v2914 = vpack.c.bf16 %v2867, %v2867
    %v2915 = vpack.c.bf16 %v2870, %v2870
    %v2916 = vpack.c.bf16 %v2872, %v2872
    %v2917 = vpack.c.bf16 %v2875, %v2875
    %v2918 = vpack.c.bf16 %v2877, %v2877
    %v2919 = vpack.c.bf16 %v2880, %v2880
    %v2920 = vpack.c.bf16 %v2882, %v2882
    %v2921 = vpack.c.bf16 %v2885, %v2885
    %v2922 = vpack.c.bf16 %v2887, %v2887
    %v2923 = vpack.c.bf16 %v2890, %v2890
    %v2924 = vpack.c.bf16 %v2892, %v2892
    %v2925 = vpack.c.bf16 %v2895, %v2895
    %v2926 = vpack.c.bf16 %v2897, %v2897
    %v2927 = vpack.c.bf16 %v2900, %v2900
    %2928 = vst.msk [vmem:[#allocation2 + $0x44c] sm:$0xf] %vm1211, %v2903
    %2929 = vst.msk [vmem:[#allocation2 + $0x450] sm:$0xf] %vm1211, %v2904
    %2930 = vst.msk [vmem:[#allocation2 + $0x454] sm:$0xf] %vm1211, %v2905
    %2931 = vst.msk [vmem:[#allocation2 + $0x458] sm:$0xf] %vm1211, %v2906
    %2932 = vst.msk [vmem:[#allocation2 + $0x45c] sm:$0xf] %vm1211, %v2907
    %2933 = vst.msk [vmem:[#allocation2 + $0x460] sm:$0xf] %vm1211, %v2908
    %2934 = vst.msk [vmem:[#allocation2 + $0x464] sm:$0xf] %vm1211, %v2909
    %2935 = vst.msk [vmem:[#allocation2 + $0x468] sm:$0xf] %vm1211, %v2910
    %2936 = vst.msk [vmem:[#allocation2 + $0x46c] sm:$0xf] %vm1211, %v2911
    %2937 = vst.msk [vmem:[#allocation2 + $0x470] sm:$0xf] %vm1211, %v2912
    %2938 = vst.msk [vmem:[#allocation2 + $0x474] sm:$0xf] %vm1211, %v2913
    %2939 = vst.msk [vmem:[#allocation2 + $0x478] sm:$0xf] %vm1211, %v2914
    %2940 = vst.msk [vmem:[#allocation2 + $0x47c] sm:$0xf] %vm1211, %v2915
    %2941 = vst.msk [vmem:[#allocation2 + $0x480] sm:$0xf] %vm1211, %v2916
    %2942 = vst.msk [vmem:[#allocation2 + $0x484] sm:$0xf] %vm1211, %v2917
    %2943 = vst.msk [vmem:[#allocation2 + $0x488] sm:$0xf] %vm1211, %v2918
    %2944 = vst.msk [vmem:[#allocation2 + $0x48c] sm:$0xf] %vm1211, %v2919
    %2945 = vst.msk [vmem:[#allocation2 + $0x490] sm:$0xf] %vm1211, %v2920
    %2946 = vst.msk [vmem:[#allocation2 + $0x494] sm:$0xf] %vm1211, %v2921
    %2947 = vst.msk [vmem:[#allocation2 + $0x498] sm:$0xf] %vm1211, %v2922
    %2948 = vst.msk [vmem:[#allocation2 + $0x49c] sm:$0xf] %vm1211, %v2923
    %2949 = vst.msk [vmem:[#allocation2 + $0x4a0] sm:$0xf] %vm1211, %v2924
    %2950 = vst.msk [vmem:[#allocation2 + $0x4a4] sm:$0xf] %vm1211, %v2925
    %2951 = vst.msk [vmem:[#allocation2 + $0x4a8] sm:$0xf] %vm1211, %v2926
    %2952 = vst.msk [vmem:[#allocation2 + $0x4ac] sm:$0xf] %vm1211, %v2927
    %s2953 = scalar_lea.vmem %s3, 384
    %v2954 = vld [vmem:[%s2953] sm:$0xf]
    %v2955 = vld [vmem:[%s2953 + $0x4] sm:$0xf]
    %v2956 = vld [vmem:[%s2953 + $0x8] sm:$0xf]
    %v2957 = vld [vmem:[%s2953 + $0xc] sm:$0xf]
    %v2958 = vld [vmem:[%s2953 + $0x10] sm:$0xf]
    %v2959 = vld [vmem:[%s2953 + $0x14] sm:$0xf]
    %v2960 = vld [vmem:[%s2953 + $0x18] sm:$0xf]
    %v2961 = vld [vmem:[%s2953 + $0x1c] sm:$0xf]
    %v2970 = vunpack.c.l.b16 %v2954
    %v2971 = vunpack.c.l.b16 %v2955
    %v2972 = vunpack.c.l.b16 %v2956
    %v2973 = vunpack.c.l.b16 %v2957
    %v2974 = vunpack.c.l.b16 %v2958
    %v2975 = vunpack.c.l.b16 %v2959
    %v2976 = vunpack.c.l.b16 %v2960
    %v2977 = vunpack.c.l.b16 %v2961
    %v2978 = vpack.c.b16 %v2971, %v2970
    %v2979 = vpack.c.b16 %v2973, %v2972
    %v2980 = vpack.c.b16 %v2975, %v2974
    %v2981 = vpack.c.b16 %v2977, %v2976
    %2986 = vmatpush.bf16.msra.mxu0 0
    %2987 = vmatpush.bf16.msra.mxu0 0
    %2988 = vmatpush.bf16.msra.mxu0 0
    %2989 = vmatpush.bf16.msra.mxu0 0
    %2990 = vmatpush.bf16.msra.mxu0 %v2981
    %2991 = vmatpush.bf16.msra.mxu0 %v2980
    %2992 = vmatpush.bf16.msra.mxu0 %v2979
    %2993 = vmatpush.bf16.msra.mxu0 %v2978
    %2994 = vmatmul.bf16.gmra.mxu0 %v1075
    %v2995 = vpop.f32.mrf.mxu0
    %v2996 = vadd.f32 0.0, %v2995
    %v2997 = vpop.f32.mrf.mxu0
    %v2998 = vadd.f32 0.0, %v2997
    %2999 = vmatmul.bf16.gmra.mxu0 %v1078
    %v3000 = vpop.f32.mrf.mxu0
    %v3001 = vadd.f32 0.0, %v3000
    %v3002 = vpop.f32.mrf.mxu0
    %v3003 = vadd.f32 0.0, %v3002
    %3004 = vmatmul.bf16.gmra.mxu0 %v1081
    %v3005 = vpop.f32.mrf.mxu0
    %v3006 = vadd.f32 0.0, %v3005
    %v3007 = vpop.f32.mrf.mxu0
    %v3008 = vadd.f32 0.0, %v3007
    %3009 = vmatmul.bf16.gmra.mxu0 %v1084
    %v3010 = vpop.f32.mrf.mxu0
    %v3011 = vadd.f32 0.0, %v3010
    %v3012 = vpop.f32.mrf.mxu0
    %v3013 = vadd.f32 0.0, %v3012
    %3014 = vmatmul.bf16.gmra.mxu0 %v1087
    %v3015 = vpop.f32.mrf.mxu0
    %v3016 = vadd.f32 0.0, %v3015
    %v3017 = vpop.f32.mrf.mxu0
    %v3018 = vadd.f32 0.0, %v3017
    %3019 = vmatmul.bf16.gmra.mxu0 %v1090
    %v3020 = vpop.f32.mrf.mxu0
    %v3021 = vadd.f32 0.0, %v3020
    %v3022 = vpop.f32.mrf.mxu0
    %v3023 = vadd.f32 0.0, %v3022
    %3024 = vmatmul.bf16.gmra.mxu0 %v1093
    %v3025 = vpop.f32.mrf.mxu0
    %v3026 = vadd.f32 0.0, %v3025
    %v3027 = vpop.f32.mrf.mxu0
    %v3028 = vadd.f32 0.0, %v3027
    %3029 = vmatmul.bf16.gmra.mxu0 %v1096
    %v3030 = vpop.f32.mrf.mxu0
    %v3031 = vadd.f32 0.0, %v3030
    %v3032 = vpop.f32.mrf.mxu0
    %v3033 = vadd.f32 0.0, %v3032
    %3034 = vmatmul.bf16.gmra.mxu0 %v1099
    %v3035 = vpop.f32.mrf.mxu0
    %v3036 = vadd.f32 0.0, %v3035
    %v3037 = vpop.f32.mrf.mxu0
    %v3038 = vadd.f32 0.0, %v3037
    %3039 = vmatmul.bf16.gmra.mxu0 %v1102
    %v3040 = vpop.f32.mrf.mxu0
    %v3041 = vadd.f32 0.0, %v3040
    %v3042 = vpop.f32.mrf.mxu0
    %v3043 = vadd.f32 0.0, %v3042
    %3044 = vmatmul.bf16.gmra.mxu0 %v1105
    %v3045 = vpop.f32.mrf.mxu0
    %v3046 = vadd.f32 0.0, %v3045
    %v3047 = vpop.f32.mrf.mxu0
    %v3048 = vadd.f32 0.0, %v3047
    %3049 = vmatmul.bf16.gmra.mxu0 %v1108
    %v3050 = vpop.f32.mrf.mxu0
    %v3051 = vadd.f32 0.0, %v3050
    %v3052 = vpop.f32.mrf.mxu0
    %v3053 = vadd.f32 0.0, %v3052
    %3054 = vmatmul.bf16.gmra.mxu0 %v1111
    %v3055 = vpop.f32.mrf.mxu0
    %v3056 = vadd.f32 0.0, %v3055
    %v3057 = vpop.f32.mrf.mxu0
    %3058 = vdwg.mxu0
    %v3059 = vpack.c.bf16 %v2996, %v2996
    %v3060 = vpack.c.bf16 %v2998, %v2998
    %v3061 = vpack.c.bf16 %v3001, %v3001
    %v3062 = vpack.c.bf16 %v3003, %v3003
    %v3063 = vpack.c.bf16 %v3006, %v3006
    %v3064 = vpack.c.bf16 %v3008, %v3008
    %v3065 = vpack.c.bf16 %v3011, %v3011
    %v3066 = vpack.c.bf16 %v3013, %v3013
    %v3067 = vpack.c.bf16 %v3016, %v3016
    %v3068 = vpack.c.bf16 %v3018, %v3018
    %v3069 = vpack.c.bf16 %v3021, %v3021
    %v3070 = vpack.c.bf16 %v3023, %v3023
    %v3071 = vpack.c.bf16 %v3026, %v3026
    %v3072 = vpack.c.bf16 %v3028, %v3028
    %v3073 = vpack.c.bf16 %v3031, %v3031
    %v3074 = vpack.c.bf16 %v3033, %v3033
    %v3075 = vpack.c.bf16 %v3036, %v3036
    %v3076 = vpack.c.bf16 %v3038, %v3038
    %v3077 = vpack.c.bf16 %v3041, %v3041
    %v3078 = vpack.c.bf16 %v3043, %v3043
    %v3079 = vpack.c.bf16 %v3046, %v3046
    %v3080 = vpack.c.bf16 %v3048, %v3048
    %v3081 = vpack.c.bf16 %v3051, %v3051
    %v3082 = vpack.c.bf16 %v3053, %v3053
    %v3083 = vpack.c.bf16 %v3056, %v3056
    %3084 = vst.msk [vmem:[#allocation2 + $0x4b0] sm:$0xf] %vm1211, %v3059
    %3085 = vst.msk [vmem:[#allocation2 + $0x4b4] sm:$0xf] %vm1211, %v3060
    %3086 = vst.msk [vmem:[#allocation2 + $0x4b8] sm:$0xf] %vm1211, %v3061
    %3087 = vst.msk [vmem:[#allocation2 + $0x4bc] sm:$0xf] %vm1211, %v3062
    %3088 = vst.msk [vmem:[#allocation2 + $0x4c0] sm:$0xf] %vm1211, %v3063
    %3089 = vst.msk [vmem:[#allocation2 + $0x4c4] sm:$0xf] %vm1211, %v3064
    %3090 = vst.msk [vmem:[#allocation2 + $0x4c8] sm:$0xf] %vm1211, %v3065
    %3091 = vst.msk [vmem:[#allocation2 + $0x4cc] sm:$0xf] %vm1211, %v3066
    %3092 = vst.msk [vmem:[#allocation2 + $0x4d0] sm:$0xf] %vm1211, %v3067
    %3093 = vst.msk [vmem:[#allocation2 + $0x4d4] sm:$0xf] %vm1211, %v3068
    %3094 = vst.msk [vmem:[#allocation2 + $0x4d8] sm:$0xf] %vm1211, %v3069
    %3095 = vst.msk [vmem:[#allocation2 + $0x4dc] sm:$0xf] %vm1211, %v3070
    %3096 = vst.msk [vmem:[#allocation2 + $0x4e0] sm:$0xf] %vm1211, %v3071
    %3097 = vst.msk [vmem:[#allocation2 + $0x4e4] sm:$0xf] %vm1211, %v3072
    %3098 = vst.msk [vmem:[#allocation2 + $0x4e8] sm:$0xf] %vm1211, %v3073
    %3099 = vst.msk [vmem:[#allocation2 + $0x4ec] sm:$0xf] %vm1211, %v3074
    %3100 = vst.msk [vmem:[#allocation2 + $0x4f0] sm:$0xf] %vm1211, %v3075
    %3101 = vst.msk [vmem:[#allocation2 + $0x4f4] sm:$0xf] %vm1211, %v3076
    %3102 = vst.msk [vmem:[#allocation2 + $0x4f8] sm:$0xf] %vm1211, %v3077
    %3103 = vst.msk [vmem:[#allocation2 + $0x4fc] sm:$0xf] %vm1211, %v3078
    %3104 = vst.msk [vmem:[#allocation2 + $0x500] sm:$0xf] %vm1211, %v3079
    %3105 = vst.msk [vmem:[#allocation2 + $0x504] sm:$0xf] %vm1211, %v3080
    %3106 = vst.msk [vmem:[#allocation2 + $0x508] sm:$0xf] %vm1211, %v3081
    %3107 = vst.msk [vmem:[#allocation2 + $0x50c] sm:$0xf] %vm1211, %v3082
    %3108 = vst.msk [vmem:[#allocation2 + $0x510] sm:$0xf] %vm1211, %v3083
    %s3109 = scalar_lea.vmem %s3, 416
    %v3110 = vld [vmem:[%s3109] sm:$0xf]
    %v3111 = vld [vmem:[%s3109 + $0x4] sm:$0xf]
    %v3112 = vld [vmem:[%s3109 + $0x8] sm:$0xf]
    %v3113 = vld [vmem:[%s3109 + $0xc] sm:$0xf]
    %v3114 = vld [vmem:[%s3109 + $0x10] sm:$0xf]
    %v3115 = vld [vmem:[%s3109 + $0x14] sm:$0xf]
    %v3116 = vld [vmem:[%s3109 + $0x18] sm:$0xf]
    %v3117 = vld [vmem:[%s3109 + $0x1c] sm:$0xf]
    %v3126 = vunpack.c.l.b16 %v3110
    %v3127 = vunpack.c.l.b16 %v3111
    %v3128 = vunpack.c.l.b16 %v3112
    %v3129 = vunpack.c.l.b16 %v3113
    %v3130 = vunpack.c.l.b16 %v3114
    %v3131 = vunpack.c.l.b16 %v3115
    %v3132 = vunpack.c.l.b16 %v3116
    %v3133 = vunpack.c.l.b16 %v3117
    %v3134 = vpack.c.b16 %v3127, %v3126
    %v3135 = vpack.c.b16 %v3129, %v3128
    %v3136 = vpack.c.b16 %v3131, %v3130
    %v3137 = vpack.c.b16 %v3133, %v3132
    %3142 = vmatpush.bf16.msra.mxu0 0
    %3143 = vmatpush.bf16.msra.mxu0 0
    %3144 = vmatpush.bf16.msra.mxu0 0
    %3145 = vmatpush.bf16.msra.mxu0 0
    %3146 = vmatpush.bf16.msra.mxu0 %v3137
    %3147 = vmatpush.bf16.msra.mxu0 %v3136
    %3148 = vmatpush.bf16.msra.mxu0 %v3135
    %3149 = vmatpush.bf16.msra.mxu0 %v3134
    %3150 = vmatmul.bf16.gmra.mxu0 %v1075
    %v3151 = vpop.f32.mrf.mxu0
    %v3152 = vadd.f32 0.0, %v3151
    %v3153 = vpop.f32.mrf.mxu0
    %v3154 = vadd.f32 0.0, %v3153
    %3155 = vmatmul.bf16.gmra.mxu0 %v1078
    %v3156 = vpop.f32.mrf.mxu0
    %v3157 = vadd.f32 0.0, %v3156
    %v3158 = vpop.f32.mrf.mxu0
    %v3159 = vadd.f32 0.0, %v3158
    %3160 = vmatmul.bf16.gmra.mxu0 %v1081
    %v3161 = vpop.f32.mrf.mxu0
    %v3162 = vadd.f32 0.0, %v3161
    %v3163 = vpop.f32.mrf.mxu0
    %v3164 = vadd.f32 0.0, %v3163
    %3165 = vmatmul.bf16.gmra.mxu0 %v1084
    %v3166 = vpop.f32.mrf.mxu0
    %v3167 = vadd.f32 0.0, %v3166
    %v3168 = vpop.f32.mrf.mxu0
    %v3169 = vadd.f32 0.0, %v3168
    %3170 = vmatmul.bf16.gmra.mxu0 %v1087
    %v3171 = vpop.f32.mrf.mxu0
    %v3172 = vadd.f32 0.0, %v3171
    %v3173 = vpop.f32.mrf.mxu0
    %v3174 = vadd.f32 0.0, %v3173
    %3175 = vmatmul.bf16.gmra.mxu0 %v1090
    %v3176 = vpop.f32.mrf.mxu0
    %v3177 = vadd.f32 0.0, %v3176
    %v3178 = vpop.f32.mrf.mxu0
    %v3179 = vadd.f32 0.0, %v3178
    %3180 = vmatmul.bf16.gmra.mxu0 %v1093
    %v3181 = vpop.f32.mrf.mxu0
    %v3182 = vadd.f32 0.0, %v3181
    %v3183 = vpop.f32.mrf.mxu0
    %v3184 = vadd.f32 0.0, %v3183
    %3185 = vmatmul.bf16.gmra.mxu0 %v1096
    %v3186 = vpop.f32.mrf.mxu0
    %v3187 = vadd.f32 0.0, %v3186
    %v3188 = vpop.f32.mrf.mxu0
    %v3189 = vadd.f32 0.0, %v3188
    %3190 = vmatmul.bf16.gmra.mxu0 %v1099
    %v3191 = vpop.f32.mrf.mxu0
    %v3192 = vadd.f32 0.0, %v3191
    %v3193 = vpop.f32.mrf.mxu0
    %v3194 = vadd.f32 0.0, %v3193
    %3195 = vmatmul.bf16.gmra.mxu0 %v1102
    %v3196 = vpop.f32.mrf.mxu0
    %v3197 = vadd.f32 0.0, %v3196
    %v3198 = vpop.f32.mrf.mxu0
    %v3199 = vadd.f32 0.0, %v3198
    %3200 = vmatmul.bf16.gmra.mxu0 %v1105
    %v3201 = vpop.f32.mrf.mxu0
    %v3202 = vadd.f32 0.0, %v3201
    %v3203 = vpop.f32.mrf.mxu0
    %v3204 = vadd.f32 0.0, %v3203
    %3205 = vmatmul.bf16.gmra.mxu0 %v1108
    %v3206 = vpop.f32.mrf.mxu0
    %v3207 = vadd.f32 0.0, %v3206
    %v3208 = vpop.f32.mrf.mxu0
    %v3209 = vadd.f32 0.0, %v3208
    %3210 = vmatmul.bf16.gmra.mxu0 %v1111
    %v3211 = vpop.f32.mrf.mxu0
    %v3212 = vadd.f32 0.0, %v3211
    %v3213 = vpop.f32.mrf.mxu0
    %3214 = vdwg.mxu0
    %v3215 = vpack.c.bf16 %v3152, %v3152
    %v3216 = vpack.c.bf16 %v3154, %v3154
    %v3217 = vpack.c.bf16 %v3157, %v3157
    %v3218 = vpack.c.bf16 %v3159, %v3159
    %v3219 = vpack.c.bf16 %v3162, %v3162
    %v3220 = vpack.c.bf16 %v3164, %v3164
    %v3221 = vpack.c.bf16 %v3167, %v3167
    %v3222 = vpack.c.bf16 %v3169, %v3169
    %v3223 = vpack.c.bf16 %v3172, %v3172
    %v3224 = vpack.c.bf16 %v3174, %v3174
    %v3225 = vpack.c.bf16 %v3177, %v3177
    %v3226 = vpack.c.bf16 %v3179, %v3179
    %v3227 = vpack.c.bf16 %v3182, %v3182
    %v3228 = vpack.c.bf16 %v3184, %v3184
    %v3229 = vpack.c.bf16 %v3187, %v3187
    %v3230 = vpack.c.bf16 %v3189, %v3189
    %v3231 = vpack.c.bf16 %v3192, %v3192
    %v3232 = vpack.c.bf16 %v3194, %v3194
    %v3233 = vpack.c.bf16 %v3197, %v3197
    %v3234 = vpack.c.bf16 %v3199, %v3199
    %v3235 = vpack.c.bf16 %v3202, %v3202
    %v3236 = vpack.c.bf16 %v3204, %v3204
    %v3237 = vpack.c.bf16 %v3207, %v3207
    %v3238 = vpack.c.bf16 %v3209, %v3209
    %v3239 = vpack.c.bf16 %v3212, %v3212
    %3240 = vst.msk [vmem:[#allocation2 + $0x514] sm:$0xf] %vm1211, %v3215
    %3241 = vst.msk [vmem:[#allocation2 + $0x518] sm:$0xf] %vm1211, %v3216
    %3242 = vst.msk [vmem:[#allocation2 + $0x51c] sm:$0xf] %vm1211, %v3217
    %3243 = vst.msk [vmem:[#allocation2 + $0x520] sm:$0xf] %vm1211, %v3218
    %3244 = vst.msk [vmem:[#allocation2 + $0x524] sm:$0xf] %vm1211, %v3219
    %3245 = vst.msk [vmem:[#allocation2 + $0x528] sm:$0xf] %vm1211, %v3220
    %3246 = vst.msk [vmem:[#allocation2 + $0x52c] sm:$0xf] %vm1211, %v3221
    %3247 = vst.msk [vmem:[#allocation2 + $0x530] sm:$0xf] %vm1211, %v3222
    %3248 = vst.msk [vmem:[#allocation2 + $0x534] sm:$0xf] %vm1211, %v3223
    %3249 = vst.msk [vmem:[#allocation2 + $0x538] sm:$0xf] %vm1211, %v3224
    %3250 = vst.msk [vmem:[#allocation2 + $0x53c] sm:$0xf] %vm1211, %v3225
    %3251 = vst.msk [vmem:[#allocation2 + $0x540] sm:$0xf] %vm1211, %v3226
    %3252 = vst.msk [vmem:[#allocation2 + $0x544] sm:$0xf] %vm1211, %v3227
    %3253 = vst.msk [vmem:[#allocation2 + $0x548] sm:$0xf] %vm1211, %v3228
    %3254 = vst.msk [vmem:[#allocation2 + $0x54c] sm:$0xf] %vm1211, %v3229
    %3255 = vst.msk [vmem:[#allocation2 + $0x550] sm:$0xf] %vm1211, %v3230
    %3256 = vst.msk [vmem:[#allocation2 + $0x554] sm:$0xf] %vm1211, %v3231
    %3257 = vst.msk [vmem:[#allocation2 + $0x558] sm:$0xf] %vm1211, %v3232
    %3258 = vst.msk [vmem:[#allocation2 + $0x55c] sm:$0xf] %vm1211, %v3233
    %3259 = vst.msk [vmem:[#allocation2 + $0x560] sm:$0xf] %vm1211, %v3234
    %3260 = vst.msk [vmem:[#allocation2 + $0x564] sm:$0xf] %vm1211, %v3235
    %3261 = vst.msk [vmem:[#allocation2 + $0x568] sm:$0xf] %vm1211, %v3236
    %3262 = vst.msk [vmem:[#allocation2 + $0x56c] sm:$0xf] %vm1211, %v3237
    %3263 = vst.msk [vmem:[#allocation2 + $0x570] sm:$0xf] %vm1211, %v3238
    %3264 = vst.msk [vmem:[#allocation2 + $0x574] sm:$0xf] %vm1211, %v3239
    %s3265 = scalar_lea.vmem %s3, 448
    %v3266 = vld [vmem:[%s3265] sm:$0xf]
    %v3267 = vld [vmem:[%s3265 + $0x4] sm:$0xf]
    %v3268 = vld [vmem:[%s3265 + $0x8] sm:$0xf]
    %v3269 = vld [vmem:[%s3265 + $0xc] sm:$0xf]
    %v3270 = vld [vmem:[%s3265 + $0x10] sm:$0xf]
    %v3271 = vld [vmem:[%s3265 + $0x14] sm:$0xf]
    %v3272 = vld [vmem:[%s3265 + $0x18] sm:$0xf]
    %v3273 = vld [vmem:[%s3265 + $0x1c] sm:$0xf]
    %v3282 = vunpack.c.l.b16 %v3266
    %v3283 = vunpack.c.l.b16 %v3267
    %v3284 = vunpack.c.l.b16 %v3268
    %v3285 = vunpack.c.l.b16 %v3269
    %v3286 = vunpack.c.l.b16 %v3270
    %v3287 = vunpack.c.l.b16 %v3271
    %v3288 = vunpack.c.l.b16 %v3272
    %v3289 = vunpack.c.l.b16 %v3273
    %v3290 = vpack.c.b16 %v3283, %v3282
    %v3291 = vpack.c.b16 %v3285, %v3284
    %v3292 = vpack.c.b16 %v3287, %v3286
    %v3293 = vpack.c.b16 %v3289, %v3288
    %3298 = vmatpush.bf16.msra.mxu0 0
    %3299 = vmatpush.bf16.msra.mxu0 0
    %3300 = vmatpush.bf16.msra.mxu0 0
    %3301 = vmatpush.bf16.msra.mxu0 0
    %3302 = vmatpush.bf16.msra.mxu0 %v3293
    %3303 = vmatpush.bf16.msra.mxu0 %v3292
    %3304 = vmatpush.bf16.msra.mxu0 %v3291
    %3305 = vmatpush.bf16.msra.mxu0 %v3290
    %3306 = vmatmul.bf16.gmra.mxu0 %v1075
    %v3307 = vpop.f32.mrf.mxu0
    %v3308 = vadd.f32 0.0, %v3307
    %v3309 = vpop.f32.mrf.mxu0
    %v3310 = vadd.f32 0.0, %v3309
    %3311 = vmatmul.bf16.gmra.mxu0 %v1078
    %v3312 = vpop.f32.mrf.mxu0
    %v3313 = vadd.f32 0.0, %v3312
    %v3314 = vpop.f32.mrf.mxu0
    %v3315 = vadd.f32 0.0, %v3314
    %3316 = vmatmul.bf16.gmra.mxu0 %v1081
    %v3317 = vpop.f32.mrf.mxu0
    %v3318 = vadd.f32 0.0, %v3317
    %v3319 = vpop.f32.mrf.mxu0
    %v3320 = vadd.f32 0.0, %v3319
    %3321 = vmatmul.bf16.gmra.mxu0 %v1084
    %v3322 = vpop.f32.mrf.mxu0
    %v3323 = vadd.f32 0.0, %v3322
    %v3324 = vpop.f32.mrf.mxu0
    %v3325 = vadd.f32 0.0, %v3324
    %3326 = vmatmul.bf16.gmra.mxu0 %v1087
    %v3327 = vpop.f32.mrf.mxu0
    %v3328 = vadd.f32 0.0, %v3327
    %v3329 = vpop.f32.mrf.mxu0
    %v3330 = vadd.f32 0.0, %v3329
    %3331 = vmatmul.bf16.gmra.mxu0 %v1090
    %v3332 = vpop.f32.mrf.mxu0
    %v3333 = vadd.f32 0.0, %v3332
    %v3334 = vpop.f32.mrf.mxu0
    %v3335 = vadd.f32 0.0, %v3334
    %3336 = vmatmul.bf16.gmra.mxu0 %v1093
    %v3337 = vpop.f32.mrf.mxu0
    %v3338 = vadd.f32 0.0, %v3337
    %v3339 = vpop.f32.mrf.mxu0
    %v3340 = vadd.f32 0.0, %v3339
    %3341 = vmatmul.bf16.gmra.mxu0 %v1096
    %v3342 = vpop.f32.mrf.mxu0
    %v3343 = vadd.f32 0.0, %v3342
    %v3344 = vpop.f32.mrf.mxu0
    %v3345 = vadd.f32 0.0, %v3344
    %3346 = vmatmul.bf16.gmra.mxu0 %v1099
    %v3347 = vpop.f32.mrf.mxu0
    %v3348 = vadd.f32 0.0, %v3347
    %v3349 = vpop.f32.mrf.mxu0
    %v3350 = vadd.f32 0.0, %v3349
    %3351 = vmatmul.bf16.gmra.mxu0 %v1102
    %v3352 = vpop.f32.mrf.mxu0
    %v3353 = vadd.f32 0.0, %v3352
    %v3354 = vpop.f32.mrf.mxu0
    %v3355 = vadd.f32 0.0, %v3354
    %3356 = vmatmul.bf16.gmra.mxu0 %v1105
    %v3357 = vpop.f32.mrf.mxu0
    %v3358 = vadd.f32 0.0, %v3357
    %v3359 = vpop.f32.mrf.mxu0
    %v3360 = vadd.f32 0.0, %v3359
    %3361 = vmatmul.bf16.gmra.mxu0 %v1108
    %v3362 = vpop.f32.mrf.mxu0
    %v3363 = vadd.f32 0.0, %v3362
    %v3364 = vpop.f32.mrf.mxu0
    %v3365 = vadd.f32 0.0, %v3364
    %3366 = vmatmul.bf16.gmra.mxu0 %v1111
    %v3367 = vpop.f32.mrf.mxu0
    %v3368 = vadd.f32 0.0, %v3367
    %v3369 = vpop.f32.mrf.mxu0
    %3370 = vdwg.mxu0
    %v3371 = vpack.c.bf16 %v3308, %v3308
    %v3372 = vpack.c.bf16 %v3310, %v3310
    %v3373 = vpack.c.bf16 %v3313, %v3313
    %v3374 = vpack.c.bf16 %v3315, %v3315
    %v3375 = vpack.c.bf16 %v3318, %v3318
    %v3376 = vpack.c.bf16 %v3320, %v3320
    %v3377 = vpack.c.bf16 %v3323, %v3323
    %v3378 = vpack.c.bf16 %v3325, %v3325
    %v3379 = vpack.c.bf16 %v3328, %v3328
    %v3380 = vpack.c.bf16 %v3330, %v3330
    %v3381 = vpack.c.bf16 %v3333, %v3333
    %v3382 = vpack.c.bf16 %v3335, %v3335
    %v3383 = vpack.c.bf16 %v3338, %v3338
    %v3384 = vpack.c.bf16 %v3340, %v3340
    %v3385 = vpack.c.bf16 %v3343, %v3343
    %v3386 = vpack.c.bf16 %v3345, %v3345
    %v3387 = vpack.c.bf16 %v3348, %v3348
    %v3388 = vpack.c.bf16 %v3350, %v3350
    %v3389 = vpack.c.bf16 %v3353, %v3353
    %v3390 = vpack.c.bf16 %v3355, %v3355
    %v3391 = vpack.c.bf16 %v3358, %v3358
    %v3392 = vpack.c.bf16 %v3360, %v3360
    %v3393 = vpack.c.bf16 %v3363, %v3363
    %v3394 = vpack.c.bf16 %v3365, %v3365
    %v3395 = vpack.c.bf16 %v3368, %v3368
    %3396 = vst.msk [vmem:[#allocation2 + $0x578] sm:$0xf] %vm1211, %v3371
    %3397 = vst.msk [vmem:[#allocation2 + $0x57c] sm:$0xf] %vm1211, %v3372
    %3398 = vst.msk [vmem:[#allocation2 + $0x580] sm:$0xf] %vm1211, %v3373
    %3399 = vst.msk [vmem:[#allocation2 + $0x584] sm:$0xf] %vm1211, %v3374
    %3400 = vst.msk [vmem:[#allocation2 + $0x588] sm:$0xf] %vm1211, %v3375
    %3401 = vst.msk [vmem:[#allocation2 + $0x58c] sm:$0xf] %vm1211, %v3376
    %3402 = vst.msk [vmem:[#allocation2 + $0x590] sm:$0xf] %vm1211, %v3377
    %3403 = vst.msk [vmem:[#allocation2 + $0x594] sm:$0xf] %vm1211, %v3378
    %3404 = vst.msk [vmem:[#allocation2 + $0x598] sm:$0xf] %vm1211, %v3379
    %3405 = vst.msk [vmem:[#allocation2 + $0x59c] sm:$0xf] %vm1211, %v3380
    %3406 = vst.msk [vmem:[#allocation2 + $0x5a0] sm:$0xf] %vm1211, %v3381
    %3407 = vst.msk [vmem:[#allocation2 + $0x5a4] sm:$0xf] %vm1211, %v3382
    %3408 = vst.msk [vmem:[#allocation2 + $0x5a8] sm:$0xf] %vm1211, %v3383
    %3409 = vst.msk [vmem:[#allocation2 + $0x5ac] sm:$0xf] %vm1211, %v3384
    %3410 = vst.msk [vmem:[#allocation2 + $0x5b0] sm:$0xf] %vm1211, %v3385
    %3411 = vst.msk [vmem:[#allocation2 + $0x5b4] sm:$0xf] %vm1211, %v3386
    %3412 = vst.msk [vmem:[#allocation2 + $0x5b8] sm:$0xf] %vm1211, %v3387
    %3413 = vst.msk [vmem:[#allocation2 + $0x5bc] sm:$0xf] %vm1211, %v3388
    %3414 = vst.msk [vmem:[#allocation2 + $0x5c0] sm:$0xf] %vm1211, %v3389
    %3415 = vst.msk [vmem:[#allocation2 + $0x5c4] sm:$0xf] %vm1211, %v3390
    %3416 = vst.msk [vmem:[#allocation2 + $0x5c8] sm:$0xf] %vm1211, %v3391
    %3417 = vst.msk [vmem:[#allocation2 + $0x5cc] sm:$0xf] %vm1211, %v3392
    %3418 = vst.msk [vmem:[#allocation2 + $0x5d0] sm:$0xf] %vm1211, %v3393
    %3419 = vst.msk [vmem:[#allocation2 + $0x5d4] sm:$0xf] %vm1211, %v3394
    %3420 = vst.msk [vmem:[#allocation2 + $0x5d8] sm:$0xf] %vm1211, %v3395
    %s3421 = scalar_lea.vmem %s3, 480
    %v3422 = vld [vmem:[%s3421] sm:$0xf]
    %v3423 = vld [vmem:[%s3421 + $0x4] sm:$0xf]
    %v3424 = vld [vmem:[%s3421 + $0x8] sm:$0xf]
    %v3425 = vld [vmem:[%s3421 + $0xc] sm:$0xf]
    %v3426 = vld [vmem:[%s3421 + $0x10] sm:$0xf]
    %v3427 = vld [vmem:[%s3421 + $0x14] sm:$0xf]
    %v3428 = vld [vmem:[%s3421 + $0x18] sm:$0xf]
    %v3429 = vld [vmem:[%s3421 + $0x1c] sm:$0xf]
    %v3438 = vunpack.c.l.b16 %v3422
    %v3439 = vunpack.c.l.b16 %v3423
    %v3440 = vunpack.c.l.b16 %v3424
    %v3441 = vunpack.c.l.b16 %v3425
    %v3442 = vunpack.c.l.b16 %v3426
    %v3443 = vunpack.c.l.b16 %v3427
    %v3444 = vunpack.c.l.b16 %v3428
    %v3445 = vunpack.c.l.b16 %v3429
    %v3446 = vpack.c.b16 %v3439, %v3438
    %v3447 = vpack.c.b16 %v3441, %v3440
    %v3448 = vpack.c.b16 %v3443, %v3442
    %v3449 = vpack.c.b16 %v3445, %v3444
    %3454 = vmatpush.bf16.msra.mxu0 0
    %3455 = vmatpush.bf16.msra.mxu0 0
    %3456 = vmatpush.bf16.msra.mxu0 0
    %3457 = vmatpush.bf16.msra.mxu0 0
    %3458 = vmatpush.bf16.msra.mxu0 %v3449
    %3459 = vmatpush.bf16.msra.mxu0 %v3448
    %3460 = vmatpush.bf16.msra.mxu0 %v3447
    %3461 = vmatpush.bf16.msra.mxu0 %v3446
    %3462 = vmatmul.bf16.gmra.mxu0 %v1075
    %v3463 = vpop.f32.mrf.mxu0
    %v3464 = vadd.f32 0.0, %v3463
    %v3465 = vpop.f32.mrf.mxu0
    %v3466 = vadd.f32 0.0, %v3465
    %3467 = vmatmul.bf16.gmra.mxu0 %v1078
    %v3468 = vpop.f32.mrf.mxu0
    %v3469 = vadd.f32 0.0, %v3468
    %v3470 = vpop.f32.mrf.mxu0
    %v3471 = vadd.f32 0.0, %v3470
    %3472 = vmatmul.bf16.gmra.mxu0 %v1081
    %v3473 = vpop.f32.mrf.mxu0
    %v3474 = vadd.f32 0.0, %v3473
    %v3475 = vpop.f32.mrf.mxu0
    %v3476 = vadd.f32 0.0, %v3475
    %3477 = vmatmul.bf16.gmra.mxu0 %v1084
    %v3478 = vpop.f32.mrf.mxu0
    %v3479 = vadd.f32 0.0, %v3478
    %v3480 = vpop.f32.mrf.mxu0
    %v3481 = vadd.f32 0.0, %v3480
    %3482 = vmatmul.bf16.gmra.mxu0 %v1087
    %v3483 = vpop.f32.mrf.mxu0
    %v3484 = vadd.f32 0.0, %v3483
    %v3485 = vpop.f32.mrf.mxu0
    %v3486 = vadd.f32 0.0, %v3485
    %3487 = vmatmul.bf16.gmra.mxu0 %v1090
    %v3488 = vpop.f32.mrf.mxu0
    %v3489 = vadd.f32 0.0, %v3488
    %v3490 = vpop.f32.mrf.mxu0
    %v3491 = vadd.f32 0.0, %v3490
    %3492 = vmatmul.bf16.gmra.mxu0 %v1093
    %v3493 = vpop.f32.mrf.mxu0
    %v3494 = vadd.f32 0.0, %v3493
    %v3495 = vpop.f32.mrf.mxu0
    %v3496 = vadd.f32 0.0, %v3495
    %3497 = vmatmul.bf16.gmra.mxu0 %v1096
    %v3498 = vpop.f32.mrf.mxu0
    %v3499 = vadd.f32 0.0, %v3498
    %v3500 = vpop.f32.mrf.mxu0
    %v3501 = vadd.f32 0.0, %v3500
    %3502 = vmatmul.bf16.gmra.mxu0 %v1099
    %v3503 = vpop.f32.mrf.mxu0
    %v3504 = vadd.f32 0.0, %v3503
    %v3505 = vpop.f32.mrf.mxu0
    %v3506 = vadd.f32 0.0, %v3505
    %3507 = vmatmul.bf16.gmra.mxu0 %v1102
    %v3508 = vpop.f32.mrf.mxu0
    %v3509 = vadd.f32 0.0, %v3508
    %v3510 = vpop.f32.mrf.mxu0
    %v3511 = vadd.f32 0.0, %v3510
    %3512 = vmatmul.bf16.gmra.mxu0 %v1105
    %v3513 = vpop.f32.mrf.mxu0
    %v3514 = vadd.f32 0.0, %v3513
    %v3515 = vpop.f32.mrf.mxu0
    %v3516 = vadd.f32 0.0, %v3515
    %3517 = vmatmul.bf16.gmra.mxu0 %v1108
    %v3518 = vpop.f32.mrf.mxu0
    %v3519 = vadd.f32 0.0, %v3518
    %v3520 = vpop.f32.mrf.mxu0
    %v3521 = vadd.f32 0.0, %v3520
    %3522 = vmatmul.bf16.gmra.mxu0 %v1111
    %v3523 = vpop.f32.mrf.mxu0
    %v3524 = vadd.f32 0.0, %v3523
    %v3525 = vpop.f32.mrf.mxu0
    %3526 = vdwg.mxu0
    %v3527 = vpack.c.bf16 %v3464, %v3464
    %v3528 = vpack.c.bf16 %v3466, %v3466
    %v3529 = vpack.c.bf16 %v3469, %v3469
    %v3530 = vpack.c.bf16 %v3471, %v3471
    %v3531 = vpack.c.bf16 %v3474, %v3474
    %v3532 = vpack.c.bf16 %v3476, %v3476
    %v3533 = vpack.c.bf16 %v3479, %v3479
    %v3534 = vpack.c.bf16 %v3481, %v3481
    %v3535 = vpack.c.bf16 %v3484, %v3484
    %v3536 = vpack.c.bf16 %v3486, %v3486
    %v3537 = vpack.c.bf16 %v3489, %v3489
    %v3538 = vpack.c.bf16 %v3491, %v3491
    %v3539 = vpack.c.bf16 %v3494, %v3494
    %v3540 = vpack.c.bf16 %v3496, %v3496
    %v3541 = vpack.c.bf16 %v3499, %v3499
    %v3542 = vpack.c.bf16 %v3501, %v3501
    %v3543 = vpack.c.bf16 %v3504, %v3504
    %v3544 = vpack.c.bf16 %v3506, %v3506
    %v3545 = vpack.c.bf16 %v3509, %v3509
    %v3546 = vpack.c.bf16 %v3511, %v3511
    %v3547 = vpack.c.bf16 %v3514, %v3514
    %v3548 = vpack.c.bf16 %v3516, %v3516
    %v3549 = vpack.c.bf16 %v3519, %v3519
    %v3550 = vpack.c.bf16 %v3521, %v3521
    %v3551 = vpack.c.bf16 %v3524, %v3524
    %3552 = vst.msk [vmem:[#allocation2 + $0x5dc] sm:$0xf] %vm1211, %v3527
    %3553 = vst.msk [vmem:[#allocation2 + $0x5e0] sm:$0xf] %vm1211, %v3528
    %3554 = vst.msk [vmem:[#allocation2 + $0x5e4] sm:$0xf] %vm1211, %v3529
    %3555 = vst.msk [vmem:[#allocation2 + $0x5e8] sm:$0xf] %vm1211, %v3530
    %3556 = vst.msk [vmem:[#allocation2 + $0x5ec] sm:$0xf] %vm1211, %v3531
    %3557 = vst.msk [vmem:[#allocation2 + $0x5f0] sm:$0xf] %vm1211, %v3532
    %3558 = vst.msk [vmem:[#allocation2 + $0x5f4] sm:$0xf] %vm1211, %v3533
    %3559 = vst.msk [vmem:[#allocation2 + $0x5f8] sm:$0xf] %vm1211, %v3534
    %3560 = vst.msk [vmem:[#allocation2 + $0x5fc] sm:$0xf] %vm1211, %v3535
    %3561 = vst.msk [vmem:[#allocation2 + $0x600] sm:$0xf] %vm1211, %v3536
    %3562 = vst.msk [vmem:[#allocation2 + $0x604] sm:$0xf] %vm1211, %v3537
    %3563 = vst.msk [vmem:[#allocation2 + $0x608] sm:$0xf] %vm1211, %v3538
    %3564 = vst.msk [vmem:[#allocation2 + $0x60c] sm:$0xf] %vm1211, %v3539
    %3565 = vst.msk [vmem:[#allocation2 + $0x610] sm:$0xf] %vm1211, %v3540
    %3566 = vst.msk [vmem:[#allocation2 + $0x614] sm:$0xf] %vm1211, %v3541
    %3567 = vst.msk [vmem:[#allocation2 + $0x618] sm:$0xf] %vm1211, %v3542
    %3568 = vst.msk [vmem:[#allocation2 + $0x61c] sm:$0xf] %vm1211, %v3543
    %3569 = vst.msk [vmem:[#allocation2 + $0x620] sm:$0xf] %vm1211, %v3544
    %3570 = vst.msk [vmem:[#allocation2 + $0x624] sm:$0xf] %vm1211, %v3545
    %3571 = vst.msk [vmem:[#allocation2 + $0x628] sm:$0xf] %vm1211, %v3546
    %3572 = vst.msk [vmem:[#allocation2 + $0x62c] sm:$0xf] %vm1211, %v3547
    %3573 = vst.msk [vmem:[#allocation2 + $0x630] sm:$0xf] %vm1211, %v3548
    %3574 = vst.msk [vmem:[#allocation2 + $0x634] sm:$0xf] %vm1211, %v3549
    %3575 = vst.msk [vmem:[#allocation2 + $0x638] sm:$0xf] %vm1211, %v3550
    %3576 = vst.msk [vmem:[#allocation2 + $0x63c] sm:$0xf] %vm1211, %v3551
    %s3577 = scalar_lea.vmem %s3, 512
    %v3578 = vld [vmem:[%s3577] sm:$0xf]
    %v3579 = vld [vmem:[%s3577 + $0x4] sm:$0xf]
    %v3580 = vld [vmem:[%s3577 + $0x8] sm:$0xf]
    %v3581 = vld [vmem:[%s3577 + $0xc] sm:$0xf]
    %v3582 = vld [vmem:[%s3577 + $0x10] sm:$0xf]
    %v3583 = vld [vmem:[%s3577 + $0x14] sm:$0xf]
    %v3584 = vld [vmem:[%s3577 + $0x18] sm:$0xf]
    %v3585 = vld [vmem:[%s3577 + $0x1c] sm:$0xf]
    %v3594 = vunpack.c.l.b16 %v3578
    %v3595 = vunpack.c.l.b16 %v3579
    %v3596 = vunpack.c.l.b16 %v3580
    %v3597 = vunpack.c.l.b16 %v3581
    %v3598 = vunpack.c.l.b16 %v3582
    %v3599 = vunpack.c.l.b16 %v3583
    %v3600 = vunpack.c.l.b16 %v3584
    %v3601 = vunpack.c.l.b16 %v3585
    %v3602 = vpack.c.b16 %v3595, %v3594
    %v3603 = vpack.c.b16 %v3597, %v3596
    %v3604 = vpack.c.b16 %v3599, %v3598
    %v3605 = vpack.c.b16 %v3601, %v3600
    %3610 = vmatpush.bf16.msra.mxu0 0
    %3611 = vmatpush.bf16.msra.mxu0 0
    %3612 = vmatpush.bf16.msra.mxu0 0
    %3613 = vmatpush.bf16.msra.mxu0 0
    %3614 = vmatpush.bf16.msra.mxu0 %v3605
    %3615 = vmatpush.bf16.msra.mxu0 %v3604
    %3616 = vmatpush.bf16.msra.mxu0 %v3603
    %3617 = vmatpush.bf16.msra.mxu0 %v3602
    %3618 = vmatmul.bf16.gmra.mxu0 %v1075
    %v3619 = vpop.f32.mrf.mxu0
    %v3620 = vadd.f32 0.0, %v3619
    %v3621 = vpop.f32.mrf.mxu0
    %v3622 = vadd.f32 0.0, %v3621
    %3623 = vmatmul.bf16.gmra.mxu0 %v1078
    %v3624 = vpop.f32.mrf.mxu0
    %v3625 = vadd.f32 0.0, %v3624
    %v3626 = vpop.f32.mrf.mxu0
    %v3627 = vadd.f32 0.0, %v3626
    %3628 = vmatmul.bf16.gmra.mxu0 %v1081
    %v3629 = vpop.f32.mrf.mxu0
    %v3630 = vadd.f32 0.0, %v3629
    %v3631 = vpop.f32.mrf.mxu0
    %v3632 = vadd.f32 0.0, %v3631
    %3633 = vmatmul.bf16.gmra.mxu0 %v1084
    %v3634 = vpop.f32.mrf.mxu0
    %v3635 = vadd.f32 0.0, %v3634
    %v3636 = vpop.f32.mrf.mxu0
    %v3637 = vadd.f32 0.0, %v3636
    %3638 = vmatmul.bf16.gmra.mxu0 %v1087
    %v3639 = vpop.f32.mrf.mxu0
    %v3640 = vadd.f32 0.0, %v3639
    %v3641 = vpop.f32.mrf.mxu0
    %v3642 = vadd.f32 0.0, %v3641
    %3643 = vmatmul.bf16.gmra.mxu0 %v1090
    %v3644 = vpop.f32.mrf.mxu0
    %v3645 = vadd.f32 0.0, %v3644
    %v3646 = vpop.f32.mrf.mxu0
    %v3647 = vadd.f32 0.0, %v3646
    %3648 = vmatmul.bf16.gmra.mxu0 %v1093
    %v3649 = vpop.f32.mrf.mxu0
    %v3650 = vadd.f32 0.0, %v3649
    %v3651 = vpop.f32.mrf.mxu0
    %v3652 = vadd.f32 0.0, %v3651
    %3653 = vmatmul.bf16.gmra.mxu0 %v1096
    %v3654 = vpop.f32.mrf.mxu0
    %v3655 = vadd.f32 0.0, %v3654
    %v3656 = vpop.f32.mrf.mxu0
    %v3657 = vadd.f32 0.0, %v3656
    %3658 = vmatmul.bf16.gmra.mxu0 %v1099
    %v3659 = vpop.f32.mrf.mxu0
    %v3660 = vadd.f32 0.0, %v3659
    %v3661 = vpop.f32.mrf.mxu0
    %v3662 = vadd.f32 0.0, %v3661
    %3663 = vmatmul.bf16.gmra.mxu0 %v1102
    %v3664 = vpop.f32.mrf.mxu0
    %v3665 = vadd.f32 0.0, %v3664
    %v3666 = vpop.f32.mrf.mxu0
    %v3667 = vadd.f32 0.0, %v3666
    %3668 = vmatmul.bf16.gmra.mxu0 %v1105
    %v3669 = vpop.f32.mrf.mxu0
    %v3670 = vadd.f32 0.0, %v3669
    %v3671 = vpop.f32.mrf.mxu0
    %v3672 = vadd.f32 0.0, %v3671
    %3673 = vmatmul.bf16.gmra.mxu0 %v1108
    %v3674 = vpop.f32.mrf.mxu0
    %v3675 = vadd.f32 0.0, %v3674
    %v3676 = vpop.f32.mrf.mxu0
    %v3677 = vadd.f32 0.0, %v3676
    %3678 = vmatmul.bf16.gmra.mxu0 %v1111
    %v3679 = vpop.f32.mrf.mxu0
    %v3680 = vadd.f32 0.0, %v3679
    %v3681 = vpop.f32.mrf.mxu0
    %3682 = vdwg.mxu0
    %v3683 = vpack.c.bf16 %v3620, %v3620
    %v3684 = vpack.c.bf16 %v3622, %v3622
    %v3685 = vpack.c.bf16 %v3625, %v3625
    %v3686 = vpack.c.bf16 %v3627, %v3627
    %v3687 = vpack.c.bf16 %v3630, %v3630
    %v3688 = vpack.c.bf16 %v3632, %v3632
    %v3689 = vpack.c.bf16 %v3635, %v3635
    %v3690 = vpack.c.bf16 %v3637, %v3637
    %v3691 = vpack.c.bf16 %v3640, %v3640
    %v3692 = vpack.c.bf16 %v3642, %v3642
    %v3693 = vpack.c.bf16 %v3645, %v3645
    %v3694 = vpack.c.bf16 %v3647, %v3647
    %v3695 = vpack.c.bf16 %v3650, %v3650
    %v3696 = vpack.c.bf16 %v3652, %v3652
    %v3697 = vpack.c.bf16 %v3655, %v3655
    %v3698 = vpack.c.bf16 %v3657, %v3657
    %v3699 = vpack.c.bf16 %v3660, %v3660
    %v3700 = vpack.c.bf16 %v3662, %v3662
    %v3701 = vpack.c.bf16 %v3665, %v3665
    %v3702 = vpack.c.bf16 %v3667, %v3667
    %v3703 = vpack.c.bf16 %v3670, %v3670
    %v3704 = vpack.c.bf16 %v3672, %v3672
    %v3705 = vpack.c.bf16 %v3675, %v3675
    %v3706 = vpack.c.bf16 %v3677, %v3677
    %v3707 = vpack.c.bf16 %v3680, %v3680
    %3708 = vst.msk [vmem:[#allocation2 + $0x640] sm:$0xf] %vm1211, %v3683
    %3709 = vst.msk [vmem:[#allocation2 + $0x644] sm:$0xf] %vm1211, %v3684
    %3710 = vst.msk [vmem:[#allocation2 + $0x648] sm:$0xf] %vm1211, %v3685
    %3711 = vst.msk [vmem:[#allocation2 + $0x64c] sm:$0xf] %vm1211, %v3686
    %3712 = vst.msk [vmem:[#allocation2 + $0x650] sm:$0xf] %vm1211, %v3687
    %3713 = vst.msk [vmem:[#allocation2 + $0x654] sm:$0xf] %vm1211, %v3688
    %3714 = vst.msk [vmem:[#allocation2 + $0x658] sm:$0xf] %vm1211, %v3689
    %3715 = vst.msk [vmem:[#allocation2 + $0x65c] sm:$0xf] %vm1211, %v3690
    %3716 = vst.msk [vmem:[#allocation2 + $0x660] sm:$0xf] %vm1211, %v3691
    %3717 = vst.msk [vmem:[#allocation2 + $0x664] sm:$0xf] %vm1211, %v3692
    %3718 = vst.msk [vmem:[#allocation2 + $0x668] sm:$0xf] %vm1211, %v3693
    %3719 = vst.msk [vmem:[#allocation2 + $0x66c] sm:$0xf] %vm1211, %v3694
    %3720 = vst.msk [vmem:[#allocation2 + $0x670] sm:$0xf] %vm1211, %v3695
    %3721 = vst.msk [vmem:[#allocation2 + $0x674] sm:$0xf] %vm1211, %v3696
    %3722 = vst.msk [vmem:[#allocation2 + $0x678] sm:$0xf] %vm1211, %v3697
    %3723 = vst.msk [vmem:[#allocation2 + $0x67c] sm:$0xf] %vm1211, %v3698
    %3724 = vst.msk [vmem:[#allocation2 + $0x680] sm:$0xf] %vm1211, %v3699
    %3725 = vst.msk [vmem:[#allocation2 + $0x684] sm:$0xf] %vm1211, %v3700
    %3726 = vst.msk [vmem:[#allocation2 + $0x688] sm:$0xf] %vm1211, %v3701
    %3727 = vst.msk [vmem:[#allocation2 + $0x68c] sm:$0xf] %vm1211, %v3702
    %3728 = vst.msk [vmem:[#allocation2 + $0x690] sm:$0xf] %vm1211, %v3703
    %3729 = vst.msk [vmem:[#allocation2 + $0x694] sm:$0xf] %vm1211, %v3704
    %3730 = vst.msk [vmem:[#allocation2 + $0x698] sm:$0xf] %vm1211, %v3705
    %3731 = vst.msk [vmem:[#allocation2 + $0x69c] sm:$0xf] %vm1211, %v3706
    %3732 = vst.msk [vmem:[#allocation2 + $0x6a0] sm:$0xf] %vm1211, %v3707
    %s3733 = scalar_lea.vmem %s3, 544
    %v3734 = vld [vmem:[%s3733] sm:$0xf]
    %v3735 = vld [vmem:[%s3733 + $0x4] sm:$0xf]
    %v3736 = vld [vmem:[%s3733 + $0x8] sm:$0xf]
    %v3737 = vld [vmem:[%s3733 + $0xc] sm:$0xf]
    %v3738 = vld [vmem:[%s3733 + $0x10] sm:$0xf]
    %v3739 = vld [vmem:[%s3733 + $0x14] sm:$0xf]
    %v3740 = vld [vmem:[%s3733 + $0x18] sm:$0xf]
    %v3741 = vld [vmem:[%s3733 + $0x1c] sm:$0xf]
    %v3750 = vunpack.c.l.b16 %v3734
    %v3751 = vunpack.c.l.b16 %v3735
    %v3752 = vunpack.c.l.b16 %v3736
    %v3753 = vunpack.c.l.b16 %v3737
    %v3754 = vunpack.c.l.b16 %v3738
    %v3755 = vunpack.c.l.b16 %v3739
    %v3756 = vunpack.c.l.b16 %v3740
    %v3757 = vunpack.c.l.b16 %v3741
    %v3758 = vpack.c.b16 %v3751, %v3750
    %v3759 = vpack.c.b16 %v3753, %v3752
    %v3760 = vpack.c.b16 %v3755, %v3754
    %v3761 = vpack.c.b16 %v3757, %v3756
    %3766 = vmatpush.bf16.msra.mxu0 0
    %3767 = vmatpush.bf16.msra.mxu0 0
    %3768 = vmatpush.bf16.msra.mxu0 0
    %3769 = vmatpush.bf16.msra.mxu0 0
    %3770 = vmatpush.bf16.msra.mxu0 %v3761
    %3771 = vmatpush.bf16.msra.mxu0 %v3760
    %3772 = vmatpush.bf16.msra.mxu0 %v3759
    %3773 = vmatpush.bf16.msra.mxu0 %v3758
    %3774 = vmatmul.bf16.gmra.mxu0 %v1075
    %v3775 = vpop.f32.mrf.mxu0
    %v3776 = vadd.f32 0.0, %v3775
    %v3777 = vpop.f32.mrf.mxu0
    %v3778 = vadd.f32 0.0, %v3777
    %3779 = vmatmul.bf16.gmra.mxu0 %v1078
    %v3780 = vpop.f32.mrf.mxu0
    %v3781 = vadd.f32 0.0, %v3780
    %v3782 = vpop.f32.mrf.mxu0
    %v3783 = vadd.f32 0.0, %v3782
    %3784 = vmatmul.bf16.gmra.mxu0 %v1081
    %v3785 = vpop.f32.mrf.mxu0
    %v3786 = vadd.f32 0.0, %v3785
    %v3787 = vpop.f32.mrf.mxu0
    %v3788 = vadd.f32 0.0, %v3787
    %3789 = vmatmul.bf16.gmra.mxu0 %v1084
    %v3790 = vpop.f32.mrf.mxu0
    %v3791 = vadd.f32 0.0, %v3790
    %v3792 = vpop.f32.mrf.mxu0
    %v3793 = vadd.f32 0.0, %v3792
    %3794 = vmatmul.bf16.gmra.mxu0 %v1087
    %v3795 = vpop.f32.mrf.mxu0
    %v3796 = vadd.f32 0.0, %v3795
    %v3797 = vpop.f32.mrf.mxu0
    %v3798 = vadd.f32 0.0, %v3797
    %3799 = vmatmul.bf16.gmra.mxu0 %v1090
    %v3800 = vpop.f32.mrf.mxu0
    %v3801 = vadd.f32 0.0, %v3800
    %v3802 = vpop.f32.mrf.mxu0
    %v3803 = vadd.f32 0.0, %v3802
    %3804 = vmatmul.bf16.gmra.mxu0 %v1093
    %v3805 = vpop.f32.mrf.mxu0
    %v3806 = vadd.f32 0.0, %v3805
    %v3807 = vpop.f32.mrf.mxu0
    %v3808 = vadd.f32 0.0, %v3807
    %3809 = vmatmul.bf16.gmra.mxu0 %v1096
    %v3810 = vpop.f32.mrf.mxu0
    %v3811 = vadd.f32 0.0, %v3810
    %v3812 = vpop.f32.mrf.mxu0
    %v3813 = vadd.f32 0.0, %v3812
    %3814 = vmatmul.bf16.gmra.mxu0 %v1099
    %v3815 = vpop.f32.mrf.mxu0
    %v3816 = vadd.f32 0.0, %v3815
    %v3817 = vpop.f32.mrf.mxu0
    %v3818 = vadd.f32 0.0, %v3817
    %3819 = vmatmul.bf16.gmra.mxu0 %v1102
    %v3820 = vpop.f32.mrf.mxu0
    %v3821 = vadd.f32 0.0, %v3820
    %v3822 = vpop.f32.mrf.mxu0
    %v3823 = vadd.f32 0.0, %v3822
    %3824 = vmatmul.bf16.gmra.mxu0 %v1105
    %v3825 = vpop.f32.mrf.mxu0
    %v3826 = vadd.f32 0.0, %v3825
    %v3827 = vpop.f32.mrf.mxu0
    %v3828 = vadd.f32 0.0, %v3827
    %3829 = vmatmul.bf16.gmra.mxu0 %v1108
    %v3830 = vpop.f32.mrf.mxu0
    %v3831 = vadd.f32 0.0, %v3830
    %v3832 = vpop.f32.mrf.mxu0
    %v3833 = vadd.f32 0.0, %v3832
    %3834 = vmatmul.bf16.gmra.mxu0 %v1111
    %v3835 = vpop.f32.mrf.mxu0
    %v3836 = vadd.f32 0.0, %v3835
    %v3837 = vpop.f32.mrf.mxu0
    %3838 = vdwg.mxu0
    %v3839 = vpack.c.bf16 %v3776, %v3776
    %v3840 = vpack.c.bf16 %v3778, %v3778
    %v3841 = vpack.c.bf16 %v3781, %v3781
    %v3842 = vpack.c.bf16 %v3783, %v3783
    %v3843 = vpack.c.bf16 %v3786, %v3786
    %v3844 = vpack.c.bf16 %v3788, %v3788
    %v3845 = vpack.c.bf16 %v3791, %v3791
    %v3846 = vpack.c.bf16 %v3793, %v3793
    %v3847 = vpack.c.bf16 %v3796, %v3796
    %v3848 = vpack.c.bf16 %v3798, %v3798
    %v3849 = vpack.c.bf16 %v3801, %v3801
    %v3850 = vpack.c.bf16 %v3803, %v3803
    %v3851 = vpack.c.bf16 %v3806, %v3806
    %v3852 = vpack.c.bf16 %v3808, %v3808
    %v3853 = vpack.c.bf16 %v3811, %v3811
    %v3854 = vpack.c.bf16 %v3813, %v3813
    %v3855 = vpack.c.bf16 %v3816, %v3816
    %v3856 = vpack.c.bf16 %v3818, %v3818
    %v3857 = vpack.c.bf16 %v3821, %v3821
    %v3858 = vpack.c.bf16 %v3823, %v3823
    %v3859 = vpack.c.bf16 %v3826, %v3826
    %v3860 = vpack.c.bf16 %v3828, %v3828
    %v3861 = vpack.c.bf16 %v3831, %v3831
    %v3862 = vpack.c.bf16 %v3833, %v3833
    %v3863 = vpack.c.bf16 %v3836, %v3836
    %3864 = vst.msk [vmem:[#allocation2 + $0x6a4] sm:$0xf] %vm1211, %v3839
    %3865 = vst.msk [vmem:[#allocation2 + $0x6a8] sm:$0xf] %vm1211, %v3840
    %3866 = vst.msk [vmem:[#allocation2 + $0x6ac] sm:$0xf] %vm1211, %v3841
    %3867 = vst.msk [vmem:[#allocation2 + $0x6b0] sm:$0xf] %vm1211, %v3842
    %3868 = vst.msk [vmem:[#allocation2 + $0x6b4] sm:$0xf] %vm1211, %v3843
    %3869 = vst.msk [vmem:[#allocation2 + $0x6b8] sm:$0xf] %vm1211, %v3844
    %3870 = vst.msk [vmem:[#allocation2 + $0x6bc] sm:$0xf] %vm1211, %v3845
    %3871 = vst.msk [vmem:[#allocation2 + $0x6c0] sm:$0xf] %vm1211, %v3846
    %3872 = vst.msk [vmem:[#allocation2 + $0x6c4] sm:$0xf] %vm1211, %v3847
    %3873 = vst.msk [vmem:[#allocation2 + $0x6c8] sm:$0xf] %vm1211, %v3848
    %3874 = vst.msk [vmem:[#allocation2 + $0x6cc] sm:$0xf] %vm1211, %v3849
    %3875 = vst.msk [vmem:[#allocation2 + $0x6d0] sm:$0xf] %vm1211, %v3850
    %3876 = vst.msk [vmem:[#allocation2 + $0x6d4] sm:$0xf] %vm1211, %v3851
    %3877 = vst.msk [vmem:[#allocation2 + $0x6d8] sm:$0xf] %vm1211, %v3852
    %3878 = vst.msk [vmem:[#allocation2 + $0x6dc] sm:$0xf] %vm1211, %v3853
    %3879 = vst.msk [vmem:[#allocation2 + $0x6e0] sm:$0xf] %vm1211, %v3854
    %3880 = vst.msk [vmem:[#allocation2 + $0x6e4] sm:$0xf] %vm1211, %v3855
    %3881 = vst.msk [vmem:[#allocation2 + $0x6e8] sm:$0xf] %vm1211, %v3856
    %3882 = vst.msk [vmem:[#allocation2 + $0x6ec] sm:$0xf] %vm1211, %v3857
    %3883 = vst.msk [vmem:[#allocation2 + $0x6f0] sm:$0xf] %vm1211, %v3858
    %3884 = vst.msk [vmem:[#allocation2 + $0x6f4] sm:$0xf] %vm1211, %v3859
    %3885 = vst.msk [vmem:[#allocation2 + $0x6f8] sm:$0xf] %vm1211, %v3860
    %3886 = vst.msk [vmem:[#allocation2 + $0x6fc] sm:$0xf] %vm1211, %v3861
    %3887 = vst.msk [vmem:[#allocation2 + $0x700] sm:$0xf] %vm1211, %v3862
    %3888 = vst.msk [vmem:[#allocation2 + $0x704] sm:$0xf] %vm1211, %v3863
    %s3889 = scalar_lea.vmem %s3, 576
    %v3890 = vld [vmem:[%s3889] sm:$0xf]
    %v3891 = vld [vmem:[%s3889 + $0x4] sm:$0xf]
    %v3892 = vld [vmem:[%s3889 + $0x8] sm:$0xf]
    %v3893 = vld [vmem:[%s3889 + $0xc] sm:$0xf]
    %v3894 = vld [vmem:[%s3889 + $0x10] sm:$0xf]
    %v3895 = vld [vmem:[%s3889 + $0x14] sm:$0xf]
    %v3896 = vld [vmem:[%s3889 + $0x18] sm:$0xf]
    %v3897 = vld [vmem:[%s3889 + $0x1c] sm:$0xf]
    %v3906 = vunpack.c.l.b16 %v3890
    %v3907 = vunpack.c.l.b16 %v3891
    %v3908 = vunpack.c.l.b16 %v3892
    %v3909 = vunpack.c.l.b16 %v3893
    %v3910 = vunpack.c.l.b16 %v3894
    %v3911 = vunpack.c.l.b16 %v3895
    %v3912 = vunpack.c.l.b16 %v3896
    %v3913 = vunpack.c.l.b16 %v3897
    %v3914 = vpack.c.b16 %v3907, %v3906
    %v3915 = vpack.c.b16 %v3909, %v3908
    %v3916 = vpack.c.b16 %v3911, %v3910
    %v3917 = vpack.c.b16 %v3913, %v3912
    %3922 = vmatpush.bf16.msra.mxu0 0
    %3923 = vmatpush.bf16.msra.mxu0 0
    %3924 = vmatpush.bf16.msra.mxu0 0
    %3925 = vmatpush.bf16.msra.mxu0 0
    %3926 = vmatpush.bf16.msra.mxu0 %v3917
    %3927 = vmatpush.bf16.msra.mxu0 %v3916
    %3928 = vmatpush.bf16.msra.mxu0 %v3915
    %3929 = vmatpush.bf16.msra.mxu0 %v3914
    %3930 = vmatmul.bf16.gmra.mxu0 %v1075
    %v3931 = vpop.f32.mrf.mxu0
    %v3932 = vadd.f32 0.0, %v3931
    %v3933 = vpop.f32.mrf.mxu0
    %v3934 = vadd.f32 0.0, %v3933
    %3935 = vmatmul.bf16.gmra.mxu0 %v1078
    %v3936 = vpop.f32.mrf.mxu0
    %v3937 = vadd.f32 0.0, %v3936
    %v3938 = vpop.f32.mrf.mxu0
    %v3939 = vadd.f32 0.0, %v3938
    %3940 = vmatmul.bf16.gmra.mxu0 %v1081
    %v3941 = vpop.f32.mrf.mxu0
    %v3942 = vadd.f32 0.0, %v3941
    %v3943 = vpop.f32.mrf.mxu0
    %v3944 = vadd.f32 0.0, %v3943
    %3945 = vmatmul.bf16.gmra.mxu0 %v1084
    %v3946 = vpop.f32.mrf.mxu0
    %v3947 = vadd.f32 0.0, %v3946
    %v3948 = vpop.f32.mrf.mxu0
    %v3949 = vadd.f32 0.0, %v3948
    %3950 = vmatmul.bf16.gmra.mxu0 %v1087
    %v3951 = vpop.f32.mrf.mxu0
    %v3952 = vadd.f32 0.0, %v3951
    %v3953 = vpop.f32.mrf.mxu0
    %v3954 = vadd.f32 0.0, %v3953
    %3955 = vmatmul.bf16.gmra.mxu0 %v1090
    %v3956 = vpop.f32.mrf.mxu0
    %v3957 = vadd.f32 0.0, %v3956
    %v3958 = vpop.f32.mrf.mxu0
    %v3959 = vadd.f32 0.0, %v3958
    %3960 = vmatmul.bf16.gmra.mxu0 %v1093
    %v3961 = vpop.f32.mrf.mxu0
    %v3962 = vadd.f32 0.0, %v3961
    %v3963 = vpop.f32.mrf.mxu0
    %v3964 = vadd.f32 0.0, %v3963
    %3965 = vmatmul.bf16.gmra.mxu0 %v1096
    %v3966 = vpop.f32.mrf.mxu0
    %v3967 = vadd.f32 0.0, %v3966
    %v3968 = vpop.f32.mrf.mxu0
    %v3969 = vadd.f32 0.0, %v3968
    %3970 = vmatmul.bf16.gmra.mxu0 %v1099
    %v3971 = vpop.f32.mrf.mxu0
    %v3972 = vadd.f32 0.0, %v3971
    %v3973 = vpop.f32.mrf.mxu0
    %v3974 = vadd.f32 0.0, %v3973
    %3975 = vmatmul.bf16.gmra.mxu0 %v1102
    %v3976 = vpop.f32.mrf.mxu0
    %v3977 = vadd.f32 0.0, %v3976
    %v3978 = vpop.f32.mrf.mxu0
    %v3979 = vadd.f32 0.0, %v3978
    %3980 = vmatmul.bf16.gmra.mxu0 %v1105
    %v3981 = vpop.f32.mrf.mxu0
    %v3982 = vadd.f32 0.0, %v3981
    %v3983 = vpop.f32.mrf.mxu0
    %v3984 = vadd.f32 0.0, %v3983
    %3985 = vmatmul.bf16.gmra.mxu0 %v1108
    %v3986 = vpop.f32.mrf.mxu0
    %v3987 = vadd.f32 0.0, %v3986
    %v3988 = vpop.f32.mrf.mxu0
    %v3989 = vadd.f32 0.0, %v3988
    %3990 = vmatmul.bf16.gmra.mxu0 %v1111
    %v3991 = vpop.f32.mrf.mxu0
    %v3992 = vadd.f32 0.0, %v3991
    %v3993 = vpop.f32.mrf.mxu0
    %3994 = vdwg.mxu0
    %v3995 = vpack.c.bf16 %v3932, %v3932
    %v3996 = vpack.c.bf16 %v3934, %v3934
    %v3997 = vpack.c.bf16 %v3937, %v3937
    %v3998 = vpack.c.bf16 %v3939, %v3939
    %v3999 = vpack.c.bf16 %v3942, %v3942
    %v4000 = vpack.c.bf16 %v3944, %v3944
    %v4001 = vpack.c.bf16 %v3947, %v3947
    %v4002 = vpack.c.bf16 %v3949, %v3949
    %v4003 = vpack.c.bf16 %v3952, %v3952
    %v4004 = vpack.c.bf16 %v3954, %v3954
    %v4005 = vpack.c.bf16 %v3957, %v3957
    %v4006 = vpack.c.bf16 %v3959, %v3959
    %v4007 = vpack.c.bf16 %v3962, %v3962
    %v4008 = vpack.c.bf16 %v3964, %v3964
    %v4009 = vpack.c.bf16 %v3967, %v3967
    %v4010 = vpack.c.bf16 %v3969, %v3969
    %v4011 = vpack.c.bf16 %v3972, %v3972
    %v4012 = vpack.c.bf16 %v3974, %v3974
    %v4013 = vpack.c.bf16 %v3977, %v3977
    %v4014 = vpack.c.bf16 %v3979, %v3979
    %v4015 = vpack.c.bf16 %v3982, %v3982
    %v4016 = vpack.c.bf16 %v3984, %v3984
    %v4017 = vpack.c.bf16 %v3987, %v3987
    %v4018 = vpack.c.bf16 %v3989, %v3989
    %v4019 = vpack.c.bf16 %v3992, %v3992
    %4020 = vst.msk [vmem:[#allocation2 + $0x708] sm:$0xf] %vm1211, %v3995
    %4021 = vst.msk [vmem:[#allocation2 + $0x70c] sm:$0xf] %vm1211, %v3996
    %4022 = vst.msk [vmem:[#allocation2 + $0x710] sm:$0xf] %vm1211, %v3997
    %4023 = vst.msk [vmem:[#allocation2 + $0x714] sm:$0xf] %vm1211, %v3998
    %4024 = vst.msk [vmem:[#allocation2 + $0x718] sm:$0xf] %vm1211, %v3999
    %4025 = vst.msk [vmem:[#allocation2 + $0x71c] sm:$0xf] %vm1211, %v4000
    %4026 = vst.msk [vmem:[#allocation2 + $0x720] sm:$0xf] %vm1211, %v4001
    %4027 = vst.msk [vmem:[#allocation2 + $0x724] sm:$0xf] %vm1211, %v4002
    %4028 = vst.msk [vmem:[#allocation2 + $0x728] sm:$0xf] %vm1211, %v4003
    %4029 = vst.msk [vmem:[#allocation2 + $0x72c] sm:$0xf] %vm1211, %v4004
    %4030 = vst.msk [vmem:[#allocation2 + $0x730] sm:$0xf] %vm1211, %v4005
    %4031 = vst.msk [vmem:[#allocation2 + $0x734] sm:$0xf] %vm1211, %v4006
    %4032 = vst.msk [vmem:[#allocation2 + $0x738] sm:$0xf] %vm1211, %v4007
    %4033 = vst.msk [vmem:[#allocation2 + $0x73c] sm:$0xf] %vm1211, %v4008
    %4034 = vst.msk [vmem:[#allocation2 + $0x740] sm:$0xf] %vm1211, %v4009
    %4035 = vst.msk [vmem:[#allocation2 + $0x744] sm:$0xf] %vm1211, %v4010
    %4036 = vst.msk [vmem:[#allocation2 + $0x748] sm:$0xf] %vm1211, %v4011
    %4037 = vst.msk [vmem:[#allocation2 + $0x74c] sm:$0xf] %vm1211, %v4012
    %4038 = vst.msk [vmem:[#allocation2 + $0x750] sm:$0xf] %vm1211, %v4013
    %4039 = vst.msk [vmem:[#allocation2 + $0x754] sm:$0xf] %vm1211, %v4014
    %4040 = vst.msk [vmem:[#allocation2 + $0x758] sm:$0xf] %vm1211, %v4015
    %4041 = vst.msk [vmem:[#allocation2 + $0x75c] sm:$0xf] %vm1211, %v4016
    %4042 = vst.msk [vmem:[#allocation2 + $0x760] sm:$0xf] %vm1211, %v4017
    %4043 = vst.msk [vmem:[#allocation2 + $0x764] sm:$0xf] %vm1211, %v4018
    %4044 = vst.msk [vmem:[#allocation2 + $0x768] sm:$0xf] %vm1211, %v4019
    %s4045 = scalar_lea.vmem %s3, 608
    %v4046 = vld [vmem:[%s4045] sm:$0xf]
    %v4047 = vld [vmem:[%s4045 + $0x4] sm:$0xf]
    %v4048 = vld [vmem:[%s4045 + $0x8] sm:$0xf]
    %v4049 = vld [vmem:[%s4045 + $0xc] sm:$0xf]
    %v4050 = vld [vmem:[%s4045 + $0x10] sm:$0xf]
    %v4051 = vld [vmem:[%s4045 + $0x14] sm:$0xf]
    %v4052 = vld [vmem:[%s4045 + $0x18] sm:$0xf]
    %v4053 = vld [vmem:[%s4045 + $0x1c] sm:$0xf]
    %v4062 = vunpack.c.l.b16 %v4046
    %v4063 = vunpack.c.l.b16 %v4047
    %v4064 = vunpack.c.l.b16 %v4048
    %v4065 = vunpack.c.l.b16 %v4049
    %v4066 = vunpack.c.l.b16 %v4050
    %v4067 = vunpack.c.l.b16 %v4051
    %v4068 = vunpack.c.l.b16 %v4052
    %v4069 = vunpack.c.l.b16 %v4053
    %v4070 = vpack.c.b16 %v4063, %v4062
    %v4071 = vpack.c.b16 %v4065, %v4064
    %v4072 = vpack.c.b16 %v4067, %v4066
    %v4073 = vpack.c.b16 %v4069, %v4068
    %4078 = vmatpush.bf16.msra.mxu0 0
    %4079 = vmatpush.bf16.msra.mxu0 0
    %4080 = vmatpush.bf16.msra.mxu0 0
    %4081 = vmatpush.bf16.msra.mxu0 0
    %4082 = vmatpush.bf16.msra.mxu0 %v4073
    %4083 = vmatpush.bf16.msra.mxu0 %v4072
    %4084 = vmatpush.bf16.msra.mxu0 %v4071
    %4085 = vmatpush.bf16.msra.mxu0 %v4070
    %4086 = vmatmul.bf16.gmra.mxu0 %v1075
    %v4087 = vpop.f32.mrf.mxu0
    %v4088 = vadd.f32 0.0, %v4087
    %v4089 = vpop.f32.mrf.mxu0
    %v4090 = vadd.f32 0.0, %v4089
    %4091 = vmatmul.bf16.gmra.mxu0 %v1078
    %v4092 = vpop.f32.mrf.mxu0
    %v4093 = vadd.f32 0.0, %v4092
    %v4094 = vpop.f32.mrf.mxu0
    %v4095 = vadd.f32 0.0, %v4094
    %4096 = vmatmul.bf16.gmra.mxu0 %v1081
    %v4097 = vpop.f32.mrf.mxu0
    %v4098 = vadd.f32 0.0, %v4097
    %v4099 = vpop.f32.mrf.mxu0
    %v4100 = vadd.f32 0.0, %v4099
    %4101 = vmatmul.bf16.gmra.mxu0 %v1084
    %v4102 = vpop.f32.mrf.mxu0
    %v4103 = vadd.f32 0.0, %v4102
    %v4104 = vpop.f32.mrf.mxu0
    %v4105 = vadd.f32 0.0, %v4104
    %4106 = vmatmul.bf16.gmra.mxu0 %v1087
    %v4107 = vpop.f32.mrf.mxu0
    %v4108 = vadd.f32 0.0, %v4107
    %v4109 = vpop.f32.mrf.mxu0
    %v4110 = vadd.f32 0.0, %v4109
    %4111 = vmatmul.bf16.gmra.mxu0 %v1090
    %v4112 = vpop.f32.mrf.mxu0
    %v4113 = vadd.f32 0.0, %v4112
    %v4114 = vpop.f32.mrf.mxu0
    %v4115 = vadd.f32 0.0, %v4114
    %4116 = vmatmul.bf16.gmra.mxu0 %v1093
    %v4117 = vpop.f32.mrf.mxu0
    %v4118 = vadd.f32 0.0, %v4117
    %v4119 = vpop.f32.mrf.mxu0
    %v4120 = vadd.f32 0.0, %v4119
    %4121 = vmatmul.bf16.gmra.mxu0 %v1096
    %v4122 = vpop.f32.mrf.mxu0
    %v4123 = vadd.f32 0.0, %v4122
    %v4124 = vpop.f32.mrf.mxu0
    %v4125 = vadd.f32 0.0, %v4124
    %4126 = vmatmul.bf16.gmra.mxu0 %v1099
    %v4127 = vpop.f32.mrf.mxu0
    %v4128 = vadd.f32 0.0, %v4127
    %v4129 = vpop.f32.mrf.mxu0
    %v4130 = vadd.f32 0.0, %v4129
    %4131 = vmatmul.bf16.gmra.mxu0 %v1102
    %v4132 = vpop.f32.mrf.mxu0
    %v4133 = vadd.f32 0.0, %v4132
    %v4134 = vpop.f32.mrf.mxu0
    %v4135 = vadd.f32 0.0, %v4134
    %4136 = vmatmul.bf16.gmra.mxu0 %v1105
    %v4137 = vpop.f32.mrf.mxu0
    %v4138 = vadd.f32 0.0, %v4137
    %v4139 = vpop.f32.mrf.mxu0
    %v4140 = vadd.f32 0.0, %v4139
    %4141 = vmatmul.bf16.gmra.mxu0 %v1108
    %v4142 = vpop.f32.mrf.mxu0
    %v4143 = vadd.f32 0.0, %v4142
    %v4144 = vpop.f32.mrf.mxu0
    %v4145 = vadd.f32 0.0, %v4144
    %4146 = vmatmul.bf16.gmra.mxu0 %v1111
    %v4147 = vpop.f32.mrf.mxu0
    %v4148 = vadd.f32 0.0, %v4147
    %v4149 = vpop.f32.mrf.mxu0
    %4150 = vdwg.mxu0
    %v4151 = vpack.c.bf16 %v4088, %v4088
    %v4152 = vpack.c.bf16 %v4090, %v4090
    %v4153 = vpack.c.bf16 %v4093, %v4093
    %v4154 = vpack.c.bf16 %v4095, %v4095
    %v4155 = vpack.c.bf16 %v4098, %v4098
    %v4156 = vpack.c.bf16 %v4100, %v4100
    %v4157 = vpack.c.bf16 %v4103, %v4103
    %v4158 = vpack.c.bf16 %v4105, %v4105
    %v4159 = vpack.c.bf16 %v4108, %v4108
    %v4160 = vpack.c.bf16 %v4110, %v4110
    %v4161 = vpack.c.bf16 %v4113, %v4113
    %v4162 = vpack.c.bf16 %v4115, %v4115
    %v4163 = vpack.c.bf16 %v4118, %v4118
    %v4164 = vpack.c.bf16 %v4120, %v4120
    %v4165 = vpack.c.bf16 %v4123, %v4123
    %v4166 = vpack.c.bf16 %v4125, %v4125
    %v4167 = vpack.c.bf16 %v4128, %v4128
    %v4168 = vpack.c.bf16 %v4130, %v4130
    %v4169 = vpack.c.bf16 %v4133, %v4133
    %v4170 = vpack.c.bf16 %v4135, %v4135
    %v4171 = vpack.c.bf16 %v4138, %v4138
    %v4172 = vpack.c.bf16 %v4140, %v4140
    %v4173 = vpack.c.bf16 %v4143, %v4143
    %v4174 = vpack.c.bf16 %v4145, %v4145
    %v4175 = vpack.c.bf16 %v4148, %v4148
    %4176 = vst.msk [vmem:[#allocation2 + $0x76c] sm:$0xf] %vm1211, %v4151
    %4177 = vst.msk [vmem:[#allocation2 + $0x770] sm:$0xf] %vm1211, %v4152
    %4178 = vst.msk [vmem:[#allocation2 + $0x774] sm:$0xf] %vm1211, %v4153
    %4179 = vst.msk [vmem:[#allocation2 + $0x778] sm:$0xf] %vm1211, %v4154
    %4180 = vst.msk [vmem:[#allocation2 + $0x77c] sm:$0xf] %vm1211, %v4155
    %4181 = vst.msk [vmem:[#allocation2 + $0x780] sm:$0xf] %vm1211, %v4156
    %4182 = vst.msk [vmem:[#allocation2 + $0x784] sm:$0xf] %vm1211, %v4157
    %4183 = vst.msk [vmem:[#allocation2 + $0x788] sm:$0xf] %vm1211, %v4158
    %4184 = vst.msk [vmem:[#allocation2 + $0x78c] sm:$0xf] %vm1211, %v4159
    %4185 = vst.msk [vmem:[#allocation2 + $0x790] sm:$0xf] %vm1211, %v4160
    %4186 = vst.msk [vmem:[#allocation2 + $0x794] sm:$0xf] %vm1211, %v4161
    %4187 = vst.msk [vmem:[#allocation2 + $0x798] sm:$0xf] %vm1211, %v4162
    %4188 = vst.msk [vmem:[#allocation2 + $0x79c] sm:$0xf] %vm1211, %v4163
    %4189 = vst.msk [vmem:[#allocation2 + $0x7a0] sm:$0xf] %vm1211, %v4164
    %4190 = vst.msk [vmem:[#allocation2 + $0x7a4] sm:$0xf] %vm1211, %v4165
    %4191 = vst.msk [vmem:[#allocation2 + $0x7a8] sm:$0xf] %vm1211, %v4166
    %4192 = vst.msk [vmem:[#allocation2 + $0x7ac] sm:$0xf] %vm1211, %v4167
    %4193 = vst.msk [vmem:[#allocation2 + $0x7b0] sm:$0xf] %vm1211, %v4168
    %4194 = vst.msk [vmem:[#allocation2 + $0x7b4] sm:$0xf] %vm1211, %v4169
    %4195 = vst.msk [vmem:[#allocation2 + $0x7b8] sm:$0xf] %vm1211, %v4170
    %4196 = vst.msk [vmem:[#allocation2 + $0x7bc] sm:$0xf] %vm1211, %v4171
    %4197 = vst.msk [vmem:[#allocation2 + $0x7c0] sm:$0xf] %vm1211, %v4172
    %4198 = vst.msk [vmem:[#allocation2 + $0x7c4] sm:$0xf] %vm1211, %v4173
    %4199 = vst.msk [vmem:[#allocation2 + $0x7c8] sm:$0xf] %vm1211, %v4174
    %4200 = vst.msk [vmem:[#allocation2 + $0x7cc] sm:$0xf] %vm1211, %v4175
    %s4201 = scalar_lea.vmem %s3, 640
    %v4202 = vld [vmem:[%s4201] sm:$0xf]
    %v4203 = vld [vmem:[%s4201 + $0x4] sm:$0xf]
    %v4204 = vld [vmem:[%s4201 + $0x8] sm:$0xf]
    %v4205 = vld [vmem:[%s4201 + $0xc] sm:$0xf]
    %v4206 = vld [vmem:[%s4201 + $0x10] sm:$0xf]
    %v4207 = vld [vmem:[%s4201 + $0x14] sm:$0xf]
    %v4208 = vld [vmem:[%s4201 + $0x18] sm:$0xf]
    %v4209 = vld [vmem:[%s4201 + $0x1c] sm:$0xf]
    %v4218 = vunpack.c.l.b16 %v4202
    %v4219 = vunpack.c.l.b16 %v4203
    %v4220 = vunpack.c.l.b16 %v4204
    %v4221 = vunpack.c.l.b16 %v4205
    %v4222 = vunpack.c.l.b16 %v4206
    %v4223 = vunpack.c.l.b16 %v4207
    %v4224 = vunpack.c.l.b16 %v4208
    %v4225 = vunpack.c.l.b16 %v4209
    %v4226 = vpack.c.b16 %v4219, %v4218
    %v4227 = vpack.c.b16 %v4221, %v4220
    %v4228 = vpack.c.b16 %v4223, %v4222
    %v4229 = vpack.c.b16 %v4225, %v4224
    %4234 = vmatpush.bf16.msra.mxu0 0
    %4235 = vmatpush.bf16.msra.mxu0 0
    %4236 = vmatpush.bf16.msra.mxu0 0
    %4237 = vmatpush.bf16.msra.mxu0 0
    %4238 = vmatpush.bf16.msra.mxu0 %v4229
    %4239 = vmatpush.bf16.msra.mxu0 %v4228
    %4240 = vmatpush.bf16.msra.mxu0 %v4227
    %4241 = vmatpush.bf16.msra.mxu0 %v4226
    %4242 = vmatmul.bf16.gmra.mxu0 %v1075
    %v4243 = vpop.f32.mrf.mxu0
    %v4244 = vadd.f32 0.0, %v4243
    %v4245 = vpop.f32.mrf.mxu0
    %v4246 = vadd.f32 0.0, %v4245
    %4247 = vmatmul.bf16.gmra.mxu0 %v1078
    %v4248 = vpop.f32.mrf.mxu0
    %v4249 = vadd.f32 0.0, %v4248
    %v4250 = vpop.f32.mrf.mxu0
    %v4251 = vadd.f32 0.0, %v4250
    %4252 = vmatmul.bf16.gmra.mxu0 %v1081
    %v4253 = vpop.f32.mrf.mxu0
    %v4254 = vadd.f32 0.0, %v4253
    %v4255 = vpop.f32.mrf.mxu0
    %v4256 = vadd.f32 0.0, %v4255
    %4257 = vmatmul.bf16.gmra.mxu0 %v1084
    %v4258 = vpop.f32.mrf.mxu0
    %v4259 = vadd.f32 0.0, %v4258
    %v4260 = vpop.f32.mrf.mxu0
    %v4261 = vadd.f32 0.0, %v4260
    %4262 = vmatmul.bf16.gmra.mxu0 %v1087
    %v4263 = vpop.f32.mrf.mxu0
    %v4264 = vadd.f32 0.0, %v4263
    %v4265 = vpop.f32.mrf.mxu0
    %v4266 = vadd.f32 0.0, %v4265
    %4267 = vmatmul.bf16.gmra.mxu0 %v1090
    %v4268 = vpop.f32.mrf.mxu0
    %v4269 = vadd.f32 0.0, %v4268
    %v4270 = vpop.f32.mrf.mxu0
    %v4271 = vadd.f32 0.0, %v4270
    %4272 = vmatmul.bf16.gmra.mxu0 %v1093
    %v4273 = vpop.f32.mrf.mxu0
    %v4274 = vadd.f32 0.0, %v4273
    %v4275 = vpop.f32.mrf.mxu0
    %v4276 = vadd.f32 0.0, %v4275
    %4277 = vmatmul.bf16.gmra.mxu0 %v1096
    %v4278 = vpop.f32.mrf.mxu0
    %v4279 = vadd.f32 0.0, %v4278
    %v4280 = vpop.f32.mrf.mxu0
    %v4281 = vadd.f32 0.0, %v4280
    %4282 = vmatmul.bf16.gmra.mxu0 %v1099
    %v4283 = vpop.f32.mrf.mxu0
    %v4284 = vadd.f32 0.0, %v4283
    %v4285 = vpop.f32.mrf.mxu0
    %v4286 = vadd.f32 0.0, %v4285
    %4287 = vmatmul.bf16.gmra.mxu0 %v1102
    %v4288 = vpop.f32.mrf.mxu0
    %v4289 = vadd.f32 0.0, %v4288
    %v4290 = vpop.f32.mrf.mxu0
    %v4291 = vadd.f32 0.0, %v4290
    %4292 = vmatmul.bf16.gmra.mxu0 %v1105
    %v4293 = vpop.f32.mrf.mxu0
    %v4294 = vadd.f32 0.0, %v4293
    %v4295 = vpop.f32.mrf.mxu0
    %v4296 = vadd.f32 0.0, %v4295
    %4297 = vmatmul.bf16.gmra.mxu0 %v1108
    %v4298 = vpop.f32.mrf.mxu0
    %v4299 = vadd.f32 0.0, %v4298
    %v4300 = vpop.f32.mrf.mxu0
    %v4301 = vadd.f32 0.0, %v4300
    %4302 = vmatmul.bf16.gmra.mxu0 %v1111
    %v4303 = vpop.f32.mrf.mxu0
    %v4304 = vadd.f32 0.0, %v4303
    %v4305 = vpop.f32.mrf.mxu0
    %4306 = vdwg.mxu0
    %v4307 = vpack.c.bf16 %v4244, %v4244
    %v4308 = vpack.c.bf16 %v4246, %v4246
    %v4309 = vpack.c.bf16 %v4249, %v4249
    %v4310 = vpack.c.bf16 %v4251, %v4251
    %v4311 = vpack.c.bf16 %v4254, %v4254
    %v4312 = vpack.c.bf16 %v4256, %v4256
    %v4313 = vpack.c.bf16 %v4259, %v4259
    %v4314 = vpack.c.bf16 %v4261, %v4261
    %v4315 = vpack.c.bf16 %v4264, %v4264
    %v4316 = vpack.c.bf16 %v4266, %v4266
    %v4317 = vpack.c.bf16 %v4269, %v4269
    %v4318 = vpack.c.bf16 %v4271, %v4271
    %v4319 = vpack.c.bf16 %v4274, %v4274
    %v4320 = vpack.c.bf16 %v4276, %v4276
    %v4321 = vpack.c.bf16 %v4279, %v4279
    %v4322 = vpack.c.bf16 %v4281, %v4281
    %v4323 = vpack.c.bf16 %v4284, %v4284
    %v4324 = vpack.c.bf16 %v4286, %v4286
    %v4325 = vpack.c.bf16 %v4289, %v4289
    %v4326 = vpack.c.bf16 %v4291, %v4291
    %v4327 = vpack.c.bf16 %v4294, %v4294
    %v4328 = vpack.c.bf16 %v4296, %v4296
    %v4329 = vpack.c.bf16 %v4299, %v4299
    %v4330 = vpack.c.bf16 %v4301, %v4301
    %v4331 = vpack.c.bf16 %v4304, %v4304
    %4332 = vst.msk [vmem:[#allocation2 + $0x7d0] sm:$0xf] %vm1211, %v4307
    %4333 = vst.msk [vmem:[#allocation2 + $0x7d4] sm:$0xf] %vm1211, %v4308
    %4334 = vst.msk [vmem:[#allocation2 + $0x7d8] sm:$0xf] %vm1211, %v4309
    %4335 = vst.msk [vmem:[#allocation2 + $0x7dc] sm:$0xf] %vm1211, %v4310
    %4336 = vst.msk [vmem:[#allocation2 + $0x7e0] sm:$0xf] %vm1211, %v4311
    %4337 = vst.msk [vmem:[#allocation2 + $0x7e4] sm:$0xf] %vm1211, %v4312
    %4338 = vst.msk [vmem:[#allocation2 + $0x7e8] sm:$0xf] %vm1211, %v4313
    %4339 = vst.msk [vmem:[#allocation2 + $0x7ec] sm:$0xf] %vm1211, %v4314
    %4340 = vst.msk [vmem:[#allocation2 + $0x7f0] sm:$0xf] %vm1211, %v4315
    %4341 = vst.msk [vmem:[#allocation2 + $0x7f4] sm:$0xf] %vm1211, %v4316
    %4342 = vst.msk [vmem:[#allocation2 + $0x7f8] sm:$0xf] %vm1211, %v4317
    %4343 = vst.msk [vmem:[#allocation2 + $0x7fc] sm:$0xf] %vm1211, %v4318
    %4344 = vst.msk [vmem:[#allocation2 + $0x800] sm:$0xf] %vm1211, %v4319
    %4345 = vst.msk [vmem:[#allocation2 + $0x804] sm:$0xf] %vm1211, %v4320
    %4346 = vst.msk [vmem:[#allocation2 + $0x808] sm:$0xf] %vm1211, %v4321
    %4347 = vst.msk [vmem:[#allocation2 + $0x80c] sm:$0xf] %vm1211, %v4322
    %4348 = vst.msk [vmem:[#allocation2 + $0x810] sm:$0xf] %vm1211, %v4323
    %4349 = vst.msk [vmem:[#allocation2 + $0x814] sm:$0xf] %vm1211, %v4324
    %4350 = vst.msk [vmem:[#allocation2 + $0x818] sm:$0xf] %vm1211, %v4325
    %4351 = vst.msk [vmem:[#allocation2 + $0x81c] sm:$0xf] %vm1211, %v4326
    %4352 = vst.msk [vmem:[#allocation2 + $0x820] sm:$0xf] %vm1211, %v4327
    %4353 = vst.msk [vmem:[#allocation2 + $0x824] sm:$0xf] %vm1211, %v4328
    %4354 = vst.msk [vmem:[#allocation2 + $0x828] sm:$0xf] %vm1211, %v4329
    %4355 = vst.msk [vmem:[#allocation2 + $0x82c] sm:$0xf] %vm1211, %v4330
    %4356 = vst.msk [vmem:[#allocation2 + $0x830] sm:$0xf] %vm1211, %v4331
    %s4357 = scalar_lea.vmem %s3, 672
    %v4358 = vld [vmem:[%s4357] sm:$0xf]
    %v4359 = vld [vmem:[%s4357 + $0x4] sm:$0xf]
    %v4360 = vld [vmem:[%s4357 + $0x8] sm:$0xf]
    %v4361 = vld [vmem:[%s4357 + $0xc] sm:$0xf]
    %v4362 = vld [vmem:[%s4357 + $0x10] sm:$0xf]
    %v4363 = vld [vmem:[%s4357 + $0x14] sm:$0xf]
    %v4364 = vld [vmem:[%s4357 + $0x18] sm:$0xf]
    %v4365 = vld [vmem:[%s4357 + $0x1c] sm:$0xf]
    %v4374 = vunpack.c.l.b16 %v4358
    %v4375 = vunpack.c.l.b16 %v4359
    %v4376 = vunpack.c.l.b16 %v4360
    %v4377 = vunpack.c.l.b16 %v4361
    %v4378 = vunpack.c.l.b16 %v4362
    %v4379 = vunpack.c.l.b16 %v4363
    %v4380 = vunpack.c.l.b16 %v4364
    %v4381 = vunpack.c.l.b16 %v4365
    %v4382 = vpack.c.b16 %v4375, %v4374
    %v4383 = vpack.c.b16 %v4377, %v4376
    %v4384 = vpack.c.b16 %v4379, %v4378
    %v4385 = vpack.c.b16 %v4381, %v4380
    %4390 = vmatpush.bf16.msra.mxu0 0
    %4391 = vmatpush.bf16.msra.mxu0 0
    %4392 = vmatpush.bf16.msra.mxu0 0
    %4393 = vmatpush.bf16.msra.mxu0 0
    %4394 = vmatpush.bf16.msra.mxu0 %v4385
    %4395 = vmatpush.bf16.msra.mxu0 %v4384
    %4396 = vmatpush.bf16.msra.mxu0 %v4383
    %4397 = vmatpush.bf16.msra.mxu0 %v4382
    %4398 = vmatmul.bf16.gmra.mxu0 %v1075
    %v4399 = vpop.f32.mrf.mxu0
    %v4400 = vadd.f32 0.0, %v4399
    %v4401 = vpop.f32.mrf.mxu0
    %v4402 = vadd.f32 0.0, %v4401
    %4403 = vmatmul.bf16.gmra.mxu0 %v1078
    %v4404 = vpop.f32.mrf.mxu0
    %v4405 = vadd.f32 0.0, %v4404
    %v4406 = vpop.f32.mrf.mxu0
    %v4407 = vadd.f32 0.0, %v4406
    %4408 = vmatmul.bf16.gmra.mxu0 %v1081
    %v4409 = vpop.f32.mrf.mxu0
    %v4410 = vadd.f32 0.0, %v4409
    %v4411 = vpop.f32.mrf.mxu0
    %v4412 = vadd.f32 0.0, %v4411
    %4413 = vmatmul.bf16.gmra.mxu0 %v1084
    %v4414 = vpop.f32.mrf.mxu0
    %v4415 = vadd.f32 0.0, %v4414
    %v4416 = vpop.f32.mrf.mxu0
    %v4417 = vadd.f32 0.0, %v4416
    %4418 = vmatmul.bf16.gmra.mxu0 %v1087
    %v4419 = vpop.f32.mrf.mxu0
    %v4420 = vadd.f32 0.0, %v4419
    %v4421 = vpop.f32.mrf.mxu0
    %v4422 = vadd.f32 0.0, %v4421
    %4423 = vmatmul.bf16.gmra.mxu0 %v1090
    %v4424 = vpop.f32.mrf.mxu0
    %v4425 = vadd.f32 0.0, %v4424
    %v4426 = vpop.f32.mrf.mxu0
    %v4427 = vadd.f32 0.0, %v4426
    %4428 = vmatmul.bf16.gmra.mxu0 %v1093
    %v4429 = vpop.f32.mrf.mxu0
    %v4430 = vadd.f32 0.0, %v4429
    %v4431 = vpop.f32.mrf.mxu0
    %v4432 = vadd.f32 0.0, %v4431
    %4433 = vmatmul.bf16.gmra.mxu0 %v1096
    %v4434 = vpop.f32.mrf.mxu0
    %v4435 = vadd.f32 0.0, %v4434
    %v4436 = vpop.f32.mrf.mxu0
    %v4437 = vadd.f32 0.0, %v4436
    %4438 = vmatmul.bf16.gmra.mxu0 %v1099
    %v4439 = vpop.f32.mrf.mxu0
    %v4440 = vadd.f32 0.0, %v4439
    %v4441 = vpop.f32.mrf.mxu0
    %v4442 = vadd.f32 0.0, %v4441
    %4443 = vmatmul.bf16.gmra.mxu0 %v1102
    %v4444 = vpop.f32.mrf.mxu0
    %v4445 = vadd.f32 0.0, %v4444
    %v4446 = vpop.f32.mrf.mxu0
    %v4447 = vadd.f32 0.0, %v4446
    %4448 = vmatmul.bf16.gmra.mxu0 %v1105
    %v4449 = vpop.f32.mrf.mxu0
    %v4450 = vadd.f32 0.0, %v4449
    %v4451 = vpop.f32.mrf.mxu0
    %v4452 = vadd.f32 0.0, %v4451
    %4453 = vmatmul.bf16.gmra.mxu0 %v1108
    %v4454 = vpop.f32.mrf.mxu0
    %v4455 = vadd.f32 0.0, %v4454
    %v4456 = vpop.f32.mrf.mxu0
    %v4457 = vadd.f32 0.0, %v4456
    %4458 = vmatmul.bf16.gmra.mxu0 %v1111
    %v4459 = vpop.f32.mrf.mxu0
    %v4460 = vadd.f32 0.0, %v4459
    %v4461 = vpop.f32.mrf.mxu0
    %4462 = vdwg.mxu0
    %v4463 = vpack.c.bf16 %v4400, %v4400
    %v4464 = vpack.c.bf16 %v4402, %v4402
    %v4465 = vpack.c.bf16 %v4405, %v4405
    %v4466 = vpack.c.bf16 %v4407, %v4407
    %v4467 = vpack.c.bf16 %v4410, %v4410
    %v4468 = vpack.c.bf16 %v4412, %v4412
    %v4469 = vpack.c.bf16 %v4415, %v4415
    %v4470 = vpack.c.bf16 %v4417, %v4417
    %v4471 = vpack.c.bf16 %v4420, %v4420
    %v4472 = vpack.c.bf16 %v4422, %v4422
    %v4473 = vpack.c.bf16 %v4425, %v4425
    %v4474 = vpack.c.bf16 %v4427, %v4427
    %v4475 = vpack.c.bf16 %v4430, %v4430
    %v4476 = vpack.c.bf16 %v4432, %v4432
    %v4477 = vpack.c.bf16 %v4435, %v4435
    %v4478 = vpack.c.bf16 %v4437, %v4437
    %v4479 = vpack.c.bf16 %v4440, %v4440
    %v4480 = vpack.c.bf16 %v4442, %v4442
    %v4481 = vpack.c.bf16 %v4445, %v4445
    %v4482 = vpack.c.bf16 %v4447, %v4447
    %v4483 = vpack.c.bf16 %v4450, %v4450
    %v4484 = vpack.c.bf16 %v4452, %v4452
    %v4485 = vpack.c.bf16 %v4455, %v4455
    %v4486 = vpack.c.bf16 %v4457, %v4457
    %v4487 = vpack.c.bf16 %v4460, %v4460
    %4488 = vst.msk [vmem:[#allocation2 + $0x834] sm:$0xf] %vm1211, %v4463
    %4489 = vst.msk [vmem:[#allocation2 + $0x838] sm:$0xf] %vm1211, %v4464
    %4490 = vst.msk [vmem:[#allocation2 + $0x83c] sm:$0xf] %vm1211, %v4465
    %4491 = vst.msk [vmem:[#allocation2 + $0x840] sm:$0xf] %vm1211, %v4466
    %4492 = vst.msk [vmem:[#allocation2 + $0x844] sm:$0xf] %vm1211, %v4467
    %4493 = vst.msk [vmem:[#allocation2 + $0x848] sm:$0xf] %vm1211, %v4468
    %4494 = vst.msk [vmem:[#allocation2 + $0x84c] sm:$0xf] %vm1211, %v4469
    %4495 = vst.msk [vmem:[#allocation2 + $0x850] sm:$0xf] %vm1211, %v4470
    %4496 = vst.msk [vmem:[#allocation2 + $0x854] sm:$0xf] %vm1211, %v4471
    %4497 = vst.msk [vmem:[#allocation2 + $0x858] sm:$0xf] %vm1211, %v4472
    %4498 = vst.msk [vmem:[#allocation2 + $0x85c] sm:$0xf] %vm1211, %v4473
    %4499 = vst.msk [vmem:[#allocation2 + $0x860] sm:$0xf] %vm1211, %v4474
    %4500 = vst.msk [vmem:[#allocation2 + $0x864] sm:$0xf] %vm1211, %v4475
    %4501 = vst.msk [vmem:[#allocation2 + $0x868] sm:$0xf] %vm1211, %v4476
    %4502 = vst.msk [vmem:[#allocation2 + $0x86c] sm:$0xf] %vm1211, %v4477
    %4503 = vst.msk [vmem:[#allocation2 + $0x870] sm:$0xf] %vm1211, %v4478
    %4504 = vst.msk [vmem:[#allocation2 + $0x874] sm:$0xf] %vm1211, %v4479
    %4505 = vst.msk [vmem:[#allocation2 + $0x878] sm:$0xf] %vm1211, %v4480
    %4506 = vst.msk [vmem:[#allocation2 + $0x87c] sm:$0xf] %vm1211, %v4481
    %4507 = vst.msk [vmem:[#allocation2 + $0x880] sm:$0xf] %vm1211, %v4482
    %4508 = vst.msk [vmem:[#allocation2 + $0x884] sm:$0xf] %vm1211, %v4483
    %4509 = vst.msk [vmem:[#allocation2 + $0x888] sm:$0xf] %vm1211, %v4484
    %4510 = vst.msk [vmem:[#allocation2 + $0x88c] sm:$0xf] %vm1211, %v4485
    %4511 = vst.msk [vmem:[#allocation2 + $0x890] sm:$0xf] %vm1211, %v4486
    %4512 = vst.msk [vmem:[#allocation2 + $0x894] sm:$0xf] %vm1211, %v4487
    %s4513 = scalar_lea.vmem %s3, 704
    %v4514 = vld [vmem:[%s4513] sm:$0xf]
    %v4515 = vld [vmem:[%s4513 + $0x4] sm:$0xf]
    %v4516 = vld [vmem:[%s4513 + $0x8] sm:$0xf]
    %v4517 = vld [vmem:[%s4513 + $0xc] sm:$0xf]
    %v4518 = vld [vmem:[%s4513 + $0x10] sm:$0xf]
    %v4519 = vld [vmem:[%s4513 + $0x14] sm:$0xf]
    %v4520 = vld [vmem:[%s4513 + $0x18] sm:$0xf]
    %v4521 = vld [vmem:[%s4513 + $0x1c] sm:$0xf]
    %v4530 = vunpack.c.l.b16 %v4514
    %v4531 = vunpack.c.l.b16 %v4515
    %v4532 = vunpack.c.l.b16 %v4516
    %v4533 = vunpack.c.l.b16 %v4517
    %v4534 = vunpack.c.l.b16 %v4518
    %v4535 = vunpack.c.l.b16 %v4519
    %v4536 = vunpack.c.l.b16 %v4520
    %v4537 = vunpack.c.l.b16 %v4521
    %v4538 = vpack.c.b16 %v4531, %v4530
    %v4539 = vpack.c.b16 %v4533, %v4532
    %v4540 = vpack.c.b16 %v4535, %v4534
    %v4541 = vpack.c.b16 %v4537, %v4536
    %4546 = vmatpush.bf16.msra.mxu0 0
    %4547 = vmatpush.bf16.msra.mxu0 0
    %4548 = vmatpush.bf16.msra.mxu0 0
    %4549 = vmatpush.bf16.msra.mxu0 0
    %4550 = vmatpush.bf16.msra.mxu0 %v4541
    %4551 = vmatpush.bf16.msra.mxu0 %v4540
    %4552 = vmatpush.bf16.msra.mxu0 %v4539
    %4553 = vmatpush.bf16.msra.mxu0 %v4538
    %4554 = vmatmul.bf16.gmra.mxu0 %v1075
    %v4555 = vpop.f32.mrf.mxu0
    %v4556 = vadd.f32 0.0, %v4555
    %v4557 = vpop.f32.mrf.mxu0
    %v4558 = vadd.f32 0.0, %v4557
    %4559 = vmatmul.bf16.gmra.mxu0 %v1078
    %v4560 = vpop.f32.mrf.mxu0
    %v4561 = vadd.f32 0.0, %v4560
    %v4562 = vpop.f32.mrf.mxu0
    %v4563 = vadd.f32 0.0, %v4562
    %4564 = vmatmul.bf16.gmra.mxu0 %v1081
    %v4565 = vpop.f32.mrf.mxu0
    %v4566 = vadd.f32 0.0, %v4565
    %v4567 = vpop.f32.mrf.mxu0
    %v4568 = vadd.f32 0.0, %v4567
    %4569 = vmatmul.bf16.gmra.mxu0 %v1084
    %v4570 = vpop.f32.mrf.mxu0
    %v4571 = vadd.f32 0.0, %v4570
    %v4572 = vpop.f32.mrf.mxu0
    %v4573 = vadd.f32 0.0, %v4572
    %4574 = vmatmul.bf16.gmra.mxu0 %v1087
    %v4575 = vpop.f32.mrf.mxu0
    %v4576 = vadd.f32 0.0, %v4575
    %v4577 = vpop.f32.mrf.mxu0
    %v4578 = vadd.f32 0.0, %v4577
    %4579 = vmatmul.bf16.gmra.mxu0 %v1090
    %v4580 = vpop.f32.mrf.mxu0
    %v4581 = vadd.f32 0.0, %v4580
    %v4582 = vpop.f32.mrf.mxu0
    %v4583 = vadd.f32 0.0, %v4582
    %4584 = vmatmul.bf16.gmra.mxu0 %v1093
    %v4585 = vpop.f32.mrf.mxu0
    %v4586 = vadd.f32 0.0, %v4585
    %v4587 = vpop.f32.mrf.mxu0
    %v4588 = vadd.f32 0.0, %v4587
    %4589 = vmatmul.bf16.gmra.mxu0 %v1096
    %v4590 = vpop.f32.mrf.mxu0
    %v4591 = vadd.f32 0.0, %v4590
    %v4592 = vpop.f32.mrf.mxu0
    %v4593 = vadd.f32 0.0, %v4592
    %4594 = vmatmul.bf16.gmra.mxu0 %v1099
    %v4595 = vpop.f32.mrf.mxu0
    %v4596 = vadd.f32 0.0, %v4595
    %v4597 = vpop.f32.mrf.mxu0
    %v4598 = vadd.f32 0.0, %v4597
    %4599 = vmatmul.bf16.gmra.mxu0 %v1102
    %v4600 = vpop.f32.mrf.mxu0
    %v4601 = vadd.f32 0.0, %v4600
    %v4602 = vpop.f32.mrf.mxu0
    %v4603 = vadd.f32 0.0, %v4602
    %4604 = vmatmul.bf16.gmra.mxu0 %v1105
    %v4605 = vpop.f32.mrf.mxu0
    %v4606 = vadd.f32 0.0, %v4605
    %v4607 = vpop.f32.mrf.mxu0
    %v4608 = vadd.f32 0.0, %v4607
    %4609 = vmatmul.bf16.gmra.mxu0 %v1108
    %v4610 = vpop.f32.mrf.mxu0
    %v4611 = vadd.f32 0.0, %v4610
    %v4612 = vpop.f32.mrf.mxu0
    %v4613 = vadd.f32 0.0, %v4612
    %4614 = vmatmul.bf16.gmra.mxu0 %v1111
    %v4615 = vpop.f32.mrf.mxu0
    %v4616 = vadd.f32 0.0, %v4615
    %v4617 = vpop.f32.mrf.mxu0
    %4618 = vdwg.mxu0
    %v4619 = vpack.c.bf16 %v4556, %v4556
    %v4620 = vpack.c.bf16 %v4558, %v4558
    %v4621 = vpack.c.bf16 %v4561, %v4561
    %v4622 = vpack.c.bf16 %v4563, %v4563
    %v4623 = vpack.c.bf16 %v4566, %v4566
    %v4624 = vpack.c.bf16 %v4568, %v4568
    %v4625 = vpack.c.bf16 %v4571, %v4571
    %v4626 = vpack.c.bf16 %v4573, %v4573
    %v4627 = vpack.c.bf16 %v4576, %v4576
    %v4628 = vpack.c.bf16 %v4578, %v4578
    %v4629 = vpack.c.bf16 %v4581, %v4581
    %v4630 = vpack.c.bf16 %v4583, %v4583
    %v4631 = vpack.c.bf16 %v4586, %v4586
    %v4632 = vpack.c.bf16 %v4588, %v4588
    %v4633 = vpack.c.bf16 %v4591, %v4591
    %v4634 = vpack.c.bf16 %v4593, %v4593
    %v4635 = vpack.c.bf16 %v4596, %v4596
    %v4636 = vpack.c.bf16 %v4598, %v4598
    %v4637 = vpack.c.bf16 %v4601, %v4601
    %v4638 = vpack.c.bf16 %v4603, %v4603
    %v4639 = vpack.c.bf16 %v4606, %v4606
    %v4640 = vpack.c.bf16 %v4608, %v4608
    %v4641 = vpack.c.bf16 %v4611, %v4611
    %v4642 = vpack.c.bf16 %v4613, %v4613
    %v4643 = vpack.c.bf16 %v4616, %v4616
    %4644 = vst.msk [vmem:[#allocation2 + $0x898] sm:$0xf] %vm1211, %v4619
    %4645 = vst.msk [vmem:[#allocation2 + $0x89c] sm:$0xf] %vm1211, %v4620
    %4646 = vst.msk [vmem:[#allocation2 + $0x8a0] sm:$0xf] %vm1211, %v4621
    %4647 = vst.msk [vmem:[#allocation2 + $0x8a4] sm:$0xf] %vm1211, %v4622
    %4648 = vst.msk [vmem:[#allocation2 + $0x8a8] sm:$0xf] %vm1211, %v4623
    %4649 = vst.msk [vmem:[#allocation2 + $0x8ac] sm:$0xf] %vm1211, %v4624
    %4650 = vst.msk [vmem:[#allocation2 + $0x8b0] sm:$0xf] %vm1211, %v4625
    %4651 = vst.msk [vmem:[#allocation2 + $0x8b4] sm:$0xf] %vm1211, %v4626
    %4652 = vst.msk [vmem:[#allocation2 + $0x8b8] sm:$0xf] %vm1211, %v4627
    %4653 = vst.msk [vmem:[#allocation2 + $0x8bc] sm:$0xf] %vm1211, %v4628
    %4654 = vst.msk [vmem:[#allocation2 + $0x8c0] sm:$0xf] %vm1211, %v4629
    %4655 = vst.msk [vmem:[#allocation2 + $0x8c4] sm:$0xf] %vm1211, %v4630
    %4656 = vst.msk [vmem:[#allocation2 + $0x8c8] sm:$0xf] %vm1211, %v4631
    %4657 = vst.msk [vmem:[#allocation2 + $0x8cc] sm:$0xf] %vm1211, %v4632
    %4658 = vst.msk [vmem:[#allocation2 + $0x8d0] sm:$0xf] %vm1211, %v4633
    %4659 = vst.msk [vmem:[#allocation2 + $0x8d4] sm:$0xf] %vm1211, %v4634
    %4660 = vst.msk [vmem:[#allocation2 + $0x8d8] sm:$0xf] %vm1211, %v4635
    %4661 = vst.msk [vmem:[#allocation2 + $0x8dc] sm:$0xf] %vm1211, %v4636
    %4662 = vst.msk [vmem:[#allocation2 + $0x8e0] sm:$0xf] %vm1211, %v4637
    %4663 = vst.msk [vmem:[#allocation2 + $0x8e4] sm:$0xf] %vm1211, %v4638
    %4664 = vst.msk [vmem:[#allocation2 + $0x8e8] sm:$0xf] %vm1211, %v4639
    %4665 = vst.msk [vmem:[#allocation2 + $0x8ec] sm:$0xf] %vm1211, %v4640
    %4666 = vst.msk [vmem:[#allocation2 + $0x8f0] sm:$0xf] %vm1211, %v4641
    %4667 = vst.msk [vmem:[#allocation2 + $0x8f4] sm:$0xf] %vm1211, %v4642
    %4668 = vst.msk [vmem:[#allocation2 + $0x8f8] sm:$0xf] %vm1211, %v4643
    %s4669 = scalar_lea.vmem %s3, 736
    %v4670 = vld [vmem:[%s4669] sm:$0xf]
    %v4671 = vld [vmem:[%s4669 + $0x4] sm:$0xf]
    %v4672 = vld [vmem:[%s4669 + $0x8] sm:$0xf]
    %v4673 = vld [vmem:[%s4669 + $0xc] sm:$0xf]
    %v4674 = vld [vmem:[%s4669 + $0x10] sm:$0xf]
    %v4675 = vld [vmem:[%s4669 + $0x14] sm:$0xf]
    %v4676 = vld [vmem:[%s4669 + $0x18] sm:$0xf]
    %v4677 = vld [vmem:[%s4669 + $0x1c] sm:$0xf]
    %v4686 = vunpack.c.l.b16 %v4670
    %v4687 = vunpack.c.l.b16 %v4671
    %v4688 = vunpack.c.l.b16 %v4672
    %v4689 = vunpack.c.l.b16 %v4673
    %v4690 = vunpack.c.l.b16 %v4674
    %v4691 = vunpack.c.l.b16 %v4675
    %v4692 = vunpack.c.l.b16 %v4676
    %v4693 = vunpack.c.l.b16 %v4677
    %v4694 = vpack.c.b16 %v4687, %v4686
    %v4695 = vpack.c.b16 %v4689, %v4688
    %v4696 = vpack.c.b16 %v4691, %v4690
    %v4697 = vpack.c.b16 %v4693, %v4692
    %4702 = vmatpush.bf16.msra.mxu0 0
    %4703 = vmatpush.bf16.msra.mxu0 0
    %4704 = vmatpush.bf16.msra.mxu0 0
    %4705 = vmatpush.bf16.msra.mxu0 0
    %4706 = vmatpush.bf16.msra.mxu0 %v4697
    %4707 = vmatpush.bf16.msra.mxu0 %v4696
    %4708 = vmatpush.bf16.msra.mxu0 %v4695
    %4709 = vmatpush.bf16.msra.mxu0 %v4694
    %4710 = vmatmul.bf16.gmra.mxu0 %v1075
    %v4711 = vpop.f32.mrf.mxu0
    %v4712 = vadd.f32 0.0, %v4711
    %v4713 = vpop.f32.mrf.mxu0
    %v4714 = vadd.f32 0.0, %v4713
    %4715 = vmatmul.bf16.gmra.mxu0 %v1078
    %v4716 = vpop.f32.mrf.mxu0
    %v4717 = vadd.f32 0.0, %v4716
    %v4718 = vpop.f32.mrf.mxu0
    %v4719 = vadd.f32 0.0, %v4718
    %4720 = vmatmul.bf16.gmra.mxu0 %v1081
    %v4721 = vpop.f32.mrf.mxu0
    %v4722 = vadd.f32 0.0, %v4721
    %v4723 = vpop.f32.mrf.mxu0
    %v4724 = vadd.f32 0.0, %v4723
    %4725 = vmatmul.bf16.gmra.mxu0 %v1084
    %v4726 = vpop.f32.mrf.mxu0
    %v4727 = vadd.f32 0.0, %v4726
    %v4728 = vpop.f32.mrf.mxu0
    %v4729 = vadd.f32 0.0, %v4728
    %4730 = vmatmul.bf16.gmra.mxu0 %v1087
    %v4731 = vpop.f32.mrf.mxu0
    %v4732 = vadd.f32 0.0, %v4731
    %v4733 = vpop.f32.mrf.mxu0
    %v4734 = vadd.f32 0.0, %v4733
    %4735 = vmatmul.bf16.gmra.mxu0 %v1090
    %v4736 = vpop.f32.mrf.mxu0
    %v4737 = vadd.f32 0.0, %v4736
    %v4738 = vpop.f32.mrf.mxu0
    %v4739 = vadd.f32 0.0, %v4738
    %4740 = vmatmul.bf16.gmra.mxu0 %v1093
    %v4741 = vpop.f32.mrf.mxu0
    %v4742 = vadd.f32 0.0, %v4741
    %v4743 = vpop.f32.mrf.mxu0
    %v4744 = vadd.f32 0.0, %v4743
    %4745 = vmatmul.bf16.gmra.mxu0 %v1096
    %v4746 = vpop.f32.mrf.mxu0
    %v4747 = vadd.f32 0.0, %v4746
    %v4748 = vpop.f32.mrf.mxu0
    %v4749 = vadd.f32 0.0, %v4748
    %4750 = vmatmul.bf16.gmra.mxu0 %v1099
    %v4751 = vpop.f32.mrf.mxu0
    %v4752 = vadd.f32 0.0, %v4751
    %v4753 = vpop.f32.mrf.mxu0
    %v4754 = vadd.f32 0.0, %v4753
    %4755 = vmatmul.bf16.gmra.mxu0 %v1102
    %v4756 = vpop.f32.mrf.mxu0
    %v4757 = vadd.f32 0.0, %v4756
    %v4758 = vpop.f32.mrf.mxu0
    %v4759 = vadd.f32 0.0, %v4758
    %4760 = vmatmul.bf16.gmra.mxu0 %v1105
    %v4761 = vpop.f32.mrf.mxu0
    %v4762 = vadd.f32 0.0, %v4761
    %v4763 = vpop.f32.mrf.mxu0
    %v4764 = vadd.f32 0.0, %v4763
    %4765 = vmatmul.bf16.gmra.mxu0 %v1108
    %v4766 = vpop.f32.mrf.mxu0
    %v4767 = vadd.f32 0.0, %v4766
    %v4768 = vpop.f32.mrf.mxu0
    %v4769 = vadd.f32 0.0, %v4768
    %4770 = vmatmul.bf16.gmra.mxu0 %v1111
    %v4771 = vpop.f32.mrf.mxu0
    %v4772 = vadd.f32 0.0, %v4771
    %v4773 = vpop.f32.mrf.mxu0
    %4774 = vdwg.mxu0
    %v4775 = vpack.c.bf16 %v4712, %v4712
    %v4776 = vpack.c.bf16 %v4714, %v4714
    %v4777 = vpack.c.bf16 %v4717, %v4717
    %v4778 = vpack.c.bf16 %v4719, %v4719
    %v4779 = vpack.c.bf16 %v4722, %v4722
    %v4780 = vpack.c.bf16 %v4724, %v4724
    %v4781 = vpack.c.bf16 %v4727, %v4727
    %v4782 = vpack.c.bf16 %v4729, %v4729
    %v4783 = vpack.c.bf16 %v4732, %v4732
    %v4784 = vpack.c.bf16 %v4734, %v4734
    %v4785 = vpack.c.bf16 %v4737, %v4737
    %v4786 = vpack.c.bf16 %v4739, %v4739
    %v4787 = vpack.c.bf16 %v4742, %v4742
    %v4788 = vpack.c.bf16 %v4744, %v4744
    %v4789 = vpack.c.bf16 %v4747, %v4747
    %v4790 = vpack.c.bf16 %v4749, %v4749
    %v4791 = vpack.c.bf16 %v4752, %v4752
    %v4792 = vpack.c.bf16 %v4754, %v4754
    %v4793 = vpack.c.bf16 %v4757, %v4757
    %v4794 = vpack.c.bf16 %v4759, %v4759
    %v4795 = vpack.c.bf16 %v4762, %v4762
    %v4796 = vpack.c.bf16 %v4764, %v4764
    %v4797 = vpack.c.bf16 %v4767, %v4767
    %v4798 = vpack.c.bf16 %v4769, %v4769
    %v4799 = vpack.c.bf16 %v4772, %v4772
    %4800 = vst.msk [vmem:[#allocation2 + $0x8fc] sm:$0xf] %vm1211, %v4775
    %4801 = vst.msk [vmem:[#allocation2 + $0x900] sm:$0xf] %vm1211, %v4776
    %4802 = vst.msk [vmem:[#allocation2 + $0x904] sm:$0xf] %vm1211, %v4777
    %4803 = vst.msk [vmem:[#allocation2 + $0x908] sm:$0xf] %vm1211, %v4778
    %4804 = vst.msk [vmem:[#allocation2 + $0x90c] sm:$0xf] %vm1211, %v4779
    %4805 = vst.msk [vmem:[#allocation2 + $0x910] sm:$0xf] %vm1211, %v4780
    %4806 = vst.msk [vmem:[#allocation2 + $0x914] sm:$0xf] %vm1211, %v4781
    %4807 = vst.msk [vmem:[#allocation2 + $0x918] sm:$0xf] %vm1211, %v4782
    %4808 = vst.msk [vmem:[#allocation2 + $0x91c] sm:$0xf] %vm1211, %v4783
    %4809 = vst.msk [vmem:[#allocation2 + $0x920] sm:$0xf] %vm1211, %v4784
    %4810 = vst.msk [vmem:[#allocation2 + $0x924] sm:$0xf] %vm1211, %v4785
    %4811 = vst.msk [vmem:[#allocation2 + $0x928] sm:$0xf] %vm1211, %v4786
    %4812 = vst.msk [vmem:[#allocation2 + $0x92c] sm:$0xf] %vm1211, %v4787
    %4813 = vst.msk [vmem:[#allocation2 + $0x930] sm:$0xf] %vm1211, %v4788
    %4814 = vst.msk [vmem:[#allocation2 + $0x934] sm:$0xf] %vm1211, %v4789
    %4815 = vst.msk [vmem:[#allocation2 + $0x938] sm:$0xf] %vm1211, %v4790
    %4816 = vst.msk [vmem:[#allocation2 + $0x93c] sm:$0xf] %vm1211, %v4791
    %4817 = vst.msk [vmem:[#allocation2 + $0x940] sm:$0xf] %vm1211, %v4792
    %4818 = vst.msk [vmem:[#allocation2 + $0x944] sm:$0xf] %vm1211, %v4793
    %4819 = vst.msk [vmem:[#allocation2 + $0x948] sm:$0xf] %vm1211, %v4794
    %4820 = vst.msk [vmem:[#allocation2 + $0x94c] sm:$0xf] %vm1211, %v4795
    %4821 = vst.msk [vmem:[#allocation2 + $0x950] sm:$0xf] %vm1211, %v4796
    %4822 = vst.msk [vmem:[#allocation2 + $0x954] sm:$0xf] %vm1211, %v4797
    %4823 = vst.msk [vmem:[#allocation2 + $0x958] sm:$0xf] %vm1211, %v4798
    %4824 = vst.msk [vmem:[#allocation2 + $0x95c] sm:$0xf] %vm1211, %v4799
    %s4825 = scalar_lea.vmem %s3, 768
    %v4826 = vld [vmem:[%s4825] sm:$0xf]
    %v4827 = vld [vmem:[%s4825 + $0x4] sm:$0xf]
    %v4828 = vld [vmem:[%s4825 + $0x8] sm:$0xf]
    %v4829 = vld [vmem:[%s4825 + $0xc] sm:$0xf]
    %v4830 = vld [vmem:[%s4825 + $0x10] sm:$0xf]
    %v4831 = vld [vmem:[%s4825 + $0x14] sm:$0xf]
    %v4832 = vld [vmem:[%s4825 + $0x18] sm:$0xf]
    %v4833 = vld [vmem:[%s4825 + $0x1c] sm:$0xf]
    %v4842 = vunpack.c.l.b16 %v4826
    %v4843 = vunpack.c.l.b16 %v4827
    %v4844 = vunpack.c.l.b16 %v4828
    %v4845 = vunpack.c.l.b16 %v4829
    %v4846 = vunpack.c.l.b16 %v4830
    %v4847 = vunpack.c.l.b16 %v4831
    %v4848 = vunpack.c.l.b16 %v4832
    %v4849 = vunpack.c.l.b16 %v4833
    %v4850 = vpack.c.b16 %v4843, %v4842
    %v4851 = vpack.c.b16 %v4845, %v4844
    %v4852 = vpack.c.b16 %v4847, %v4846
    %v4853 = vpack.c.b16 %v4849, %v4848
    %4858 = vmatpush.bf16.msra.mxu0 0
    %4859 = vmatpush.bf16.msra.mxu0 0
    %4860 = vmatpush.bf16.msra.mxu0 0
    %4861 = vmatpush.bf16.msra.mxu0 0
    %4862 = vmatpush.bf16.msra.mxu0 %v4853
    %4863 = vmatpush.bf16.msra.mxu0 %v4852
    %4864 = vmatpush.bf16.msra.mxu0 %v4851
    %4865 = vmatpush.bf16.msra.mxu0 %v4850
    %4866 = vmatmul.bf16.gmra.mxu0 %v1075
    %v4867 = vpop.f32.mrf.mxu0
    %v4868 = vadd.f32 0.0, %v4867
    %v4869 = vpop.f32.mrf.mxu0
    %v4870 = vadd.f32 0.0, %v4869
    %4871 = vmatmul.bf16.gmra.mxu0 %v1078
    %v4872 = vpop.f32.mrf.mxu0
    %v4873 = vadd.f32 0.0, %v4872
    %v4874 = vpop.f32.mrf.mxu0
    %v4875 = vadd.f32 0.0, %v4874
    %4876 = vmatmul.bf16.gmra.mxu0 %v1081
    %v4877 = vpop.f32.mrf.mxu0
    %v4878 = vadd.f32 0.0, %v4877
    %v4879 = vpop.f32.mrf.mxu0
    %v4880 = vadd.f32 0.0, %v4879
    %4881 = vmatmul.bf16.gmra.mxu0 %v1084
    %v4882 = vpop.f32.mrf.mxu0
    %v4883 = vadd.f32 0.0, %v4882
    %v4884 = vpop.f32.mrf.mxu0
    %v4885 = vadd.f32 0.0, %v4884
    %4886 = vmatmul.bf16.gmra.mxu0 %v1087
    %v4887 = vpop.f32.mrf.mxu0
    %v4888 = vadd.f32 0.0, %v4887
    %v4889 = vpop.f32.mrf.mxu0
    %v4890 = vadd.f32 0.0, %v4889
    %4891 = vmatmul.bf16.gmra.mxu0 %v1090
    %v4892 = vpop.f32.mrf.mxu0
    %v4893 = vadd.f32 0.0, %v4892
    %v4894 = vpop.f32.mrf.mxu0
    %v4895 = vadd.f32 0.0, %v4894
    %4896 = vmatmul.bf16.gmra.mxu0 %v1093
    %v4897 = vpop.f32.mrf.mxu0
    %v4898 = vadd.f32 0.0, %v4897
    %v4899 = vpop.f32.mrf.mxu0
    %v4900 = vadd.f32 0.0, %v4899
    %4901 = vmatmul.bf16.gmra.mxu0 %v1096
    %v4902 = vpop.f32.mrf.mxu0
    %v4903 = vadd.f32 0.0, %v4902
    %v4904 = vpop.f32.mrf.mxu0
    %v4905 = vadd.f32 0.0, %v4904
    %4906 = vmatmul.bf16.gmra.mxu0 %v1099
    %v4907 = vpop.f32.mrf.mxu0
    %v4908 = vadd.f32 0.0, %v4907
    %v4909 = vpop.f32.mrf.mxu0
    %v4910 = vadd.f32 0.0, %v4909
    %4911 = vmatmul.bf16.gmra.mxu0 %v1102
    %v4912 = vpop.f32.mrf.mxu0
    %v4913 = vadd.f32 0.0, %v4912
    %v4914 = vpop.f32.mrf.mxu0
    %v4915 = vadd.f32 0.0, %v4914
    %4916 = vmatmul.bf16.gmra.mxu0 %v1105
    %v4917 = vpop.f32.mrf.mxu0
    %v4918 = vadd.f32 0.0, %v4917
    %v4919 = vpop.f32.mrf.mxu0
    %v4920 = vadd.f32 0.0, %v4919
    %4921 = vmatmul.bf16.gmra.mxu0 %v1108
    %v4922 = vpop.f32.mrf.mxu0
    %v4923 = vadd.f32 0.0, %v4922
    %v4924 = vpop.f32.mrf.mxu0
    %v4925 = vadd.f32 0.0, %v4924
    %4926 = vmatmul.bf16.gmra.mxu0 %v1111
    %v4927 = vpop.f32.mrf.mxu0
    %v4928 = vadd.f32 0.0, %v4927
    %v4929 = vpop.f32.mrf.mxu0
    %4930 = vdwg.mxu0
    %v4931 = vpack.c.bf16 %v4868, %v4868
    %v4932 = vpack.c.bf16 %v4870, %v4870
    %v4933 = vpack.c.bf16 %v4873, %v4873
    %v4934 = vpack.c.bf16 %v4875, %v4875
    %v4935 = vpack.c.bf16 %v4878, %v4878
    %v4936 = vpack.c.bf16 %v4880, %v4880
    %v4937 = vpack.c.bf16 %v4883, %v4883
    %v4938 = vpack.c.bf16 %v4885, %v4885
    %v4939 = vpack.c.bf16 %v4888, %v4888
    %v4940 = vpack.c.bf16 %v4890, %v4890
    %v4941 = vpack.c.bf16 %v4893, %v4893
    %v4942 = vpack.c.bf16 %v4895, %v4895
    %v4943 = vpack.c.bf16 %v4898, %v4898
    %v4944 = vpack.c.bf16 %v4900, %v4900
    %v4945 = vpack.c.bf16 %v4903, %v4903
    %v4946 = vpack.c.bf16 %v4905, %v4905
    %v4947 = vpack.c.bf16 %v4908, %v4908
    %v4948 = vpack.c.bf16 %v4910, %v4910
    %v4949 = vpack.c.bf16 %v4913, %v4913
    %v4950 = vpack.c.bf16 %v4915, %v4915
    %v4951 = vpack.c.bf16 %v4918, %v4918
    %v4952 = vpack.c.bf16 %v4920, %v4920
    %v4953 = vpack.c.bf16 %v4923, %v4923
    %v4954 = vpack.c.bf16 %v4925, %v4925
    %v4955 = vpack.c.bf16 %v4928, %v4928
    %4956 = vst.msk [vmem:[#allocation2 + $0x960] sm:$0xf] %vm1211, %v4931
    %4957 = vst.msk [vmem:[#allocation2 + $0x964] sm:$0xf] %vm1211, %v4932
    %4958 = vst.msk [vmem:[#allocation2 + $0x968] sm:$0xf] %vm1211, %v4933
    %4959 = vst.msk [vmem:[#allocation2 + $0x96c] sm:$0xf] %vm1211, %v4934
    %4960 = vst.msk [vmem:[#allocation2 + $0x970] sm:$0xf] %vm1211, %v4935
    %4961 = vst.msk [vmem:[#allocation2 + $0x974] sm:$0xf] %vm1211, %v4936
    %4962 = vst.msk [vmem:[#allocation2 + $0x978] sm:$0xf] %vm1211, %v4937
    %4963 = vst.msk [vmem:[#allocation2 + $0x97c] sm:$0xf] %vm1211, %v4938
    %4964 = vst.msk [vmem:[#allocation2 + $0x980] sm:$0xf] %vm1211, %v4939
    %4965 = vst.msk [vmem:[#allocation2 + $0x984] sm:$0xf] %vm1211, %v4940
    %4966 = vst.msk [vmem:[#allocation2 + $0x988] sm:$0xf] %vm1211, %v4941
    %4967 = vst.msk [vmem:[#allocation2 + $0x98c] sm:$0xf] %vm1211, %v4942
    %4968 = vst.msk [vmem:[#allocation2 + $0x990] sm:$0xf] %vm1211, %v4943
    %4969 = vst.msk [vmem:[#allocation2 + $0x994] sm:$0xf] %vm1211, %v4944
    %4970 = vst.msk [vmem:[#allocation2 + $0x998] sm:$0xf] %vm1211, %v4945
    %4971 = vst.msk [vmem:[#allocation2 + $0x99c] sm:$0xf] %vm1211, %v4946
    %4972 = vst.msk [vmem:[#allocation2 + $0x9a0] sm:$0xf] %vm1211, %v4947
    %4973 = vst.msk [vmem:[#allocation2 + $0x9a4] sm:$0xf] %vm1211, %v4948
    %4974 = vst.msk [vmem:[#allocation2 + $0x9a8] sm:$0xf] %vm1211, %v4949
    %4975 = vst.msk [vmem:[#allocation2 + $0x9ac] sm:$0xf] %vm1211, %v4950
    %4976 = vst.msk [vmem:[#allocation2 + $0x9b0] sm:$0xf] %vm1211, %v4951
    %4977 = vst.msk [vmem:[#allocation2 + $0x9b4] sm:$0xf] %vm1211, %v4952
    %4978 = vst.msk [vmem:[#allocation2 + $0x9b8] sm:$0xf] %vm1211, %v4953
    %4979 = vst.msk [vmem:[#allocation2 + $0x9bc] sm:$0xf] %vm1211, %v4954
    %4980 = vst.msk [vmem:[#allocation2 + $0x9c0] sm:$0xf] %vm1211, %v4955
    %v4981 = vld [vmem:[%s5] sm:$0xff]
    %v4982 = vld [vmem:[%s5 + $0x8] sm:$0xff]
    %v4983 = vld [vmem:[%s5 + $0x10] sm:$0xff]
    %v4984 = vld [vmem:[%s5 + $0x18] sm:$0xff]
    %v4985 = vld [vmem:[%s5 + $0x20] sm:$0xff]
    %v4986 = vld [vmem:[%s5 + $0x28] sm:$0xff]
    %v4987 = vld [vmem:[%s5 + $0x30] sm:$0xff]
    %v4988 = vld [vmem:[%s5 + $0x38] sm:$0xff]
    %v4989 = vld [vmem:[%s5 + $0x40] sm:$0xff]
    %v4990 = vld [vmem:[%s5 + $0x48] sm:$0xff]
    %v4991 = vld [vmem:[%s5 + $0x50] sm:$0xff]
    %v4992 = vld [vmem:[%s5 + $0x58] sm:$0xff]
    %v4993 = vld [vmem:[%s5 + $0x60] sm:$0xff]
    %v4994 = vld [vmem:[%s5 + $0x68] sm:$0xff]
    %v4995 = vld [vmem:[%s5 + $0x70] sm:$0xff]
    %v4996 = vld [vmem:[%s5 + $0x78] sm:$0xff]
    %v4997 = vld [vmem:[%s5 + $0x80] sm:$0xff]
    %v4998 = vld [vmem:[%s5 + $0x88] sm:$0xff]
    %v4999 = vld [vmem:[%s5 + $0x90] sm:$0xff]
    %v5000 = vld [vmem:[%s5 + $0x98] sm:$0xff]
    %v5001 = vld [vmem:[%s5 + $0xa0] sm:$0xff]
    %v5002 = vld [vmem:[%s5 + $0xa8] sm:$0xff]
    %v5003 = vld [vmem:[%s5 + $0xb0] sm:$0xff]
    %v5004 = vld [vmem:[%s5 + $0xb8] sm:$0xff]
    %v5005 = vld [vmem:[%s5 + $0xc0] sm:$0xff]
    %v5006 = vld [vmem:[%s5 + $0xc8] sm:$0xff]
    %v5007 = vld [vmem:[%s5 + $0xd0] sm:$0xff]
    %v5008 = vld [vmem:[%s5 + $0xd8] sm:$0xff]
    %v5009 = vld [vmem:[%s5 + $0xe0] sm:$0xff]
    %v5010 = vld [vmem:[%s5 + $0xe8] sm:$0xff]
    %v5011 = vld [vmem:[%s5 + $0xf0] sm:$0xff]
    %v5012 = vld [vmem:[%s5 + $0xf8] sm:$0xff]
    %v5013 = vld [vmem:[%s5 + $0x100] sm:$0xff]
    %v5014 = vld [vmem:[%s5 + $0x108] sm:$0xff]
    %v5015 = vld [vmem:[%s5 + $0x110] sm:$0xff]
    %v5016 = vld [vmem:[%s5 + $0x118] sm:$0xff]
    %v5017 = vld [vmem:[%s5 + $0x120] sm:$0xff]
    %v5018 = vld [vmem:[%s5 + $0x128] sm:$0xff]
    %v5019 = vld [vmem:[%s5 + $0x130] sm:$0xff]
    %v5020 = vld [vmem:[%s5 + $0x138] sm:$0xff]
    %v5021 = vld [vmem:[%s5 + $0x140] sm:$0xff]
    %v5022 = vld [vmem:[%s5 + $0x148] sm:$0xff]
    %v5023 = vld [vmem:[%s5 + $0x150] sm:$0xff]
    %v5024 = vld [vmem:[%s5 + $0x158] sm:$0xff]
    %v5025 = vld [vmem:[%s5 + $0x160] sm:$0xff]
    %v5026 = vld [vmem:[%s5 + $0x168] sm:$0xff]
    %v5027 = vld [vmem:[%s5 + $0x170] sm:$0xff]
    %v5028 = vld [vmem:[%s5 + $0x178] sm:$0xff]
    %v5029 = vld [vmem:[%s5 + $0x180] sm:$0xff]
    %v5030 = vld [vmem:[%s5 + $0x188] sm:$0xff]
    %v5031 = vld [vmem:[%s5 + $0x190] sm:$0xff]
    %v5032 = vld [vmem:[%s5 + $0x198] sm:$0xff]
    %v5033 = vld [vmem:[%s5 + $0x1a0] sm:$0xff]
    %v5034 = vld [vmem:[%s5 + $0x1a8] sm:$0xff]
    %v5035 = vld [vmem:[%s5 + $0x1b0] sm:$0xff]
    %v5036 = vld [vmem:[%s5 + $0x1b8] sm:$0xff]
    %v5037 = vld [vmem:[%s5 + $0x1c0] sm:$0xff]
    %v5038 = vld [vmem:[%s5 + $0x1c8] sm:$0xff]
    %v5039 = vld [vmem:[%s5 + $0x1d0] sm:$0xff]
    %v5040 = vld [vmem:[%s5 + $0x1d8] sm:$0xff]
    %v5041 = vld [vmem:[%s5 + $0x1e0] sm:$0xff]
    %v5042 = vld [vmem:[%s5 + $0x1e8] sm:$0xff]
    %v5043 = vld [vmem:[%s5 + $0x1f0] sm:$0xff]
    %v5044 = vld [vmem:[%s5 + $0x1f8] sm:$0xff]
    %v5045 = vld [vmem:[%s5 + $0x200] sm:$0xff]
    %v5046 = vld [vmem:[%s5 + $0x208] sm:$0xff]
    %v5047 = vld [vmem:[%s5 + $0x210] sm:$0xff]
    %v5048 = vld [vmem:[%s5 + $0x218] sm:$0xff]
    %v5049 = vld [vmem:[%s5 + $0x220] sm:$0xff]
    %v5050 = vld [vmem:[%s5 + $0x228] sm:$0xff]
    %v5051 = vld [vmem:[%s5 + $0x230] sm:$0xff]
    %v5052 = vld [vmem:[%s5 + $0x238] sm:$0xff]
    %v5053 = vld [vmem:[%s5 + $0x240] sm:$0xff]
    %v5054 = vld [vmem:[%s5 + $0x248] sm:$0xff]
    %v5055 = vld [vmem:[%s5 + $0x250] sm:$0xff]
    %v5056 = vld [vmem:[%s5 + $0x258] sm:$0xff]
    %v5057 = vld [vmem:[%s5 + $0x260] sm:$0xff]
    %v5058 = vld [vmem:[%s5 + $0x268] sm:$0xff]
    %v5059 = vld [vmem:[%s5 + $0x270] sm:$0xff]
    %v5060 = vld [vmem:[%s5 + $0x278] sm:$0xff]
    %v5061 = vld [vmem:[%s5 + $0x280] sm:$0xff]
    %v5062 = vld [vmem:[%s5 + $0x288] sm:$0xff]
    %v5063 = vld [vmem:[%s5 + $0x290] sm:$0xff]
    %v5064 = vld [vmem:[%s5 + $0x298] sm:$0xff]
    %v5065 = vld [vmem:[%s5 + $0x2a0] sm:$0xff]
    %v5066 = vld [vmem:[%s5 + $0x2a8] sm:$0xff]
    %v5067 = vld [vmem:[%s5 + $0x2b0] sm:$0xff]
    %v5068 = vld [vmem:[%s5 + $0x2b8] sm:$0xff]
    %v5069 = vld [vmem:[%s5 + $0x2c0] sm:$0xff]
    %v5070 = vld [vmem:[%s5 + $0x2c8] sm:$0xff]
    %v5071 = vld [vmem:[%s5 + $0x2d0] sm:$0xff]
    %v5072 = vld [vmem:[%s5 + $0x2d8] sm:$0xff]
    %v5073 = vld [vmem:[%s5 + $0x2e0] sm:$0xff]
    %v5074 = vld [vmem:[%s5 + $0x2e8] sm:$0xff]
    %v5075 = vld [vmem:[%s5 + $0x2f0] sm:$0xff]
    %v5076 = vld [vmem:[%s5 + $0x2f8] sm:$0xff]
    %v5077 = vld [vmem:[%s5 + $0x300] sm:$0xff]
    %v5078 = vld [vmem:[%s5 + $0x308] sm:$0xff]
    %v5079 = vld [vmem:[%s5 + $0x310] sm:$0xff]
    %v5080 = vld [vmem:[%s5 + $0x318] sm:$0xff]
    %v5081 = vld [vmem:[%s5 + $0x320] sm:$0xff]
    %v5082 = vld [vmem:[%s5 + $0x328] sm:$0xff]
    %v5083 = vld [vmem:[%s5 + $0x330] sm:$0xff]
    %v5084 = vld [vmem:[%s5 + $0x338] sm:$0xff]
    %v5085 = vld [vmem:[%s5 + $0x340] sm:$0xff]
    %v5086 = vld [vmem:[%s5 + $0x348] sm:$0xff]
    %v5087 = vld [vmem:[%s5 + $0x350] sm:$0xff]
    %v5088 = vld [vmem:[%s5 + $0x358] sm:$0xff]
    %v5089 = vld [vmem:[%s5 + $0x360] sm:$0xff]
    %v5090 = vld [vmem:[%s5 + $0x368] sm:$0xff]
    %v5091 = vld [vmem:[%s5 + $0x370] sm:$0xff]
    %v5092 = vld [vmem:[%s5 + $0x378] sm:$0xff]
    %v5093 = vld [vmem:[%s5 + $0x380] sm:$0xff]
    %v5094 = vld [vmem:[%s5 + $0x388] sm:$0xff]
    %v5095 = vld [vmem:[%s5 + $0x390] sm:$0xff]
    %v5096 = vld [vmem:[%s5 + $0x398] sm:$0xff]
    %v5097 = vld [vmem:[%s5 + $0x3a0] sm:$0xff]
    %v5098 = vld [vmem:[%s5 + $0x3a8] sm:$0xff]
    %v5099 = vld [vmem:[%s5 + $0x3b0] sm:$0xff]
    %v5100 = vld [vmem:[%s5 + $0x3b8] sm:$0xff]
    %v5101 = vld [vmem:[%s5 + $0x3c0] sm:$0xff]
    %v5102 = vld [vmem:[%s5 + $0x3c8] sm:$0xff]
    %v5103 = vld [vmem:[%s5 + $0x3d0] sm:$0xff]
    %v5104 = vld [vmem:[%s5 + $0x3d8] sm:$0xff]
    %v5105 = vld [vmem:[%s5 + $0x3e0] sm:$0xff]
    %v5106 = vld [vmem:[%s5 + $0x3e8] sm:$0xff]
    %v5107 = vld [vmem:[%s5 + $0x3f0] sm:$0xff]
    %v5108 = vld [vmem:[%s5 + $0x3f8] sm:$0xff]
    %v5109 = vld [vmem:[%s5 + $0x400] sm:$0xff]
    %v5110 = vld [vmem:[%s5 + $0x408] sm:$0xff]
    %v5111 = vld [vmem:[%s5 + $0x410] sm:$0xff]
    %v5112 = vld [vmem:[%s5 + $0x418] sm:$0xff]
    %v5113 = vld [vmem:[%s5 + $0x420] sm:$0xff]
    %v5114 = vld [vmem:[%s5 + $0x428] sm:$0xff]
    %v5115 = vld [vmem:[%s5 + $0x430] sm:$0xff]
    %v5116 = vld [vmem:[%s5 + $0x438] sm:$0xff]
    %v5117 = vld [vmem:[%s5 + $0x440] sm:$0xff]
    %v5118 = vld [vmem:[%s5 + $0x448] sm:$0xff]
    %v5119 = vld [vmem:[%s5 + $0x450] sm:$0xff]
    %v5120 = vld [vmem:[%s5 + $0x458] sm:$0xff]
    %v5121 = vld [vmem:[%s5 + $0x460] sm:$0xff]
    %v5122 = vld [vmem:[%s5 + $0x468] sm:$0xff]
    %v5123 = vld [vmem:[%s5 + $0x470] sm:$0xff]
    %v5124 = vld [vmem:[%s5 + $0x478] sm:$0xff]
    %v5125 = vld [vmem:[%s5 + $0x480] sm:$0xff]
    %v5126 = vld [vmem:[%s5 + $0x488] sm:$0xff]
    %v5127 = vld [vmem:[%s5 + $0x490] sm:$0xff]
    %v5128 = vld [vmem:[%s5 + $0x498] sm:$0xff]
    %v5129 = vld [vmem:[%s5 + $0x4a0] sm:$0xff]
    %v5130 = vld [vmem:[%s5 + $0x4a8] sm:$0xff]
    %v5131 = vld [vmem:[%s5 + $0x4b0] sm:$0xff]
    %v5132 = vld [vmem:[%s5 + $0x4b8] sm:$0xff]
    %v5133 = vld [vmem:[%s5 + $0x4c0] sm:$0xff]
    %v5134 = vld [vmem:[%s5 + $0x4c8] sm:$0xff]
    %v5135 = vld [vmem:[%s5 + $0x4d0] sm:$0xff]
    %v5136 = vld [vmem:[%s5 + $0x4d8] sm:$0xff]
    %v5137 = vld [vmem:[%s5 + $0x4e0] sm:$0xff]
    %v5138 = vld [vmem:[%s5 + $0x4e8] sm:$0xff]
    %v5139 = vld [vmem:[%s5 + $0x4f0] sm:$0xff]
    %v5140 = vld [vmem:[%s5 + $0x4f8] sm:$0xff]
    %v5141 = vld [vmem:[%s5 + $0x500] sm:$0xff]
    %v5142 = vld [vmem:[%s5 + $0x508] sm:$0xff]
    %v5143 = vld [vmem:[%s5 + $0x510] sm:$0xff]
    %v5144 = vld [vmem:[%s5 + $0x518] sm:$0xff]
    %v5145 = vld [vmem:[%s5 + $0x520] sm:$0xff]
    %v5146 = vld [vmem:[%s5 + $0x528] sm:$0xff]
    %v5147 = vld [vmem:[%s5 + $0x530] sm:$0xff]
    %v5148 = vld [vmem:[%s5 + $0x538] sm:$0xff]
    %v5149 = vld [vmem:[%s5 + $0x540] sm:$0xff]
    %v5150 = vld [vmem:[%s5 + $0x548] sm:$0xff]
    %v5151 = vld [vmem:[%s5 + $0x550] sm:$0xff]
    %v5152 = vld [vmem:[%s5 + $0x558] sm:$0xff]
    %v5153 = vld [vmem:[%s5 + $0x560] sm:$0xff]
    %v5154 = vld [vmem:[%s5 + $0x568] sm:$0xff]
    %v5155 = vld [vmem:[%s5 + $0x570] sm:$0xff]
    %v5156 = vld [vmem:[%s5 + $0x578] sm:$0xff]
    %v5157 = vld [vmem:[%s5 + $0x580] sm:$0xff]
    %v5158 = vld [vmem:[%s5 + $0x588] sm:$0xff]
    %v5159 = vld [vmem:[%s5 + $0x590] sm:$0xff]
    %v5160 = vld [vmem:[%s5 + $0x598] sm:$0xff]
    %v5161 = vld [vmem:[%s5 + $0x5a0] sm:$0xff]
    %v5162 = vld [vmem:[%s5 + $0x5a8] sm:$0xff]
    %v5163 = vld [vmem:[%s5 + $0x5b0] sm:$0xff]
    %v5164 = vld [vmem:[%s5 + $0x5b8] sm:$0xff]
    %v5165 = vld [vmem:[%s5 + $0x5c0] sm:$0xff]
    %v5166 = vld [vmem:[%s5 + $0x5c8] sm:$0xff]
    %v5167 = vld [vmem:[%s5 + $0x5d0] sm:$0xff]
    %v5168 = vld [vmem:[%s5 + $0x5d8] sm:$0xff]
    %v5169 = vld [vmem:[%s5 + $0x5e0] sm:$0xff]
    %v5170 = vld [vmem:[%s5 + $0x5e8] sm:$0xff]
    %v5171 = vld [vmem:[%s5 + $0x5f0] sm:$0xff]
    %v5172 = vld [vmem:[%s5 + $0x5f8] sm:$0xff]
    %v5173 = vld [vmem:[%s5 + $0x600] sm:$0xff]
    %v5174 = vld [vmem:[%s5 + $0x608] sm:$0xff]
    %v5175 = vld [vmem:[%s5 + $0x610] sm:$0xff]
    %v5176 = vld [vmem:[%s5 + $0x618] sm:$0xff]
    %v5177 = vld [vmem:[%s5 + $0x620] sm:$0xff]
    %v5178 = vld [vmem:[%s5 + $0x628] sm:$0xff]
    %v5179 = vld [vmem:[%s5 + $0x630] sm:$0xff]
    %v5180 = vld [vmem:[%s5 + $0x638] sm:$0xff]
    %v5181 = vld [vmem:[%s5 + $0x640] sm:$0xff]
    %v5182 = vld [vmem:[%s5 + $0x648] sm:$0xff]
    %v5183 = vld [vmem:[%s5 + $0x650] sm:$0xff]
    %v5184 = vld [vmem:[%s5 + $0x658] sm:$0xff]
    %v5185 = vld [vmem:[%s5 + $0x660] sm:$0xff]
    %v5186 = vld [vmem:[%s5 + $0x668] sm:$0xff]
    %v5187 = vld [vmem:[%s5 + $0x670] sm:$0xff]
    %v5188 = vld [vmem:[%s5 + $0x678] sm:$0xff]
    %v5189 = vld [vmem:[%s5 + $0x680] sm:$0xff]
    %v5190 = vld [vmem:[%s5 + $0x688] sm:$0xff]
    %v5191 = vld [vmem:[%s5 + $0x690] sm:$0xff]
    %v5192 = vld [vmem:[%s5 + $0x698] sm:$0xff]
    %v5193 = vld [vmem:[%s5 + $0x6a0] sm:$0xff]
    %v5194 = vld [vmem:[%s5 + $0x6a8] sm:$0xff]
    %v5195 = vld [vmem:[%s5 + $0x6b0] sm:$0xff]
    %v5196 = vld [vmem:[%s5 + $0x6b8] sm:$0xff]
    %v5197 = vld [vmem:[%s5 + $0x6c0] sm:$0xff]
    %v5198 = vld [vmem:[%s5 + $0x6c8] sm:$0xff]
    %v5199 = vld [vmem:[%s5 + $0x6d0] sm:$0xff]
    %v5200 = vld [vmem:[%s5 + $0x6d8] sm:$0xff]
    %v5201 = vld [vmem:[%s5 + $0x6e0] sm:$0xff]
    %v5202 = vld [vmem:[%s5 + $0x6e8] sm:$0xff]
    %v5203 = vld [vmem:[%s5 + $0x6f0] sm:$0xff]
    %v5204 = vld [vmem:[%s5 + $0x6f8] sm:$0xff]
    %v5205 = vld [vmem:[%s5 + $0x700] sm:$0xff]
    %v5206 = vld [vmem:[%s5 + $0x708] sm:$0xff]
    %v5207 = vld [vmem:[%s5 + $0x710] sm:$0xff]
    %v5208 = vld [vmem:[%s5 + $0x718] sm:$0xff]
    %v5209 = vld [vmem:[%s5 + $0x720] sm:$0xff]
    %v5210 = vld [vmem:[%s5 + $0x728] sm:$0xff]
    %v5211 = vld [vmem:[%s5 + $0x730] sm:$0xff]
    %v5212 = vld [vmem:[%s5 + $0x738] sm:$0xff]
    %v5213 = vld [vmem:[%s5 + $0x740] sm:$0xff]
    %v5214 = vld [vmem:[%s5 + $0x748] sm:$0xff]
    %v5215 = vld [vmem:[%s5 + $0x750] sm:$0xff]
    %v5216 = vld [vmem:[%s5 + $0x758] sm:$0xff]
    %v5217 = vld [vmem:[%s5 + $0x760] sm:$0xff]
    %v5218 = vld [vmem:[%s5 + $0x768] sm:$0xff]
    %v5219 = vld [vmem:[%s5 + $0x770] sm:$0xff]
    %v5220 = vld [vmem:[%s5 + $0x778] sm:$0xff]
    %v5221 = vld [vmem:[#allocation2] sm:$0xf]
    %v5222 = vld [vmem:[#allocation2 + $0x4] sm:$0xf]
    %v5223 = vld [vmem:[#allocation2 + $0x8] sm:$0xf]
    %v5224 = vld [vmem:[#allocation2 + $0xc] sm:$0xf]
    %v5225 = vld [vmem:[#allocation2 + $0x10] sm:$0xf]
    %v5226 = vld [vmem:[#allocation2 + $0x14] sm:$0xf]
    %v5227 = vld [vmem:[#allocation2 + $0x18] sm:$0xf]
    %v5228 = vld [vmem:[#allocation2 + $0x1c] sm:$0xf]
    %v5229 = vld [vmem:[#allocation2 + $0x20] sm:$0xf]
    %v5230 = vld [vmem:[#allocation2 + $0x24] sm:$0xf]
    %v5231 = vld [vmem:[#allocation2 + $0x28] sm:$0xf]
    %v5232 = vld [vmem:[#allocation2 + $0x2c] sm:$0xf]
    %v5233 = vld [vmem:[#allocation2 + $0x30] sm:$0xf]
    %v5234 = vld [vmem:[#allocation2 + $0x34] sm:$0xf]
    %v5235 = vld [vmem:[#allocation2 + $0x38] sm:$0xf]
    %v5236 = vld [vmem:[#allocation2 + $0x3c] sm:$0xf]
    %v5237 = vld [vmem:[#allocation2 + $0x40] sm:$0xf]
    %v5238 = vld [vmem:[#allocation2 + $0x44] sm:$0xf]
    %v5239 = vld [vmem:[#allocation2 + $0x48] sm:$0xf]
    %v5240 = vld [vmem:[#allocation2 + $0x4c] sm:$0xf]
    %v5241 = vld [vmem:[#allocation2 + $0x50] sm:$0xf]
    %v5242 = vld [vmem:[#allocation2 + $0x54] sm:$0xf]
    %v5243 = vld [vmem:[#allocation2 + $0x58] sm:$0xf]
    %v5244 = vld [vmem:[#allocation2 + $0x5c] sm:$0xf]
    %v5245 = vld [vmem:[#allocation2 + $0x60] sm:$0xf]
    %v5246 = vld [vmem:[#allocation2 + $0x64] sm:$0xf]
    %v5247 = vld [vmem:[#allocation2 + $0x68] sm:$0xf]
    %v5248 = vld [vmem:[#allocation2 + $0x6c] sm:$0xf]
    %v5249 = vld [vmem:[#allocation2 + $0x70] sm:$0xf]
    %v5250 = vld [vmem:[#allocation2 + $0x74] sm:$0xf]
    %v5251 = vld [vmem:[#allocation2 + $0x78] sm:$0xf]
    %v5252 = vld [vmem:[#allocation2 + $0x7c] sm:$0xf]
    %v5253 = vld [vmem:[#allocation2 + $0x80] sm:$0xf]
    %v5254 = vld [vmem:[#allocation2 + $0x84] sm:$0xf]
    %v5255 = vld [vmem:[#allocation2 + $0x88] sm:$0xf]
    %v5256 = vld [vmem:[#allocation2 + $0x8c] sm:$0xf]
    %v5257 = vld [vmem:[#allocation2 + $0x90] sm:$0xf]
    %v5258 = vld [vmem:[#allocation2 + $0x94] sm:$0xf]
    %v5259 = vld [vmem:[#allocation2 + $0x98] sm:$0xf]
    %v5260 = vld [vmem:[#allocation2 + $0x9c] sm:$0xf]
    %v5261 = vld [vmem:[#allocation2 + $0xa0] sm:$0xf]
    %v5262 = vld [vmem:[#allocation2 + $0xa4] sm:$0xf]
    %v5263 = vld [vmem:[#allocation2 + $0xa8] sm:$0xf]
    %v5264 = vld [vmem:[#allocation2 + $0xac] sm:$0xf]
    %v5265 = vld [vmem:[#allocation2 + $0xb0] sm:$0xf]
    %v5266 = vld [vmem:[#allocation2 + $0xb4] sm:$0xf]
    %v5267 = vld [vmem:[#allocation2 + $0xb8] sm:$0xf]
    %v5268 = vld [vmem:[#allocation2 + $0xbc] sm:$0xf]
    %v5269 = vld [vmem:[#allocation2 + $0xc0] sm:$0xf]
    %v5270 = vld [vmem:[#allocation2 + $0xc4] sm:$0xf]
    %v5271 = vld [vmem:[#allocation2 + $0xc8] sm:$0xf]
    %v5272 = vld [vmem:[#allocation2 + $0xcc] sm:$0xf]
    %v5273 = vld [vmem:[#allocation2 + $0xd0] sm:$0xf]
    %v5274 = vld [vmem:[#allocation2 + $0xd4] sm:$0xf]
    %v5275 = vld [vmem:[#allocation2 + $0xd8] sm:$0xf]
    %v5276 = vld [vmem:[#allocation2 + $0xdc] sm:$0xf]
    %v5277 = vld [vmem:[#allocation2 + $0xe0] sm:$0xf]
    %v5278 = vld [vmem:[#allocation2 + $0xe4] sm:$0xf]
    %v5279 = vld [vmem:[#allocation2 + $0xe8] sm:$0xf]
    %v5280 = vld [vmem:[#allocation2 + $0xec] sm:$0xf]
    %v5281 = vld [vmem:[#allocation2 + $0xf0] sm:$0xf]
    %v5282 = vld [vmem:[#allocation2 + $0xf4] sm:$0xf]
    %v5283 = vld [vmem:[#allocation2 + $0xf8] sm:$0xf]
    %v5284 = vld [vmem:[#allocation2 + $0xfc] sm:$0xf]
    %v5285 = vld [vmem:[#allocation2 + $0x100] sm:$0xf]
    %v5286 = vld [vmem:[#allocation2 + $0x104] sm:$0xf]
    %v5287 = vld [vmem:[#allocation2 + $0x108] sm:$0xf]
    %v5288 = vld [vmem:[#allocation2 + $0x10c] sm:$0xf]
    %v5289 = vld [vmem:[#allocation2 + $0x110] sm:$0xf]
    %v5290 = vld [vmem:[#allocation2 + $0x114] sm:$0xf]
    %v5291 = vld [vmem:[#allocation2 + $0x118] sm:$0xf]
    %v5292 = vld [vmem:[#allocation2 + $0x11c] sm:$0xf]
    %v5293 = vld [vmem:[#allocation2 + $0x120] sm:$0xf]
    %v5294 = vld [vmem:[#allocation2 + $0x124] sm:$0xf]
    %v5295 = vld [vmem:[#allocation2 + $0x128] sm:$0xf]
    %v5296 = vld [vmem:[#allocation2 + $0x12c] sm:$0xf]
    %v5297 = vld [vmem:[#allocation2 + $0x130] sm:$0xf]
    %v5298 = vld [vmem:[#allocation2 + $0x134] sm:$0xf]
    %v5299 = vld [vmem:[#allocation2 + $0x138] sm:$0xf]
    %v5300 = vld [vmem:[#allocation2 + $0x13c] sm:$0xf]
    %v5301 = vld [vmem:[#allocation2 + $0x140] sm:$0xf]
    %v5302 = vld [vmem:[#allocation2 + $0x144] sm:$0xf]
    %v5303 = vld [vmem:[#allocation2 + $0x148] sm:$0xf]
    %v5304 = vld [vmem:[#allocation2 + $0x14c] sm:$0xf]
    %v5305 = vld [vmem:[#allocation2 + $0x150] sm:$0xf]
    %v5306 = vld [vmem:[#allocation2 + $0x154] sm:$0xf]
    %v5307 = vld [vmem:[#allocation2 + $0x158] sm:$0xf]
    %v5308 = vld [vmem:[#allocation2 + $0x15c] sm:$0xf]
    %v5309 = vld [vmem:[#allocation2 + $0x160] sm:$0xf]
    %v5310 = vld [vmem:[#allocation2 + $0x164] sm:$0xf]
    %v5311 = vld [vmem:[#allocation2 + $0x168] sm:$0xf]
    %v5312 = vld [vmem:[#allocation2 + $0x16c] sm:$0xf]
    %v5313 = vld [vmem:[#allocation2 + $0x170] sm:$0xf]
    %v5314 = vld [vmem:[#allocation2 + $0x174] sm:$0xf]
    %v5315 = vld [vmem:[#allocation2 + $0x178] sm:$0xf]
    %v5316 = vld [vmem:[#allocation2 + $0x17c] sm:$0xf]
    %v5317 = vld [vmem:[#allocation2 + $0x180] sm:$0xf]
    %v5318 = vld [vmem:[#allocation2 + $0x184] sm:$0xf]
    %v5319 = vld [vmem:[#allocation2 + $0x188] sm:$0xf]
    %v5320 = vld [vmem:[#allocation2 + $0x18c] sm:$0xf]
    %v5321 = vld [vmem:[#allocation2 + $0x190] sm:$0xf]
    %v5322 = vld [vmem:[#allocation2 + $0x194] sm:$0xf]
    %v5323 = vld [vmem:[#allocation2 + $0x198] sm:$0xf]
    %v5324 = vld [vmem:[#allocation2 + $0x19c] sm:$0xf]
    %v5325 = vld [vmem:[#allocation2 + $0x1a0] sm:$0xf]
    %v5326 = vld [vmem:[#allocation2 + $0x1a4] sm:$0xf]
    %v5327 = vld [vmem:[#allocation2 + $0x1a8] sm:$0xf]
    %v5328 = vld [vmem:[#allocation2 + $0x1ac] sm:$0xf]
    %v5329 = vld [vmem:[#allocation2 + $0x1b0] sm:$0xf]
    %v5330 = vld [vmem:[#allocation2 + $0x1b4] sm:$0xf]
    %v5331 = vld [vmem:[#allocation2 + $0x1b8] sm:$0xf]
    %v5332 = vld [vmem:[#allocation2 + $0x1bc] sm:$0xf]
    %v5333 = vld [vmem:[#allocation2 + $0x1c0] sm:$0xf]
    %v5334 = vld [vmem:[#allocation2 + $0x1c4] sm:$0xf]
    %v5335 = vld [vmem:[#allocation2 + $0x1c8] sm:$0xf]
    %v5336 = vld [vmem:[#allocation2 + $0x1cc] sm:$0xf]
    %v5337 = vld [vmem:[#allocation2 + $0x1d0] sm:$0xf]
    %v5338 = vld [vmem:[#allocation2 + $0x1d4] sm:$0xf]
    %v5339 = vld [vmem:[#allocation2 + $0x1d8] sm:$0xf]
    %v5340 = vld [vmem:[#allocation2 + $0x1dc] sm:$0xf]
    %v5341 = vld [vmem:[#allocation2 + $0x1e0] sm:$0xf]
    %v5342 = vld [vmem:[#allocation2 + $0x1e4] sm:$0xf]
    %v5343 = vld [vmem:[#allocation2 + $0x1e8] sm:$0xf]
    %v5344 = vld [vmem:[#allocation2 + $0x1ec] sm:$0xf]
    %v5345 = vld [vmem:[#allocation2 + $0x1f0] sm:$0xf]
    %v5346 = vld [vmem:[#allocation2 + $0x1f4] sm:$0xf]
    %v5347 = vld [vmem:[#allocation2 + $0x1f8] sm:$0xf]
    %v5348 = vld [vmem:[#allocation2 + $0x1fc] sm:$0xf]
    %v5349 = vld [vmem:[#allocation2 + $0x200] sm:$0xf]
    %v5350 = vld [vmem:[#allocation2 + $0x204] sm:$0xf]
    %v5351 = vld [vmem:[#allocation2 + $0x208] sm:$0xf]
    %v5352 = vld [vmem:[#allocation2 + $0x20c] sm:$0xf]
    %v5353 = vld [vmem:[#allocation2 + $0x210] sm:$0xf]
    %v5354 = vld [vmem:[#allocation2 + $0x214] sm:$0xf]
    %v5355 = vld [vmem:[#allocation2 + $0x218] sm:$0xf]
    %v5356 = vld [vmem:[#allocation2 + $0x21c] sm:$0xf]
    %v5357 = vld [vmem:[#allocation2 + $0x220] sm:$0xf]
    %v5358 = vld [vmem:[#allocation2 + $0x224] sm:$0xf]
    %v5359 = vld [vmem:[#allocation2 + $0x228] sm:$0xf]
    %v5360 = vld [vmem:[#allocation2 + $0x22c] sm:$0xf]
    %v5361 = vld [vmem:[#allocation2 + $0x230] sm:$0xf]
    %v5362 = vld [vmem:[#allocation2 + $0x234] sm:$0xf]
    %v5363 = vld [vmem:[#allocation2 + $0x238] sm:$0xf]
    %v5364 = vld [vmem:[#allocation2 + $0x23c] sm:$0xf]
    %v5365 = vld [vmem:[#allocation2 + $0x240] sm:$0xf]
    %v5366 = vld [vmem:[#allocation2 + $0x244] sm:$0xf]
    %v5367 = vld [vmem:[#allocation2 + $0x248] sm:$0xf]
    %v5368 = vld [vmem:[#allocation2 + $0x24c] sm:$0xf]
    %v5369 = vld [vmem:[#allocation2 + $0x250] sm:$0xf]
    %v5370 = vld [vmem:[#allocation2 + $0x254] sm:$0xf]
    %v5371 = vld [vmem:[#allocation2 + $0x258] sm:$0xf]
    %v5372 = vld [vmem:[#allocation2 + $0x25c] sm:$0xf]
    %v5373 = vld [vmem:[#allocation2 + $0x260] sm:$0xf]
    %v5374 = vld [vmem:[#allocation2 + $0x264] sm:$0xf]
    %v5375 = vld [vmem:[#allocation2 + $0x268] sm:$0xf]
    %v5376 = vld [vmem:[#allocation2 + $0x26c] sm:$0xf]
    %v5377 = vld [vmem:[#allocation2 + $0x270] sm:$0xf]
    %v5378 = vld [vmem:[#allocation2 + $0x274] sm:$0xf]
    %v5379 = vld [vmem:[#allocation2 + $0x278] sm:$0xf]
    %v5380 = vld [vmem:[#allocation2 + $0x27c] sm:$0xf]
    %v5381 = vld [vmem:[#allocation2 + $0x280] sm:$0xf]
    %v5382 = vld [vmem:[#allocation2 + $0x284] sm:$0xf]
    %v5383 = vld [vmem:[#allocation2 + $0x288] sm:$0xf]
    %v5384 = vld [vmem:[#allocation2 + $0x28c] sm:$0xf]
    %v5385 = vld [vmem:[#allocation2 + $0x290] sm:$0xf]
    %v5386 = vld [vmem:[#allocation2 + $0x294] sm:$0xf]
    %v5387 = vld [vmem:[#allocation2 + $0x298] sm:$0xf]
    %v5388 = vld [vmem:[#allocation2 + $0x29c] sm:$0xf]
    %v5389 = vld [vmem:[#allocation2 + $0x2a0] sm:$0xf]
    %v5390 = vld [vmem:[#allocation2 + $0x2a4] sm:$0xf]
    %v5391 = vld [vmem:[#allocation2 + $0x2a8] sm:$0xf]
    %v5392 = vld [vmem:[#allocation2 + $0x2ac] sm:$0xf]
    %v5393 = vld [vmem:[#allocation2 + $0x2b0] sm:$0xf]
    %v5394 = vld [vmem:[#allocation2 + $0x2b4] sm:$0xf]
    %v5395 = vld [vmem:[#allocation2 + $0x2b8] sm:$0xf]
    %v5396 = vld [vmem:[#allocation2 + $0x2bc] sm:$0xf]
    %v5397 = vld [vmem:[#allocation2 + $0x2c0] sm:$0xf]
    %v5398 = vld [vmem:[#allocation2 + $0x2c4] sm:$0xf]
    %v5399 = vld [vmem:[#allocation2 + $0x2c8] sm:$0xf]
    %v5400 = vld [vmem:[#allocation2 + $0x2cc] sm:$0xf]
    %v5401 = vld [vmem:[#allocation2 + $0x2d0] sm:$0xf]
    %v5402 = vld [vmem:[#allocation2 + $0x2d4] sm:$0xf]
    %v5403 = vld [vmem:[#allocation2 + $0x2d8] sm:$0xf]
    %v5404 = vld [vmem:[#allocation2 + $0x2dc] sm:$0xf]
    %v5405 = vld [vmem:[#allocation2 + $0x2e0] sm:$0xf]
    %v5406 = vld [vmem:[#allocation2 + $0x2e4] sm:$0xf]
    %v5407 = vld [vmem:[#allocation2 + $0x2e8] sm:$0xf]
    %v5408 = vld [vmem:[#allocation2 + $0x2ec] sm:$0xf]
    %v5409 = vld [vmem:[#allocation2 + $0x2f0] sm:$0xf]
    %v5410 = vld [vmem:[#allocation2 + $0x2f4] sm:$0xf]
    %v5411 = vld [vmem:[#allocation2 + $0x2f8] sm:$0xf]
    %v5412 = vld [vmem:[#allocation2 + $0x2fc] sm:$0xf]
    %v5413 = vld [vmem:[#allocation2 + $0x300] sm:$0xf]
    %v5414 = vld [vmem:[#allocation2 + $0x304] sm:$0xf]
    %v5415 = vld [vmem:[#allocation2 + $0x308] sm:$0xf]
    %v5416 = vld [vmem:[#allocation2 + $0x30c] sm:$0xf]
    %v5417 = vld [vmem:[#allocation2 + $0x310] sm:$0xf]
    %v5418 = vld [vmem:[#allocation2 + $0x314] sm:$0xf]
    %v5419 = vld [vmem:[#allocation2 + $0x318] sm:$0xf]
    %v5420 = vld [vmem:[#allocation2 + $0x31c] sm:$0xf]
    %v5421 = vld [vmem:[#allocation2 + $0x320] sm:$0xf]
    %v5422 = vld [vmem:[#allocation2 + $0x324] sm:$0xf]
    %v5423 = vld [vmem:[#allocation2 + $0x328] sm:$0xf]
    %v5424 = vld [vmem:[#allocation2 + $0x32c] sm:$0xf]
    %v5425 = vld [vmem:[#allocation2 + $0x330] sm:$0xf]
    %v5426 = vld [vmem:[#allocation2 + $0x334] sm:$0xf]
    %v5427 = vld [vmem:[#allocation2 + $0x338] sm:$0xf]
    %v5428 = vld [vmem:[#allocation2 + $0x33c] sm:$0xf]
    %v5429 = vld [vmem:[#allocation2 + $0x340] sm:$0xf]
    %v5430 = vld [vmem:[#allocation2 + $0x344] sm:$0xf]
    %v5431 = vld [vmem:[#allocation2 + $0x348] sm:$0xf]
    %v5432 = vld [vmem:[#allocation2 + $0x34c] sm:$0xf]
    %v5433 = vld [vmem:[#allocation2 + $0x350] sm:$0xf]
    %v5434 = vld [vmem:[#allocation2 + $0x354] sm:$0xf]
    %v5435 = vld [vmem:[#allocation2 + $0x358] sm:$0xf]
    %v5436 = vld [vmem:[#allocation2 + $0x35c] sm:$0xf]
    %v5437 = vld [vmem:[#allocation2 + $0x360] sm:$0xf]
    %v5438 = vld [vmem:[#allocation2 + $0x364] sm:$0xf]
    %v5439 = vld [vmem:[#allocation2 + $0x368] sm:$0xf]
    %v5440 = vld [vmem:[#allocation2 + $0x36c] sm:$0xf]
    %v5441 = vld [vmem:[#allocation2 + $0x370] sm:$0xf]
    %v5442 = vld [vmem:[#allocation2 + $0x374] sm:$0xf]
    %v5443 = vld [vmem:[#allocation2 + $0x378] sm:$0xf]
    %v5444 = vld [vmem:[#allocation2 + $0x37c] sm:$0xf]
    %v5445 = vld [vmem:[#allocation2 + $0x380] sm:$0xf]
    %v5446 = vld [vmem:[#allocation2 + $0x384] sm:$0xf]
    %v5447 = vld [vmem:[#allocation2 + $0x388] sm:$0xf]
    %v5448 = vld [vmem:[#allocation2 + $0x38c] sm:$0xf]
    %v5449 = vld [vmem:[#allocation2 + $0x390] sm:$0xf]
    %v5450 = vld [vmem:[#allocation2 + $0x394] sm:$0xf]
    %v5451 = vld [vmem:[#allocation2 + $0x398] sm:$0xf]
    %v5452 = vld [vmem:[#allocation2 + $0x39c] sm:$0xf]
    %v5453 = vld [vmem:[#allocation2 + $0x3a0] sm:$0xf]
    %v5454 = vld [vmem:[#allocation2 + $0x3a4] sm:$0xf]
    %v5455 = vld [vmem:[#allocation2 + $0x3a8] sm:$0xf]
    %v5456 = vld [vmem:[#allocation2 + $0x3ac] sm:$0xf]
    %v5457 = vld [vmem:[#allocation2 + $0x3b0] sm:$0xf]
    %v5458 = vld [vmem:[#allocation2 + $0x3b4] sm:$0xf]
    %v5459 = vld [vmem:[#allocation2 + $0x3b8] sm:$0xf]
    %v5460 = vld [vmem:[#allocation2 + $0x3bc] sm:$0xf]
    %v5461 = vld [vmem:[#allocation2 + $0x3c0] sm:$0xf]
    %v5462 = vld [vmem:[#allocation2 + $0x3c4] sm:$0xf]
    %v5463 = vld [vmem:[#allocation2 + $0x3c8] sm:$0xf]
    %v5464 = vld [vmem:[#allocation2 + $0x3cc] sm:$0xf]
    %v5465 = vld [vmem:[#allocation2 + $0x3d0] sm:$0xf]
    %v5466 = vld [vmem:[#allocation2 + $0x3d4] sm:$0xf]
    %v5467 = vld [vmem:[#allocation2 + $0x3d8] sm:$0xf]
    %v5468 = vld [vmem:[#allocation2 + $0x3dc] sm:$0xf]
    %v5469 = vld [vmem:[#allocation2 + $0x3e0] sm:$0xf]
    %v5470 = vld [vmem:[#allocation2 + $0x3e4] sm:$0xf]
    %v5471 = vld [vmem:[#allocation2 + $0x3e8] sm:$0xf]
    %v5472 = vld [vmem:[#allocation2 + $0x3ec] sm:$0xf]
    %v5473 = vld [vmem:[#allocation2 + $0x3f0] sm:$0xf]
    %v5474 = vld [vmem:[#allocation2 + $0x3f4] sm:$0xf]
    %v5475 = vld [vmem:[#allocation2 + $0x3f8] sm:$0xf]
    %v5476 = vld [vmem:[#allocation2 + $0x3fc] sm:$0xf]
    %v5477 = vld [vmem:[#allocation2 + $0x400] sm:$0xf]
    %v5478 = vld [vmem:[#allocation2 + $0x404] sm:$0xf]
    %v5479 = vld [vmem:[#allocation2 + $0x408] sm:$0xf]
    %v5480 = vld [vmem:[#allocation2 + $0x40c] sm:$0xf]
    %v5481 = vld [vmem:[#allocation2 + $0x410] sm:$0xf]
    %v5482 = vld [vmem:[#allocation2 + $0x414] sm:$0xf]
    %v5483 = vld [vmem:[#allocation2 + $0x418] sm:$0xf]
    %v5484 = vld [vmem:[#allocation2 + $0x41c] sm:$0xf]
    %v5485 = vld [vmem:[#allocation2 + $0x420] sm:$0xf]
    %v5486 = vld [vmem:[#allocation2 + $0x424] sm:$0xf]
    %v5487 = vld [vmem:[#allocation2 + $0x428] sm:$0xf]
    %v5488 = vld [vmem:[#allocation2 + $0x42c] sm:$0xf]
    %v5489 = vld [vmem:[#allocation2 + $0x430] sm:$0xf]
    %v5490 = vld [vmem:[#allocation2 + $0x434] sm:$0xf]
    %v5491 = vld [vmem:[#allocation2 + $0x438] sm:$0xf]
    %v5492 = vld [vmem:[#allocation2 + $0x43c] sm:$0xf]
    %v5493 = vld [vmem:[#allocation2 + $0x440] sm:$0xf]
    %v5494 = vld [vmem:[#allocation2 + $0x444] sm:$0xf]
    %v5495 = vld [vmem:[#allocation2 + $0x448] sm:$0xf]
    %v5496 = vld [vmem:[#allocation2 + $0x44c] sm:$0xf]
    %v5497 = vld [vmem:[#allocation2 + $0x450] sm:$0xf]
    %v5498 = vld [vmem:[#allocation2 + $0x454] sm:$0xf]
    %v5499 = vld [vmem:[#allocation2 + $0x458] sm:$0xf]
    %v5500 = vld [vmem:[#allocation2 + $0x45c] sm:$0xf]
    %v5501 = vld [vmem:[#allocation2 + $0x460] sm:$0xf]
    %v5502 = vld [vmem:[#allocation2 + $0x464] sm:$0xf]
    %v5503 = vld [vmem:[#allocation2 + $0x468] sm:$0xf]
    %v5504 = vld [vmem:[#allocation2 + $0x46c] sm:$0xf]
    %v5505 = vld [vmem:[#allocation2 + $0x470] sm:$0xf]
    %v5506 = vld [vmem:[#allocation2 + $0x474] sm:$0xf]
    %v5507 = vld [vmem:[#allocation2 + $0x478] sm:$0xf]
    %v5508 = vld [vmem:[#allocation2 + $0x47c] sm:$0xf]
    %v5509 = vld [vmem:[#allocation2 + $0x480] sm:$0xf]
    %v5510 = vld [vmem:[#allocation2 + $0x484] sm:$0xf]
    %v5511 = vld [vmem:[#allocation2 + $0x488] sm:$0xf]
    %v5512 = vld [vmem:[#allocation2 + $0x48c] sm:$0xf]
    %v5513 = vld [vmem:[#allocation2 + $0x490] sm:$0xf]
    %v5514 = vld [vmem:[#allocation2 + $0x494] sm:$0xf]
    %v5515 = vld [vmem:[#allocation2 + $0x498] sm:$0xf]
    %v5516 = vld [vmem:[#allocation2 + $0x49c] sm:$0xf]
    %v5517 = vld [vmem:[#allocation2 + $0x4a0] sm:$0xf]
    %v5518 = vld [vmem:[#allocation2 + $0x4a4] sm:$0xf]
    %v5519 = vld [vmem:[#allocation2 + $0x4a8] sm:$0xf]
    %v5520 = vld [vmem:[#allocation2 + $0x4ac] sm:$0xf]
    %v5521 = vld [vmem:[#allocation2 + $0x4b0] sm:$0xf]
    %v5522 = vld [vmem:[#allocation2 + $0x4b4] sm:$0xf]
    %v5523 = vld [vmem:[#allocation2 + $0x4b8] sm:$0xf]
    %v5524 = vld [vmem:[#allocation2 + $0x4bc] sm:$0xf]
    %v5525 = vld [vmem:[#allocation2 + $0x4c0] sm:$0xf]
    %v5526 = vld [vmem:[#allocation2 + $0x4c4] sm:$0xf]
    %v5527 = vld [vmem:[#allocation2 + $0x4c8] sm:$0xf]
    %v5528 = vld [vmem:[#allocation2 + $0x4cc] sm:$0xf]
    %v5529 = vld [vmem:[#allocation2 + $0x4d0] sm:$0xf]
    %v5530 = vld [vmem:[#allocation2 + $0x4d4] sm:$0xf]
    %v5531 = vld [vmem:[#allocation2 + $0x4d8] sm:$0xf]
    %v5532 = vld [vmem:[#allocation2 + $0x4dc] sm:$0xf]
    %v5533 = vld [vmem:[#allocation2 + $0x4e0] sm:$0xf]
    %v5534 = vld [vmem:[#allocation2 + $0x4e4] sm:$0xf]
    %v5535 = vld [vmem:[#allocation2 + $0x4e8] sm:$0xf]
    %v5536 = vld [vmem:[#allocation2 + $0x4ec] sm:$0xf]
    %v5537 = vld [vmem:[#allocation2 + $0x4f0] sm:$0xf]
    %v5538 = vld [vmem:[#allocation2 + $0x4f4] sm:$0xf]
    %v5539 = vld [vmem:[#allocation2 + $0x4f8] sm:$0xf]
    %v5540 = vld [vmem:[#allocation2 + $0x4fc] sm:$0xf]
    %v5541 = vld [vmem:[#allocation2 + $0x500] sm:$0xf]
    %v5542 = vld [vmem:[#allocation2 + $0x504] sm:$0xf]
    %v5543 = vld [vmem:[#allocation2 + $0x508] sm:$0xf]
    %v5544 = vld [vmem:[#allocation2 + $0x50c] sm:$0xf]
    %v5545 = vld [vmem:[#allocation2 + $0x510] sm:$0xf]
    %v5546 = vld [vmem:[#allocation2 + $0x514] sm:$0xf]
    %v5547 = vld [vmem:[#allocation2 + $0x518] sm:$0xf]
    %v5548 = vld [vmem:[#allocation2 + $0x51c] sm:$0xf]
    %v5549 = vld [vmem:[#allocation2 + $0x520] sm:$0xf]
    %v5550 = vld [vmem:[#allocation2 + $0x524] sm:$0xf]
    %v5551 = vld [vmem:[#allocation2 + $0x528] sm:$0xf]
    %v5552 = vld [vmem:[#allocation2 + $0x52c] sm:$0xf]
    %v5553 = vld [vmem:[#allocation2 + $0x530] sm:$0xf]
    %v5554 = vld [vmem:[#allocation2 + $0x534] sm:$0xf]
    %v5555 = vld [vmem:[#allocation2 + $0x538] sm:$0xf]
    %v5556 = vld [vmem:[#allocation2 + $0x53c] sm:$0xf]
    %v5557 = vld [vmem:[#allocation2 + $0x540] sm:$0xf]
    %v5558 = vld [vmem:[#allocation2 + $0x544] sm:$0xf]
    %v5559 = vld [vmem:[#allocation2 + $0x548] sm:$0xf]
    %v5560 = vld [vmem:[#allocation2 + $0x54c] sm:$0xf]
    %v5561 = vld [vmem:[#allocation2 + $0x550] sm:$0xf]
    %v5562 = vld [vmem:[#allocation2 + $0x554] sm:$0xf]
    %v5563 = vld [vmem:[#allocation2 + $0x558] sm:$0xf]
    %v5564 = vld [vmem:[#allocation2 + $0x55c] sm:$0xf]
    %v5565 = vld [vmem:[#allocation2 + $0x560] sm:$0xf]
    %v5566 = vld [vmem:[#allocation2 + $0x564] sm:$0xf]
    %v5567 = vld [vmem:[#allocation2 + $0x568] sm:$0xf]
    %v5568 = vld [vmem:[#allocation2 + $0x56c] sm:$0xf]
    %v5569 = vld [vmem:[#allocation2 + $0x570] sm:$0xf]
    %v5570 = vld [vmem:[#allocation2 + $0x574] sm:$0xf]
    %v5571 = vld [vmem:[#allocation2 + $0x578] sm:$0xf]
    %v5572 = vld [vmem:[#allocation2 + $0x57c] sm:$0xf]
    %v5573 = vld [vmem:[#allocation2 + $0x580] sm:$0xf]
    %v5574 = vld [vmem:[#allocation2 + $0x584] sm:$0xf]
    %v5575 = vld [vmem:[#allocation2 + $0x588] sm:$0xf]
    %v5576 = vld [vmem:[#allocation2 + $0x58c] sm:$0xf]
    %v5577 = vld [vmem:[#allocation2 + $0x590] sm:$0xf]
    %v5578 = vld [vmem:[#allocation2 + $0x594] sm:$0xf]
    %v5579 = vld [vmem:[#allocation2 + $0x598] sm:$0xf]
    %v5580 = vld [vmem:[#allocation2 + $0x59c] sm:$0xf]
    %v5581 = vld [vmem:[#allocation2 + $0x5a0] sm:$0xf]
    %v5582 = vld [vmem:[#allocation2 + $0x5a4] sm:$0xf]
    %v5583 = vld [vmem:[#allocation2 + $0x5a8] sm:$0xf]
    %v5584 = vld [vmem:[#allocation2 + $0x5ac] sm:$0xf]
    %v5585 = vld [vmem:[#allocation2 + $0x5b0] sm:$0xf]
    %v5586 = vld [vmem:[#allocation2 + $0x5b4] sm:$0xf]
    %v5587 = vld [vmem:[#allocation2 + $0x5b8] sm:$0xf]
    %v5588 = vld [vmem:[#allocation2 + $0x5bc] sm:$0xf]
    %v5589 = vld [vmem:[#allocation2 + $0x5c0] sm:$0xf]
    %v5590 = vld [vmem:[#allocation2 + $0x5c4] sm:$0xf]
    %v5591 = vld [vmem:[#allocation2 + $0x5c8] sm:$0xf]
    %v5592 = vld [vmem:[#allocation2 + $0x5cc] sm:$0xf]
    %v5593 = vld [vmem:[#allocation2 + $0x5d0] sm:$0xf]
    %v5594 = vld [vmem:[#allocation2 + $0x5d4] sm:$0xf]
    %v5595 = vld [vmem:[#allocation2 + $0x5d8] sm:$0xf]
    %v5596 = vld [vmem:[#allocation2 + $0x5dc] sm:$0xf]
    %v5597 = vld [vmem:[#allocation2 + $0x5e0] sm:$0xf]
    %v5598 = vld [vmem:[#allocation2 + $0x5e4] sm:$0xf]
    %v5599 = vld [vmem:[#allocation2 + $0x5e8] sm:$0xf]
    %v5600 = vld [vmem:[#allocation2 + $0x5ec] sm:$0xf]
    %v5601 = vld [vmem:[#allocation2 + $0x5f0] sm:$0xf]
    %v5602 = vld [vmem:[#allocation2 + $0x5f4] sm:$0xf]
    %v5603 = vld [vmem:[#allocation2 + $0x5f8] sm:$0xf]
    %v5604 = vld [vmem:[#allocation2 + $0x5fc] sm:$0xf]
    %v5605 = vld [vmem:[#allocation2 + $0x600] sm:$0xf]
    %v5606 = vld [vmem:[#allocation2 + $0x604] sm:$0xf]
    %v5607 = vld [vmem:[#allocation2 + $0x608] sm:$0xf]
    %v5608 = vld [vmem:[#allocation2 + $0x60c] sm:$0xf]
    %v5609 = vld [vmem:[#allocation2 + $0x610] sm:$0xf]
    %v5610 = vld [vmem:[#allocation2 + $0x614] sm:$0xf]
    %v5611 = vld [vmem:[#allocation2 + $0x618] sm:$0xf]
    %v5612 = vld [vmem:[#allocation2 + $0x61c] sm:$0xf]
    %v5613 = vld [vmem:[#allocation2 + $0x620] sm:$0xf]
    %v5614 = vld [vmem:[#allocation2 + $0x624] sm:$0xf]
    %v5615 = vld [vmem:[#allocation2 + $0x628] sm:$0xf]
    %v5616 = vld [vmem:[#allocation2 + $0x62c] sm:$0xf]
    %v5617 = vld [vmem:[#allocation2 + $0x630] sm:$0xf]
    %v5618 = vld [vmem:[#allocation2 + $0x634] sm:$0xf]
    %v5619 = vld [vmem:[#allocation2 + $0x638] sm:$0xf]
    %v5620 = vld [vmem:[#allocation2 + $0x63c] sm:$0xf]
    %v5621 = vld [vmem:[#allocation2 + $0x640] sm:$0xf]
    %v5622 = vld [vmem:[#allocation2 + $0x644] sm:$0xf]
    %v5623 = vld [vmem:[#allocation2 + $0x648] sm:$0xf]
    %v5624 = vld [vmem:[#allocation2 + $0x64c] sm:$0xf]
    %v5625 = vld [vmem:[#allocation2 + $0x650] sm:$0xf]
    %v5626 = vld [vmem:[#allocation2 + $0x654] sm:$0xf]
    %v5627 = vld [vmem:[#allocation2 + $0x658] sm:$0xf]
    %v5628 = vld [vmem:[#allocation2 + $0x65c] sm:$0xf]
    %v5629 = vld [vmem:[#allocation2 + $0x660] sm:$0xf]
    %v5630 = vld [vmem:[#allocation2 + $0x664] sm:$0xf]
    %v5631 = vld [vmem:[#allocation2 + $0x668] sm:$0xf]
    %v5632 = vld [vmem:[#allocation2 + $0x66c] sm:$0xf]
    %v5633 = vld [vmem:[#allocation2 + $0x670] sm:$0xf]
    %v5634 = vld [vmem:[#allocation2 + $0x674] sm:$0xf]
    %v5635 = vld [vmem:[#allocation2 + $0x678] sm:$0xf]
    %v5636 = vld [vmem:[#allocation2 + $0x67c] sm:$0xf]
    %v5637 = vld [vmem:[#allocation2 + $0x680] sm:$0xf]
    %v5638 = vld [vmem:[#allocation2 + $0x684] sm:$0xf]
    %v5639 = vld [vmem:[#allocation2 + $0x688] sm:$0xf]
    %v5640 = vld [vmem:[#allocation2 + $0x68c] sm:$0xf]
    %v5641 = vld [vmem:[#allocation2 + $0x690] sm:$0xf]
    %v5642 = vld [vmem:[#allocation2 + $0x694] sm:$0xf]
    %v5643 = vld [vmem:[#allocation2 + $0x698] sm:$0xf]
    %v5644 = vld [vmem:[#allocation2 + $0x69c] sm:$0xf]
    %v5645 = vld [vmem:[#allocation2 + $0x6a0] sm:$0xf]
    %v5646 = vld [vmem:[#allocation2 + $0x6a4] sm:$0xf]
    %v5647 = vld [vmem:[#allocation2 + $0x6a8] sm:$0xf]
    %v5648 = vld [vmem:[#allocation2 + $0x6ac] sm:$0xf]
    %v5649 = vld [vmem:[#allocation2 + $0x6b0] sm:$0xf]
    %v5650 = vld [vmem:[#allocation2 + $0x6b4] sm:$0xf]
    %v5651 = vld [vmem:[#allocation2 + $0x6b8] sm:$0xf]
    %v5652 = vld [vmem:[#allocation2 + $0x6bc] sm:$0xf]
    %v5653 = vld [vmem:[#allocation2 + $0x6c0] sm:$0xf]
    %v5654 = vld [vmem:[#allocation2 + $0x6c4] sm:$0xf]
    %v5655 = vld [vmem:[#allocation2 + $0x6c8] sm:$0xf]
    %v5656 = vld [vmem:[#allocation2 + $0x6cc] sm:$0xf]
    %v5657 = vld [vmem:[#allocation2 + $0x6d0] sm:$0xf]
    %v5658 = vld [vmem:[#allocation2 + $0x6d4] sm:$0xf]
    %v5659 = vld [vmem:[#allocation2 + $0x6d8] sm:$0xf]
    %v5660 = vld [vmem:[#allocation2 + $0x6dc] sm:$0xf]
    %v5661 = vld [vmem:[#allocation2 + $0x6e0] sm:$0xf]
    %v5662 = vld [vmem:[#allocation2 + $0x6e4] sm:$0xf]
    %v5663 = vld [vmem:[#allocation2 + $0x6e8] sm:$0xf]
    %v5664 = vld [vmem:[#allocation2 + $0x6ec] sm:$0xf]
    %v5665 = vld [vmem:[#allocation2 + $0x6f0] sm:$0xf]
    %v5666 = vld [vmem:[#allocation2 + $0x6f4] sm:$0xf]
    %v5667 = vld [vmem:[#allocation2 + $0x6f8] sm:$0xf]
    %v5668 = vld [vmem:[#allocation2 + $0x6fc] sm:$0xf]
    %v5669 = vld [vmem:[#allocation2 + $0x700] sm:$0xf]
    %v5670 = vld [vmem:[#allocation2 + $0x704] sm:$0xf]
    %v5671 = vld [vmem:[#allocation2 + $0x708] sm:$0xf]
    %v5672 = vld [vmem:[#allocation2 + $0x70c] sm:$0xf]
    %v5673 = vld [vmem:[#allocation2 + $0x710] sm:$0xf]
    %v5674 = vld [vmem:[#allocation2 + $0x714] sm:$0xf]
    %v5675 = vld [vmem:[#allocation2 + $0x718] sm:$0xf]
    %v5676 = vld [vmem:[#allocation2 + $0x71c] sm:$0xf]
    %v5677 = vld [vmem:[#allocation2 + $0x720] sm:$0xf]
    %v5678 = vld [vmem:[#allocation2 + $0x724] sm:$0xf]
    %v5679 = vld [vmem:[#allocation2 + $0x728] sm:$0xf]
    %v5680 = vld [vmem:[#allocation2 + $0x72c] sm:$0xf]
    %v5681 = vld [vmem:[#allocation2 + $0x730] sm:$0xf]
    %v5682 = vld [vmem:[#allocation2 + $0x734] sm:$0xf]
    %v5683 = vld [vmem:[#allocation2 + $0x738] sm:$0xf]
    %v5684 = vld [vmem:[#allocation2 + $0x73c] sm:$0xf]
    %v5685 = vld [vmem:[#allocation2 + $0x740] sm:$0xf]
    %v5686 = vld [vmem:[#allocation2 + $0x744] sm:$0xf]
    %v5687 = vld [vmem:[#allocation2 + $0x748] sm:$0xf]
    %v5688 = vld [vmem:[#allocation2 + $0x74c] sm:$0xf]
    %v5689 = vld [vmem:[#allocation2 + $0x750] sm:$0xf]
    %v5690 = vld [vmem:[#allocation2 + $0x754] sm:$0xf]
    %v5691 = vld [vmem:[#allocation2 + $0x758] sm:$0xf]
    %v5692 = vld [vmem:[#allocation2 + $0x75c] sm:$0xf]
    %v5693 = vld [vmem:[#allocation2 + $0x760] sm:$0xf]
    %v5694 = vld [vmem:[#allocation2 + $0x764] sm:$0xf]
    %v5695 = vld [vmem:[#allocation2 + $0x768] sm:$0xf]
    %v5696 = vld [vmem:[#allocation2 + $0x76c] sm:$0xf]
    %v5697 = vld [vmem:[#allocation2 + $0x770] sm:$0xf]
    %v5698 = vld [vmem:[#allocation2 + $0x774] sm:$0xf]
    %v5699 = vld [vmem:[#allocation2 + $0x778] sm:$0xf]
    %v5700 = vld [vmem:[#allocation2 + $0x77c] sm:$0xf]
    %v5701 = vld [vmem:[#allocation2 + $0x780] sm:$0xf]
    %v5702 = vld [vmem:[#allocation2 + $0x784] sm:$0xf]
    %v5703 = vld [vmem:[#allocation2 + $0x788] sm:$0xf]
    %v5704 = vld [vmem:[#allocation2 + $0x78c] sm:$0xf]
    %v5705 = vld [vmem:[#allocation2 + $0x790] sm:$0xf]
    %v5706 = vld [vmem:[#allocation2 + $0x794] sm:$0xf]
    %v5707 = vld [vmem:[#allocation2 + $0x798] sm:$0xf]
    %v5708 = vld [vmem:[#allocation2 + $0x79c] sm:$0xf]
    %v5709 = vld [vmem:[#allocation2 + $0x7a0] sm:$0xf]
    %v5710 = vld [vmem:[#allocation2 + $0x7a4] sm:$0xf]
    %v5711 = vld [vmem:[#allocation2 + $0x7a8] sm:$0xf]
    %v5712 = vld [vmem:[#allocation2 + $0x7ac] sm:$0xf]
    %v5713 = vld [vmem:[#allocation2 + $0x7b0] sm:$0xf]
    %v5714 = vld [vmem:[#allocation2 + $0x7b4] sm:$0xf]
    %v5715 = vld [vmem:[#allocation2 + $0x7b8] sm:$0xf]
    %v5716 = vld [vmem:[#allocation2 + $0x7bc] sm:$0xf]
    %v5717 = vld [vmem:[#allocation2 + $0x7c0] sm:$0xf]
    %v5718 = vld [vmem:[#allocation2 + $0x7c4] sm:$0xf]
    %v5719 = vld [vmem:[#allocation2 + $0x7c8] sm:$0xf]
    %v5720 = vld [vmem:[#allocation2 + $0x7cc] sm:$0xf]
    %v5721 = vld [vmem:[#allocation2 + $0x7d0] sm:$0xf]
    %v5722 = vld [vmem:[#allocation2 + $0x7d4] sm:$0xf]
    %v5723 = vld [vmem:[#allocation2 + $0x7d8] sm:$0xf]
    %v5724 = vld [vmem:[#allocation2 + $0x7dc] sm:$0xf]
    %v5725 = vld [vmem:[#allocation2 + $0x7e0] sm:$0xf]
    %v5726 = vld [vmem:[#allocation2 + $0x7e4] sm:$0xf]
    %v5727 = vld [vmem:[#allocation2 + $0x7e8] sm:$0xf]
    %v5728 = vld [vmem:[#allocation2 + $0x7ec] sm:$0xf]
    %v5729 = vld [vmem:[#allocation2 + $0x7f0] sm:$0xf]
    %v5730 = vld [vmem:[#allocation2 + $0x7f4] sm:$0xf]
    %v5731 = vld [vmem:[#allocation2 + $0x7f8] sm:$0xf]
    %v5732 = vld [vmem:[#allocation2 + $0x7fc] sm:$0xf]
    %v5733 = vld [vmem:[#allocation2 + $0x800] sm:$0xf]
    %v5734 = vld [vmem:[#allocation2 + $0x804] sm:$0xf]
    %v5735 = vld [vmem:[#allocation2 + $0x808] sm:$0xf]
    %v5736 = vld [vmem:[#allocation2 + $0x80c] sm:$0xf]
    %v5737 = vld [vmem:[#allocation2 + $0x810] sm:$0xf]
    %v5738 = vld [vmem:[#allocation2 + $0x814] sm:$0xf]
    %v5739 = vld [vmem:[#allocation2 + $0x818] sm:$0xf]
    %v5740 = vld [vmem:[#allocation2 + $0x81c] sm:$0xf]
    %v5741 = vld [vmem:[#allocation2 + $0x820] sm:$0xf]
    %v5742 = vld [vmem:[#allocation2 + $0x824] sm:$0xf]
    %v5743 = vld [vmem:[#allocation2 + $0x828] sm:$0xf]
    %v5744 = vld [vmem:[#allocation2 + $0x82c] sm:$0xf]
    %v5745 = vld [vmem:[#allocation2 + $0x830] sm:$0xf]
    %v5746 = vld [vmem:[#allocation2 + $0x834] sm:$0xf]
    %v5747 = vld [vmem:[#allocation2 + $0x838] sm:$0xf]
    %v5748 = vld [vmem:[#allocation2 + $0x83c] sm:$0xf]
    %v5749 = vld [vmem:[#allocation2 + $0x840] sm:$0xf]
    %v5750 = vld [vmem:[#allocation2 + $0x844] sm:$0xf]
    %v5751 = vld [vmem:[#allocation2 + $0x848] sm:$0xf]
    %v5752 = vld [vmem:[#allocation2 + $0x84c] sm:$0xf]
    %v5753 = vld [vmem:[#allocation2 + $0x850] sm:$0xf]
    %v5754 = vld [vmem:[#allocation2 + $0x854] sm:$0xf]
    %v5755 = vld [vmem:[#allocation2 + $0x858] sm:$0xf]
    %v5756 = vld [vmem:[#allocation2 + $0x85c] sm:$0xf]
    %v5757 = vld [vmem:[#allocation2 + $0x860] sm:$0xf]
    %v5758 = vld [vmem:[#allocation2 + $0x864] sm:$0xf]
    %v5759 = vld [vmem:[#allocation2 + $0x868] sm:$0xf]
    %v5760 = vld [vmem:[#allocation2 + $0x86c] sm:$0xf]
    %v5761 = vld [vmem:[#allocation2 + $0x870] sm:$0xf]
    %v5762 = vld [vmem:[#allocation2 + $0x874] sm:$0xf]
    %v5763 = vld [vmem:[#allocation2 + $0x878] sm:$0xf]
    %v5764 = vld [vmem:[#allocation2 + $0x87c] sm:$0xf]
    %v5765 = vld [vmem:[#allocation2 + $0x880] sm:$0xf]
    %v5766 = vld [vmem:[#allocation2 + $0x884] sm:$0xf]
    %v5767 = vld [vmem:[#allocation2 + $0x888] sm:$0xf]
    %v5768 = vld [vmem:[#allocation2 + $0x88c] sm:$0xf]
    %v5769 = vld [vmem:[#allocation2 + $0x890] sm:$0xf]
    %v5770 = vld [vmem:[#allocation2 + $0x894] sm:$0xf]
    %v5771 = vld [vmem:[#allocation2 + $0x898] sm:$0xf]
    %v5772 = vld [vmem:[#allocation2 + $0x89c] sm:$0xf]
    %v5773 = vld [vmem:[#allocation2 + $0x8a0] sm:$0xf]
    %v5774 = vld [vmem:[#allocation2 + $0x8a4] sm:$0xf]
    %v5775 = vld [vmem:[#allocation2 + $0x8a8] sm:$0xf]
    %v5776 = vld [vmem:[#allocation2 + $0x8ac] sm:$0xf]
    %v5777 = vld [vmem:[#allocation2 + $0x8b0] sm:$0xf]
    %v5778 = vld [vmem:[#allocation2 + $0x8b4] sm:$0xf]
    %v5779 = vld [vmem:[#allocation2 + $0x8b8] sm:$0xf]
    %v5780 = vld [vmem:[#allocation2 + $0x8bc] sm:$0xf]
    %v5781 = vld [vmem:[#allocation2 + $0x8c0] sm:$0xf]
    %v5782 = vld [vmem:[#allocation2 + $0x8c4] sm:$0xf]
    %v5783 = vld [vmem:[#allocation2 + $0x8c8] sm:$0xf]
    %v5784 = vld [vmem:[#allocation2 + $0x8cc] sm:$0xf]
    %v5785 = vld [vmem:[#allocation2 + $0x8d0] sm:$0xf]
    %v5786 = vld [vmem:[#allocation2 + $0x8d4] sm:$0xf]
    %v5787 = vld [vmem:[#allocation2 + $0x8d8] sm:$0xf]
    %v5788 = vld [vmem:[#allocation2 + $0x8dc] sm:$0xf]
    %v5789 = vld [vmem:[#allocation2 + $0x8e0] sm:$0xf]
    %v5790 = vld [vmem:[#allocation2 + $0x8e4] sm:$0xf]
    %v5791 = vld [vmem:[#allocation2 + $0x8e8] sm:$0xf]
    %v5792 = vld [vmem:[#allocation2 + $0x8ec] sm:$0xf]
    %v5793 = vld [vmem:[#allocation2 + $0x8f0] sm:$0xf]
    %v5794 = vld [vmem:[#allocation2 + $0x8f4] sm:$0xf]
    %v5795 = vld [vmem:[#allocation2 + $0x8f8] sm:$0xf]
    %v5796 = vld [vmem:[#allocation2 + $0x8fc] sm:$0xf]
    %v5797 = vld [vmem:[#allocation2 + $0x900] sm:$0xf]
    %v5798 = vld [vmem:[#allocation2 + $0x904] sm:$0xf]
    %v5799 = vld [vmem:[#allocation2 + $0x908] sm:$0xf]
    %v5800 = vld [vmem:[#allocation2 + $0x90c] sm:$0xf]
    %v5801 = vld [vmem:[#allocation2 + $0x910] sm:$0xf]
    %v5802 = vld [vmem:[#allocation2 + $0x914] sm:$0xf]
    %v5803 = vld [vmem:[#allocation2 + $0x918] sm:$0xf]
    %v5804 = vld [vmem:[#allocation2 + $0x91c] sm:$0xf]
    %v5805 = vld [vmem:[#allocation2 + $0x920] sm:$0xf]
    %v5806 = vld [vmem:[#allocation2 + $0x924] sm:$0xf]
    %v5807 = vld [vmem:[#allocation2 + $0x928] sm:$0xf]
    %v5808 = vld [vmem:[#allocation2 + $0x92c] sm:$0xf]
    %v5809 = vld [vmem:[#allocation2 + $0x930] sm:$0xf]
    %v5810 = vld [vmem:[#allocation2 + $0x934] sm:$0xf]
    %v5811 = vld [vmem:[#allocation2 + $0x938] sm:$0xf]
    %v5812 = vld [vmem:[#allocation2 + $0x93c] sm:$0xf]
    %v5813 = vld [vmem:[#allocation2 + $0x940] sm:$0xf]
    %v5814 = vld [vmem:[#allocation2 + $0x944] sm:$0xf]
    %v5815 = vld [vmem:[#allocation2 + $0x948] sm:$0xf]
    %v5816 = vld [vmem:[#allocation2 + $0x94c] sm:$0xf]
    %v5817 = vld [vmem:[#allocation2 + $0x950] sm:$0xf]
    %v5818 = vld [vmem:[#allocation2 + $0x954] sm:$0xf]
    %v5819 = vld [vmem:[#allocation2 + $0x958] sm:$0xf]
    %v5820 = vld [vmem:[#allocation2 + $0x95c] sm:$0xf]
    %v5821 = vld [vmem:[#allocation2 + $0x960] sm:$0xf]
    %v5822 = vld [vmem:[#allocation2 + $0x964] sm:$0xf]
    %v5823 = vld [vmem:[#allocation2 + $0x968] sm:$0xf]
    %v5824 = vld [vmem:[#allocation2 + $0x96c] sm:$0xf]
    %v5825 = vld [vmem:[#allocation2 + $0x970] sm:$0xf]
    %v5826 = vld [vmem:[#allocation2 + $0x974] sm:$0xf]
    %v5827 = vld [vmem:[#allocation2 + $0x978] sm:$0xf]
    %v5828 = vld [vmem:[#allocation2 + $0x97c] sm:$0xf]
    %v5829 = vld [vmem:[#allocation2 + $0x980] sm:$0xf]
    %v5830 = vld [vmem:[#allocation2 + $0x984] sm:$0xf]
    %v5831 = vld [vmem:[#allocation2 + $0x988] sm:$0xf]
    %v5832 = vld [vmem:[#allocation2 + $0x98c] sm:$0xf]
    %v5833 = vld [vmem:[#allocation2 + $0x990] sm:$0xf]
    %v5834 = vld [vmem:[#allocation2 + $0x994] sm:$0xf]
    %v5835 = vld [vmem:[#allocation2 + $0x998] sm:$0xf]
    %v5836 = vld [vmem:[#allocation2 + $0x99c] sm:$0xf]
    %v5837 = vld [vmem:[#allocation2 + $0x9a0] sm:$0xf]
    %v5838 = vld [vmem:[#allocation2 + $0x9a4] sm:$0xf]
    %v5839 = vld [vmem:[#allocation2 + $0x9a8] sm:$0xf]
    %v5840 = vld [vmem:[#allocation2 + $0x9ac] sm:$0xf]
    %v5841 = vld [vmem:[#allocation2 + $0x9b0] sm:$0xf]
    %v5842 = vld [vmem:[#allocation2 + $0x9b4] sm:$0xf]
    %v5843 = vld [vmem:[#allocation2 + $0x9b8] sm:$0xf]
    %v5844 = vld [vmem:[#allocation2 + $0x9bc] sm:$0xf]
    %v5845 = vld [vmem:[#allocation2 + $0x9c0] sm:$0xf]
    %v5846 = vld [vmem:[%s4] sm:$0x1]
    %v5848 = vperm.slane %v5846, 0
    %v6090 = vunpack.c.l.b16 %v4981
    %v6091 = vunpack.c.h.b16 %v4981
    %v6092 = vunpack.c.l.b16 %v4982
    %v6093 = vunpack.c.h.b16 %v4982
    %v6094 = vunpack.c.l.b16 %v4983
    %v6095 = vunpack.c.h.b16 %v4983
    %v6096 = vunpack.c.l.b16 %v4984
    %v6097 = vunpack.c.h.b16 %v4984
    %v6098 = vunpack.c.l.b16 %v4985
    %v6099 = vunpack.c.h.b16 %v4985
    %v6100 = vunpack.c.l.b16 %v4986
    %v6101 = vunpack.c.h.b16 %v4986
    %v6102 = vunpack.c.l.b16 %v4987
    %v6103 = vunpack.c.h.b16 %v4987
    %v6104 = vunpack.c.l.b16 %v4988
    %v6105 = vunpack.c.h.b16 %v4988
    %v6106 = vunpack.c.l.b16 %v4989
    %v6107 = vunpack.c.h.b16 %v4989
    %v6108 = vunpack.c.l.b16 %v4990
    %v6109 = vunpack.c.h.b16 %v4990
    %v6110 = vunpack.c.l.b16 %v4991
    %v6111 = vunpack.c.h.b16 %v4991
    %v6112 = vunpack.c.l.b16 %v4992
    %v6113 = vunpack.c.h.b16 %v4992
    %v6114 = vunpack.c.l.b16 %v4993
    %v6115 = vunpack.c.h.b16 %v4993
    %v6116 = vunpack.c.l.b16 %v4994
    %v6117 = vunpack.c.h.b16 %v4994
    %v6118 = vunpack.c.l.b16 %v4995
    %v6119 = vunpack.c.h.b16 %v4995
    %v6120 = vunpack.c.l.b16 %v4996
    %v6121 = vunpack.c.h.b16 %v4996
    %v6122 = vunpack.c.l.b16 %v4997
    %v6123 = vunpack.c.h.b16 %v4997
    %v6124 = vunpack.c.l.b16 %v4998
    %v6125 = vunpack.c.h.b16 %v4998
    %v6126 = vunpack.c.l.b16 %v4999
    %v6127 = vunpack.c.h.b16 %v4999
    %v6128 = vunpack.c.l.b16 %v5000
    %v6129 = vunpack.c.h.b16 %v5000
    %v6130 = vunpack.c.l.b16 %v5001
    %v6131 = vunpack.c.h.b16 %v5001
    %v6132 = vunpack.c.l.b16 %v5002
    %v6133 = vunpack.c.h.b16 %v5002
    %v6134 = vunpack.c.l.b16 %v5003
    %v6135 = vunpack.c.h.b16 %v5003
    %v6136 = vunpack.c.l.b16 %v5004
    %v6137 = vunpack.c.h.b16 %v5004
    %v6138 = vunpack.c.l.b16 %v5005
    %v6139 = vunpack.c.h.b16 %v5005
    %v6140 = vunpack.c.l.b16 %v5006
    %v6141 = vunpack.c.h.b16 %v5006
    %v6142 = vunpack.c.l.b16 %v5007
    %v6143 = vunpack.c.h.b16 %v5007
    %v6144 = vunpack.c.l.b16 %v5008
    %v6145 = vunpack.c.h.b16 %v5008
    %v6146 = vunpack.c.l.b16 %v5009
    %v6147 = vunpack.c.h.b16 %v5009
    %v6148 = vunpack.c.l.b16 %v5010
    %v6149 = vunpack.c.h.b16 %v5010
    %v6150 = vunpack.c.l.b16 %v5011
    %v6151 = vunpack.c.h.b16 %v5011
    %v6152 = vunpack.c.l.b16 %v5012
    %v6153 = vunpack.c.h.b16 %v5012
    %v6154 = vunpack.c.l.b16 %v5013
    %v6155 = vunpack.c.h.b16 %v5013
    %v6156 = vunpack.c.l.b16 %v5014
    %v6157 = vunpack.c.h.b16 %v5014
    %v6158 = vunpack.c.l.b16 %v5015
    %v6159 = vunpack.c.h.b16 %v5015
    %v6160 = vunpack.c.l.b16 %v5016
    %v6161 = vunpack.c.h.b16 %v5016
    %v6162 = vunpack.c.l.b16 %v5017
    %v6163 = vunpack.c.h.b16 %v5017
    %v6164 = vunpack.c.l.b16 %v5018
    %v6165 = vunpack.c.h.b16 %v5018
    %v6166 = vunpack.c.l.b16 %v5019
    %v6167 = vunpack.c.h.b16 %v5019
    %v6168 = vunpack.c.l.b16 %v5020
    %v6169 = vunpack.c.h.b16 %v5020
    %v6170 = vunpack.c.l.b16 %v5021
    %v6171 = vunpack.c.h.b16 %v5021
    %v6172 = vunpack.c.l.b16 %v5022
    %v6173 = vunpack.c.h.b16 %v5022
    %v6174 = vunpack.c.l.b16 %v5023
    %v6175 = vunpack.c.h.b16 %v5023
    %v6176 = vunpack.c.l.b16 %v5024
    %v6177 = vunpack.c.h.b16 %v5024
    %v6178 = vunpack.c.l.b16 %v5025
    %v6179 = vunpack.c.h.b16 %v5025
    %v6180 = vunpack.c.l.b16 %v5026
    %v6181 = vunpack.c.h.b16 %v5026
    %v6182 = vunpack.c.l.b16 %v5027
    %v6183 = vunpack.c.h.b16 %v5027
    %v6184 = vunpack.c.l.b16 %v5028
    %v6185 = vunpack.c.h.b16 %v5028
    %v6186 = vunpack.c.l.b16 %v5029
    %v6187 = vunpack.c.h.b16 %v5029
    %v6188 = vunpack.c.l.b16 %v5030
    %v6189 = vunpack.c.h.b16 %v5030
    %v6190 = vunpack.c.l.b16 %v5031
    %v6191 = vunpack.c.h.b16 %v5031
    %v6192 = vunpack.c.l.b16 %v5032
    %v6193 = vunpack.c.h.b16 %v5032
    %v6194 = vunpack.c.l.b16 %v5033
    %v6195 = vunpack.c.h.b16 %v5033
    %v6196 = vunpack.c.l.b16 %v5034
    %v6197 = vunpack.c.h.b16 %v5034
    %v6198 = vunpack.c.l.b16 %v5035
    %v6199 = vunpack.c.h.b16 %v5035
    %v6200 = vunpack.c.l.b16 %v5036
    %v6201 = vunpack.c.h.b16 %v5036
    %v6202 = vunpack.c.l.b16 %v5037
    %v6203 = vunpack.c.h.b16 %v5037
    %v6204 = vunpack.c.l.b16 %v5038
    %v6205 = vunpack.c.h.b16 %v5038
    %v6206 = vunpack.c.l.b16 %v5039
    %v6207 = vunpack.c.h.b16 %v5039
    %v6208 = vunpack.c.l.b16 %v5040
    %v6209 = vunpack.c.h.b16 %v5040
    %v6210 = vunpack.c.l.b16 %v5041
    %v6211 = vunpack.c.h.b16 %v5041
    %v6212 = vunpack.c.l.b16 %v5042
    %v6213 = vunpack.c.h.b16 %v5042
    %v6214 = vunpack.c.l.b16 %v5043
    %v6215 = vunpack.c.h.b16 %v5043
    %v6216 = vunpack.c.l.b16 %v5044
    %v6217 = vunpack.c.h.b16 %v5044
    %v6218 = vunpack.c.l.b16 %v5045
    %v6219 = vunpack.c.h.b16 %v5045
    %v6220 = vunpack.c.l.b16 %v5046
    %v6221 = vunpack.c.h.b16 %v5046
    %v6222 = vunpack.c.l.b16 %v5047
    %v6223 = vunpack.c.h.b16 %v5047
    %v6224 = vunpack.c.l.b16 %v5048
    %v6225 = vunpack.c.h.b16 %v5048
    %v6226 = vunpack.c.l.b16 %v5049
    %v6227 = vunpack.c.h.b16 %v5049
    %v6228 = vunpack.c.l.b16 %v5050
    %v6229 = vunpack.c.h.b16 %v5050
    %v6230 = vunpack.c.l.b16 %v5051
    %v6231 = vunpack.c.h.b16 %v5051
    %v6232 = vunpack.c.l.b16 %v5052
    %v6233 = vunpack.c.h.b16 %v5052
    %v6234 = vunpack.c.l.b16 %v5053
    %v6235 = vunpack.c.h.b16 %v5053
    %v6236 = vunpack.c.l.b16 %v5054
    %v6237 = vunpack.c.h.b16 %v5054
    %v6238 = vunpack.c.l.b16 %v5055
    %v6239 = vunpack.c.h.b16 %v5055
    %v6240 = vunpack.c.l.b16 %v5056
    %v6241 = vunpack.c.h.b16 %v5056
    %v6242 = vunpack.c.l.b16 %v5057
    %v6243 = vunpack.c.h.b16 %v5057
    %v6244 = vunpack.c.l.b16 %v5058
    %v6245 = vunpack.c.h.b16 %v5058
    %v6246 = vunpack.c.l.b16 %v5059
    %v6247 = vunpack.c.h.b16 %v5059
    %v6248 = vunpack.c.l.b16 %v5060
    %v6249 = vunpack.c.h.b16 %v5060
    %v6250 = vunpack.c.l.b16 %v5061
    %v6251 = vunpack.c.h.b16 %v5061
    %v6252 = vunpack.c.l.b16 %v5062
    %v6253 = vunpack.c.h.b16 %v5062
    %v6254 = vunpack.c.l.b16 %v5063
    %v6255 = vunpack.c.h.b16 %v5063
    %v6256 = vunpack.c.l.b16 %v5064
    %v6257 = vunpack.c.h.b16 %v5064
    %v6258 = vunpack.c.l.b16 %v5065
    %v6259 = vunpack.c.h.b16 %v5065
    %v6260 = vunpack.c.l.b16 %v5066
    %v6261 = vunpack.c.h.b16 %v5066
    %v6262 = vunpack.c.l.b16 %v5067
    %v6263 = vunpack.c.h.b16 %v5067
    %v6264 = vunpack.c.l.b16 %v5068
    %v6265 = vunpack.c.h.b16 %v5068
    %v6266 = vunpack.c.l.b16 %v5069
    %v6267 = vunpack.c.h.b16 %v5069
    %v6268 = vunpack.c.l.b16 %v5070
    %v6269 = vunpack.c.h.b16 %v5070
    %v6270 = vunpack.c.l.b16 %v5071
    %v6271 = vunpack.c.h.b16 %v5071
    %v6272 = vunpack.c.l.b16 %v5072
    %v6273 = vunpack.c.h.b16 %v5072
    %v6274 = vunpack.c.l.b16 %v5073
    %v6275 = vunpack.c.h.b16 %v5073
    %v6276 = vunpack.c.l.b16 %v5074
    %v6277 = vunpack.c.h.b16 %v5074
    %v6278 = vunpack.c.l.b16 %v5075
    %v6279 = vunpack.c.h.b16 %v5075
    %v6280 = vunpack.c.l.b16 %v5076
    %v6281 = vunpack.c.h.b16 %v5076
    %v6282 = vunpack.c.l.b16 %v5077
    %v6283 = vunpack.c.h.b16 %v5077
    %v6284 = vunpack.c.l.b16 %v5078
    %v6285 = vunpack.c.h.b16 %v5078
    %v6286 = vunpack.c.l.b16 %v5079
    %v6287 = vunpack.c.h.b16 %v5079
    %v6288 = vunpack.c.l.b16 %v5080
    %v6289 = vunpack.c.h.b16 %v5080
    %v6290 = vunpack.c.l.b16 %v5081
    %v6291 = vunpack.c.h.b16 %v5081
    %v6292 = vunpack.c.l.b16 %v5082
    %v6293 = vunpack.c.h.b16 %v5082
    %v6294 = vunpack.c.l.b16 %v5083
    %v6295 = vunpack.c.h.b16 %v5083
    %v6296 = vunpack.c.l.b16 %v5084
    %v6297 = vunpack.c.h.b16 %v5084
    %v6298 = vunpack.c.l.b16 %v5085
    %v6299 = vunpack.c.h.b16 %v5085
    %v6300 = vunpack.c.l.b16 %v5086
    %v6301 = vunpack.c.h.b16 %v5086
    %v6302 = vunpack.c.l.b16 %v5087
    %v6303 = vunpack.c.h.b16 %v5087
    %v6304 = vunpack.c.l.b16 %v5088
    %v6305 = vunpack.c.h.b16 %v5088
    %v6306 = vunpack.c.l.b16 %v5089
    %v6307 = vunpack.c.h.b16 %v5089
    %v6308 = vunpack.c.l.b16 %v5090
    %v6309 = vunpack.c.h.b16 %v5090
    %v6310 = vunpack.c.l.b16 %v5091
    %v6311 = vunpack.c.h.b16 %v5091
    %v6312 = vunpack.c.l.b16 %v5092
    %v6313 = vunpack.c.h.b16 %v5092
    %v6314 = vunpack.c.l.b16 %v5093
    %v6315 = vunpack.c.h.b16 %v5093
    %v6316 = vunpack.c.l.b16 %v5094
    %v6317 = vunpack.c.h.b16 %v5094
    %v6318 = vunpack.c.l.b16 %v5095
    %v6319 = vunpack.c.h.b16 %v5095
    %v6320 = vunpack.c.l.b16 %v5096
    %v6321 = vunpack.c.h.b16 %v5096
    %v6322 = vunpack.c.l.b16 %v5097
    %v6323 = vunpack.c.h.b16 %v5097
    %v6324 = vunpack.c.l.b16 %v5098
    %v6325 = vunpack.c.h.b16 %v5098
    %v6326 = vunpack.c.l.b16 %v5099
    %v6327 = vunpack.c.h.b16 %v5099
    %v6328 = vunpack.c.l.b16 %v5100
    %v6329 = vunpack.c.h.b16 %v5100
    %v6330 = vunpack.c.l.b16 %v5101
    %v6331 = vunpack.c.h.b16 %v5101
    %v6332 = vunpack.c.l.b16 %v5102
    %v6333 = vunpack.c.h.b16 %v5102
    %v6334 = vunpack.c.l.b16 %v5103
    %v6335 = vunpack.c.h.b16 %v5103
    %v6336 = vunpack.c.l.b16 %v5104
    %v6337 = vunpack.c.h.b16 %v5104
    %v6338 = vunpack.c.l.b16 %v5105
    %v6339 = vunpack.c.h.b16 %v5105
    %v6340 = vunpack.c.l.b16 %v5106
    %v6341 = vunpack.c.h.b16 %v5106
    %v6342 = vunpack.c.l.b16 %v5107
    %v6343 = vunpack.c.h.b16 %v5107
    %v6344 = vunpack.c.l.b16 %v5108
    %v6345 = vunpack.c.h.b16 %v5108
    %v6346 = vunpack.c.l.b16 %v5109
    %v6347 = vunpack.c.h.b16 %v5109
    %v6348 = vunpack.c.l.b16 %v5110
    %v6349 = vunpack.c.h.b16 %v5110
    %v6350 = vunpack.c.l.b16 %v5111
    %v6351 = vunpack.c.h.b16 %v5111
    %v6352 = vunpack.c.l.b16 %v5112
    %v6353 = vunpack.c.h.b16 %v5112
    %v6354 = vunpack.c.l.b16 %v5113
    %v6355 = vunpack.c.h.b16 %v5113
    %v6356 = vunpack.c.l.b16 %v5114
    %v6357 = vunpack.c.h.b16 %v5114
    %v6358 = vunpack.c.l.b16 %v5115
    %v6359 = vunpack.c.h.b16 %v5115
    %v6360 = vunpack.c.l.b16 %v5116
    %v6361 = vunpack.c.h.b16 %v5116
    %v6362 = vunpack.c.l.b16 %v5117
    %v6363 = vunpack.c.h.b16 %v5117
    %v6364 = vunpack.c.l.b16 %v5118
    %v6365 = vunpack.c.h.b16 %v5118
    %v6366 = vunpack.c.l.b16 %v5119
    %v6367 = vunpack.c.h.b16 %v5119
    %v6368 = vunpack.c.l.b16 %v5120
    %v6369 = vunpack.c.h.b16 %v5120
    %v6370 = vunpack.c.l.b16 %v5121
    %v6371 = vunpack.c.h.b16 %v5121
    %v6372 = vunpack.c.l.b16 %v5122
    %v6373 = vunpack.c.h.b16 %v5122
    %v6374 = vunpack.c.l.b16 %v5123
    %v6375 = vunpack.c.h.b16 %v5123
    %v6376 = vunpack.c.l.b16 %v5124
    %v6377 = vunpack.c.h.b16 %v5124
    %v6378 = vunpack.c.l.b16 %v5125
    %v6379 = vunpack.c.h.b16 %v5125
    %v6380 = vunpack.c.l.b16 %v5126
    %v6381 = vunpack.c.h.b16 %v5126
    %v6382 = vunpack.c.l.b16 %v5127
    %v6383 = vunpack.c.h.b16 %v5127
    %v6384 = vunpack.c.l.b16 %v5128
    %v6385 = vunpack.c.h.b16 %v5128
    %v6386 = vunpack.c.l.b16 %v5129
    %v6387 = vunpack.c.h.b16 %v5129
    %v6388 = vunpack.c.l.b16 %v5130
    %v6389 = vunpack.c.h.b16 %v5130
    %v6390 = vunpack.c.l.b16 %v5131
    %v6391 = vunpack.c.h.b16 %v5131
    %v6392 = vunpack.c.l.b16 %v5132
    %v6393 = vunpack.c.h.b16 %v5132
    %v6394 = vunpack.c.l.b16 %v5133
    %v6395 = vunpack.c.h.b16 %v5133
    %v6396 = vunpack.c.l.b16 %v5134
    %v6397 = vunpack.c.h.b16 %v5134
    %v6398 = vunpack.c.l.b16 %v5135
    %v6399 = vunpack.c.h.b16 %v5135
    %v6400 = vunpack.c.l.b16 %v5136
    %v6401 = vunpack.c.h.b16 %v5136
    %v6402 = vunpack.c.l.b16 %v5137
    %v6403 = vunpack.c.h.b16 %v5137
    %v6404 = vunpack.c.l.b16 %v5138
    %v6405 = vunpack.c.h.b16 %v5138
    %v6406 = vunpack.c.l.b16 %v5139
    %v6407 = vunpack.c.h.b16 %v5139
    %v6408 = vunpack.c.l.b16 %v5140
    %v6409 = vunpack.c.h.b16 %v5140
    %v6410 = vunpack.c.l.b16 %v5141
    %v6411 = vunpack.c.h.b16 %v5141
    %v6412 = vunpack.c.l.b16 %v5142
    %v6413 = vunpack.c.h.b16 %v5142
    %v6414 = vunpack.c.l.b16 %v5143
    %v6415 = vunpack.c.h.b16 %v5143
    %v6416 = vunpack.c.l.b16 %v5144
    %v6417 = vunpack.c.h.b16 %v5144
    %v6418 = vunpack.c.l.b16 %v5145
    %v6419 = vunpack.c.h.b16 %v5145
    %v6420 = vunpack.c.l.b16 %v5146
    %v6421 = vunpack.c.h.b16 %v5146
    %v6422 = vunpack.c.l.b16 %v5147
    %v6423 = vunpack.c.h.b16 %v5147
    %v6424 = vunpack.c.l.b16 %v5148
    %v6425 = vunpack.c.h.b16 %v5148
    %v6426 = vunpack.c.l.b16 %v5149
    %v6427 = vunpack.c.h.b16 %v5149
    %v6428 = vunpack.c.l.b16 %v5150
    %v6429 = vunpack.c.h.b16 %v5150
    %v6430 = vunpack.c.l.b16 %v5151
    %v6431 = vunpack.c.h.b16 %v5151
    %v6432 = vunpack.c.l.b16 %v5152
    %v6433 = vunpack.c.h.b16 %v5152
    %v6434 = vunpack.c.l.b16 %v5153
    %v6435 = vunpack.c.h.b16 %v5153
    %v6436 = vunpack.c.l.b16 %v5154
    %v6437 = vunpack.c.h.b16 %v5154
    %v6438 = vunpack.c.l.b16 %v5155
    %v6439 = vunpack.c.h.b16 %v5155
    %v6440 = vunpack.c.l.b16 %v5156
    %v6441 = vunpack.c.h.b16 %v5156
    %v6442 = vunpack.c.l.b16 %v5157
    %v6443 = vunpack.c.h.b16 %v5157
    %v6444 = vunpack.c.l.b16 %v5158
    %v6445 = vunpack.c.h.b16 %v5158
    %v6446 = vunpack.c.l.b16 %v5159
    %v6447 = vunpack.c.h.b16 %v5159
    %v6448 = vunpack.c.l.b16 %v5160
    %v6449 = vunpack.c.h.b16 %v5160
    %v6450 = vunpack.c.l.b16 %v5161
    %v6451 = vunpack.c.h.b16 %v5161
    %v6452 = vunpack.c.l.b16 %v5162
    %v6453 = vunpack.c.h.b16 %v5162
    %v6454 = vunpack.c.l.b16 %v5163
    %v6455 = vunpack.c.h.b16 %v5163
    %v6456 = vunpack.c.l.b16 %v5164
    %v6457 = vunpack.c.h.b16 %v5164
    %v6458 = vunpack.c.l.b16 %v5165
    %v6459 = vunpack.c.h.b16 %v5165
    %v6460 = vunpack.c.l.b16 %v5166
    %v6461 = vunpack.c.h.b16 %v5166
    %v6462 = vunpack.c.l.b16 %v5167
    %v6463 = vunpack.c.h.b16 %v5167
    %v6464 = vunpack.c.l.b16 %v5168
    %v6465 = vunpack.c.h.b16 %v5168
    %v6466 = vunpack.c.l.b16 %v5169
    %v6467 = vunpack.c.h.b16 %v5169
    %v6468 = vunpack.c.l.b16 %v5170
    %v6469 = vunpack.c.h.b16 %v5170
    %v6470 = vunpack.c.l.b16 %v5171
    %v6471 = vunpack.c.h.b16 %v5171
    %v6472 = vunpack.c.l.b16 %v5172
    %v6473 = vunpack.c.h.b16 %v5172
    %v6474 = vunpack.c.l.b16 %v5173
    %v6475 = vunpack.c.h.b16 %v5173
    %v6476 = vunpack.c.l.b16 %v5174
    %v6477 = vunpack.c.h.b16 %v5174
    %v6478 = vunpack.c.l.b16 %v5175
    %v6479 = vunpack.c.h.b16 %v5175
    %v6480 = vunpack.c.l.b16 %v5176
    %v6481 = vunpack.c.h.b16 %v5176
    %v6482 = vunpack.c.l.b16 %v5177
    %v6483 = vunpack.c.h.b16 %v5177
    %v6484 = vunpack.c.l.b16 %v5178
    %v6485 = vunpack.c.h.b16 %v5178
    %v6486 = vunpack.c.l.b16 %v5179
    %v6487 = vunpack.c.h.b16 %v5179
    %v6488 = vunpack.c.l.b16 %v5180
    %v6489 = vunpack.c.h.b16 %v5180
    %v6490 = vunpack.c.l.b16 %v5181
    %v6491 = vunpack.c.h.b16 %v5181
    %v6492 = vunpack.c.l.b16 %v5182
    %v6493 = vunpack.c.h.b16 %v5182
    %v6494 = vunpack.c.l.b16 %v5183
    %v6495 = vunpack.c.h.b16 %v5183
    %v6496 = vunpack.c.l.b16 %v5184
    %v6497 = vunpack.c.h.b16 %v5184
    %v6498 = vunpack.c.l.b16 %v5185
    %v6499 = vunpack.c.h.b16 %v5185
    %v6500 = vunpack.c.l.b16 %v5186
    %v6501 = vunpack.c.h.b16 %v5186
    %v6502 = vunpack.c.l.b16 %v5187
    %v6503 = vunpack.c.h.b16 %v5187
    %v6504 = vunpack.c.l.b16 %v5188
    %v6505 = vunpack.c.h.b16 %v5188
    %v6506 = vunpack.c.l.b16 %v5189
    %v6507 = vunpack.c.h.b16 %v5189
    %v6508 = vunpack.c.l.b16 %v5190
    %v6509 = vunpack.c.h.b16 %v5190
    %v6510 = vunpack.c.l.b16 %v5191
    %v6511 = vunpack.c.h.b16 %v5191
    %v6512 = vunpack.c.l.b16 %v5192
    %v6513 = vunpack.c.h.b16 %v5192
    %v6514 = vunpack.c.l.b16 %v5193
    %v6515 = vunpack.c.h.b16 %v5193
    %v6516 = vunpack.c.l.b16 %v5194
    %v6517 = vunpack.c.h.b16 %v5194
    %v6518 = vunpack.c.l.b16 %v5195
    %v6519 = vunpack.c.h.b16 %v5195
    %v6520 = vunpack.c.l.b16 %v5196
    %v6521 = vunpack.c.h.b16 %v5196
    %v6522 = vunpack.c.l.b16 %v5197
    %v6523 = vunpack.c.h.b16 %v5197
    %v6524 = vunpack.c.l.b16 %v5198
    %v6525 = vunpack.c.h.b16 %v5198
    %v6526 = vunpack.c.l.b16 %v5199
    %v6527 = vunpack.c.h.b16 %v5199
    %v6528 = vunpack.c.l.b16 %v5200
    %v6529 = vunpack.c.h.b16 %v5200
    %v6530 = vunpack.c.l.b16 %v5201
    %v6531 = vunpack.c.h.b16 %v5201
    %v6532 = vunpack.c.l.b16 %v5202
    %v6533 = vunpack.c.h.b16 %v5202
    %v6534 = vunpack.c.l.b16 %v5203
    %v6535 = vunpack.c.h.b16 %v5203
    %v6536 = vunpack.c.l.b16 %v5204
    %v6537 = vunpack.c.h.b16 %v5204
    %v6538 = vunpack.c.l.b16 %v5205
    %v6539 = vunpack.c.h.b16 %v5205
    %v6540 = vunpack.c.l.b16 %v5206
    %v6541 = vunpack.c.h.b16 %v5206
    %v6542 = vunpack.c.l.b16 %v5207
    %v6543 = vunpack.c.h.b16 %v5207
    %v6544 = vunpack.c.l.b16 %v5208
    %v6545 = vunpack.c.h.b16 %v5208
    %v6546 = vunpack.c.l.b16 %v5209
    %v6547 = vunpack.c.h.b16 %v5209
    %v6548 = vunpack.c.l.b16 %v5210
    %v6549 = vunpack.c.h.b16 %v5210
    %v6550 = vunpack.c.l.b16 %v5211
    %v6551 = vunpack.c.h.b16 %v5211
    %v6552 = vunpack.c.l.b16 %v5212
    %v6553 = vunpack.c.h.b16 %v5212
    %v6554 = vunpack.c.l.b16 %v5213
    %v6555 = vunpack.c.h.b16 %v5213
    %v6556 = vunpack.c.l.b16 %v5214
    %v6557 = vunpack.c.h.b16 %v5214
    %v6558 = vunpack.c.l.b16 %v5215
    %v6559 = vunpack.c.h.b16 %v5215
    %v6560 = vunpack.c.l.b16 %v5216
    %v6561 = vunpack.c.h.b16 %v5216
    %v6562 = vunpack.c.l.b16 %v5217
    %v6563 = vunpack.c.h.b16 %v5217
    %v6564 = vunpack.c.l.b16 %v5218
    %v6565 = vunpack.c.h.b16 %v5218
    %v6566 = vunpack.c.l.b16 %v5219
    %v6567 = vunpack.c.h.b16 %v5219
    %v6568 = vunpack.c.l.b16 %v5220
    %v6569 = vunpack.c.h.b16 %v5220
    %v6570 = vpack.c.b16 %v6130, %v6090
    %v6571 = vpack.c.b16 %v6131, %v6091
    %v6572 = vpack.c.b16 %v6132, %v6092
    %v6573 = vpack.c.b16 %v6133, %v6093
    %v6574 = vpack.c.b16 %v6134, %v6094
    %v6575 = vpack.c.b16 %v6135, %v6095
    %v6576 = vpack.c.b16 %v6136, %v6096
    %v6577 = vpack.c.b16 %v6137, %v6097
    %v6578 = vpack.c.b16 %v6138, %v6098
    %v6579 = vpack.c.b16 %v6139, %v6099
    %v6580 = vpack.c.b16 %v6140, %v6100
    %v6581 = vpack.c.b16 %v6141, %v6101
    %v6582 = vpack.c.b16 %v6142, %v6102
    %v6583 = vpack.c.b16 %v6143, %v6103
    %v6584 = vpack.c.b16 %v6144, %v6104
    %v6585 = vpack.c.b16 %v6145, %v6105
    %v6586 = vpack.c.b16 %v6146, %v6106
    %v6587 = vpack.c.b16 %v6147, %v6107
    %v6588 = vpack.c.b16 %v6148, %v6108
    %v6589 = vpack.c.b16 %v6149, %v6109
    %v6590 = vpack.c.b16 %v6150, %v6110
    %v6591 = vpack.c.b16 %v6151, %v6111
    %v6592 = vpack.c.b16 %v6152, %v6112
    %v6593 = vpack.c.b16 %v6153, %v6113
    %v6594 = vpack.c.b16 %v6154, %v6114
    %v6595 = vpack.c.b16 %v6155, %v6115
    %v6596 = vpack.c.b16 %v6156, %v6116
    %v6597 = vpack.c.b16 %v6157, %v6117
    %v6598 = vpack.c.b16 %v6158, %v6118
    %v6599 = vpack.c.b16 %v6159, %v6119
    %v6600 = vpack.c.b16 %v6160, %v6120
    %v6601 = vpack.c.b16 %v6161, %v6121
    %v6602 = vpack.c.b16 %v6162, %v6122
    %v6603 = vpack.c.b16 %v6163, %v6123
    %v6604 = vpack.c.b16 %v6164, %v6124
    %v6605 = vpack.c.b16 %v6165, %v6125
    %v6606 = vpack.c.b16 %v6166, %v6126
    %v6607 = vpack.c.b16 %v6167, %v6127
    %v6608 = vpack.c.b16 %v6168, %v6128
    %v6609 = vpack.c.b16 %v6169, %v6129
    %v6610 = vpack.c.b16 %v6210, %v6170
    %v6611 = vpack.c.b16 %v6211, %v6171
    %v6612 = vpack.c.b16 %v6212, %v6172
    %v6613 = vpack.c.b16 %v6213, %v6173
    %v6614 = vpack.c.b16 %v6214, %v6174
    %v6615 = vpack.c.b16 %v6215, %v6175
    %v6616 = vpack.c.b16 %v6216, %v6176
    %v6617 = vpack.c.b16 %v6217, %v6177
    %v6618 = vpack.c.b16 %v6218, %v6178
    %v6619 = vpack.c.b16 %v6219, %v6179
    %v6620 = vpack.c.b16 %v6220, %v6180
    %v6621 = vpack.c.b16 %v6221, %v6181
    %v6622 = vpack.c.b16 %v6222, %v6182
    %v6623 = vpack.c.b16 %v6223, %v6183
    %v6624 = vpack.c.b16 %v6224, %v6184
    %v6625 = vpack.c.b16 %v6225, %v6185
    %v6626 = vpack.c.b16 %v6226, %v6186
    %v6627 = vpack.c.b16 %v6227, %v6187
    %v6628 = vpack.c.b16 %v6228, %v6188
    %v6629 = vpack.c.b16 %v6229, %v6189
    %v6630 = vpack.c.b16 %v6230, %v6190
    %v6631 = vpack.c.b16 %v6231, %v6191
    %v6632 = vpack.c.b16 %v6232, %v6192
    %v6633 = vpack.c.b16 %v6233, %v6193
    %v6634 = vpack.c.b16 %v6234, %v6194
    %v6635 = vpack.c.b16 %v6235, %v6195
    %v6636 = vpack.c.b16 %v6236, %v6196
    %v6637 = vpack.c.b16 %v6237, %v6197
    %v6638 = vpack.c.b16 %v6238, %v6198
    %v6639 = vpack.c.b16 %v6239, %v6199
    %v6640 = vpack.c.b16 %v6240, %v6200
    %v6641 = vpack.c.b16 %v6241, %v6201
    %v6642 = vpack.c.b16 %v6242, %v6202
    %v6643 = vpack.c.b16 %v6243, %v6203
    %v6644 = vpack.c.b16 %v6244, %v6204
    %v6645 = vpack.c.b16 %v6245, %v6205
    %v6646 = vpack.c.b16 %v6246, %v6206
    %v6647 = vpack.c.b16 %v6247, %v6207
    %v6648 = vpack.c.b16 %v6248, %v6208
    %v6649 = vpack.c.b16 %v6249, %v6209
    %v6650 = vpack.c.b16 %v6290, %v6250
    %v6651 = vpack.c.b16 %v6291, %v6251
    %v6652 = vpack.c.b16 %v6292, %v6252
    %v6653 = vpack.c.b16 %v6293, %v6253
    %v6654 = vpack.c.b16 %v6294, %v6254
    %v6655 = vpack.c.b16 %v6295, %v6255
    %v6656 = vpack.c.b16 %v6296, %v6256
    %v6657 = vpack.c.b16 %v6297, %v6257
    %v6658 = vpack.c.b16 %v6298, %v6258
    %v6659 = vpack.c.b16 %v6299, %v6259
    %v6660 = vpack.c.b16 %v6300, %v6260
    %v6661 = vpack.c.b16 %v6301, %v6261
    %v6662 = vpack.c.b16 %v6302, %v6262
    %v6663 = vpack.c.b16 %v6303, %v6263
    %v6664 = vpack.c.b16 %v6304, %v6264
    %v6665 = vpack.c.b16 %v6305, %v6265
    %v6666 = vpack.c.b16 %v6306, %v6266
    %v6667 = vpack.c.b16 %v6307, %v6267
    %v6668 = vpack.c.b16 %v6308, %v6268
    %v6669 = vpack.c.b16 %v6309, %v6269
    %v6670 = vpack.c.b16 %v6310, %v6270
    %v6671 = vpack.c.b16 %v6311, %v6271
    %v6672 = vpack.c.b16 %v6312, %v6272
    %v6673 = vpack.c.b16 %v6313, %v6273
    %v6674 = vpack.c.b16 %v6314, %v6274
    %v6675 = vpack.c.b16 %v6315, %v6275
    %v6676 = vpack.c.b16 %v6316, %v6276
    %v6677 = vpack.c.b16 %v6317, %v6277
    %v6678 = vpack.c.b16 %v6318, %v6278
    %v6679 = vpack.c.b16 %v6319, %v6279
    %v6680 = vpack.c.b16 %v6320, %v6280
    %v6681 = vpack.c.b16 %v6321, %v6281
    %v6682 = vpack.c.b16 %v6322, %v6282
    %v6683 = vpack.c.b16 %v6323, %v6283
    %v6684 = vpack.c.b16 %v6324, %v6284
    %v6685 = vpack.c.b16 %v6325, %v6285
    %v6686 = vpack.c.b16 %v6326, %v6286
    %v6687 = vpack.c.b16 %v6327, %v6287
    %v6688 = vpack.c.b16 %v6328, %v6288
    %v6689 = vpack.c.b16 %v6329, %v6289
    %v6690 = vpack.c.b16 %v6370, %v6330
    %v6691 = vpack.c.b16 %v6371, %v6331
    %v6692 = vpack.c.b16 %v6372, %v6332
    %v6693 = vpack.c.b16 %v6373, %v6333
    %v6694 = vpack.c.b16 %v6374, %v6334
    %v6695 = vpack.c.b16 %v6375, %v6335
    %v6696 = vpack.c.b16 %v6376, %v6336
    %v6697 = vpack.c.b16 %v6377, %v6337
    %v6698 = vpack.c.b16 %v6378, %v6338
    %v6699 = vpack.c.b16 %v6379, %v6339
    %v6700 = vpack.c.b16 %v6380, %v6340
    %v6701 = vpack.c.b16 %v6381, %v6341
    %v6702 = vpack.c.b16 %v6382, %v6342
    %v6703 = vpack.c.b16 %v6383, %v6343
    %v6704 = vpack.c.b16 %v6384, %v6344
    %v6705 = vpack.c.b16 %v6385, %v6345
    %v6706 = vpack.c.b16 %v6386, %v6346
    %v6707 = vpack.c.b16 %v6387, %v6347
    %v6708 = vpack.c.b16 %v6388, %v6348
    %v6709 = vpack.c.b16 %v6389, %v6349
    %v6710 = vpack.c.b16 %v6390, %v6350
    %v6711 = vpack.c.b16 %v6391, %v6351
    %v6712 = vpack.c.b16 %v6392, %v6352
    %v6713 = vpack.c.b16 %v6393, %v6353
    %v6714 = vpack.c.b16 %v6394, %v6354
    %v6715 = vpack.c.b16 %v6395, %v6355
    %v6716 = vpack.c.b16 %v6396, %v6356
    %v6717 = vpack.c.b16 %v6397, %v6357
    %v6718 = vpack.c.b16 %v6398, %v6358
    %v6719 = vpack.c.b16 %v6399, %v6359
    %v6720 = vpack.c.b16 %v6400, %v6360
    %v6721 = vpack.c.b16 %v6401, %v6361
    %v6722 = vpack.c.b16 %v6402, %v6362
    %v6723 = vpack.c.b16 %v6403, %v6363
    %v6724 = vpack.c.b16 %v6404, %v6364
    %v6725 = vpack.c.b16 %v6405, %v6365
    %v6726 = vpack.c.b16 %v6406, %v6366
    %v6727 = vpack.c.b16 %v6407, %v6367
    %v6728 = vpack.c.b16 %v6408, %v6368
    %v6729 = vpack.c.b16 %v6409, %v6369
    %v6730 = vpack.c.b16 %v6450, %v6410
    %v6731 = vpack.c.b16 %v6451, %v6411
    %v6732 = vpack.c.b16 %v6452, %v6412
    %v6733 = vpack.c.b16 %v6453, %v6413
    %v6734 = vpack.c.b16 %v6454, %v6414
    %v6735 = vpack.c.b16 %v6455, %v6415
    %v6736 = vpack.c.b16 %v6456, %v6416
    %v6737 = vpack.c.b16 %v6457, %v6417
    %v6738 = vpack.c.b16 %v6458, %v6418
    %v6739 = vpack.c.b16 %v6459, %v6419
    %v6740 = vpack.c.b16 %v6460, %v6420
    %v6741 = vpack.c.b16 %v6461, %v6421
    %v6742 = vpack.c.b16 %v6462, %v6422
    %v6743 = vpack.c.b16 %v6463, %v6423
    %v6744 = vpack.c.b16 %v6464, %v6424
    %v6745 = vpack.c.b16 %v6465, %v6425
    %v6746 = vpack.c.b16 %v6466, %v6426
    %v6747 = vpack.c.b16 %v6467, %v6427
    %v6748 = vpack.c.b16 %v6468, %v6428
    %v6749 = vpack.c.b16 %v6469, %v6429
    %v6750 = vpack.c.b16 %v6470, %v6430
    %v6751 = vpack.c.b16 %v6471, %v6431
    %v6752 = vpack.c.b16 %v6472, %v6432
    %v6753 = vpack.c.b16 %v6473, %v6433
    %v6754 = vpack.c.b16 %v6474, %v6434
    %v6755 = vpack.c.b16 %v6475, %v6435
    %v6756 = vpack.c.b16 %v6476, %v6436
    %v6757 = vpack.c.b16 %v6477, %v6437
    %v6758 = vpack.c.b16 %v6478, %v6438
    %v6759 = vpack.c.b16 %v6479, %v6439
    %v6760 = vpack.c.b16 %v6480, %v6440
    %v6761 = vpack.c.b16 %v6481, %v6441
    %v6762 = vpack.c.b16 %v6482, %v6442
    %v6763 = vpack.c.b16 %v6483, %v6443
    %v6764 = vpack.c.b16 %v6484, %v6444
    %v6765 = vpack.c.b16 %v6485, %v6445
    %v6766 = vpack.c.b16 %v6486, %v6446
    %v6767 = vpack.c.b16 %v6487, %v6447
    %v6768 = vpack.c.b16 %v6488, %v6448
    %v6769 = vpack.c.b16 %v6489, %v6449
    %v6770 = vpack.c.b16 %v6530, %v6490
    %v6771 = vpack.c.b16 %v6531, %v6491
    %v6772 = vpack.c.b16 %v6532, %v6492
    %v6773 = vpack.c.b16 %v6533, %v6493
    %v6774 = vpack.c.b16 %v6534, %v6494
    %v6775 = vpack.c.b16 %v6535, %v6495
    %v6776 = vpack.c.b16 %v6536, %v6496
    %v6777 = vpack.c.b16 %v6537, %v6497
    %v6778 = vpack.c.b16 %v6538, %v6498
    %v6779 = vpack.c.b16 %v6539, %v6499
    %v6780 = vpack.c.b16 %v6540, %v6500
    %v6781 = vpack.c.b16 %v6541, %v6501
    %v6782 = vpack.c.b16 %v6542, %v6502
    %v6783 = vpack.c.b16 %v6543, %v6503
    %v6784 = vpack.c.b16 %v6544, %v6504
    %v6785 = vpack.c.b16 %v6545, %v6505
    %v6786 = vpack.c.b16 %v6546, %v6506
    %v6787 = vpack.c.b16 %v6547, %v6507
    %v6788 = vpack.c.b16 %v6548, %v6508
    %v6789 = vpack.c.b16 %v6549, %v6509
    %v6790 = vpack.c.b16 %v6550, %v6510
    %v6791 = vpack.c.b16 %v6551, %v6511
    %v6792 = vpack.c.b16 %v6552, %v6512
    %v6793 = vpack.c.b16 %v6553, %v6513
    %v6794 = vpack.c.b16 %v6554, %v6514
    %v6795 = vpack.c.b16 %v6555, %v6515
    %v6796 = vpack.c.b16 %v6556, %v6516
    %v6797 = vpack.c.b16 %v6557, %v6517
    %v6798 = vpack.c.b16 %v6558, %v6518
    %v6799 = vpack.c.b16 %v6559, %v6519
    %v6800 = vpack.c.b16 %v6560, %v6520
    %v6801 = vpack.c.b16 %v6561, %v6521
    %v6802 = vpack.c.b16 %v6562, %v6522
    %v6803 = vpack.c.b16 %v6563, %v6523
    %v6804 = vpack.c.b16 %v6564, %v6524
    %v6805 = vpack.c.b16 %v6565, %v6525
    %v6806 = vpack.c.b16 %v6566, %v6526
    %v6807 = vpack.c.b16 %v6567, %v6527
    %v6808 = vpack.c.b16 %v6568, %v6528
    %v6809 = vpack.c.b16 %v6569, %v6529
    %v7669 = vunpack.c.l.b16 %v5221
    %v7670 = vunpack.c.l.b16 %v5222
    %v7671 = vunpack.c.l.b16 %v5223
    %v7672 = vunpack.c.l.b16 %v5224
    %v7673 = vunpack.c.l.b16 %v5225
    %v7674 = vunpack.c.l.b16 %v5226
    %v7675 = vunpack.c.l.b16 %v5227
    %v7676 = vunpack.c.l.b16 %v5228
    %v7677 = vunpack.c.l.b16 %v5229
    %v7678 = vunpack.c.l.b16 %v5230
    %v7679 = vunpack.c.l.b16 %v5231
    %v7680 = vunpack.c.l.b16 %v5232
    %v7681 = vunpack.c.l.b16 %v5233
    %v7682 = vunpack.c.l.b16 %v5234
    %v7683 = vunpack.c.l.b16 %v5235
    %v7684 = vunpack.c.l.b16 %v5236
    %v7685 = vunpack.c.l.b16 %v5237
    %v7686 = vunpack.c.l.b16 %v5238
    %v7687 = vunpack.c.l.b16 %v5239
    %v7688 = vunpack.c.l.b16 %v5240
    %v7689 = vunpack.c.l.b16 %v5241
    %v7690 = vunpack.c.l.b16 %v5242
    %v7691 = vunpack.c.l.b16 %v5243
    %v7692 = vunpack.c.l.b16 %v5244
    %v7693 = vunpack.c.l.b16 %v5245
    %v7694 = vunpack.c.l.b16 %v5246
    %v7695 = vunpack.c.l.b16 %v5247
    %v7696 = vunpack.c.l.b16 %v5248
    %v7697 = vunpack.c.l.b16 %v5249
    %v7698 = vunpack.c.l.b16 %v5250
    %v7699 = vunpack.c.l.b16 %v5251
    %v7700 = vunpack.c.l.b16 %v5252
    %v7701 = vunpack.c.l.b16 %v5253
    %v7702 = vunpack.c.l.b16 %v5254
    %v7703 = vunpack.c.l.b16 %v5255
    %v7704 = vunpack.c.l.b16 %v5256
    %v7705 = vunpack.c.l.b16 %v5257
    %v7706 = vunpack.c.l.b16 %v5258
    %v7707 = vunpack.c.l.b16 %v5259
    %v7708 = vunpack.c.l.b16 %v5260
    %v7709 = vunpack.c.l.b16 %v5261
    %v7710 = vunpack.c.l.b16 %v5262
    %v7711 = vunpack.c.l.b16 %v5263
    %v7712 = vunpack.c.l.b16 %v5264
    %v7713 = vunpack.c.l.b16 %v5265
    %v7714 = vunpack.c.l.b16 %v5266
    %v7715 = vunpack.c.l.b16 %v5267
    %v7716 = vunpack.c.l.b16 %v5268
    %v7717 = vunpack.c.l.b16 %v5269
    %v7718 = vunpack.c.l.b16 %v5270
    %v7719 = vunpack.c.l.b16 %v5271
    %v7720 = vunpack.c.l.b16 %v5272
    %v7721 = vunpack.c.l.b16 %v5273
    %v7722 = vunpack.c.l.b16 %v5274
    %v7723 = vunpack.c.l.b16 %v5275
    %v7724 = vunpack.c.l.b16 %v5276
    %v7725 = vunpack.c.l.b16 %v5277
    %v7726 = vunpack.c.l.b16 %v5278
    %v7727 = vunpack.c.l.b16 %v5279
    %v7728 = vunpack.c.l.b16 %v5280
    %v7729 = vunpack.c.l.b16 %v5281
    %v7730 = vunpack.c.l.b16 %v5282
    %v7731 = vunpack.c.l.b16 %v5283
    %v7732 = vunpack.c.l.b16 %v5284
    %v7733 = vunpack.c.l.b16 %v5285
    %v7734 = vunpack.c.l.b16 %v5286
    %v7735 = vunpack.c.l.b16 %v5287
    %v7736 = vunpack.c.l.b16 %v5288
    %v7737 = vunpack.c.l.b16 %v5289
    %v7738 = vunpack.c.l.b16 %v5290
    %v7739 = vunpack.c.l.b16 %v5291
    %v7740 = vunpack.c.l.b16 %v5292
    %v7741 = vunpack.c.l.b16 %v5293
    %v7742 = vunpack.c.l.b16 %v5294
    %v7743 = vunpack.c.l.b16 %v5295
    %v7744 = vunpack.c.l.b16 %v5296
    %v7745 = vunpack.c.l.b16 %v5297
    %v7746 = vunpack.c.l.b16 %v5298
    %v7747 = vunpack.c.l.b16 %v5299
    %v7748 = vunpack.c.l.b16 %v5300
    %v7749 = vunpack.c.l.b16 %v5301
    %v7750 = vunpack.c.l.b16 %v5302
    %v7751 = vunpack.c.l.b16 %v5303
    %v7752 = vunpack.c.l.b16 %v5304
    %v7753 = vunpack.c.l.b16 %v5305
    %v7754 = vunpack.c.l.b16 %v5306
    %v7755 = vunpack.c.l.b16 %v5307
    %v7756 = vunpack.c.l.b16 %v5308
    %v7757 = vunpack.c.l.b16 %v5309
    %v7758 = vunpack.c.l.b16 %v5310
    %v7759 = vunpack.c.l.b16 %v5311
    %v7760 = vunpack.c.l.b16 %v5312
    %v7761 = vunpack.c.l.b16 %v5313
    %v7762 = vunpack.c.l.b16 %v5314
    %v7763 = vunpack.c.l.b16 %v5315
    %v7764 = vunpack.c.l.b16 %v5316
    %v7765 = vunpack.c.l.b16 %v5317
    %v7766 = vunpack.c.l.b16 %v5318
    %v7767 = vunpack.c.l.b16 %v5319
    %v7768 = vunpack.c.l.b16 %v5320
    %v7769 = vunpack.c.l.b16 %v5321
    %v7770 = vunpack.c.l.b16 %v5322
    %v7771 = vunpack.c.l.b16 %v5323
    %v7772 = vunpack.c.l.b16 %v5324
    %v7773 = vunpack.c.l.b16 %v5325
    %v7774 = vunpack.c.l.b16 %v5326
    %v7775 = vunpack.c.l.b16 %v5327
    %v7776 = vunpack.c.l.b16 %v5328
    %v7777 = vunpack.c.l.b16 %v5329
    %v7778 = vunpack.c.l.b16 %v5330
    %v7779 = vunpack.c.l.b16 %v5331
    %v7780 = vunpack.c.l.b16 %v5332
    %v7781 = vunpack.c.l.b16 %v5333
    %v7782 = vunpack.c.l.b16 %v5334
    %v7783 = vunpack.c.l.b16 %v5335
    %v7784 = vunpack.c.l.b16 %v5336
    %v7785 = vunpack.c.l.b16 %v5337
    %v7786 = vunpack.c.l.b16 %v5338
    %v7787 = vunpack.c.l.b16 %v5339
    %v7788 = vunpack.c.l.b16 %v5340
    %v7789 = vunpack.c.l.b16 %v5341
    %v7790 = vunpack.c.l.b16 %v5342
    %v7791 = vunpack.c.l.b16 %v5343
    %v7792 = vunpack.c.l.b16 %v5344
    %v7793 = vunpack.c.l.b16 %v5345
    %v7794 = vunpack.c.l.b16 %v5346
    %v7795 = vunpack.c.l.b16 %v5347
    %v7796 = vunpack.c.l.b16 %v5348
    %v7797 = vunpack.c.l.b16 %v5349
    %v7798 = vunpack.c.l.b16 %v5350
    %v7799 = vunpack.c.l.b16 %v5351
    %v7800 = vunpack.c.l.b16 %v5352
    %v7801 = vunpack.c.l.b16 %v5353
    %v7802 = vunpack.c.l.b16 %v5354
    %v7803 = vunpack.c.l.b16 %v5355
    %v7804 = vunpack.c.l.b16 %v5356
    %v7805 = vunpack.c.l.b16 %v5357
    %v7806 = vunpack.c.l.b16 %v5358
    %v7807 = vunpack.c.l.b16 %v5359
    %v7808 = vunpack.c.l.b16 %v5360
    %v7809 = vunpack.c.l.b16 %v5361
    %v7810 = vunpack.c.l.b16 %v5362
    %v7811 = vunpack.c.l.b16 %v5363
    %v7812 = vunpack.c.l.b16 %v5364
    %v7813 = vunpack.c.l.b16 %v5365
    %v7814 = vunpack.c.l.b16 %v5366
    %v7815 = vunpack.c.l.b16 %v5367
    %v7816 = vunpack.c.l.b16 %v5368
    %v7817 = vunpack.c.l.b16 %v5369
    %v7818 = vunpack.c.l.b16 %v5370
    %v7819 = vunpack.c.l.b16 %v5371
    %v7820 = vunpack.c.l.b16 %v5372
    %v7821 = vunpack.c.l.b16 %v5373
    %v7822 = vunpack.c.l.b16 %v5374
    %v7823 = vunpack.c.l.b16 %v5375
    %v7824 = vunpack.c.l.b16 %v5376
    %v7825 = vunpack.c.l.b16 %v5377
    %v7826 = vunpack.c.l.b16 %v5378
    %v7827 = vunpack.c.l.b16 %v5379
    %v7828 = vunpack.c.l.b16 %v5380
    %v7829 = vunpack.c.l.b16 %v5381
    %v7830 = vunpack.c.l.b16 %v5382
    %v7831 = vunpack.c.l.b16 %v5383
    %v7832 = vunpack.c.l.b16 %v5384
    %v7833 = vunpack.c.l.b16 %v5385
    %v7834 = vunpack.c.l.b16 %v5386
    %v7835 = vunpack.c.l.b16 %v5387
    %v7836 = vunpack.c.l.b16 %v5388
    %v7837 = vunpack.c.l.b16 %v5389
    %v7838 = vunpack.c.l.b16 %v5390
    %v7839 = vunpack.c.l.b16 %v5391
    %v7840 = vunpack.c.l.b16 %v5392
    %v7841 = vunpack.c.l.b16 %v5393
    %v7842 = vunpack.c.l.b16 %v5394
    %v7843 = vunpack.c.l.b16 %v5395
    %v7844 = vunpack.c.l.b16 %v5396
    %v7845 = vunpack.c.l.b16 %v5397
    %v7846 = vunpack.c.l.b16 %v5398
    %v7847 = vunpack.c.l.b16 %v5399
    %v7848 = vunpack.c.l.b16 %v5400
    %v7849 = vunpack.c.l.b16 %v5401
    %v7850 = vunpack.c.l.b16 %v5402
    %v7851 = vunpack.c.l.b16 %v5403
    %v7852 = vunpack.c.l.b16 %v5404
    %v7853 = vunpack.c.l.b16 %v5405
    %v7854 = vunpack.c.l.b16 %v5406
    %v7855 = vunpack.c.l.b16 %v5407
    %v7856 = vunpack.c.l.b16 %v5408
    %v7857 = vunpack.c.l.b16 %v5409
    %v7858 = vunpack.c.l.b16 %v5410
    %v7859 = vunpack.c.l.b16 %v5411
    %v7860 = vunpack.c.l.b16 %v5412
    %v7861 = vunpack.c.l.b16 %v5413
    %v7862 = vunpack.c.l.b16 %v5414
    %v7863 = vunpack.c.l.b16 %v5415
    %v7864 = vunpack.c.l.b16 %v5416
    %v7865 = vunpack.c.l.b16 %v5417
    %v7866 = vunpack.c.l.b16 %v5418
    %v7867 = vunpack.c.l.b16 %v5419
    %v7868 = vunpack.c.l.b16 %v5420
    %v7869 = vunpack.c.l.b16 %v5421
    %v7870 = vunpack.c.l.b16 %v5422
    %v7871 = vunpack.c.l.b16 %v5423
    %v7872 = vunpack.c.l.b16 %v5424
    %v7873 = vunpack.c.l.b16 %v5425
    %v7874 = vunpack.c.l.b16 %v5426
    %v7875 = vunpack.c.l.b16 %v5427
    %v7876 = vunpack.c.l.b16 %v5428
    %v7877 = vunpack.c.l.b16 %v5429
    %v7878 = vunpack.c.l.b16 %v5430
    %v7879 = vunpack.c.l.b16 %v5431
    %v7880 = vunpack.c.l.b16 %v5432
    %v7881 = vunpack.c.l.b16 %v5433
    %v7882 = vunpack.c.l.b16 %v5434
    %v7883 = vunpack.c.l.b16 %v5435
    %v7884 = vunpack.c.l.b16 %v5436
    %v7885 = vunpack.c.l.b16 %v5437
    %v7886 = vunpack.c.l.b16 %v5438
    %v7887 = vunpack.c.l.b16 %v5439
    %v7888 = vunpack.c.l.b16 %v5440
    %v7889 = vunpack.c.l.b16 %v5441
    %v7890 = vunpack.c.l.b16 %v5442
    %v7891 = vunpack.c.l.b16 %v5443
    %v7892 = vunpack.c.l.b16 %v5444
    %v7893 = vunpack.c.l.b16 %v5445
    %v7894 = vunpack.c.l.b16 %v5446
    %v7895 = vunpack.c.l.b16 %v5447
    %v7896 = vunpack.c.l.b16 %v5448
    %v7897 = vunpack.c.l.b16 %v5449
    %v7898 = vunpack.c.l.b16 %v5450
    %v7899 = vunpack.c.l.b16 %v5451
    %v7900 = vunpack.c.l.b16 %v5452
    %v7901 = vunpack.c.l.b16 %v5453
    %v7902 = vunpack.c.l.b16 %v5454
    %v7903 = vunpack.c.l.b16 %v5455
    %v7904 = vunpack.c.l.b16 %v5456
    %v7905 = vunpack.c.l.b16 %v5457
    %v7906 = vunpack.c.l.b16 %v5458
    %v7907 = vunpack.c.l.b16 %v5459
    %v7908 = vunpack.c.l.b16 %v5460
    %v7909 = vunpack.c.l.b16 %v5461
    %v7910 = vunpack.c.l.b16 %v5462
    %v7911 = vunpack.c.l.b16 %v5463
    %v7912 = vunpack.c.l.b16 %v5464
    %v7913 = vunpack.c.l.b16 %v5465
    %v7914 = vunpack.c.l.b16 %v5466
    %v7915 = vunpack.c.l.b16 %v5467
    %v7916 = vunpack.c.l.b16 %v5468
    %v7917 = vunpack.c.l.b16 %v5469
    %v7918 = vunpack.c.l.b16 %v5470
    %v7919 = vunpack.c.l.b16 %v5471
    %v7920 = vunpack.c.l.b16 %v5472
    %v7921 = vunpack.c.l.b16 %v5473
    %v7922 = vunpack.c.l.b16 %v5474
    %v7923 = vunpack.c.l.b16 %v5475
    %v7924 = vunpack.c.l.b16 %v5476
    %v7925 = vunpack.c.l.b16 %v5477
    %v7926 = vunpack.c.l.b16 %v5478
    %v7927 = vunpack.c.l.b16 %v5479
    %v7928 = vunpack.c.l.b16 %v5480
    %v7929 = vunpack.c.l.b16 %v5481
    %v7930 = vunpack.c.l.b16 %v5482
    %v7931 = vunpack.c.l.b16 %v5483
    %v7932 = vunpack.c.l.b16 %v5484
    %v7933 = vunpack.c.l.b16 %v5485
    %v7934 = vunpack.c.l.b16 %v5486
    %v7935 = vunpack.c.l.b16 %v5487
    %v7936 = vunpack.c.l.b16 %v5488
    %v7937 = vunpack.c.l.b16 %v5489
    %v7938 = vunpack.c.l.b16 %v5490
    %v7939 = vunpack.c.l.b16 %v5491
    %v7940 = vunpack.c.l.b16 %v5492
    %v7941 = vunpack.c.l.b16 %v5493
    %v7942 = vunpack.c.l.b16 %v5494
    %v7943 = vunpack.c.l.b16 %v5495
    %v7944 = vunpack.c.l.b16 %v5496
    %v7945 = vunpack.c.l.b16 %v5497
    %v7946 = vunpack.c.l.b16 %v5498
    %v7947 = vunpack.c.l.b16 %v5499
    %v7948 = vunpack.c.l.b16 %v5500
    %v7949 = vunpack.c.l.b16 %v5501
    %v7950 = vunpack.c.l.b16 %v5502
    %v7951 = vunpack.c.l.b16 %v5503
    %v7952 = vunpack.c.l.b16 %v5504
    %v7953 = vunpack.c.l.b16 %v5505
    %v7954 = vunpack.c.l.b16 %v5506
    %v7955 = vunpack.c.l.b16 %v5507
    %v7956 = vunpack.c.l.b16 %v5508
    %v7957 = vunpack.c.l.b16 %v5509
    %v7958 = vunpack.c.l.b16 %v5510
    %v7959 = vunpack.c.l.b16 %v5511
    %v7960 = vunpack.c.l.b16 %v5512
    %v7961 = vunpack.c.l.b16 %v5513
    %v7962 = vunpack.c.l.b16 %v5514
    %v7963 = vunpack.c.l.b16 %v5515
    %v7964 = vunpack.c.l.b16 %v5516
    %v7965 = vunpack.c.l.b16 %v5517
    %v7966 = vunpack.c.l.b16 %v5518
    %v7967 = vunpack.c.l.b16 %v5519
    %v7968 = vunpack.c.l.b16 %v5520
    %v7969 = vunpack.c.l.b16 %v5521
    %v7970 = vunpack.c.l.b16 %v5522
    %v7971 = vunpack.c.l.b16 %v5523
    %v7972 = vunpack.c.l.b16 %v5524
    %v7973 = vunpack.c.l.b16 %v5525
    %v7974 = vunpack.c.l.b16 %v5526
    %v7975 = vunpack.c.l.b16 %v5527
    %v7976 = vunpack.c.l.b16 %v5528
    %v7977 = vunpack.c.l.b16 %v5529
    %v7978 = vunpack.c.l.b16 %v5530
    %v7979 = vunpack.c.l.b16 %v5531
    %v7980 = vunpack.c.l.b16 %v5532
    %v7981 = vunpack.c.l.b16 %v5533
    %v7982 = vunpack.c.l.b16 %v5534
    %v7983 = vunpack.c.l.b16 %v5535
    %v7984 = vunpack.c.l.b16 %v5536
    %v7985 = vunpack.c.l.b16 %v5537
    %v7986 = vunpack.c.l.b16 %v5538
    %v7987 = vunpack.c.l.b16 %v5539
    %v7988 = vunpack.c.l.b16 %v5540
    %v7989 = vunpack.c.l.b16 %v5541
    %v7990 = vunpack.c.l.b16 %v5542
    %v7991 = vunpack.c.l.b16 %v5543
    %v7992 = vunpack.c.l.b16 %v5544
    %v7993 = vunpack.c.l.b16 %v5545
    %v7994 = vunpack.c.l.b16 %v5546
    %v7995 = vunpack.c.l.b16 %v5547
    %v7996 = vunpack.c.l.b16 %v5548
    %v7997 = vunpack.c.l.b16 %v5549
    %v7998 = vunpack.c.l.b16 %v5550
    %v7999 = vunpack.c.l.b16 %v5551
    %v8000 = vunpack.c.l.b16 %v5552
    %v8001 = vunpack.c.l.b16 %v5553
    %v8002 = vunpack.c.l.b16 %v5554
    %v8003 = vunpack.c.l.b16 %v5555
    %v8004 = vunpack.c.l.b16 %v5556
    %v8005 = vunpack.c.l.b16 %v5557
    %v8006 = vunpack.c.l.b16 %v5558
    %v8007 = vunpack.c.l.b16 %v5559
    %v8008 = vunpack.c.l.b16 %v5560
    %v8009 = vunpack.c.l.b16 %v5561
    %v8010 = vunpack.c.l.b16 %v5562
    %v8011 = vunpack.c.l.b16 %v5563
    %v8012 = vunpack.c.l.b16 %v5564
    %v8013 = vunpack.c.l.b16 %v5565
    %v8014 = vunpack.c.l.b16 %v5566
    %v8015 = vunpack.c.l.b16 %v5567
    %v8016 = vunpack.c.l.b16 %v5568
    %v8017 = vunpack.c.l.b16 %v5569
    %v8018 = vunpack.c.l.b16 %v5570
    %v8019 = vunpack.c.l.b16 %v5571
    %v8020 = vunpack.c.l.b16 %v5572
    %v8021 = vunpack.c.l.b16 %v5573
    %v8022 = vunpack.c.l.b16 %v5574
    %v8023 = vunpack.c.l.b16 %v5575
    %v8024 = vunpack.c.l.b16 %v5576
    %v8025 = vunpack.c.l.b16 %v5577
    %v8026 = vunpack.c.l.b16 %v5578
    %v8027 = vunpack.c.l.b16 %v5579
    %v8028 = vunpack.c.l.b16 %v5580
    %v8029 = vunpack.c.l.b16 %v5581
    %v8030 = vunpack.c.l.b16 %v5582
    %v8031 = vunpack.c.l.b16 %v5583
    %v8032 = vunpack.c.l.b16 %v5584
    %v8033 = vunpack.c.l.b16 %v5585
    %v8034 = vunpack.c.l.b16 %v5586
    %v8035 = vunpack.c.l.b16 %v5587
    %v8036 = vunpack.c.l.b16 %v5588
    %v8037 = vunpack.c.l.b16 %v5589
    %v8038 = vunpack.c.l.b16 %v5590
    %v8039 = vunpack.c.l.b16 %v5591
    %v8040 = vunpack.c.l.b16 %v5592
    %v8041 = vunpack.c.l.b16 %v5593
    %v8042 = vunpack.c.l.b16 %v5594
    %v8043 = vunpack.c.l.b16 %v5595
    %v8044 = vunpack.c.l.b16 %v5596
    %v8045 = vunpack.c.l.b16 %v5597
    %v8046 = vunpack.c.l.b16 %v5598
    %v8047 = vunpack.c.l.b16 %v5599
    %v8048 = vunpack.c.l.b16 %v5600
    %v8049 = vunpack.c.l.b16 %v5601
    %v8050 = vunpack.c.l.b16 %v5602
    %v8051 = vunpack.c.l.b16 %v5603
    %v8052 = vunpack.c.l.b16 %v5604
    %v8053 = vunpack.c.l.b16 %v5605
    %v8054 = vunpack.c.l.b16 %v5606
    %v8055 = vunpack.c.l.b16 %v5607
    %v8056 = vunpack.c.l.b16 %v5608
    %v8057 = vunpack.c.l.b16 %v5609
    %v8058 = vunpack.c.l.b16 %v5610
    %v8059 = vunpack.c.l.b16 %v5611
    %v8060 = vunpack.c.l.b16 %v5612
    %v8061 = vunpack.c.l.b16 %v5613
    %v8062 = vunpack.c.l.b16 %v5614
    %v8063 = vunpack.c.l.b16 %v5615
    %v8064 = vunpack.c.l.b16 %v5616
    %v8065 = vunpack.c.l.b16 %v5617
    %v8066 = vunpack.c.l.b16 %v5618
    %v8067 = vunpack.c.l.b16 %v5619
    %v8068 = vunpack.c.l.b16 %v5620
    %v8069 = vunpack.c.l.b16 %v5621
    %v8070 = vunpack.c.l.b16 %v5622
    %v8071 = vunpack.c.l.b16 %v5623
    %v8072 = vunpack.c.l.b16 %v5624
    %v8073 = vunpack.c.l.b16 %v5625
    %v8074 = vunpack.c.l.b16 %v5626
    %v8075 = vunpack.c.l.b16 %v5627
    %v8076 = vunpack.c.l.b16 %v5628
    %v8077 = vunpack.c.l.b16 %v5629
    %v8078 = vunpack.c.l.b16 %v5630
    %v8079 = vunpack.c.l.b16 %v5631
    %v8080 = vunpack.c.l.b16 %v5632
    %v8081 = vunpack.c.l.b16 %v5633
    %v8082 = vunpack.c.l.b16 %v5634
    %v8083 = vunpack.c.l.b16 %v5635
    %v8084 = vunpack.c.l.b16 %v5636
    %v8085 = vunpack.c.l.b16 %v5637
    %v8086 = vunpack.c.l.b16 %v5638
    %v8087 = vunpack.c.l.b16 %v5639
    %v8088 = vunpack.c.l.b16 %v5640
    %v8089 = vunpack.c.l.b16 %v5641
    %v8090 = vunpack.c.l.b16 %v5642
    %v8091 = vunpack.c.l.b16 %v5643
    %v8092 = vunpack.c.l.b16 %v5644
    %v8093 = vunpack.c.l.b16 %v5645
    %v8094 = vunpack.c.l.b16 %v5646
    %v8095 = vunpack.c.l.b16 %v5647
    %v8096 = vunpack.c.l.b16 %v5648
    %v8097 = vunpack.c.l.b16 %v5649
    %v8098 = vunpack.c.l.b16 %v5650
    %v8099 = vunpack.c.l.b16 %v5651
    %v8100 = vunpack.c.l.b16 %v5652
    %v8101 = vunpack.c.l.b16 %v5653
    %v8102 = vunpack.c.l.b16 %v5654
    %v8103 = vunpack.c.l.b16 %v5655
    %v8104 = vunpack.c.l.b16 %v5656
    %v8105 = vunpack.c.l.b16 %v5657
    %v8106 = vunpack.c.l.b16 %v5658
    %v8107 = vunpack.c.l.b16 %v5659
    %v8108 = vunpack.c.l.b16 %v5660
    %v8109 = vunpack.c.l.b16 %v5661
    %v8110 = vunpack.c.l.b16 %v5662
    %v8111 = vunpack.c.l.b16 %v5663
    %v8112 = vunpack.c.l.b16 %v5664
    %v8113 = vunpack.c.l.b16 %v5665
    %v8114 = vunpack.c.l.b16 %v5666
    %v8115 = vunpack.c.l.b16 %v5667
    %v8116 = vunpack.c.l.b16 %v5668
    %v8117 = vunpack.c.l.b16 %v5669
    %v8118 = vunpack.c.l.b16 %v5670
    %v8119 = vunpack.c.l.b16 %v5671
    %v8120 = vunpack.c.l.b16 %v5672
    %v8121 = vunpack.c.l.b16 %v5673
    %v8122 = vunpack.c.l.b16 %v5674
    %v8123 = vunpack.c.l.b16 %v5675
    %v8124 = vunpack.c.l.b16 %v5676
    %v8125 = vunpack.c.l.b16 %v5677
    %v8126 = vunpack.c.l.b16 %v5678
    %v8127 = vunpack.c.l.b16 %v5679
    %v8128 = vunpack.c.l.b16 %v5680
    %v8129 = vunpack.c.l.b16 %v5681
    %v8130 = vunpack.c.l.b16 %v5682
    %v8131 = vunpack.c.l.b16 %v5683
    %v8132 = vunpack.c.l.b16 %v5684
    %v8133 = vunpack.c.l.b16 %v5685
    %v8134 = vunpack.c.l.b16 %v5686
    %v8135 = vunpack.c.l.b16 %v5687
    %v8136 = vunpack.c.l.b16 %v5688
    %v8137 = vunpack.c.l.b16 %v5689
    %v8138 = vunpack.c.l.b16 %v5690
    %v8139 = vunpack.c.l.b16 %v5691
    %v8140 = vunpack.c.l.b16 %v5692
    %v8141 = vunpack.c.l.b16 %v5693
    %v8142 = vunpack.c.l.b16 %v5694
    %v8143 = vunpack.c.l.b16 %v5695
    %v8144 = vunpack.c.l.b16 %v5696
    %v8145 = vunpack.c.l.b16 %v5697
    %v8146 = vunpack.c.l.b16 %v5698
    %v8147 = vunpack.c.l.b16 %v5699
    %v8148 = vunpack.c.l.b16 %v5700
    %v8149 = vunpack.c.l.b16 %v5701
    %v8150 = vunpack.c.l.b16 %v5702
    %v8151 = vunpack.c.l.b16 %v5703
    %v8152 = vunpack.c.l.b16 %v5704
    %v8153 = vunpack.c.l.b16 %v5705
    %v8154 = vunpack.c.l.b16 %v5706
    %v8155 = vunpack.c.l.b16 %v5707
    %v8156 = vunpack.c.l.b16 %v5708
    %v8157 = vunpack.c.l.b16 %v5709
    %v8158 = vunpack.c.l.b16 %v5710
    %v8159 = vunpack.c.l.b16 %v5711
    %v8160 = vunpack.c.l.b16 %v5712
    %v8161 = vunpack.c.l.b16 %v5713
    %v8162 = vunpack.c.l.b16 %v5714
    %v8163 = vunpack.c.l.b16 %v5715
    %v8164 = vunpack.c.l.b16 %v5716
    %v8165 = vunpack.c.l.b16 %v5717
    %v8166 = vunpack.c.l.b16 %v5718
    %v8167 = vunpack.c.l.b16 %v5719
    %v8168 = vunpack.c.l.b16 %v5720
    %v8169 = vunpack.c.l.b16 %v5721
    %v8170 = vunpack.c.l.b16 %v5722
    %v8171 = vunpack.c.l.b16 %v5723
    %v8172 = vunpack.c.l.b16 %v5724
    %v8173 = vunpack.c.l.b16 %v5725
    %v8174 = vunpack.c.l.b16 %v5726
    %v8175 = vunpack.c.l.b16 %v5727
    %v8176 = vunpack.c.l.b16 %v5728
    %v8177 = vunpack.c.l.b16 %v5729
    %v8178 = vunpack.c.l.b16 %v5730
    %v8179 = vunpack.c.l.b16 %v5731
    %v8180 = vunpack.c.l.b16 %v5732
    %v8181 = vunpack.c.l.b16 %v5733
    %v8182 = vunpack.c.l.b16 %v5734
    %v8183 = vunpack.c.l.b16 %v5735
    %v8184 = vunpack.c.l.b16 %v5736
    %v8185 = vunpack.c.l.b16 %v5737
    %v8186 = vunpack.c.l.b16 %v5738
    %v8187 = vunpack.c.l.b16 %v5739
    %v8188 = vunpack.c.l.b16 %v5740
    %v8189 = vunpack.c.l.b16 %v5741
    %v8190 = vunpack.c.l.b16 %v5742
    %v8191 = vunpack.c.l.b16 %v5743
    %v8192 = vunpack.c.l.b16 %v5744
    %v8193 = vunpack.c.l.b16 %v5745
    %v8194 = vunpack.c.l.b16 %v5746
    %v8195 = vunpack.c.l.b16 %v5747
    %v8196 = vunpack.c.l.b16 %v5748
    %v8197 = vunpack.c.l.b16 %v5749
    %v8198 = vunpack.c.l.b16 %v5750
    %v8199 = vunpack.c.l.b16 %v5751
    %v8200 = vunpack.c.l.b16 %v5752
    %v8201 = vunpack.c.l.b16 %v5753
    %v8202 = vunpack.c.l.b16 %v5754
    %v8203 = vunpack.c.l.b16 %v5755
    %v8204 = vunpack.c.l.b16 %v5756
    %v8205 = vunpack.c.l.b16 %v5757
    %v8206 = vunpack.c.l.b16 %v5758
    %v8207 = vunpack.c.l.b16 %v5759
    %v8208 = vunpack.c.l.b16 %v5760
    %v8209 = vunpack.c.l.b16 %v5761
    %v8210 = vunpack.c.l.b16 %v5762
    %v8211 = vunpack.c.l.b16 %v5763
    %v8212 = vunpack.c.l.b16 %v5764
    %v8213 = vunpack.c.l.b16 %v5765
    %v8214 = vunpack.c.l.b16 %v5766
    %v8215 = vunpack.c.l.b16 %v5767
    %v8216 = vunpack.c.l.b16 %v5768
    %v8217 = vunpack.c.l.b16 %v5769
    %v8218 = vunpack.c.l.b16 %v5770
    %v8219 = vunpack.c.l.b16 %v5771
    %v8220 = vunpack.c.l.b16 %v5772
    %v8221 = vunpack.c.l.b16 %v5773
    %v8222 = vunpack.c.l.b16 %v5774
    %v8223 = vunpack.c.l.b16 %v5775
    %v8224 = vunpack.c.l.b16 %v5776
    %v8225 = vunpack.c.l.b16 %v5777
    %v8226 = vunpack.c.l.b16 %v5778
    %v8227 = vunpack.c.l.b16 %v5779
    %v8228 = vunpack.c.l.b16 %v5780
    %v8229 = vunpack.c.l.b16 %v5781
    %v8230 = vunpack.c.l.b16 %v5782
    %v8231 = vunpack.c.l.b16 %v5783
    %v8232 = vunpack.c.l.b16 %v5784
    %v8233 = vunpack.c.l.b16 %v5785
    %v8234 = vunpack.c.l.b16 %v5786
    %v8235 = vunpack.c.l.b16 %v5787
    %v8236 = vunpack.c.l.b16 %v5788
    %v8237 = vunpack.c.l.b16 %v5789
    %v8238 = vunpack.c.l.b16 %v5790
    %v8239 = vunpack.c.l.b16 %v5791
    %v8240 = vunpack.c.l.b16 %v5792
    %v8241 = vunpack.c.l.b16 %v5793
    %v8242 = vunpack.c.l.b16 %v5794
    %v8243 = vunpack.c.l.b16 %v5795
    %v8244 = vunpack.c.l.b16 %v5796
    %v8245 = vunpack.c.l.b16 %v5797
    %v8246 = vunpack.c.l.b16 %v5798
    %v8247 = vunpack.c.l.b16 %v5799
    %v8248 = vunpack.c.l.b16 %v5800
    %v8249 = vunpack.c.l.b16 %v5801
    %v8250 = vunpack.c.l.b16 %v5802
    %v8251 = vunpack.c.l.b16 %v5803
    %v8252 = vunpack.c.l.b16 %v5804
    %v8253 = vunpack.c.l.b16 %v5805
    %v8254 = vunpack.c.l.b16 %v5806
    %v8255 = vunpack.c.l.b16 %v5807
    %v8256 = vunpack.c.l.b16 %v5808
    %v8257 = vunpack.c.l.b16 %v5809
    %v8258 = vunpack.c.l.b16 %v5810
    %v8259 = vunpack.c.l.b16 %v5811
    %v8260 = vunpack.c.l.b16 %v5812
    %v8261 = vunpack.c.l.b16 %v5813
    %v8262 = vunpack.c.l.b16 %v5814
    %v8263 = vunpack.c.l.b16 %v5815
    %v8264 = vunpack.c.l.b16 %v5816
    %v8265 = vunpack.c.l.b16 %v5817
    %v8266 = vunpack.c.l.b16 %v5818
    %v8267 = vunpack.c.l.b16 %v5819
    %v8268 = vunpack.c.l.b16 %v5820
    %v8269 = vunpack.c.l.b16 %v5821
    %v8270 = vunpack.c.l.b16 %v5822
    %v8271 = vunpack.c.l.b16 %v5823
    %v8272 = vunpack.c.l.b16 %v5824
    %v8273 = vunpack.c.l.b16 %v5825
    %v8274 = vunpack.c.l.b16 %v5826
    %v8275 = vunpack.c.l.b16 %v5827
    %v8276 = vunpack.c.l.b16 %v5828
    %v8277 = vunpack.c.l.b16 %v5829
    %v8278 = vunpack.c.l.b16 %v5830
    %v8279 = vunpack.c.l.b16 %v5831
    %v8280 = vunpack.c.l.b16 %v5832
    %v8281 = vunpack.c.l.b16 %v5833
    %v8282 = vunpack.c.l.b16 %v5834
    %v8283 = vunpack.c.l.b16 %v5835
    %v8284 = vunpack.c.l.b16 %v5836
    %v8285 = vunpack.c.l.b16 %v5837
    %v8286 = vunpack.c.l.b16 %v5838
    %v8287 = vunpack.c.l.b16 %v5839
    %v8288 = vunpack.c.l.b16 %v5840
    %v8289 = vunpack.c.l.b16 %v5841
    %v8290 = vunpack.c.l.b16 %v5842
    %v8291 = vunpack.c.l.b16 %v5843
    %v8292 = vunpack.c.l.b16 %v5844
    %v8293 = vunpack.c.l.b16 %v5845
    %v8294 = vpack.c.b16 %v7670, %v7669
    %v8295 = vpack.c.b16 %v7672, %v7671
    %v8296 = vpack.c.b16 %v7674, %v7673
    %v8297 = vpack.c.b16 %v7676, %v7675
    %v8298 = vpack.c.b16 %v7678, %v7677
    %v8299 = vpack.c.b16 %v7680, %v7679
    %v8300 = vpack.c.b16 %v7682, %v7681
    %v8301 = vpack.c.b16 %v7684, %v7683
    %v8302 = vpack.c.b16 %v7686, %v7685
    %v8303 = vpack.c.b16 %v7688, %v7687
    %v8304 = vpack.c.b16 %v7690, %v7689
    %v8305 = vpack.c.b16 %v7692, %v7691
    %v8306 = vpack.c.b16 %v7694, %v7693
    %v8307 = vpack.c.b16 %v7696, %v7695
    %v8308 = vpack.c.b16 %v7698, %v7697
    %v8309 = vpack.c.b16 %v7700, %v7699
    %v8310 = vpack.c.b16 %v7702, %v7701
    %v8311 = vpack.c.b16 %v7704, %v7703
    %v8312 = vpack.c.b16 %v7706, %v7705
    %v8313 = vpack.c.b16 %v7708, %v7707
    %v8314 = vpack.c.b16 %v7710, %v7709
    %v8315 = vpack.c.b16 %v7712, %v7711
    %v8316 = vpack.c.b16 %v7714, %v7713
    %v8317 = vpack.c.b16 %v7716, %v7715
    %v8318 = vpack.c.b16 %v7718, %v7717
    %v8319 = vpack.c.b16 %v7720, %v7719
    %v8320 = vpack.c.b16 %v7722, %v7721
    %v8321 = vpack.c.b16 %v7724, %v7723
    %v8322 = vpack.c.b16 %v7726, %v7725
    %v8323 = vpack.c.b16 %v7728, %v7727
    %v8324 = vpack.c.b16 %v7730, %v7729
    %v8325 = vpack.c.b16 %v7732, %v7731
    %v8326 = vpack.c.b16 %v7734, %v7733
    %v8327 = vpack.c.b16 %v7736, %v7735
    %v8328 = vpack.c.b16 %v7738, %v7737
    %v8329 = vpack.c.b16 %v7740, %v7739
    %v8330 = vpack.c.b16 %v7742, %v7741
    %v8331 = vpack.c.b16 %v7744, %v7743
    %v8332 = vpack.c.b16 %v7746, %v7745
    %v8333 = vpack.c.b16 %v7748, %v7747
    %v8334 = vpack.c.b16 %v7750, %v7749
    %v8335 = vpack.c.b16 %v7752, %v7751
    %v8336 = vpack.c.b16 %v7754, %v7753
    %v8337 = vpack.c.b16 %v7756, %v7755
    %v8338 = vpack.c.b16 %v7758, %v7757
    %v8339 = vpack.c.b16 %v7760, %v7759
    %v8340 = vpack.c.b16 %v7762, %v7761
    %v8341 = vpack.c.b16 %v7764, %v7763
    %v8342 = vpack.c.b16 %v7766, %v7765
    %v8343 = vpack.c.b16 %v7768, %v7767
    %v8344 = vpack.c.b16 %v7770, %v7769
    %v8345 = vpack.c.b16 %v7772, %v7771
    %v8346 = vpack.c.b16 %v7774, %v7773
    %v8347 = vpack.c.b16 %v7776, %v7775
    %v8348 = vpack.c.b16 %v7778, %v7777
    %v8349 = vpack.c.b16 %v7780, %v7779
    %v8350 = vpack.c.b16 %v7782, %v7781
    %v8351 = vpack.c.b16 %v7784, %v7783
    %v8352 = vpack.c.b16 %v7786, %v7785
    %v8353 = vpack.c.b16 %v7788, %v7787
    %v8354 = vpack.c.b16 %v7790, %v7789
    %v8355 = vpack.c.b16 %v7792, %v7791
    %v8356 = vpack.c.b16 %v7794, %v7793
    %v8357 = vpack.c.b16 %v7796, %v7795
    %v8358 = vpack.c.b16 %v7798, %v7797
    %v8359 = vpack.c.b16 %v7800, %v7799
    %v8360 = vpack.c.b16 %v7802, %v7801
    %v8361 = vpack.c.b16 %v7804, %v7803
    %v8362 = vpack.c.b16 %v7806, %v7805
    %v8363 = vpack.c.b16 %v7808, %v7807
    %v8364 = vpack.c.b16 %v7810, %v7809
    %v8365 = vpack.c.b16 %v7812, %v7811
    %v8366 = vpack.c.b16 %v7814, %v7813
    %v8367 = vpack.c.b16 %v7816, %v7815
    %v8368 = vpack.c.b16 %v7818, %v7817
    %v8369 = vpack.c.b16 %v7820, %v7819
    %v8370 = vpack.c.b16 %v7822, %v7821
    %v8371 = vpack.c.b16 %v7824, %v7823
    %v8372 = vpack.c.b16 %v7826, %v7825
    %v8373 = vpack.c.b16 %v7828, %v7827
    %v8374 = vpack.c.b16 %v7830, %v7829
    %v8375 = vpack.c.b16 %v7832, %v7831
    %v8376 = vpack.c.b16 %v7834, %v7833
    %v8377 = vpack.c.b16 %v7836, %v7835
    %v8378 = vpack.c.b16 %v7838, %v7837
    %v8379 = vpack.c.b16 %v7840, %v7839
    %v8380 = vpack.c.b16 %v7842, %v7841
    %v8381 = vpack.c.b16 %v7844, %v7843
    %v8382 = vpack.c.b16 %v7846, %v7845
    %v8383 = vpack.c.b16 %v7848, %v7847
    %v8384 = vpack.c.b16 %v7850, %v7849
    %v8385 = vpack.c.b16 %v7852, %v7851
    %v8386 = vpack.c.b16 %v7854, %v7853
    %v8387 = vpack.c.b16 %v7856, %v7855
    %v8388 = vpack.c.b16 %v7858, %v7857
    %v8389 = vpack.c.b16 %v7860, %v7859
    %v8390 = vpack.c.b16 %v7862, %v7861
    %v8391 = vpack.c.b16 %v7864, %v7863
    %v8392 = vpack.c.b16 %v7866, %v7865
    %v8393 = vpack.c.b16 %v7868, %v7867
    %v8394 = vpack.c.b16 %v7870, %v7869
    %v8395 = vpack.c.b16 %v7872, %v7871
    %v8396 = vpack.c.b16 %v7874, %v7873
    %v8397 = vpack.c.b16 %v7876, %v7875
    %v8398 = vpack.c.b16 %v7878, %v7877
    %v8399 = vpack.c.b16 %v7880, %v7879
    %v8400 = vpack.c.b16 %v7882, %v7881
    %v8401 = vpack.c.b16 %v7884, %v7883
    %v8402 = vpack.c.b16 %v7886, %v7885
    %v8403 = vpack.c.b16 %v7888, %v7887
    %v8404 = vpack.c.b16 %v7890, %v7889
    %v8405 = vpack.c.b16 %v7892, %v7891
    %v8406 = vpack.c.b16 %v7894, %v7893
    %v8407 = vpack.c.b16 %v7896, %v7895
    %v8408 = vpack.c.b16 %v7898, %v7897
    %v8409 = vpack.c.b16 %v7900, %v7899
    %v8410 = vpack.c.b16 %v7902, %v7901
    %v8411 = vpack.c.b16 %v7904, %v7903
    %v8412 = vpack.c.b16 %v7906, %v7905
    %v8413 = vpack.c.b16 %v7908, %v7907
    %v8414 = vpack.c.b16 %v7910, %v7909
    %v8415 = vpack.c.b16 %v7912, %v7911
    %v8416 = vpack.c.b16 %v7914, %v7913
    %v8417 = vpack.c.b16 %v7916, %v7915
    %v8418 = vpack.c.b16 %v7918, %v7917
    %v8419 = vpack.c.b16 %v7920, %v7919
    %v8420 = vpack.c.b16 %v7922, %v7921
    %v8421 = vpack.c.b16 %v7924, %v7923
    %v8422 = vpack.c.b16 %v7926, %v7925
    %v8423 = vpack.c.b16 %v7928, %v7927
    %v8424 = vpack.c.b16 %v7930, %v7929
    %v8425 = vpack.c.b16 %v7932, %v7931
    %v8426 = vpack.c.b16 %v7934, %v7933
    %v8427 = vpack.c.b16 %v7936, %v7935
    %v8428 = vpack.c.b16 %v7938, %v7937
    %v8429 = vpack.c.b16 %v7940, %v7939
    %v8430 = vpack.c.b16 %v7942, %v7941
    %v8431 = vpack.c.b16 %v7944, %v7943
    %v8432 = vpack.c.b16 %v7946, %v7945
    %v8433 = vpack.c.b16 %v7948, %v7947
    %v8434 = vpack.c.b16 %v7950, %v7949
    %v8435 = vpack.c.b16 %v7952, %v7951
    %v8436 = vpack.c.b16 %v7954, %v7953
    %v8437 = vpack.c.b16 %v7956, %v7955
    %v8438 = vpack.c.b16 %v7958, %v7957
    %v8439 = vpack.c.b16 %v7960, %v7959
    %v8440 = vpack.c.b16 %v7962, %v7961
    %v8441 = vpack.c.b16 %v7964, %v7963
    %v8442 = vpack.c.b16 %v7966, %v7965
    %v8443 = vpack.c.b16 %v7968, %v7967
    %v8444 = vpack.c.b16 %v7970, %v7969
    %v8445 = vpack.c.b16 %v7972, %v7971
    %v8446 = vpack.c.b16 %v7974, %v7973
    %v8447 = vpack.c.b16 %v7976, %v7975
    %v8448 = vpack.c.b16 %v7978, %v7977
    %v8449 = vpack.c.b16 %v7980, %v7979
    %v8450 = vpack.c.b16 %v7982, %v7981
    %v8451 = vpack.c.b16 %v7984, %v7983
    %v8452 = vpack.c.b16 %v7986, %v7985
    %v8453 = vpack.c.b16 %v7988, %v7987
    %v8454 = vpack.c.b16 %v7990, %v7989
    %v8455 = vpack.c.b16 %v7992, %v7991
    %v8456 = vpack.c.b16 %v7994, %v7993
    %v8457 = vpack.c.b16 %v7996, %v7995
    %v8458 = vpack.c.b16 %v7998, %v7997
    %v8459 = vpack.c.b16 %v8000, %v7999
    %v8460 = vpack.c.b16 %v8002, %v8001
    %v8461 = vpack.c.b16 %v8004, %v8003
    %v8462 = vpack.c.b16 %v8006, %v8005
    %v8463 = vpack.c.b16 %v8008, %v8007
    %v8464 = vpack.c.b16 %v8010, %v8009
    %v8465 = vpack.c.b16 %v8012, %v8011
    %v8466 = vpack.c.b16 %v8014, %v8013
    %v8467 = vpack.c.b16 %v8016, %v8015
    %v8468 = vpack.c.b16 %v8018, %v8017
    %v8469 = vpack.c.b16 %v8020, %v8019
    %v8470 = vpack.c.b16 %v8022, %v8021
    %v8471 = vpack.c.b16 %v8024, %v8023
    %v8472 = vpack.c.b16 %v8026, %v8025
    %v8473 = vpack.c.b16 %v8028, %v8027
    %v8474 = vpack.c.b16 %v8030, %v8029
    %v8475 = vpack.c.b16 %v8032, %v8031
    %v8476 = vpack.c.b16 %v8034, %v8033
    %v8477 = vpack.c.b16 %v8036, %v8035
    %v8478 = vpack.c.b16 %v8038, %v8037
    %v8479 = vpack.c.b16 %v8040, %v8039
    %v8480 = vpack.c.b16 %v8042, %v8041
    %v8481 = vpack.c.b16 %v8044, %v8043
    %v8482 = vpack.c.b16 %v8046, %v8045
    %v8483 = vpack.c.b16 %v8048, %v8047
    %v8484 = vpack.c.b16 %v8050, %v8049
    %v8485 = vpack.c.b16 %v8052, %v8051
    %v8486 = vpack.c.b16 %v8054, %v8053
    %v8487 = vpack.c.b16 %v8056, %v8055
    %v8488 = vpack.c.b16 %v8058, %v8057
    %v8489 = vpack.c.b16 %v8060, %v8059
    %v8490 = vpack.c.b16 %v8062, %v8061
    %v8491 = vpack.c.b16 %v8064, %v8063
    %v8492 = vpack.c.b16 %v8066, %v8065
    %v8493 = vpack.c.b16 %v8068, %v8067
    %v8494 = vpack.c.b16 %v8070, %v8069
    %v8495 = vpack.c.b16 %v8072, %v8071
    %v8496 = vpack.c.b16 %v8074, %v8073
    %v8497 = vpack.c.b16 %v8076, %v8075
    %v8498 = vpack.c.b16 %v8078, %v8077
    %v8499 = vpack.c.b16 %v8080, %v8079
    %v8500 = vpack.c.b16 %v8082, %v8081
    %v8501 = vpack.c.b16 %v8084, %v8083
    %v8502 = vpack.c.b16 %v8086, %v8085
    %v8503 = vpack.c.b16 %v8088, %v8087
    %v8504 = vpack.c.b16 %v8090, %v8089
    %v8505 = vpack.c.b16 %v8092, %v8091
    %v8506 = vpack.c.b16 %v8094, %v8093
    %v8507 = vpack.c.b16 %v8096, %v8095
    %v8508 = vpack.c.b16 %v8098, %v8097
    %v8509 = vpack.c.b16 %v8100, %v8099
    %v8510 = vpack.c.b16 %v8102, %v8101
    %v8511 = vpack.c.b16 %v8104, %v8103
    %v8512 = vpack.c.b16 %v8106, %v8105
    %v8513 = vpack.c.b16 %v8108, %v8107
    %v8514 = vpack.c.b16 %v8110, %v8109
    %v8515 = vpack.c.b16 %v8112, %v8111
    %v8516 = vpack.c.b16 %v8114, %v8113
    %v8517 = vpack.c.b16 %v8116, %v8115
    %v8518 = vpack.c.b16 %v8118, %v8117
    %v8519 = vpack.c.b16 %v8120, %v8119
    %v8520 = vpack.c.b16 %v8122, %v8121
    %v8521 = vpack.c.b16 %v8124, %v8123
    %v8522 = vpack.c.b16 %v8126, %v8125
    %v8523 = vpack.c.b16 %v8128, %v8127
    %v8524 = vpack.c.b16 %v8130, %v8129
    %v8525 = vpack.c.b16 %v8132, %v8131
    %v8526 = vpack.c.b16 %v8134, %v8133
    %v8527 = vpack.c.b16 %v8136, %v8135
    %v8528 = vpack.c.b16 %v8138, %v8137
    %v8529 = vpack.c.b16 %v8140, %v8139
    %v8530 = vpack.c.b16 %v8142, %v8141
    %v8531 = vpack.c.b16 %v8144, %v8143
    %v8532 = vpack.c.b16 %v8146, %v8145
    %v8533 = vpack.c.b16 %v8148, %v8147
    %v8534 = vpack.c.b16 %v8150, %v8149
    %v8535 = vpack.c.b16 %v8152, %v8151
    %v8536 = vpack.c.b16 %v8154, %v8153
    %v8537 = vpack.c.b16 %v8156, %v8155
    %v8538 = vpack.c.b16 %v8158, %v8157
    %v8539 = vpack.c.b16 %v8160, %v8159
    %v8540 = vpack.c.b16 %v8162, %v8161
    %v8541 = vpack.c.b16 %v8164, %v8163
    %v8542 = vpack.c.b16 %v8166, %v8165
    %v8543 = vpack.c.b16 %v8168, %v8167
    %v8544 = vpack.c.b16 %v8170, %v8169
    %v8545 = vpack.c.b16 %v8172, %v8171
    %v8546 = vpack.c.b16 %v8174, %v8173
    %v8547 = vpack.c.b16 %v8176, %v8175
    %v8548 = vpack.c.b16 %v8178, %v8177
    %v8549 = vpack.c.b16 %v8180, %v8179
    %v8550 = vpack.c.b16 %v8182, %v8181
    %v8551 = vpack.c.b16 %v8184, %v8183
    %v8552 = vpack.c.b16 %v8186, %v8185
    %v8553 = vpack.c.b16 %v8188, %v8187
    %v8554 = vpack.c.b16 %v8190, %v8189
    %v8555 = vpack.c.b16 %v8192, %v8191
    %v8556 = vpack.c.b16 %v8194, %v8193
    %v8557 = vpack.c.b16 %v8196, %v8195
    %v8558 = vpack.c.b16 %v8198, %v8197
    %v8559 = vpack.c.b16 %v8200, %v8199
    %v8560 = vpack.c.b16 %v8202, %v8201
    %v8561 = vpack.c.b16 %v8204, %v8203
    %v8562 = vpack.c.b16 %v8206, %v8205
    %v8563 = vpack.c.b16 %v8208, %v8207
    %v8564 = vpack.c.b16 %v8210, %v8209
    %v8565 = vpack.c.b16 %v8212, %v8211
    %v8566 = vpack.c.b16 %v8214, %v8213
    %v8567 = vpack.c.b16 %v8216, %v8215
    %v8568 = vpack.c.b16 %v8218, %v8217
    %v8569 = vpack.c.b16 %v8220, %v8219
    %v8570 = vpack.c.b16 %v8222, %v8221
    %v8571 = vpack.c.b16 %v8224, %v8223
    %v8572 = vpack.c.b16 %v8226, %v8225
    %v8573 = vpack.c.b16 %v8228, %v8227
    %v8574 = vpack.c.b16 %v8230, %v8229
    %v8575 = vpack.c.b16 %v8232, %v8231
    %v8576 = vpack.c.b16 %v8234, %v8233
    %v8577 = vpack.c.b16 %v8236, %v8235
    %v8578 = vpack.c.b16 %v8238, %v8237
    %v8579 = vpack.c.b16 %v8240, %v8239
    %v8580 = vpack.c.b16 %v8242, %v8241
    %v8581 = vpack.c.b16 %v8244, %v8243
    %v8582 = vpack.c.b16 %v8246, %v8245
    %v8583 = vpack.c.b16 %v8248, %v8247
    %v8584 = vpack.c.b16 %v8250, %v8249
    %v8585 = vpack.c.b16 %v8252, %v8251
    %v8586 = vpack.c.b16 %v8254, %v8253
    %v8587 = vpack.c.b16 %v8256, %v8255
    %v8588 = vpack.c.b16 %v8258, %v8257
    %v8589 = vpack.c.b16 %v8260, %v8259
    %v8590 = vpack.c.b16 %v8262, %v8261
    %v8591 = vpack.c.b16 %v8264, %v8263
    %v8592 = vpack.c.b16 %v8266, %v8265
    %v8593 = vpack.c.b16 %v8268, %v8267
    %v8594 = vpack.c.b16 %v8270, %v8269
    %v8595 = vpack.c.b16 %v8272, %v8271
    %v8596 = vpack.c.b16 %v8274, %v8273
    %v8597 = vpack.c.b16 %v8276, %v8275
    %v8598 = vpack.c.b16 %v8278, %v8277
    %v8599 = vpack.c.b16 %v8280, %v8279
    %v8600 = vpack.c.b16 %v8282, %v8281
    %v8601 = vpack.c.b16 %v8284, %v8283
    %v8602 = vpack.c.b16 %v8286, %v8285
    %v8603 = vpack.c.b16 %v8288, %v8287
    %v8604 = vpack.c.b16 %v8290, %v8289
    %v8605 = vpack.c.b16 %v8292, %v8291
    %v8606 = vpack.c.b16 %v8293, %v8293
    %vm8919 = vcmask 64512
    %v8921 = vsel %vm8919, %v6609, 0
    %v8924 = vsel %vm8919, %v6649, 0
    %v8927 = vsel %vm8919, %v6689, 0
    %v8930 = vsel %vm8919, %v6729, 0
    %v8933 = vsel %vm8919, %v6769, 0
    %v8936 = vsel %vm8919, %v6809, 0
    %vm8938 = vcmask 1043456
    %v8940 = vsel %vm8938, %v8606, 0
    %8942 = vmatpush.bf16.msra.mxu0 %v8301
    %8943 = vmatpush.bf16.msra.mxu0 %v8300
    %8944 = vmatpush.bf16.msra.mxu0 %v8299
    %8945 = vmatpush.bf16.msra.mxu0 %v8298
    %8946 = vmatpush.bf16.msra.mxu0 %v8297
    %8947 = vmatpush.bf16.msra.mxu0 %v8296
    %8948 = vmatpush.bf16.msra.mxu0 %v8295
    %8949 = vmatpush.bf16.msra.mxu0 %v8294
    %8950 = vmatmul.bf16.gmra.mxu0 %v6570
    %v8951 = vpop.f32.mrf.mxu0
    %v8952 = vadd.f32 %v5848, %v8951
    %v8953 = vpop.f32.mrf.mxu0
    %v8954 = vadd.f32 %v5848, %v8953
    %8955 = vmatmul.bf16.gmra.mxu0 %v6610
    %v8956 = vpop.f32.mrf.mxu0
    %v8957 = vadd.f32 %v5848, %v8956
    %v8958 = vpop.f32.mrf.mxu0
    %v8959 = vadd.f32 %v5848, %v8958
    %8960 = vmatmul.bf16.gmra.mxu0 %v6650
    %v8961 = vpop.f32.mrf.mxu0
    %v8962 = vadd.f32 %v5848, %v8961
    %v8963 = vpop.f32.mrf.mxu0
    %v8964 = vadd.f32 %v5848, %v8963
    %8965 = vmatmul.bf16.gmra.mxu0 %v6690
    %v8966 = vpop.f32.mrf.mxu0
    %v8967 = vadd.f32 %v5848, %v8966
    %v8968 = vpop.f32.mrf.mxu0
    %v8969 = vadd.f32 %v5848, %v8968
    %8970 = vmatmul.bf16.gmra.mxu0 %v6730
    %v8971 = vpop.f32.mrf.mxu0
    %v8972 = vadd.f32 %v5848, %v8971
    %v8973 = vpop.f32.mrf.mxu0
    %v8974 = vadd.f32 %v5848, %v8973
    %8975 = vmatmul.bf16.gmra.mxu0 %v6770
    %v8976 = vpop.f32.mrf.mxu0
    %v8977 = vadd.f32 %v5848, %v8976
    %v8978 = vpop.f32.mrf.mxu0
    %v8979 = vadd.f32 %v5848, %v8978
    %8980 = vdwg.mxu0
    %8981 = vmatpush.bf16.msra.mxu0 %v8309
    %8982 = vmatpush.bf16.msra.mxu0 %v8308
    %8983 = vmatpush.bf16.msra.mxu0 %v8307
    %8984 = vmatpush.bf16.msra.mxu0 %v8306
    %8985 = vmatpush.bf16.msra.mxu0 %v8305
    %8986 = vmatpush.bf16.msra.mxu0 %v8304
    %8987 = vmatpush.bf16.msra.mxu0 %v8303
    %8988 = vmatpush.bf16.msra.mxu0 %v8302
    %8989 = vmatmul.bf16.gmra.mxu0 %v6571
    %v8990 = vpop.f32.mrf.mxu0
    %v8991 = vadd.f32 %v8952, %v8990
    %v8992 = vpop.f32.mrf.mxu0
    %v8993 = vadd.f32 %v8954, %v8992
    %8994 = vmatmul.bf16.gmra.mxu0 %v6611
    %v8995 = vpop.f32.mrf.mxu0
    %v8996 = vadd.f32 %v8957, %v8995
    %v8997 = vpop.f32.mrf.mxu0
    %v8998 = vadd.f32 %v8959, %v8997
    %8999 = vmatmul.bf16.gmra.mxu0 %v6651
    %v9000 = vpop.f32.mrf.mxu0
    %v9001 = vadd.f32 %v8962, %v9000
    %v9002 = vpop.f32.mrf.mxu0
    %v9003 = vadd.f32 %v8964, %v9002
    %9004 = vmatmul.bf16.gmra.mxu0 %v6691
    %v9005 = vpop.f32.mrf.mxu0
    %v9006 = vadd.f32 %v8967, %v9005
    %v9007 = vpop.f32.mrf.mxu0
    %v9008 = vadd.f32 %v8969, %v9007
    %9009 = vmatmul.bf16.gmra.mxu0 %v6731
    %v9010 = vpop.f32.mrf.mxu0
    %v9011 = vadd.f32 %v8972, %v9010
    %v9012 = vpop.f32.mrf.mxu0
    %v9013 = vadd.f32 %v8974, %v9012
    %9014 = vmatmul.bf16.gmra.mxu0 %v6771
    %v9015 = vpop.f32.mrf.mxu0
    %v9016 = vadd.f32 %v8977, %v9015
    %v9017 = vpop.f32.mrf.mxu0
    %v9018 = vadd.f32 %v8979, %v9017
    %9019 = vdwg.mxu0
    %9020 = vmatpush.bf16.msra.mxu0 %v8317
    %9021 = vmatpush.bf16.msra.mxu0 %v8316
    %9022 = vmatpush.bf16.msra.mxu0 %v8315
    %9023 = vmatpush.bf16.msra.mxu0 %v8314
    %9024 = vmatpush.bf16.msra.mxu0 %v8313
    %9025 = vmatpush.bf16.msra.mxu0 %v8312
    %9026 = vmatpush.bf16.msra.mxu0 %v8311
    %9027 = vmatpush.bf16.msra.mxu0 %v8310
    %9028 = vmatmul.bf16.gmra.mxu0 %v6572
    %v9029 = vpop.f32.mrf.mxu0
    %v9030 = vadd.f32 %v8991, %v9029
    %v9031 = vpop.f32.mrf.mxu0
    %v9032 = vadd.f32 %v8993, %v9031
    %9033 = vmatmul.bf16.gmra.mxu0 %v6612
    %v9034 = vpop.f32.mrf.mxu0
    %v9035 = vadd.f32 %v8996, %v9034
    %v9036 = vpop.f32.mrf.mxu0
    %v9037 = vadd.f32 %v8998, %v9036
    %9038 = vmatmul.bf16.gmra.mxu0 %v6652
    %v9039 = vpop.f32.mrf.mxu0
    %v9040 = vadd.f32 %v9001, %v9039
    %v9041 = vpop.f32.mrf.mxu0
    %v9042 = vadd.f32 %v9003, %v9041
    %9043 = vmatmul.bf16.gmra.mxu0 %v6692
    %v9044 = vpop.f32.mrf.mxu0
    %v9045 = vadd.f32 %v9006, %v9044
    %v9046 = vpop.f32.mrf.mxu0
    %v9047 = vadd.f32 %v9008, %v9046
    %9048 = vmatmul.bf16.gmra.mxu0 %v6732
    %v9049 = vpop.f32.mrf.mxu0
    %v9050 = vadd.f32 %v9011, %v9049
    %v9051 = vpop.f32.mrf.mxu0
    %v9052 = vadd.f32 %v9013, %v9051
    %9053 = vmatmul.bf16.gmra.mxu0 %v6772
    %v9054 = vpop.f32.mrf.mxu0
    %v9055 = vadd.f32 %v9016, %v9054
    %v9056 = vpop.f32.mrf.mxu0
    %v9057 = vadd.f32 %v9018, %v9056
    %9058 = vdwg.mxu0
    %9059 = vmatpush.bf16.msra.mxu0 %v8325
    %9060 = vmatpush.bf16.msra.mxu0 %v8324
    %9061 = vmatpush.bf16.msra.mxu0 %v8323
    %9062 = vmatpush.bf16.msra.mxu0 %v8322
    %9063 = vmatpush.bf16.msra.mxu0 %v8321
    %9064 = vmatpush.bf16.msra.mxu0 %v8320
    %9065 = vmatpush.bf16.msra.mxu0 %v8319
    %9066 = vmatpush.bf16.msra.mxu0 %v8318
    %9067 = vmatmul.bf16.gmra.mxu0 %v6573
    %v9068 = vpop.f32.mrf.mxu0
    %v9069 = vadd.f32 %v9030, %v9068
    %v9070 = vpop.f32.mrf.mxu0
    %v9071 = vadd.f32 %v9032, %v9070
    %9072 = vmatmul.bf16.gmra.mxu0 %v6613
    %v9073 = vpop.f32.mrf.mxu0
    %v9074 = vadd.f32 %v9035, %v9073
    %v9075 = vpop.f32.mrf.mxu0
    %v9076 = vadd.f32 %v9037, %v9075
    %9077 = vmatmul.bf16.gmra.mxu0 %v6653
    %v9078 = vpop.f32.mrf.mxu0
    %v9079 = vadd.f32 %v9040, %v9078
    %v9080 = vpop.f32.mrf.mxu0
    %v9081 = vadd.f32 %v9042, %v9080
    %9082 = vmatmul.bf16.gmra.mxu0 %v6693
    %v9083 = vpop.f32.mrf.mxu0
    %v9084 = vadd.f32 %v9045, %v9083
    %v9085 = vpop.f32.mrf.mxu0
    %v9086 = vadd.f32 %v9047, %v9085
    %9087 = vmatmul.bf16.gmra.mxu0 %v6733
    %v9088 = vpop.f32.mrf.mxu0
    %v9089 = vadd.f32 %v9050, %v9088
    %v9090 = vpop.f32.mrf.mxu0
    %v9091 = vadd.f32 %v9052, %v9090
    %9092 = vmatmul.bf16.gmra.mxu0 %v6773
    %v9093 = vpop.f32.mrf.mxu0
    %v9094 = vadd.f32 %v9055, %v9093
    %v9095 = vpop.f32.mrf.mxu0
    %v9096 = vadd.f32 %v9057, %v9095
    %9097 = vdwg.mxu0
    %9098 = vmatpush.bf16.msra.mxu0 %v8333
    %9099 = vmatpush.bf16.msra.mxu0 %v8332
    %9100 = vmatpush.bf16.msra.mxu0 %v8331
    %9101 = vmatpush.bf16.msra.mxu0 %v8330
    %9102 = vmatpush.bf16.msra.mxu0 %v8329
    %9103 = vmatpush.bf16.msra.mxu0 %v8328
    %9104 = vmatpush.bf16.msra.mxu0 %v8327
    %9105 = vmatpush.bf16.msra.mxu0 %v8326
    %9106 = vmatmul.bf16.gmra.mxu0 %v6574
    %v9107 = vpop.f32.mrf.mxu0
    %v9108 = vadd.f32 %v9069, %v9107
    %v9109 = vpop.f32.mrf.mxu0
    %v9110 = vadd.f32 %v9071, %v9109
    %9111 = vmatmul.bf16.gmra.mxu0 %v6614
    %v9112 = vpop.f32.mrf.mxu0
    %v9113 = vadd.f32 %v9074, %v9112
    %v9114 = vpop.f32.mrf.mxu0
    %v9115 = vadd.f32 %v9076, %v9114
    %9116 = vmatmul.bf16.gmra.mxu0 %v6654
    %v9117 = vpop.f32.mrf.mxu0
    %v9118 = vadd.f32 %v9079, %v9117
    %v9119 = vpop.f32.mrf.mxu0
    %v9120 = vadd.f32 %v9081, %v9119
    %9121 = vmatmul.bf16.gmra.mxu0 %v6694
    %v9122 = vpop.f32.mrf.mxu0
    %v9123 = vadd.f32 %v9084, %v9122
    %v9124 = vpop.f32.mrf.mxu0
    %v9125 = vadd.f32 %v9086, %v9124
    %9126 = vmatmul.bf16.gmra.mxu0 %v6734
    %v9127 = vpop.f32.mrf.mxu0
    %v9128 = vadd.f32 %v9089, %v9127
    %v9129 = vpop.f32.mrf.mxu0
    %v9130 = vadd.f32 %v9091, %v9129
    %9131 = vmatmul.bf16.gmra.mxu0 %v6774
    %v9132 = vpop.f32.mrf.mxu0
    %v9133 = vadd.f32 %v9094, %v9132
    %v9134 = vpop.f32.mrf.mxu0
    %v9135 = vadd.f32 %v9096, %v9134
    %9136 = vdwg.mxu0
    %9137 = vmatpush.bf16.msra.mxu0 %v8341
    %9138 = vmatpush.bf16.msra.mxu0 %v8340
    %9139 = vmatpush.bf16.msra.mxu0 %v8339
    %9140 = vmatpush.bf16.msra.mxu0 %v8338
    %9141 = vmatpush.bf16.msra.mxu0 %v8337
    %9142 = vmatpush.bf16.msra.mxu0 %v8336
    %9143 = vmatpush.bf16.msra.mxu0 %v8335
    %9144 = vmatpush.bf16.msra.mxu0 %v8334
    %9145 = vmatmul.bf16.gmra.mxu0 %v6575
    %v9146 = vpop.f32.mrf.mxu0
    %v9147 = vadd.f32 %v9108, %v9146
    %v9148 = vpop.f32.mrf.mxu0
    %v9149 = vadd.f32 %v9110, %v9148
    %9150 = vmatmul.bf16.gmra.mxu0 %v6615
    %v9151 = vpop.f32.mrf.mxu0
    %v9152 = vadd.f32 %v9113, %v9151
    %v9153 = vpop.f32.mrf.mxu0
    %v9154 = vadd.f32 %v9115, %v9153
    %9155 = vmatmul.bf16.gmra.mxu0 %v6655
    %v9156 = vpop.f32.mrf.mxu0
    %v9157 = vadd.f32 %v9118, %v9156
    %v9158 = vpop.f32.mrf.mxu0
    %v9159 = vadd.f32 %v9120, %v9158
    %9160 = vmatmul.bf16.gmra.mxu0 %v6695
    %v9161 = vpop.f32.mrf.mxu0
    %v9162 = vadd.f32 %v9123, %v9161
    %v9163 = vpop.f32.mrf.mxu0
    %v9164 = vadd.f32 %v9125, %v9163
    %9165 = vmatmul.bf16.gmra.mxu0 %v6735
    %v9166 = vpop.f32.mrf.mxu0
    %v9167 = vadd.f32 %v9128, %v9166
    %v9168 = vpop.f32.mrf.mxu0
    %v9169 = vadd.f32 %v9130, %v9168
    %9170 = vmatmul.bf16.gmra.mxu0 %v6775
    %v9171 = vpop.f32.mrf.mxu0
    %v9172 = vadd.f32 %v9133, %v9171
    %v9173 = vpop.f32.mrf.mxu0
    %v9174 = vadd.f32 %v9135, %v9173
    %9175 = vdwg.mxu0
    %9176 = vmatpush.bf16.msra.mxu0 %v8349
    %9177 = vmatpush.bf16.msra.mxu0 %v8348
    %9178 = vmatpush.bf16.msra.mxu0 %v8347
    %9179 = vmatpush.bf16.msra.mxu0 %v8346
    %9180 = vmatpush.bf16.msra.mxu0 %v8345
    %9181 = vmatpush.bf16.msra.mxu0 %v8344
    %9182 = vmatpush.bf16.msra.mxu0 %v8343
    %9183 = vmatpush.bf16.msra.mxu0 %v8342
    %9184 = vmatmul.bf16.gmra.mxu0 %v6576
    %v9185 = vpop.f32.mrf.mxu0
    %v9186 = vadd.f32 %v9147, %v9185
    %v9187 = vpop.f32.mrf.mxu0
    %v9188 = vadd.f32 %v9149, %v9187
    %9189 = vmatmul.bf16.gmra.mxu0 %v6616
    %v9190 = vpop.f32.mrf.mxu0
    %v9191 = vadd.f32 %v9152, %v9190
    %v9192 = vpop.f32.mrf.mxu0
    %v9193 = vadd.f32 %v9154, %v9192
    %9194 = vmatmul.bf16.gmra.mxu0 %v6656
    %v9195 = vpop.f32.mrf.mxu0
    %v9196 = vadd.f32 %v9157, %v9195
    %v9197 = vpop.f32.mrf.mxu0
    %v9198 = vadd.f32 %v9159, %v9197
    %9199 = vmatmul.bf16.gmra.mxu0 %v6696
    %v9200 = vpop.f32.mrf.mxu0
    %v9201 = vadd.f32 %v9162, %v9200
    %v9202 = vpop.f32.mrf.mxu0
    %v9203 = vadd.f32 %v9164, %v9202
    %9204 = vmatmul.bf16.gmra.mxu0 %v6736
    %v9205 = vpop.f32.mrf.mxu0
    %v9206 = vadd.f32 %v9167, %v9205
    %v9207 = vpop.f32.mrf.mxu0
    %v9208 = vadd.f32 %v9169, %v9207
    %9209 = vmatmul.bf16.gmra.mxu0 %v6776
    %v9210 = vpop.f32.mrf.mxu0
    %v9211 = vadd.f32 %v9172, %v9210
    %v9212 = vpop.f32.mrf.mxu0
    %v9213 = vadd.f32 %v9174, %v9212
    %9214 = vdwg.mxu0
    %9215 = vmatpush.bf16.msra.mxu0 %v8357
    %9216 = vmatpush.bf16.msra.mxu0 %v8356
    %9217 = vmatpush.bf16.msra.mxu0 %v8355
    %9218 = vmatpush.bf16.msra.mxu0 %v8354
    %9219 = vmatpush.bf16.msra.mxu0 %v8353
    %9220 = vmatpush.bf16.msra.mxu0 %v8352
    %9221 = vmatpush.bf16.msra.mxu0 %v8351
    %9222 = vmatpush.bf16.msra.mxu0 %v8350
    %9223 = vmatmul.bf16.gmra.mxu0 %v6577
    %v9224 = vpop.f32.mrf.mxu0
    %v9225 = vadd.f32 %v9186, %v9224
    %v9226 = vpop.f32.mrf.mxu0
    %v9227 = vadd.f32 %v9188, %v9226
    %9228 = vmatmul.bf16.gmra.mxu0 %v6617
    %v9229 = vpop.f32.mrf.mxu0
    %v9230 = vadd.f32 %v9191, %v9229
    %v9231 = vpop.f32.mrf.mxu0
    %v9232 = vadd.f32 %v9193, %v9231
    %9233 = vmatmul.bf16.gmra.mxu0 %v6657
    %v9234 = vpop.f32.mrf.mxu0
    %v9235 = vadd.f32 %v9196, %v9234
    %v9236 = vpop.f32.mrf.mxu0
    %v9237 = vadd.f32 %v9198, %v9236
    %9238 = vmatmul.bf16.gmra.mxu0 %v6697
    %v9239 = vpop.f32.mrf.mxu0
    %v9240 = vadd.f32 %v9201, %v9239
    %v9241 = vpop.f32.mrf.mxu0
    %v9242 = vadd.f32 %v9203, %v9241
    %9243 = vmatmul.bf16.gmra.mxu0 %v6737
    %v9244 = vpop.f32.mrf.mxu0
    %v9245 = vadd.f32 %v9206, %v9244
    %v9246 = vpop.f32.mrf.mxu0
    %v9247 = vadd.f32 %v9208, %v9246
    %9248 = vmatmul.bf16.gmra.mxu0 %v6777
    %v9249 = vpop.f32.mrf.mxu0
    %v9250 = vadd.f32 %v9211, %v9249
    %v9251 = vpop.f32.mrf.mxu0
    %v9252 = vadd.f32 %v9213, %v9251
    %9253 = vdwg.mxu0
    %9254 = vmatpush.bf16.msra.mxu0 %v8365
    %9255 = vmatpush.bf16.msra.mxu0 %v8364
    %9256 = vmatpush.bf16.msra.mxu0 %v8363
    %9257 = vmatpush.bf16.msra.mxu0 %v8362
    %9258 = vmatpush.bf16.msra.mxu0 %v8361
    %9259 = vmatpush.bf16.msra.mxu0 %v8360
    %9260 = vmatpush.bf16.msra.mxu0 %v8359
    %9261 = vmatpush.bf16.msra.mxu0 %v8358
    %9262 = vmatmul.bf16.gmra.mxu0 %v6578
    %v9263 = vpop.f32.mrf.mxu0
    %v9264 = vadd.f32 %v9225, %v9263
    %v9265 = vpop.f32.mrf.mxu0
    %v9266 = vadd.f32 %v9227, %v9265
    %9267 = vmatmul.bf16.gmra.mxu0 %v6618
    %v9268 = vpop.f32.mrf.mxu0
    %v9269 = vadd.f32 %v9230, %v9268
    %v9270 = vpop.f32.mrf.mxu0
    %v9271 = vadd.f32 %v9232, %v9270
    %9272 = vmatmul.bf16.gmra.mxu0 %v6658
    %v9273 = vpop.f32.mrf.mxu0
    %v9274 = vadd.f32 %v9235, %v9273
    %v9275 = vpop.f32.mrf.mxu0
    %v9276 = vadd.f32 %v9237, %v9275
    %9277 = vmatmul.bf16.gmra.mxu0 %v6698
    %v9278 = vpop.f32.mrf.mxu0
    %v9279 = vadd.f32 %v9240, %v9278
    %v9280 = vpop.f32.mrf.mxu0
    %v9281 = vadd.f32 %v9242, %v9280
    %9282 = vmatmul.bf16.gmra.mxu0 %v6738
    %v9283 = vpop.f32.mrf.mxu0
    %v9284 = vadd.f32 %v9245, %v9283
    %v9285 = vpop.f32.mrf.mxu0
    %v9286 = vadd.f32 %v9247, %v9285
    %9287 = vmatmul.bf16.gmra.mxu0 %v6778
    %v9288 = vpop.f32.mrf.mxu0
    %v9289 = vadd.f32 %v9250, %v9288
    %v9290 = vpop.f32.mrf.mxu0
    %v9291 = vadd.f32 %v9252, %v9290
    %9292 = vdwg.mxu0
    %9293 = vmatpush.bf16.msra.mxu0 %v8373
    %9294 = vmatpush.bf16.msra.mxu0 %v8372
    %9295 = vmatpush.bf16.msra.mxu0 %v8371
    %9296 = vmatpush.bf16.msra.mxu0 %v8370
    %9297 = vmatpush.bf16.msra.mxu0 %v8369
    %9298 = vmatpush.bf16.msra.mxu0 %v8368
    %9299 = vmatpush.bf16.msra.mxu0 %v8367
    %9300 = vmatpush.bf16.msra.mxu0 %v8366
    %9301 = vmatmul.bf16.gmra.mxu0 %v6579
    %v9302 = vpop.f32.mrf.mxu0
    %v9303 = vadd.f32 %v9264, %v9302
    %v9304 = vpop.f32.mrf.mxu0
    %v9305 = vadd.f32 %v9266, %v9304
    %9306 = vmatmul.bf16.gmra.mxu0 %v6619
    %v9307 = vpop.f32.mrf.mxu0
    %v9308 = vadd.f32 %v9269, %v9307
    %v9309 = vpop.f32.mrf.mxu0
    %v9310 = vadd.f32 %v9271, %v9309
    %9311 = vmatmul.bf16.gmra.mxu0 %v6659
    %v9312 = vpop.f32.mrf.mxu0
    %v9313 = vadd.f32 %v9274, %v9312
    %v9314 = vpop.f32.mrf.mxu0
    %v9315 = vadd.f32 %v9276, %v9314
    %9316 = vmatmul.bf16.gmra.mxu0 %v6699
    %v9317 = vpop.f32.mrf.mxu0
    %v9318 = vadd.f32 %v9279, %v9317
    %v9319 = vpop.f32.mrf.mxu0
    %v9320 = vadd.f32 %v9281, %v9319
    %9321 = vmatmul.bf16.gmra.mxu0 %v6739
    %v9322 = vpop.f32.mrf.mxu0
    %v9323 = vadd.f32 %v9284, %v9322
    %v9324 = vpop.f32.mrf.mxu0
    %v9325 = vadd.f32 %v9286, %v9324
    %9326 = vmatmul.bf16.gmra.mxu0 %v6779
    %v9327 = vpop.f32.mrf.mxu0
    %v9328 = vadd.f32 %v9289, %v9327
    %v9329 = vpop.f32.mrf.mxu0
    %v9330 = vadd.f32 %v9291, %v9329
    %9331 = vdwg.mxu0
    %9332 = vmatpush.bf16.msra.mxu0 %v8381
    %9333 = vmatpush.bf16.msra.mxu0 %v8380
    %9334 = vmatpush.bf16.msra.mxu0 %v8379
    %9335 = vmatpush.bf16.msra.mxu0 %v8378
    %9336 = vmatpush.bf16.msra.mxu0 %v8377
    %9337 = vmatpush.bf16.msra.mxu0 %v8376
    %9338 = vmatpush.bf16.msra.mxu0 %v8375
    %9339 = vmatpush.bf16.msra.mxu0 %v8374
    %9340 = vmatmul.bf16.gmra.mxu0 %v6580
    %v9341 = vpop.f32.mrf.mxu0
    %v9342 = vadd.f32 %v9303, %v9341
    %v9343 = vpop.f32.mrf.mxu0
    %v9344 = vadd.f32 %v9305, %v9343
    %9345 = vmatmul.bf16.gmra.mxu0 %v6620
    %v9346 = vpop.f32.mrf.mxu0
    %v9347 = vadd.f32 %v9308, %v9346
    %v9348 = vpop.f32.mrf.mxu0
    %v9349 = vadd.f32 %v9310, %v9348
    %9350 = vmatmul.bf16.gmra.mxu0 %v6660
    %v9351 = vpop.f32.mrf.mxu0
    %v9352 = vadd.f32 %v9313, %v9351
    %v9353 = vpop.f32.mrf.mxu0
    %v9354 = vadd.f32 %v9315, %v9353
    %9355 = vmatmul.bf16.gmra.mxu0 %v6700
    %v9356 = vpop.f32.mrf.mxu0
    %v9357 = vadd.f32 %v9318, %v9356
    %v9358 = vpop.f32.mrf.mxu0
    %v9359 = vadd.f32 %v9320, %v9358
    %9360 = vmatmul.bf16.gmra.mxu0 %v6740
    %v9361 = vpop.f32.mrf.mxu0
    %v9362 = vadd.f32 %v9323, %v9361
    %v9363 = vpop.f32.mrf.mxu0
    %v9364 = vadd.f32 %v9325, %v9363
    %9365 = vmatmul.bf16.gmra.mxu0 %v6780
    %v9366 = vpop.f32.mrf.mxu0
    %v9367 = vadd.f32 %v9328, %v9366
    %v9368 = vpop.f32.mrf.mxu0
    %v9369 = vadd.f32 %v9330, %v9368
    %9370 = vdwg.mxu0
    %9371 = vmatpush.bf16.msra.mxu0 %v8389
    %9372 = vmatpush.bf16.msra.mxu0 %v8388
    %9373 = vmatpush.bf16.msra.mxu0 %v8387
    %9374 = vmatpush.bf16.msra.mxu0 %v8386
    %9375 = vmatpush.bf16.msra.mxu0 %v8385
    %9376 = vmatpush.bf16.msra.mxu0 %v8384
    %9377 = vmatpush.bf16.msra.mxu0 %v8383
    %9378 = vmatpush.bf16.msra.mxu0 %v8382
    %9379 = vmatmul.bf16.gmra.mxu0 %v6581
    %v9380 = vpop.f32.mrf.mxu0
    %v9381 = vadd.f32 %v9342, %v9380
    %v9382 = vpop.f32.mrf.mxu0
    %v9383 = vadd.f32 %v9344, %v9382
    %9384 = vmatmul.bf16.gmra.mxu0 %v6621
    %v9385 = vpop.f32.mrf.mxu0
    %v9386 = vadd.f32 %v9347, %v9385
    %v9387 = vpop.f32.mrf.mxu0
    %v9388 = vadd.f32 %v9349, %v9387
    %9389 = vmatmul.bf16.gmra.mxu0 %v6661
    %v9390 = vpop.f32.mrf.mxu0
    %v9391 = vadd.f32 %v9352, %v9390
    %v9392 = vpop.f32.mrf.mxu0
    %v9393 = vadd.f32 %v9354, %v9392
    %9394 = vmatmul.bf16.gmra.mxu0 %v6701
    %v9395 = vpop.f32.mrf.mxu0
    %v9396 = vadd.f32 %v9357, %v9395
    %v9397 = vpop.f32.mrf.mxu0
    %v9398 = vadd.f32 %v9359, %v9397
    %9399 = vmatmul.bf16.gmra.mxu0 %v6741
    %v9400 = vpop.f32.mrf.mxu0
    %v9401 = vadd.f32 %v9362, %v9400
    %v9402 = vpop.f32.mrf.mxu0
    %v9403 = vadd.f32 %v9364, %v9402
    %9404 = vmatmul.bf16.gmra.mxu0 %v6781
    %v9405 = vpop.f32.mrf.mxu0
    %v9406 = vadd.f32 %v9367, %v9405
    %v9407 = vpop.f32.mrf.mxu0
    %v9408 = vadd.f32 %v9369, %v9407
    %9409 = vdwg.mxu0
    %9410 = vmatpush.bf16.msra.mxu0 %v8397
    %9411 = vmatpush.bf16.msra.mxu0 %v8396
    %9412 = vmatpush.bf16.msra.mxu0 %v8395
    %9413 = vmatpush.bf16.msra.mxu0 %v8394
    %9414 = vmatpush.bf16.msra.mxu0 %v8393
    %9415 = vmatpush.bf16.msra.mxu0 %v8392
    %9416 = vmatpush.bf16.msra.mxu0 %v8391
    %9417 = vmatpush.bf16.msra.mxu0 %v8390
    %9418 = vmatmul.bf16.gmra.mxu0 %v6582
    %v9419 = vpop.f32.mrf.mxu0
    %v9420 = vadd.f32 %v9381, %v9419
    %v9421 = vpop.f32.mrf.mxu0
    %v9422 = vadd.f32 %v9383, %v9421
    %9423 = vmatmul.bf16.gmra.mxu0 %v6622
    %v9424 = vpop.f32.mrf.mxu0
    %v9425 = vadd.f32 %v9386, %v9424
    %v9426 = vpop.f32.mrf.mxu0
    %v9427 = vadd.f32 %v9388, %v9426
    %9428 = vmatmul.bf16.gmra.mxu0 %v6662
    %v9429 = vpop.f32.mrf.mxu0
    %v9430 = vadd.f32 %v9391, %v9429
    %v9431 = vpop.f32.mrf.mxu0
    %v9432 = vadd.f32 %v9393, %v9431
    %9433 = vmatmul.bf16.gmra.mxu0 %v6702
    %v9434 = vpop.f32.mrf.mxu0
    %v9435 = vadd.f32 %v9396, %v9434
    %v9436 = vpop.f32.mrf.mxu0
    %v9437 = vadd.f32 %v9398, %v9436
    %9438 = vmatmul.bf16.gmra.mxu0 %v6742
    %v9439 = vpop.f32.mrf.mxu0
    %v9440 = vadd.f32 %v9401, %v9439
    %v9441 = vpop.f32.mrf.mxu0
    %v9442 = vadd.f32 %v9403, %v9441
    %9443 = vmatmul.bf16.gmra.mxu0 %v6782
    %v9444 = vpop.f32.mrf.mxu0
    %v9445 = vadd.f32 %v9406, %v9444
    %v9446 = vpop.f32.mrf.mxu0
    %v9447 = vadd.f32 %v9408, %v9446
    %9448 = vdwg.mxu0
    %9449 = vmatpush.bf16.msra.mxu0 %v8405
    %9450 = vmatpush.bf16.msra.mxu0 %v8404
    %9451 = vmatpush.bf16.msra.mxu0 %v8403
    %9452 = vmatpush.bf16.msra.mxu0 %v8402
    %9453 = vmatpush.bf16.msra.mxu0 %v8401
    %9454 = vmatpush.bf16.msra.mxu0 %v8400
    %9455 = vmatpush.bf16.msra.mxu0 %v8399
    %9456 = vmatpush.bf16.msra.mxu0 %v8398
    %9457 = vmatmul.bf16.gmra.mxu0 %v6583
    %v9458 = vpop.f32.mrf.mxu0
    %v9459 = vadd.f32 %v9420, %v9458
    %v9460 = vpop.f32.mrf.mxu0
    %v9461 = vadd.f32 %v9422, %v9460
    %9462 = vmatmul.bf16.gmra.mxu0 %v6623
    %v9463 = vpop.f32.mrf.mxu0
    %v9464 = vadd.f32 %v9425, %v9463
    %v9465 = vpop.f32.mrf.mxu0
    %v9466 = vadd.f32 %v9427, %v9465
    %9467 = vmatmul.bf16.gmra.mxu0 %v6663
    %v9468 = vpop.f32.mrf.mxu0
    %v9469 = vadd.f32 %v9430, %v9468
    %v9470 = vpop.f32.mrf.mxu0
    %v9471 = vadd.f32 %v9432, %v9470
    %9472 = vmatmul.bf16.gmra.mxu0 %v6703
    %v9473 = vpop.f32.mrf.mxu0
    %v9474 = vadd.f32 %v9435, %v9473
    %v9475 = vpop.f32.mrf.mxu0
    %v9476 = vadd.f32 %v9437, %v9475
    %9477 = vmatmul.bf16.gmra.mxu0 %v6743
    %v9478 = vpop.f32.mrf.mxu0
    %v9479 = vadd.f32 %v9440, %v9478
    %v9480 = vpop.f32.mrf.mxu0
    %v9481 = vadd.f32 %v9442, %v9480
    %9482 = vmatmul.bf16.gmra.mxu0 %v6783
    %v9483 = vpop.f32.mrf.mxu0
    %v9484 = vadd.f32 %v9445, %v9483
    %v9485 = vpop.f32.mrf.mxu0
    %v9486 = vadd.f32 %v9447, %v9485
    %9487 = vdwg.mxu0
    %9488 = vmatpush.bf16.msra.mxu0 %v8413
    %9489 = vmatpush.bf16.msra.mxu0 %v8412
    %9490 = vmatpush.bf16.msra.mxu0 %v8411
    %9491 = vmatpush.bf16.msra.mxu0 %v8410
    %9492 = vmatpush.bf16.msra.mxu0 %v8409
    %9493 = vmatpush.bf16.msra.mxu0 %v8408
    %9494 = vmatpush.bf16.msra.mxu0 %v8407
    %9495 = vmatpush.bf16.msra.mxu0 %v8406
    %9496 = vmatmul.bf16.gmra.mxu0 %v6584
    %v9497 = vpop.f32.mrf.mxu0
    %v9498 = vadd.f32 %v9459, %v9497
    %v9499 = vpop.f32.mrf.mxu0
    %v9500 = vadd.f32 %v9461, %v9499
    %9501 = vmatmul.bf16.gmra.mxu0 %v6624
    %v9502 = vpop.f32.mrf.mxu0
    %v9503 = vadd.f32 %v9464, %v9502
    %v9504 = vpop.f32.mrf.mxu0
    %v9505 = vadd.f32 %v9466, %v9504
    %9506 = vmatmul.bf16.gmra.mxu0 %v6664
    %v9507 = vpop.f32.mrf.mxu0
    %v9508 = vadd.f32 %v9469, %v9507
    %v9509 = vpop.f32.mrf.mxu0
    %v9510 = vadd.f32 %v9471, %v9509
    %9511 = vmatmul.bf16.gmra.mxu0 %v6704
    %v9512 = vpop.f32.mrf.mxu0
    %v9513 = vadd.f32 %v9474, %v9512
    %v9514 = vpop.f32.mrf.mxu0
    %v9515 = vadd.f32 %v9476, %v9514
    %9516 = vmatmul.bf16.gmra.mxu0 %v6744
    %v9517 = vpop.f32.mrf.mxu0
    %v9518 = vadd.f32 %v9479, %v9517
    %v9519 = vpop.f32.mrf.mxu0
    %v9520 = vadd.f32 %v9481, %v9519
    %9521 = vmatmul.bf16.gmra.mxu0 %v6784
    %v9522 = vpop.f32.mrf.mxu0
    %v9523 = vadd.f32 %v9484, %v9522
    %v9524 = vpop.f32.mrf.mxu0
    %v9525 = vadd.f32 %v9486, %v9524
    %9526 = vdwg.mxu0
    %9527 = vmatpush.bf16.msra.mxu0 %v8421
    %9528 = vmatpush.bf16.msra.mxu0 %v8420
    %9529 = vmatpush.bf16.msra.mxu0 %v8419
    %9530 = vmatpush.bf16.msra.mxu0 %v8418
    %9531 = vmatpush.bf16.msra.mxu0 %v8417
    %9532 = vmatpush.bf16.msra.mxu0 %v8416
    %9533 = vmatpush.bf16.msra.mxu0 %v8415
    %9534 = vmatpush.bf16.msra.mxu0 %v8414
    %9535 = vmatmul.bf16.gmra.mxu0 %v6585
    %v9536 = vpop.f32.mrf.mxu0
    %v9537 = vadd.f32 %v9498, %v9536
    %v9538 = vpop.f32.mrf.mxu0
    %v9539 = vadd.f32 %v9500, %v9538
    %9540 = vmatmul.bf16.gmra.mxu0 %v6625
    %v9541 = vpop.f32.mrf.mxu0
    %v9542 = vadd.f32 %v9503, %v9541
    %v9543 = vpop.f32.mrf.mxu0
    %v9544 = vadd.f32 %v9505, %v9543
    %9545 = vmatmul.bf16.gmra.mxu0 %v6665
    %v9546 = vpop.f32.mrf.mxu0
    %v9547 = vadd.f32 %v9508, %v9546
    %v9548 = vpop.f32.mrf.mxu0
    %v9549 = vadd.f32 %v9510, %v9548
    %9550 = vmatmul.bf16.gmra.mxu0 %v6705
    %v9551 = vpop.f32.mrf.mxu0
    %v9552 = vadd.f32 %v9513, %v9551
    %v9553 = vpop.f32.mrf.mxu0
    %v9554 = vadd.f32 %v9515, %v9553
    %9555 = vmatmul.bf16.gmra.mxu0 %v6745
    %v9556 = vpop.f32.mrf.mxu0
    %v9557 = vadd.f32 %v9518, %v9556
    %v9558 = vpop.f32.mrf.mxu0
    %v9559 = vadd.f32 %v9520, %v9558
    %9560 = vmatmul.bf16.gmra.mxu0 %v6785
    %v9561 = vpop.f32.mrf.mxu0
    %v9562 = vadd.f32 %v9523, %v9561
    %v9563 = vpop.f32.mrf.mxu0
    %v9564 = vadd.f32 %v9525, %v9563
    %9565 = vdwg.mxu0
    %9566 = vmatpush.bf16.msra.mxu0 %v8429
    %9567 = vmatpush.bf16.msra.mxu0 %v8428
    %9568 = vmatpush.bf16.msra.mxu0 %v8427
    %9569 = vmatpush.bf16.msra.mxu0 %v8426
    %9570 = vmatpush.bf16.msra.mxu0 %v8425
    %9571 = vmatpush.bf16.msra.mxu0 %v8424
    %9572 = vmatpush.bf16.msra.mxu0 %v8423
    %9573 = vmatpush.bf16.msra.mxu0 %v8422
    %9574 = vmatmul.bf16.gmra.mxu0 %v6586
    %v9575 = vpop.f32.mrf.mxu0
    %v9576 = vadd.f32 %v9537, %v9575
    %v9577 = vpop.f32.mrf.mxu0
    %v9578 = vadd.f32 %v9539, %v9577
    %9579 = vmatmul.bf16.gmra.mxu0 %v6626
    %v9580 = vpop.f32.mrf.mxu0
    %v9581 = vadd.f32 %v9542, %v9580
    %v9582 = vpop.f32.mrf.mxu0
    %v9583 = vadd.f32 %v9544, %v9582
    %9584 = vmatmul.bf16.gmra.mxu0 %v6666
    %v9585 = vpop.f32.mrf.mxu0
    %v9586 = vadd.f32 %v9547, %v9585
    %v9587 = vpop.f32.mrf.mxu0
    %v9588 = vadd.f32 %v9549, %v9587
    %9589 = vmatmul.bf16.gmra.mxu0 %v6706
    %v9590 = vpop.f32.mrf.mxu0
    %v9591 = vadd.f32 %v9552, %v9590
    %v9592 = vpop.f32.mrf.mxu0
    %v9593 = vadd.f32 %v9554, %v9592
    %9594 = vmatmul.bf16.gmra.mxu0 %v6746
    %v9595 = vpop.f32.mrf.mxu0
    %v9596 = vadd.f32 %v9557, %v9595
    %v9597 = vpop.f32.mrf.mxu0
    %v9598 = vadd.f32 %v9559, %v9597
    %9599 = vmatmul.bf16.gmra.mxu0 %v6786
    %v9600 = vpop.f32.mrf.mxu0
    %v9601 = vadd.f32 %v9562, %v9600
    %v9602 = vpop.f32.mrf.mxu0
    %v9603 = vadd.f32 %v9564, %v9602
    %9604 = vdwg.mxu0
    %9605 = vmatpush.bf16.msra.mxu0 %v8437
    %9606 = vmatpush.bf16.msra.mxu0 %v8436
    %9607 = vmatpush.bf16.msra.mxu0 %v8435
    %9608 = vmatpush.bf16.msra.mxu0 %v8434
    %9609 = vmatpush.bf16.msra.mxu0 %v8433
    %9610 = vmatpush.bf16.msra.mxu0 %v8432
    %9611 = vmatpush.bf16.msra.mxu0 %v8431
    %9612 = vmatpush.bf16.msra.mxu0 %v8430
    %9613 = vmatmul.bf16.gmra.mxu0 %v6587
    %v9614 = vpop.f32.mrf.mxu0
    %v9615 = vadd.f32 %v9576, %v9614
    %v9616 = vpop.f32.mrf.mxu0
    %v9617 = vadd.f32 %v9578, %v9616
    %9618 = vmatmul.bf16.gmra.mxu0 %v6627
    %v9619 = vpop.f32.mrf.mxu0
    %v9620 = vadd.f32 %v9581, %v9619
    %v9621 = vpop.f32.mrf.mxu0
    %v9622 = vadd.f32 %v9583, %v9621
    %9623 = vmatmul.bf16.gmra.mxu0 %v6667
    %v9624 = vpop.f32.mrf.mxu0
    %v9625 = vadd.f32 %v9586, %v9624
    %v9626 = vpop.f32.mrf.mxu0
    %v9627 = vadd.f32 %v9588, %v9626
    %9628 = vmatmul.bf16.gmra.mxu0 %v6707
    %v9629 = vpop.f32.mrf.mxu0
    %v9630 = vadd.f32 %v9591, %v9629
    %v9631 = vpop.f32.mrf.mxu0
    %v9632 = vadd.f32 %v9593, %v9631
    %9633 = vmatmul.bf16.gmra.mxu0 %v6747
    %v9634 = vpop.f32.mrf.mxu0
    %v9635 = vadd.f32 %v9596, %v9634
    %v9636 = vpop.f32.mrf.mxu0
    %v9637 = vadd.f32 %v9598, %v9636
    %9638 = vmatmul.bf16.gmra.mxu0 %v6787
    %v9639 = vpop.f32.mrf.mxu0
    %v9640 = vadd.f32 %v9601, %v9639
    %v9641 = vpop.f32.mrf.mxu0
    %v9642 = vadd.f32 %v9603, %v9641
    %9643 = vdwg.mxu0
    %9644 = vmatpush.bf16.msra.mxu0 %v8445
    %9645 = vmatpush.bf16.msra.mxu0 %v8444
    %9646 = vmatpush.bf16.msra.mxu0 %v8443
    %9647 = vmatpush.bf16.msra.mxu0 %v8442
    %9648 = vmatpush.bf16.msra.mxu0 %v8441
    %9649 = vmatpush.bf16.msra.mxu0 %v8440
    %9650 = vmatpush.bf16.msra.mxu0 %v8439
    %9651 = vmatpush.bf16.msra.mxu0 %v8438
    %9652 = vmatmul.bf16.gmra.mxu0 %v6588
    %v9653 = vpop.f32.mrf.mxu0
    %v9654 = vadd.f32 %v9615, %v9653
    %v9655 = vpop.f32.mrf.mxu0
    %v9656 = vadd.f32 %v9617, %v9655
    %9657 = vmatmul.bf16.gmra.mxu0 %v6628
    %v9658 = vpop.f32.mrf.mxu0
    %v9659 = vadd.f32 %v9620, %v9658
    %v9660 = vpop.f32.mrf.mxu0
    %v9661 = vadd.f32 %v9622, %v9660
    %9662 = vmatmul.bf16.gmra.mxu0 %v6668
    %v9663 = vpop.f32.mrf.mxu0
    %v9664 = vadd.f32 %v9625, %v9663
    %v9665 = vpop.f32.mrf.mxu0
    %v9666 = vadd.f32 %v9627, %v9665
    %9667 = vmatmul.bf16.gmra.mxu0 %v6708
    %v9668 = vpop.f32.mrf.mxu0
    %v9669 = vadd.f32 %v9630, %v9668
    %v9670 = vpop.f32.mrf.mxu0
    %v9671 = vadd.f32 %v9632, %v9670
    %9672 = vmatmul.bf16.gmra.mxu0 %v6748
    %v9673 = vpop.f32.mrf.mxu0
    %v9674 = vadd.f32 %v9635, %v9673
    %v9675 = vpop.f32.mrf.mxu0
    %v9676 = vadd.f32 %v9637, %v9675
    %9677 = vmatmul.bf16.gmra.mxu0 %v6788
    %v9678 = vpop.f32.mrf.mxu0
    %v9679 = vadd.f32 %v9640, %v9678
    %v9680 = vpop.f32.mrf.mxu0
    %v9681 = vadd.f32 %v9642, %v9680
    %9682 = vdwg.mxu0
    %9683 = vmatpush.bf16.msra.mxu0 %v8453
    %9684 = vmatpush.bf16.msra.mxu0 %v8452
    %9685 = vmatpush.bf16.msra.mxu0 %v8451
    %9686 = vmatpush.bf16.msra.mxu0 %v8450
    %9687 = vmatpush.bf16.msra.mxu0 %v8449
    %9688 = vmatpush.bf16.msra.mxu0 %v8448
    %9689 = vmatpush.bf16.msra.mxu0 %v8447
    %9690 = vmatpush.bf16.msra.mxu0 %v8446
    %9691 = vmatmul.bf16.gmra.mxu0 %v6589
    %v9692 = vpop.f32.mrf.mxu0
    %v9693 = vadd.f32 %v9654, %v9692
    %v9694 = vpop.f32.mrf.mxu0
    %v9695 = vadd.f32 %v9656, %v9694
    %9696 = vmatmul.bf16.gmra.mxu0 %v6629
    %v9697 = vpop.f32.mrf.mxu0
    %v9698 = vadd.f32 %v9659, %v9697
    %v9699 = vpop.f32.mrf.mxu0
    %v9700 = vadd.f32 %v9661, %v9699
    %9701 = vmatmul.bf16.gmra.mxu0 %v6669
    %v9702 = vpop.f32.mrf.mxu0
    %v9703 = vadd.f32 %v9664, %v9702
    %v9704 = vpop.f32.mrf.mxu0
    %v9705 = vadd.f32 %v9666, %v9704
    %9706 = vmatmul.bf16.gmra.mxu0 %v6709
    %v9707 = vpop.f32.mrf.mxu0
    %v9708 = vadd.f32 %v9669, %v9707
    %v9709 = vpop.f32.mrf.mxu0
    %v9710 = vadd.f32 %v9671, %v9709
    %9711 = vmatmul.bf16.gmra.mxu0 %v6749
    %v9712 = vpop.f32.mrf.mxu0
    %v9713 = vadd.f32 %v9674, %v9712
    %v9714 = vpop.f32.mrf.mxu0
    %v9715 = vadd.f32 %v9676, %v9714
    %9716 = vmatmul.bf16.gmra.mxu0 %v6789
    %v9717 = vpop.f32.mrf.mxu0
    %v9718 = vadd.f32 %v9679, %v9717
    %v9719 = vpop.f32.mrf.mxu0
    %v9720 = vadd.f32 %v9681, %v9719
    %9721 = vdwg.mxu0
    %9722 = vmatpush.bf16.msra.mxu0 %v8461
    %9723 = vmatpush.bf16.msra.mxu0 %v8460
    %9724 = vmatpush.bf16.msra.mxu0 %v8459
    %9725 = vmatpush.bf16.msra.mxu0 %v8458
    %9726 = vmatpush.bf16.msra.mxu0 %v8457
    %9727 = vmatpush.bf16.msra.mxu0 %v8456
    %9728 = vmatpush.bf16.msra.mxu0 %v8455
    %9729 = vmatpush.bf16.msra.mxu0 %v8454
    %9730 = vmatmul.bf16.gmra.mxu0 %v6590
    %v9731 = vpop.f32.mrf.mxu0
    %v9732 = vadd.f32 %v9693, %v9731
    %v9733 = vpop.f32.mrf.mxu0
    %v9734 = vadd.f32 %v9695, %v9733
    %9735 = vmatmul.bf16.gmra.mxu0 %v6630
    %v9736 = vpop.f32.mrf.mxu0
    %v9737 = vadd.f32 %v9698, %v9736
    %v9738 = vpop.f32.mrf.mxu0
    %v9739 = vadd.f32 %v9700, %v9738
    %9740 = vmatmul.bf16.gmra.mxu0 %v6670
    %v9741 = vpop.f32.mrf.mxu0
    %v9742 = vadd.f32 %v9703, %v9741
    %v9743 = vpop.f32.mrf.mxu0
    %v9744 = vadd.f32 %v9705, %v9743
    %9745 = vmatmul.bf16.gmra.mxu0 %v6710
    %v9746 = vpop.f32.mrf.mxu0
    %v9747 = vadd.f32 %v9708, %v9746
    %v9748 = vpop.f32.mrf.mxu0
    %v9749 = vadd.f32 %v9710, %v9748
    %9750 = vmatmul.bf16.gmra.mxu0 %v6750
    %v9751 = vpop.f32.mrf.mxu0
    %v9752 = vadd.f32 %v9713, %v9751
    %v9753 = vpop.f32.mrf.mxu0
    %v9754 = vadd.f32 %v9715, %v9753
    %9755 = vmatmul.bf16.gmra.mxu0 %v6790
    %v9756 = vpop.f32.mrf.mxu0
    %v9757 = vadd.f32 %v9718, %v9756
    %v9758 = vpop.f32.mrf.mxu0
    %v9759 = vadd.f32 %v9720, %v9758
    %9760 = vdwg.mxu0
    %9761 = vmatpush.bf16.msra.mxu0 %v8469
    %9762 = vmatpush.bf16.msra.mxu0 %v8468
    %9763 = vmatpush.bf16.msra.mxu0 %v8467
    %9764 = vmatpush.bf16.msra.mxu0 %v8466
    %9765 = vmatpush.bf16.msra.mxu0 %v8465
    %9766 = vmatpush.bf16.msra.mxu0 %v8464
    %9767 = vmatpush.bf16.msra.mxu0 %v8463
    %9768 = vmatpush.bf16.msra.mxu0 %v8462
    %9769 = vmatmul.bf16.gmra.mxu0 %v6591
    %v9770 = vpop.f32.mrf.mxu0
    %v9771 = vadd.f32 %v9732, %v9770
    %v9772 = vpop.f32.mrf.mxu0
    %v9773 = vadd.f32 %v9734, %v9772
    %9774 = vmatmul.bf16.gmra.mxu0 %v6631
    %v9775 = vpop.f32.mrf.mxu0
    %v9776 = vadd.f32 %v9737, %v9775
    %v9777 = vpop.f32.mrf.mxu0
    %v9778 = vadd.f32 %v9739, %v9777
    %9779 = vmatmul.bf16.gmra.mxu0 %v6671
    %v9780 = vpop.f32.mrf.mxu0
    %v9781 = vadd.f32 %v9742, %v9780
    %v9782 = vpop.f32.mrf.mxu0
    %v9783 = vadd.f32 %v9744, %v9782
    %9784 = vmatmul.bf16.gmra.mxu0 %v6711
    %v9785 = vpop.f32.mrf.mxu0
    %v9786 = vadd.f32 %v9747, %v9785
    %v9787 = vpop.f32.mrf.mxu0
    %v9788 = vadd.f32 %v9749, %v9787
    %9789 = vmatmul.bf16.gmra.mxu0 %v6751
    %v9790 = vpop.f32.mrf.mxu0
    %v9791 = vadd.f32 %v9752, %v9790
    %v9792 = vpop.f32.mrf.mxu0
    %v9793 = vadd.f32 %v9754, %v9792
    %9794 = vmatmul.bf16.gmra.mxu0 %v6791
    %v9795 = vpop.f32.mrf.mxu0
    %v9796 = vadd.f32 %v9757, %v9795
    %v9797 = vpop.f32.mrf.mxu0
    %v9798 = vadd.f32 %v9759, %v9797
    %9799 = vdwg.mxu0
    %9800 = vmatpush.bf16.msra.mxu0 %v8477
    %9801 = vmatpush.bf16.msra.mxu0 %v8476
    %9802 = vmatpush.bf16.msra.mxu0 %v8475
    %9803 = vmatpush.bf16.msra.mxu0 %v8474
    %9804 = vmatpush.bf16.msra.mxu0 %v8473
    %9805 = vmatpush.bf16.msra.mxu0 %v8472
    %9806 = vmatpush.bf16.msra.mxu0 %v8471
    %9807 = vmatpush.bf16.msra.mxu0 %v8470
    %9808 = vmatmul.bf16.gmra.mxu0 %v6592
    %v9809 = vpop.f32.mrf.mxu0
    %v9810 = vadd.f32 %v9771, %v9809
    %v9811 = vpop.f32.mrf.mxu0
    %v9812 = vadd.f32 %v9773, %v9811
    %9813 = vmatmul.bf16.gmra.mxu0 %v6632
    %v9814 = vpop.f32.mrf.mxu0
    %v9815 = vadd.f32 %v9776, %v9814
    %v9816 = vpop.f32.mrf.mxu0
    %v9817 = vadd.f32 %v9778, %v9816
    %9818 = vmatmul.bf16.gmra.mxu0 %v6672
    %v9819 = vpop.f32.mrf.mxu0
    %v9820 = vadd.f32 %v9781, %v9819
    %v9821 = vpop.f32.mrf.mxu0
    %v9822 = vadd.f32 %v9783, %v9821
    %9823 = vmatmul.bf16.gmra.mxu0 %v6712
    %v9824 = vpop.f32.mrf.mxu0
    %v9825 = vadd.f32 %v9786, %v9824
    %v9826 = vpop.f32.mrf.mxu0
    %v9827 = vadd.f32 %v9788, %v9826
    %9828 = vmatmul.bf16.gmra.mxu0 %v6752
    %v9829 = vpop.f32.mrf.mxu0
    %v9830 = vadd.f32 %v9791, %v9829
    %v9831 = vpop.f32.mrf.mxu0
    %v9832 = vadd.f32 %v9793, %v9831
    %9833 = vmatmul.bf16.gmra.mxu0 %v6792
    %v9834 = vpop.f32.mrf.mxu0
    %v9835 = vadd.f32 %v9796, %v9834
    %v9836 = vpop.f32.mrf.mxu0
    %v9837 = vadd.f32 %v9798, %v9836
    %9838 = vdwg.mxu0
    %9839 = vmatpush.bf16.msra.mxu0 %v8485
    %9840 = vmatpush.bf16.msra.mxu0 %v8484
    %9841 = vmatpush.bf16.msra.mxu0 %v8483
    %9842 = vmatpush.bf16.msra.mxu0 %v8482
    %9843 = vmatpush.bf16.msra.mxu0 %v8481
    %9844 = vmatpush.bf16.msra.mxu0 %v8480
    %9845 = vmatpush.bf16.msra.mxu0 %v8479
    %9846 = vmatpush.bf16.msra.mxu0 %v8478
    %9847 = vmatmul.bf16.gmra.mxu0 %v6593
    %v9848 = vpop.f32.mrf.mxu0
    %v9849 = vadd.f32 %v9810, %v9848
    %v9850 = vpop.f32.mrf.mxu0
    %v9851 = vadd.f32 %v9812, %v9850
    %9852 = vmatmul.bf16.gmra.mxu0 %v6633
    %v9853 = vpop.f32.mrf.mxu0
    %v9854 = vadd.f32 %v9815, %v9853
    %v9855 = vpop.f32.mrf.mxu0
    %v9856 = vadd.f32 %v9817, %v9855
    %9857 = vmatmul.bf16.gmra.mxu0 %v6673
    %v9858 = vpop.f32.mrf.mxu0
    %v9859 = vadd.f32 %v9820, %v9858
    %v9860 = vpop.f32.mrf.mxu0
    %v9861 = vadd.f32 %v9822, %v9860
    %9862 = vmatmul.bf16.gmra.mxu0 %v6713
    %v9863 = vpop.f32.mrf.mxu0
    %v9864 = vadd.f32 %v9825, %v9863
    %v9865 = vpop.f32.mrf.mxu0
    %v9866 = vadd.f32 %v9827, %v9865
    %9867 = vmatmul.bf16.gmra.mxu0 %v6753
    %v9868 = vpop.f32.mrf.mxu0
    %v9869 = vadd.f32 %v9830, %v9868
    %v9870 = vpop.f32.mrf.mxu0
    %v9871 = vadd.f32 %v9832, %v9870
    %9872 = vmatmul.bf16.gmra.mxu0 %v6793
    %v9873 = vpop.f32.mrf.mxu0
    %v9874 = vadd.f32 %v9835, %v9873
    %v9875 = vpop.f32.mrf.mxu0
    %v9876 = vadd.f32 %v9837, %v9875
    %9877 = vdwg.mxu0
    %9878 = vmatpush.bf16.msra.mxu0 %v8493
    %9879 = vmatpush.bf16.msra.mxu0 %v8492
    %9880 = vmatpush.bf16.msra.mxu0 %v8491
    %9881 = vmatpush.bf16.msra.mxu0 %v8490
    %9882 = vmatpush.bf16.msra.mxu0 %v8489
    %9883 = vmatpush.bf16.msra.mxu0 %v8488
    %9884 = vmatpush.bf16.msra.mxu0 %v8487
    %9885 = vmatpush.bf16.msra.mxu0 %v8486
    %9886 = vmatmul.bf16.gmra.mxu0 %v6594
    %v9887 = vpop.f32.mrf.mxu0
    %v9888 = vadd.f32 %v9849, %v9887
    %v9889 = vpop.f32.mrf.mxu0
    %v9890 = vadd.f32 %v9851, %v9889
    %9891 = vmatmul.bf16.gmra.mxu0 %v6634
    %v9892 = vpop.f32.mrf.mxu0
    %v9893 = vadd.f32 %v9854, %v9892
    %v9894 = vpop.f32.mrf.mxu0
    %v9895 = vadd.f32 %v9856, %v9894
    %9896 = vmatmul.bf16.gmra.mxu0 %v6674
    %v9897 = vpop.f32.mrf.mxu0
    %v9898 = vadd.f32 %v9859, %v9897
    %v9899 = vpop.f32.mrf.mxu0
    %v9900 = vadd.f32 %v9861, %v9899
    %9901 = vmatmul.bf16.gmra.mxu0 %v6714
    %v9902 = vpop.f32.mrf.mxu0
    %v9903 = vadd.f32 %v9864, %v9902
    %v9904 = vpop.f32.mrf.mxu0
    %v9905 = vadd.f32 %v9866, %v9904
    %9906 = vmatmul.bf16.gmra.mxu0 %v6754
    %v9907 = vpop.f32.mrf.mxu0
    %v9908 = vadd.f32 %v9869, %v9907
    %v9909 = vpop.f32.mrf.mxu0
    %v9910 = vadd.f32 %v9871, %v9909
    %9911 = vmatmul.bf16.gmra.mxu0 %v6794
    %v9912 = vpop.f32.mrf.mxu0
    %v9913 = vadd.f32 %v9874, %v9912
    %v9914 = vpop.f32.mrf.mxu0
    %v9915 = vadd.f32 %v9876, %v9914
    %9916 = vdwg.mxu0
    %9917 = vmatpush.bf16.msra.mxu0 %v8501
    %9918 = vmatpush.bf16.msra.mxu0 %v8500
    %9919 = vmatpush.bf16.msra.mxu0 %v8499
    %9920 = vmatpush.bf16.msra.mxu0 %v8498
    %9921 = vmatpush.bf16.msra.mxu0 %v8497
    %9922 = vmatpush.bf16.msra.mxu0 %v8496
    %9923 = vmatpush.bf16.msra.mxu0 %v8495
    %9924 = vmatpush.bf16.msra.mxu0 %v8494
    %9925 = vmatmul.bf16.gmra.mxu0 %v6595
    %v9926 = vpop.f32.mrf.mxu0
    %v9927 = vadd.f32 %v9888, %v9926
    %v9928 = vpop.f32.mrf.mxu0
    %v9929 = vadd.f32 %v9890, %v9928
    %9930 = vmatmul.bf16.gmra.mxu0 %v6635
    %v9931 = vpop.f32.mrf.mxu0
    %v9932 = vadd.f32 %v9893, %v9931
    %v9933 = vpop.f32.mrf.mxu0
    %v9934 = vadd.f32 %v9895, %v9933
    %9935 = vmatmul.bf16.gmra.mxu0 %v6675
    %v9936 = vpop.f32.mrf.mxu0
    %v9937 = vadd.f32 %v9898, %v9936
    %v9938 = vpop.f32.mrf.mxu0
    %v9939 = vadd.f32 %v9900, %v9938
    %9940 = vmatmul.bf16.gmra.mxu0 %v6715
    %v9941 = vpop.f32.mrf.mxu0
    %v9942 = vadd.f32 %v9903, %v9941
    %v9943 = vpop.f32.mrf.mxu0
    %v9944 = vadd.f32 %v9905, %v9943
    %9945 = vmatmul.bf16.gmra.mxu0 %v6755
    %v9946 = vpop.f32.mrf.mxu0
    %v9947 = vadd.f32 %v9908, %v9946
    %v9948 = vpop.f32.mrf.mxu0
    %v9949 = vadd.f32 %v9910, %v9948
    %9950 = vmatmul.bf16.gmra.mxu0 %v6795
    %v9951 = vpop.f32.mrf.mxu0
    %v9952 = vadd.f32 %v9913, %v9951
    %v9953 = vpop.f32.mrf.mxu0
    %v9954 = vadd.f32 %v9915, %v9953
    %9955 = vdwg.mxu0
    %9956 = vmatpush.bf16.msra.mxu0 %v8509
    %9957 = vmatpush.bf16.msra.mxu0 %v8508
    %9958 = vmatpush.bf16.msra.mxu0 %v8507
    %9959 = vmatpush.bf16.msra.mxu0 %v8506
    %9960 = vmatpush.bf16.msra.mxu0 %v8505
    %9961 = vmatpush.bf16.msra.mxu0 %v8504
    %9962 = vmatpush.bf16.msra.mxu0 %v8503
    %9963 = vmatpush.bf16.msra.mxu0 %v8502
    %9964 = vmatmul.bf16.gmra.mxu0 %v6596
    %v9965 = vpop.f32.mrf.mxu0
    %v9966 = vadd.f32 %v9927, %v9965
    %v9967 = vpop.f32.mrf.mxu0
    %v9968 = vadd.f32 %v9929, %v9967
    %9969 = vmatmul.bf16.gmra.mxu0 %v6636
    %v9970 = vpop.f32.mrf.mxu0
    %v9971 = vadd.f32 %v9932, %v9970
    %v9972 = vpop.f32.mrf.mxu0
    %v9973 = vadd.f32 %v9934, %v9972
    %9974 = vmatmul.bf16.gmra.mxu0 %v6676
    %v9975 = vpop.f32.mrf.mxu0
    %v9976 = vadd.f32 %v9937, %v9975
    %v9977 = vpop.f32.mrf.mxu0
    %v9978 = vadd.f32 %v9939, %v9977
    %9979 = vmatmul.bf16.gmra.mxu0 %v6716
    %v9980 = vpop.f32.mrf.mxu0
    %v9981 = vadd.f32 %v9942, %v9980
    %v9982 = vpop.f32.mrf.mxu0
    %v9983 = vadd.f32 %v9944, %v9982
    %9984 = vmatmul.bf16.gmra.mxu0 %v6756
    %v9985 = vpop.f32.mrf.mxu0
    %v9986 = vadd.f32 %v9947, %v9985
    %v9987 = vpop.f32.mrf.mxu0
    %v9988 = vadd.f32 %v9949, %v9987
    %9989 = vmatmul.bf16.gmra.mxu0 %v6796
    %v9990 = vpop.f32.mrf.mxu0
    %v9991 = vadd.f32 %v9952, %v9990
    %v9992 = vpop.f32.mrf.mxu0
    %v9993 = vadd.f32 %v9954, %v9992
    %9994 = vdwg.mxu0
    %9995 = vmatpush.bf16.msra.mxu0 %v8517
    %9996 = vmatpush.bf16.msra.mxu0 %v8516
    %9997 = vmatpush.bf16.msra.mxu0 %v8515
    %9998 = vmatpush.bf16.msra.mxu0 %v8514
    %9999 = vmatpush.bf16.msra.mxu0 %v8513
    %10000 = vmatpush.bf16.msra.mxu0 %v8512
    %10001 = vmatpush.bf16.msra.mxu0 %v8511
    %10002 = vmatpush.bf16.msra.mxu0 %v8510
    %10003 = vmatmul.bf16.gmra.mxu0 %v6597
    %v10004 = vpop.f32.mrf.mxu0
    %v10005 = vadd.f32 %v9966, %v10004
    %v10006 = vpop.f32.mrf.mxu0
    %v10007 = vadd.f32 %v9968, %v10006
    %10008 = vmatmul.bf16.gmra.mxu0 %v6637
    %v10009 = vpop.f32.mrf.mxu0
    %v10010 = vadd.f32 %v9971, %v10009
    %v10011 = vpop.f32.mrf.mxu0
    %v10012 = vadd.f32 %v9973, %v10011
    %10013 = vmatmul.bf16.gmra.mxu0 %v6677
    %v10014 = vpop.f32.mrf.mxu0
    %v10015 = vadd.f32 %v9976, %v10014
    %v10016 = vpop.f32.mrf.mxu0
    %v10017 = vadd.f32 %v9978, %v10016
    %10018 = vmatmul.bf16.gmra.mxu0 %v6717
    %v10019 = vpop.f32.mrf.mxu0
    %v10020 = vadd.f32 %v9981, %v10019
    %v10021 = vpop.f32.mrf.mxu0
    %v10022 = vadd.f32 %v9983, %v10021
    %10023 = vmatmul.bf16.gmra.mxu0 %v6757
    %v10024 = vpop.f32.mrf.mxu0
    %v10025 = vadd.f32 %v9986, %v10024
    %v10026 = vpop.f32.mrf.mxu0
    %v10027 = vadd.f32 %v9988, %v10026
    %10028 = vmatmul.bf16.gmra.mxu0 %v6797
    %v10029 = vpop.f32.mrf.mxu0
    %v10030 = vadd.f32 %v9991, %v10029
    %v10031 = vpop.f32.mrf.mxu0
    %v10032 = vadd.f32 %v9993, %v10031
    %10033 = vdwg.mxu0
    %10034 = vmatpush.bf16.msra.mxu0 %v8525
    %10035 = vmatpush.bf16.msra.mxu0 %v8524
    %10036 = vmatpush.bf16.msra.mxu0 %v8523
    %10037 = vmatpush.bf16.msra.mxu0 %v8522
    %10038 = vmatpush.bf16.msra.mxu0 %v8521
    %10039 = vmatpush.bf16.msra.mxu0 %v8520
    %10040 = vmatpush.bf16.msra.mxu0 %v8519
    %10041 = vmatpush.bf16.msra.mxu0 %v8518
    %10042 = vmatmul.bf16.gmra.mxu0 %v6598
    %v10043 = vpop.f32.mrf.mxu0
    %v10044 = vadd.f32 %v10005, %v10043
    %v10045 = vpop.f32.mrf.mxu0
    %v10046 = vadd.f32 %v10007, %v10045
    %10047 = vmatmul.bf16.gmra.mxu0 %v6638
    %v10048 = vpop.f32.mrf.mxu0
    %v10049 = vadd.f32 %v10010, %v10048
    %v10050 = vpop.f32.mrf.mxu0
    %v10051 = vadd.f32 %v10012, %v10050
    %10052 = vmatmul.bf16.gmra.mxu0 %v6678
    %v10053 = vpop.f32.mrf.mxu0
    %v10054 = vadd.f32 %v10015, %v10053
    %v10055 = vpop.f32.mrf.mxu0
    %v10056 = vadd.f32 %v10017, %v10055
    %10057 = vmatmul.bf16.gmra.mxu0 %v6718
    %v10058 = vpop.f32.mrf.mxu0
    %v10059 = vadd.f32 %v10020, %v10058
    %v10060 = vpop.f32.mrf.mxu0
    %v10061 = vadd.f32 %v10022, %v10060
    %10062 = vmatmul.bf16.gmra.mxu0 %v6758
    %v10063 = vpop.f32.mrf.mxu0
    %v10064 = vadd.f32 %v10025, %v10063
    %v10065 = vpop.f32.mrf.mxu0
    %v10066 = vadd.f32 %v10027, %v10065
    %10067 = vmatmul.bf16.gmra.mxu0 %v6798
    %v10068 = vpop.f32.mrf.mxu0
    %v10069 = vadd.f32 %v10030, %v10068
    %v10070 = vpop.f32.mrf.mxu0
    %v10071 = vadd.f32 %v10032, %v10070
    %10072 = vdwg.mxu0
    %10073 = vmatpush.bf16.msra.mxu0 %v8533
    %10074 = vmatpush.bf16.msra.mxu0 %v8532
    %10075 = vmatpush.bf16.msra.mxu0 %v8531
    %10076 = vmatpush.bf16.msra.mxu0 %v8530
    %10077 = vmatpush.bf16.msra.mxu0 %v8529
    %10078 = vmatpush.bf16.msra.mxu0 %v8528
    %10079 = vmatpush.bf16.msra.mxu0 %v8527
    %10080 = vmatpush.bf16.msra.mxu0 %v8526
    %10081 = vmatmul.bf16.gmra.mxu0 %v6599
    %v10082 = vpop.f32.mrf.mxu0
    %v10083 = vadd.f32 %v10044, %v10082
    %v10084 = vpop.f32.mrf.mxu0
    %v10085 = vadd.f32 %v10046, %v10084
    %10086 = vmatmul.bf16.gmra.mxu0 %v6639
    %v10087 = vpop.f32.mrf.mxu0
    %v10088 = vadd.f32 %v10049, %v10087
    %v10089 = vpop.f32.mrf.mxu0
    %v10090 = vadd.f32 %v10051, %v10089
    %10091 = vmatmul.bf16.gmra.mxu0 %v6679
    %v10092 = vpop.f32.mrf.mxu0
    %v10093 = vadd.f32 %v10054, %v10092
    %v10094 = vpop.f32.mrf.mxu0
    %v10095 = vadd.f32 %v10056, %v10094
    %10096 = vmatmul.bf16.gmra.mxu0 %v6719
    %v10097 = vpop.f32.mrf.mxu0
    %v10098 = vadd.f32 %v10059, %v10097
    %v10099 = vpop.f32.mrf.mxu0
    %v10100 = vadd.f32 %v10061, %v10099
    %10101 = vmatmul.bf16.gmra.mxu0 %v6759
    %v10102 = vpop.f32.mrf.mxu0
    %v10103 = vadd.f32 %v10064, %v10102
    %v10104 = vpop.f32.mrf.mxu0
    %v10105 = vadd.f32 %v10066, %v10104
    %10106 = vmatmul.bf16.gmra.mxu0 %v6799
    %v10107 = vpop.f32.mrf.mxu0
    %v10108 = vadd.f32 %v10069, %v10107
    %v10109 = vpop.f32.mrf.mxu0
    %v10110 = vadd.f32 %v10071, %v10109
    %10111 = vdwg.mxu0
    %10112 = vmatpush.bf16.msra.mxu0 %v8541
    %10113 = vmatpush.bf16.msra.mxu0 %v8540
    %10114 = vmatpush.bf16.msra.mxu0 %v8539
    %10115 = vmatpush.bf16.msra.mxu0 %v8538
    %10116 = vmatpush.bf16.msra.mxu0 %v8537
    %10117 = vmatpush.bf16.msra.mxu0 %v8536
    %10118 = vmatpush.bf16.msra.mxu0 %v8535
    %10119 = vmatpush.bf16.msra.mxu0 %v8534
    %10120 = vmatmul.bf16.gmra.mxu0 %v6600
    %v10121 = vpop.f32.mrf.mxu0
    %v10122 = vadd.f32 %v10083, %v10121
    %v10123 = vpop.f32.mrf.mxu0
    %v10124 = vadd.f32 %v10085, %v10123
    %10125 = vmatmul.bf16.gmra.mxu0 %v6640
    %v10126 = vpop.f32.mrf.mxu0
    %v10127 = vadd.f32 %v10088, %v10126
    %v10128 = vpop.f32.mrf.mxu0
    %v10129 = vadd.f32 %v10090, %v10128
    %10130 = vmatmul.bf16.gmra.mxu0 %v6680
    %v10131 = vpop.f32.mrf.mxu0
    %v10132 = vadd.f32 %v10093, %v10131
    %v10133 = vpop.f32.mrf.mxu0
    %v10134 = vadd.f32 %v10095, %v10133
    %10135 = vmatmul.bf16.gmra.mxu0 %v6720
    %v10136 = vpop.f32.mrf.mxu0
    %v10137 = vadd.f32 %v10098, %v10136
    %v10138 = vpop.f32.mrf.mxu0
    %v10139 = vadd.f32 %v10100, %v10138
    %10140 = vmatmul.bf16.gmra.mxu0 %v6760
    %v10141 = vpop.f32.mrf.mxu0
    %v10142 = vadd.f32 %v10103, %v10141
    %v10143 = vpop.f32.mrf.mxu0
    %v10144 = vadd.f32 %v10105, %v10143
    %10145 = vmatmul.bf16.gmra.mxu0 %v6800
    %v10146 = vpop.f32.mrf.mxu0
    %v10147 = vadd.f32 %v10108, %v10146
    %v10148 = vpop.f32.mrf.mxu0
    %v10149 = vadd.f32 %v10110, %v10148
    %10150 = vdwg.mxu0
    %10151 = vmatpush.bf16.msra.mxu0 %v8549
    %10152 = vmatpush.bf16.msra.mxu0 %v8548
    %10153 = vmatpush.bf16.msra.mxu0 %v8547
    %10154 = vmatpush.bf16.msra.mxu0 %v8546
    %10155 = vmatpush.bf16.msra.mxu0 %v8545
    %10156 = vmatpush.bf16.msra.mxu0 %v8544
    %10157 = vmatpush.bf16.msra.mxu0 %v8543
    %10158 = vmatpush.bf16.msra.mxu0 %v8542
    %10159 = vmatmul.bf16.gmra.mxu0 %v6601
    %v10160 = vpop.f32.mrf.mxu0
    %v10161 = vadd.f32 %v10122, %v10160
    %v10162 = vpop.f32.mrf.mxu0
    %v10163 = vadd.f32 %v10124, %v10162
    %10164 = vmatmul.bf16.gmra.mxu0 %v6641
    %v10165 = vpop.f32.mrf.mxu0
    %v10166 = vadd.f32 %v10127, %v10165
    %v10167 = vpop.f32.mrf.mxu0
    %v10168 = vadd.f32 %v10129, %v10167
    %10169 = vmatmul.bf16.gmra.mxu0 %v6681
    %v10170 = vpop.f32.mrf.mxu0
    %v10171 = vadd.f32 %v10132, %v10170
    %v10172 = vpop.f32.mrf.mxu0
    %v10173 = vadd.f32 %v10134, %v10172
    %10174 = vmatmul.bf16.gmra.mxu0 %v6721
    %v10175 = vpop.f32.mrf.mxu0
    %v10176 = vadd.f32 %v10137, %v10175
    %v10177 = vpop.f32.mrf.mxu0
    %v10178 = vadd.f32 %v10139, %v10177
    %10179 = vmatmul.bf16.gmra.mxu0 %v6761
    %v10180 = vpop.f32.mrf.mxu0
    %v10181 = vadd.f32 %v10142, %v10180
    %v10182 = vpop.f32.mrf.mxu0
    %v10183 = vadd.f32 %v10144, %v10182
    %10184 = vmatmul.bf16.gmra.mxu0 %v6801
    %v10185 = vpop.f32.mrf.mxu0
    %v10186 = vadd.f32 %v10147, %v10185
    %v10187 = vpop.f32.mrf.mxu0
    %v10188 = vadd.f32 %v10149, %v10187
    %10189 = vdwg.mxu0
    %10190 = vmatpush.bf16.msra.mxu0 %v8557
    %10191 = vmatpush.bf16.msra.mxu0 %v8556
    %10192 = vmatpush.bf16.msra.mxu0 %v8555
    %10193 = vmatpush.bf16.msra.mxu0 %v8554
    %10194 = vmatpush.bf16.msra.mxu0 %v8553
    %10195 = vmatpush.bf16.msra.mxu0 %v8552
    %10196 = vmatpush.bf16.msra.mxu0 %v8551
    %10197 = vmatpush.bf16.msra.mxu0 %v8550
    %10198 = vmatmul.bf16.gmra.mxu0 %v6602
    %v10199 = vpop.f32.mrf.mxu0
    %v10200 = vadd.f32 %v10161, %v10199
    %v10201 = vpop.f32.mrf.mxu0
    %v10202 = vadd.f32 %v10163, %v10201
    %10203 = vmatmul.bf16.gmra.mxu0 %v6642
    %v10204 = vpop.f32.mrf.mxu0
    %v10205 = vadd.f32 %v10166, %v10204
    %v10206 = vpop.f32.mrf.mxu0
    %v10207 = vadd.f32 %v10168, %v10206
    %10208 = vmatmul.bf16.gmra.mxu0 %v6682
    %v10209 = vpop.f32.mrf.mxu0
    %v10210 = vadd.f32 %v10171, %v10209
    %v10211 = vpop.f32.mrf.mxu0
    %v10212 = vadd.f32 %v10173, %v10211
    %10213 = vmatmul.bf16.gmra.mxu0 %v6722
    %v10214 = vpop.f32.mrf.mxu0
    %v10215 = vadd.f32 %v10176, %v10214
    %v10216 = vpop.f32.mrf.mxu0
    %v10217 = vadd.f32 %v10178, %v10216
    %10218 = vmatmul.bf16.gmra.mxu0 %v6762
    %v10219 = vpop.f32.mrf.mxu0
    %v10220 = vadd.f32 %v10181, %v10219
    %v10221 = vpop.f32.mrf.mxu0
    %v10222 = vadd.f32 %v10183, %v10221
    %10223 = vmatmul.bf16.gmra.mxu0 %v6802
    %v10224 = vpop.f32.mrf.mxu0
    %v10225 = vadd.f32 %v10186, %v10224
    %v10226 = vpop.f32.mrf.mxu0
    %v10227 = vadd.f32 %v10188, %v10226
    %10228 = vdwg.mxu0
    %10229 = vmatpush.bf16.msra.mxu0 %v8565
    %10230 = vmatpush.bf16.msra.mxu0 %v8564
    %10231 = vmatpush.bf16.msra.mxu0 %v8563
    %10232 = vmatpush.bf16.msra.mxu0 %v8562
    %10233 = vmatpush.bf16.msra.mxu0 %v8561
    %10234 = vmatpush.bf16.msra.mxu0 %v8560
    %10235 = vmatpush.bf16.msra.mxu0 %v8559
    %10236 = vmatpush.bf16.msra.mxu0 %v8558
    %10237 = vmatmul.bf16.gmra.mxu0 %v6603
    %v10238 = vpop.f32.mrf.mxu0
    %v10239 = vadd.f32 %v10200, %v10238
    %v10240 = vpop.f32.mrf.mxu0
    %v10241 = vadd.f32 %v10202, %v10240
    %10242 = vmatmul.bf16.gmra.mxu0 %v6643
    %v10243 = vpop.f32.mrf.mxu0
    %v10244 = vadd.f32 %v10205, %v10243
    %v10245 = vpop.f32.mrf.mxu0
    %v10246 = vadd.f32 %v10207, %v10245
    %10247 = vmatmul.bf16.gmra.mxu0 %v6683
    %v10248 = vpop.f32.mrf.mxu0
    %v10249 = vadd.f32 %v10210, %v10248
    %v10250 = vpop.f32.mrf.mxu0
    %v10251 = vadd.f32 %v10212, %v10250
    %10252 = vmatmul.bf16.gmra.mxu0 %v6723
    %v10253 = vpop.f32.mrf.mxu0
    %v10254 = vadd.f32 %v10215, %v10253
    %v10255 = vpop.f32.mrf.mxu0
    %v10256 = vadd.f32 %v10217, %v10255
    %10257 = vmatmul.bf16.gmra.mxu0 %v6763
    %v10258 = vpop.f32.mrf.mxu0
    %v10259 = vadd.f32 %v10220, %v10258
    %v10260 = vpop.f32.mrf.mxu0
    %v10261 = vadd.f32 %v10222, %v10260
    %10262 = vmatmul.bf16.gmra.mxu0 %v6803
    %v10263 = vpop.f32.mrf.mxu0
    %v10264 = vadd.f32 %v10225, %v10263
    %v10265 = vpop.f32.mrf.mxu0
    %v10266 = vadd.f32 %v10227, %v10265
    %10267 = vdwg.mxu0
    %10268 = vmatpush.bf16.msra.mxu0 %v8573
    %10269 = vmatpush.bf16.msra.mxu0 %v8572
    %10270 = vmatpush.bf16.msra.mxu0 %v8571
    %10271 = vmatpush.bf16.msra.mxu0 %v8570
    %10272 = vmatpush.bf16.msra.mxu0 %v8569
    %10273 = vmatpush.bf16.msra.mxu0 %v8568
    %10274 = vmatpush.bf16.msra.mxu0 %v8567
    %10275 = vmatpush.bf16.msra.mxu0 %v8566
    %10276 = vmatmul.bf16.gmra.mxu0 %v6604
    %v10277 = vpop.f32.mrf.mxu0
    %v10278 = vadd.f32 %v10239, %v10277
    %v10279 = vpop.f32.mrf.mxu0
    %v10280 = vadd.f32 %v10241, %v10279
    %10281 = vmatmul.bf16.gmra.mxu0 %v6644
    %v10282 = vpop.f32.mrf.mxu0
    %v10283 = vadd.f32 %v10244, %v10282
    %v10284 = vpop.f32.mrf.mxu0
    %v10285 = vadd.f32 %v10246, %v10284
    %10286 = vmatmul.bf16.gmra.mxu0 %v6684
    %v10287 = vpop.f32.mrf.mxu0
    %v10288 = vadd.f32 %v10249, %v10287
    %v10289 = vpop.f32.mrf.mxu0
    %v10290 = vadd.f32 %v10251, %v10289
    %10291 = vmatmul.bf16.gmra.mxu0 %v6724
    %v10292 = vpop.f32.mrf.mxu0
    %v10293 = vadd.f32 %v10254, %v10292
    %v10294 = vpop.f32.mrf.mxu0
    %v10295 = vadd.f32 %v10256, %v10294
    %10296 = vmatmul.bf16.gmra.mxu0 %v6764
    %v10297 = vpop.f32.mrf.mxu0
    %v10298 = vadd.f32 %v10259, %v10297
    %v10299 = vpop.f32.mrf.mxu0
    %v10300 = vadd.f32 %v10261, %v10299
    %10301 = vmatmul.bf16.gmra.mxu0 %v6804
    %v10302 = vpop.f32.mrf.mxu0
    %v10303 = vadd.f32 %v10264, %v10302
    %v10304 = vpop.f32.mrf.mxu0
    %v10305 = vadd.f32 %v10266, %v10304
    %10306 = vdwg.mxu0
    %10307 = vmatpush.bf16.msra.mxu0 %v8581
    %10308 = vmatpush.bf16.msra.mxu0 %v8580
    %10309 = vmatpush.bf16.msra.mxu0 %v8579
    %10310 = vmatpush.bf16.msra.mxu0 %v8578
    %10311 = vmatpush.bf16.msra.mxu0 %v8577
    %10312 = vmatpush.bf16.msra.mxu0 %v8576
    %10313 = vmatpush.bf16.msra.mxu0 %v8575
    %10314 = vmatpush.bf16.msra.mxu0 %v8574
    %10315 = vmatmul.bf16.gmra.mxu0 %v6605
    %v10316 = vpop.f32.mrf.mxu0
    %v10317 = vadd.f32 %v10278, %v10316
    %v10318 = vpop.f32.mrf.mxu0
    %v10319 = vadd.f32 %v10280, %v10318
    %10320 = vmatmul.bf16.gmra.mxu0 %v6645
    %v10321 = vpop.f32.mrf.mxu0
    %v10322 = vadd.f32 %v10283, %v10321
    %v10323 = vpop.f32.mrf.mxu0
    %v10324 = vadd.f32 %v10285, %v10323
    %10325 = vmatmul.bf16.gmra.mxu0 %v6685
    %v10326 = vpop.f32.mrf.mxu0
    %v10327 = vadd.f32 %v10288, %v10326
    %v10328 = vpop.f32.mrf.mxu0
    %v10329 = vadd.f32 %v10290, %v10328
    %10330 = vmatmul.bf16.gmra.mxu0 %v6725
    %v10331 = vpop.f32.mrf.mxu0
    %v10332 = vadd.f32 %v10293, %v10331
    %v10333 = vpop.f32.mrf.mxu0
    %v10334 = vadd.f32 %v10295, %v10333
    %10335 = vmatmul.bf16.gmra.mxu0 %v6765
    %v10336 = vpop.f32.mrf.mxu0
    %v10337 = vadd.f32 %v10298, %v10336
    %v10338 = vpop.f32.mrf.mxu0
    %v10339 = vadd.f32 %v10300, %v10338
    %10340 = vmatmul.bf16.gmra.mxu0 %v6805
    %v10341 = vpop.f32.mrf.mxu0
    %v10342 = vadd.f32 %v10303, %v10341
    %v10343 = vpop.f32.mrf.mxu0
    %v10344 = vadd.f32 %v10305, %v10343
    %10345 = vdwg.mxu0
    %10346 = vmatpush.bf16.msra.mxu0 %v8589
    %10347 = vmatpush.bf16.msra.mxu0 %v8588
    %10348 = vmatpush.bf16.msra.mxu0 %v8587
    %10349 = vmatpush.bf16.msra.mxu0 %v8586
    %10350 = vmatpush.bf16.msra.mxu0 %v8585
    %10351 = vmatpush.bf16.msra.mxu0 %v8584
    %10352 = vmatpush.bf16.msra.mxu0 %v8583
    %10353 = vmatpush.bf16.msra.mxu0 %v8582
    %10354 = vmatmul.bf16.gmra.mxu0 %v6606
    %v10355 = vpop.f32.mrf.mxu0
    %v10356 = vadd.f32 %v10317, %v10355
    %v10357 = vpop.f32.mrf.mxu0
    %v10358 = vadd.f32 %v10319, %v10357
    %10359 = vmatmul.bf16.gmra.mxu0 %v6646
    %v10360 = vpop.f32.mrf.mxu0
    %v10361 = vadd.f32 %v10322, %v10360
    %v10362 = vpop.f32.mrf.mxu0
    %v10363 = vadd.f32 %v10324, %v10362
    %10364 = vmatmul.bf16.gmra.mxu0 %v6686
    %v10365 = vpop.f32.mrf.mxu0
    %v10366 = vadd.f32 %v10327, %v10365
    %v10367 = vpop.f32.mrf.mxu0
    %v10368 = vadd.f32 %v10329, %v10367
    %10369 = vmatmul.bf16.gmra.mxu0 %v6726
    %v10370 = vpop.f32.mrf.mxu0
    %v10371 = vadd.f32 %v10332, %v10370
    %v10372 = vpop.f32.mrf.mxu0
    %v10373 = vadd.f32 %v10334, %v10372
    %10374 = vmatmul.bf16.gmra.mxu0 %v6766
    %v10375 = vpop.f32.mrf.mxu0
    %v10376 = vadd.f32 %v10337, %v10375
    %v10377 = vpop.f32.mrf.mxu0
    %v10378 = vadd.f32 %v10339, %v10377
    %10379 = vmatmul.bf16.gmra.mxu0 %v6806
    %v10380 = vpop.f32.mrf.mxu0
    %v10381 = vadd.f32 %v10342, %v10380
    %v10382 = vpop.f32.mrf.mxu0
    %v10383 = vadd.f32 %v10344, %v10382
    %10384 = vdwg.mxu0
    %10385 = vmatpush.bf16.msra.mxu0 %v8597
    %10386 = vmatpush.bf16.msra.mxu0 %v8596
    %10387 = vmatpush.bf16.msra.mxu0 %v8595
    %10388 = vmatpush.bf16.msra.mxu0 %v8594
    %10389 = vmatpush.bf16.msra.mxu0 %v8593
    %10390 = vmatpush.bf16.msra.mxu0 %v8592
    %10391 = vmatpush.bf16.msra.mxu0 %v8591
    %10392 = vmatpush.bf16.msra.mxu0 %v8590
    %10393 = vmatmul.bf16.gmra.mxu0 %v6607
    %v10394 = vpop.f32.mrf.mxu0
    %v10395 = vadd.f32 %v10356, %v10394
    %v10396 = vpop.f32.mrf.mxu0
    %v10397 = vadd.f32 %v10358, %v10396
    %10398 = vmatmul.bf16.gmra.mxu0 %v6647
    %v10399 = vpop.f32.mrf.mxu0
    %v10400 = vadd.f32 %v10361, %v10399
    %v10401 = vpop.f32.mrf.mxu0
    %v10402 = vadd.f32 %v10363, %v10401
    %10403 = vmatmul.bf16.gmra.mxu0 %v6687
    %v10404 = vpop.f32.mrf.mxu0
    %v10405 = vadd.f32 %v10366, %v10404
    %v10406 = vpop.f32.mrf.mxu0
    %v10407 = vadd.f32 %v10368, %v10406
    %10408 = vmatmul.bf16.gmra.mxu0 %v6727
    %v10409 = vpop.f32.mrf.mxu0
    %v10410 = vadd.f32 %v10371, %v10409
    %v10411 = vpop.f32.mrf.mxu0
    %v10412 = vadd.f32 %v10373, %v10411
    %10413 = vmatmul.bf16.gmra.mxu0 %v6767
    %v10414 = vpop.f32.mrf.mxu0
    %v10415 = vadd.f32 %v10376, %v10414
    %v10416 = vpop.f32.mrf.mxu0
    %v10417 = vadd.f32 %v10378, %v10416
    %10418 = vmatmul.bf16.gmra.mxu0 %v6807
    %v10419 = vpop.f32.mrf.mxu0
    %v10420 = vadd.f32 %v10381, %v10419
    %v10421 = vpop.f32.mrf.mxu0
    %v10422 = vadd.f32 %v10383, %v10421
    %10423 = vdwg.mxu0
    %10424 = vmatpush.bf16.msra.mxu0 %v8605
    %10425 = vmatpush.bf16.msra.mxu0 %v8604
    %10426 = vmatpush.bf16.msra.mxu0 %v8603
    %10427 = vmatpush.bf16.msra.mxu0 %v8602
    %10428 = vmatpush.bf16.msra.mxu0 %v8601
    %10429 = vmatpush.bf16.msra.mxu0 %v8600
    %10430 = vmatpush.bf16.msra.mxu0 %v8599
    %10431 = vmatpush.bf16.msra.mxu0 %v8598
    %10432 = vmatmul.bf16.gmra.mxu0 %v6608
    %v10433 = vpop.f32.mrf.mxu0
    %v10434 = vadd.f32 %v10395, %v10433
    %v10435 = vpop.f32.mrf.mxu0
    %v10436 = vadd.f32 %v10397, %v10435
    %10437 = vmatmul.bf16.gmra.mxu0 %v6648
    %v10438 = vpop.f32.mrf.mxu0
    %v10439 = vadd.f32 %v10400, %v10438
    %v10440 = vpop.f32.mrf.mxu0
    %v10441 = vadd.f32 %v10402, %v10440
    %10442 = vmatmul.bf16.gmra.mxu0 %v6688
    %v10443 = vpop.f32.mrf.mxu0
    %v10444 = vadd.f32 %v10405, %v10443
    %v10445 = vpop.f32.mrf.mxu0
    %v10446 = vadd.f32 %v10407, %v10445
    %10447 = vmatmul.bf16.gmra.mxu0 %v6728
    %v10448 = vpop.f32.mrf.mxu0
    %v10449 = vadd.f32 %v10410, %v10448
    %v10450 = vpop.f32.mrf.mxu0
    %v10451 = vadd.f32 %v10412, %v10450
    %10452 = vmatmul.bf16.gmra.mxu0 %v6768
    %v10453 = vpop.f32.mrf.mxu0
    %v10454 = vadd.f32 %v10415, %v10453
    %v10455 = vpop.f32.mrf.mxu0
    %v10456 = vadd.f32 %v10417, %v10455
    %10457 = vmatmul.bf16.gmra.mxu0 %v6808
    %v10458 = vpop.f32.mrf.mxu0
    %v10459 = vadd.f32 %v10420, %v10458
    %v10460 = vpop.f32.mrf.mxu0
    %v10461 = vadd.f32 %v10422, %v10460
    %10462 = vdwg.mxu0
    %10463 = vmatpush.bf16.msra.mxu0 0
    %10464 = vmatpush.bf16.msra.mxu0 0
    %10465 = vmatpush.bf16.msra.mxu0 0
    %10466 = vmatpush.bf16.msra.mxu0 0
    %10467 = vmatpush.bf16.msra.mxu0 0
    %10468 = vmatpush.bf16.msra.mxu0 0
    %10469 = vmatpush.bf16.msra.mxu0 0
    %10470 = vmatpush.bf16.msra.mxu0 %v8940
    %10471 = vmatmul.bf16.gmra.mxu0 %v8921
    %v10472 = vpop.f32.mrf.mxu0
    %v10473 = vadd.f32 %v10434, %v10472
    %v10474 = vpop.f32.mrf.mxu0
    %v10475 = vadd.f32 %v10436, %v10474
    %10476 = vmatmul.bf16.gmra.mxu0 %v8924
    %v10477 = vpop.f32.mrf.mxu0
    %v10478 = vadd.f32 %v10439, %v10477
    %v10479 = vpop.f32.mrf.mxu0
    %v10480 = vadd.f32 %v10441, %v10479
    %10481 = vmatmul.bf16.gmra.mxu0 %v8927
    %v10482 = vpop.f32.mrf.mxu0
    %v10483 = vadd.f32 %v10444, %v10482
    %v10484 = vpop.f32.mrf.mxu0
    %v10485 = vadd.f32 %v10446, %v10484
    %10486 = vmatmul.bf16.gmra.mxu0 %v8930
    %v10487 = vpop.f32.mrf.mxu0
    %v10488 = vadd.f32 %v10449, %v10487
    %v10489 = vpop.f32.mrf.mxu0
    %v10490 = vadd.f32 %v10451, %v10489
    %10491 = vmatmul.bf16.gmra.mxu0 %v8933
    %v10492 = vpop.f32.mrf.mxu0
    %v10493 = vadd.f32 %v10454, %v10492
    %v10494 = vpop.f32.mrf.mxu0
    %v10495 = vadd.f32 %v10456, %v10494
    %10496 = vmatmul.bf16.gmra.mxu0 %v8936
    %v10497 = vpop.f32.mrf.mxu0
    %v10498 = vadd.f32 %v10459, %v10497
    %v10499 = vpop.f32.mrf.mxu0
    %v10500 = vadd.f32 %v10461, %v10499
    %10501 = vdwg.mxu0
    %v10502 = vmax.f32 %v10473, 0.0
    %v10503 = vmax.f32 %v10475, 0.0
    %v10504 = vmax.f32 %v10478, 0.0
    %v10505 = vmax.f32 %v10480, 0.0
    %v10506 = vmax.f32 %v10483, 0.0
    %v10507 = vmax.f32 %v10485, 0.0
    %v10508 = vmax.f32 %v10488, 0.0
    %v10509 = vmax.f32 %v10490, 0.0
    %v10510 = vmax.f32 %v10493, 0.0
    %v10511 = vmax.f32 %v10495, 0.0
    %v10512 = vmax.f32 %v10498, 0.0
    %v10513 = vmax.f32 %v10500, 0.0
    %v10514 = vmax.f32 %v10502, %v10505
    %v10515 = vmax.f32 %v10503, %v10506
    %v10516 = vmax.f32 %v10504, %v10507
    %v10517 = vmax.f32 %v10508, %v10511
    %v10518 = vmax.f32 %v10509, %v10512
    %v10519 = vmax.f32 %v10510, %v10513
    %v10520 = vmax.f32 %v10514, %v10517
    %v10521 = vmax.f32 %v10515, %v10518
    %v10522 = vmax.f32 %v10516, %v10519
    %v10523 = vpack.c.bf16 %v10520, %v10520
    %v10524 = vpack.c.bf16 %v10521, %v10521
    %v10525 = vpack.c.bf16 %v10522, %v10522
    %v10526 = vld [vmem:[%s6] sm:$0xff]
    %v10527 = vld [vmem:[%s6 + $0x8] sm:$0xf]
    %v10528 = vld [vmem:[%s6 + $0xc] sm:$0xff]
    %v10529 = vld [vmem:[%s6 + $0x14] sm:$0xf]
    %v10530 = vld [vmem:[%s6 + $0x18] sm:$0xff]
    %v10531 = vld [vmem:[%s6 + $0x20] sm:$0xf]
    %v10532 = vld [vmem:[%s6 + $0x24] sm:$0xff]
    %v10533 = vld [vmem:[%s6 + $0x2c] sm:$0xf]
    %v10534 = vld [vmem:[%s6 + $0x30] sm:$0xff]
    %v10535 = vld [vmem:[%s6 + $0x38] sm:$0xf]
    %v10536 = vld [vmem:[%s6 + $0x3c] sm:$0xff]
    %v10537 = vld [vmem:[%s6 + $0x44] sm:$0xf]
    %v10538 = vld [vmem:[%s6 + $0x48] sm:$0xff]
    %v10539 = vld [vmem:[%s6 + $0x50] sm:$0xf]
    %v10540 = vld [vmem:[%s6 + $0x54] sm:$0xff]
    %v10541 = vld [vmem:[%s6 + $0x5c] sm:$0xf]
    %s10542 = scalar_lea.vmem %s6, 96
    %v10543 = vld [vmem:[%s10542] sm:$0xff]
    %v10544 = vld [vmem:[%s10542 + $0x8] sm:$0xf]
    %v10545 = vld [vmem:[%s10542 + $0xc] sm:$0xff]
    %v10546 = vld [vmem:[%s10542 + $0x14] sm:$0xf]
    %v10547 = vld [vmem:[%s10542 + $0x18] sm:$0xff]
    %v10548 = vld [vmem:[%s10542 + $0x20] sm:$0xf]
    %v10549 = vld [vmem:[%s10542 + $0x24] sm:$0xff]
    %v10550 = vld [vmem:[%s10542 + $0x2c] sm:$0xf]
    %v10551 = vld [vmem:[%s10542 + $0x30] sm:$0xff]
    %v10552 = vld [vmem:[%s10542 + $0x38] sm:$0xf]
    %v10553 = vld [vmem:[%s10542 + $0x3c] sm:$0xff]
    %v10554 = vld [vmem:[%s10542 + $0x44] sm:$0xf]
    %v10555 = vld [vmem:[%s10542 + $0x48] sm:$0xff]
    %v10556 = vld [vmem:[%s10542 + $0x50] sm:$0xf]
    %v10557 = vld [vmem:[%s10542 + $0x54] sm:$0xff]
    %v10558 = vld [vmem:[%s10542 + $0x5c] sm:$0xf]
    %v10560 = vunpack.c.l.b16 %v10523
    %v10561 = vpack.c.b16 %v10560, %v10560
    %v10562 = vrot.slane %v10561, 1
    %v10579 = vunpack.c.l.b16 %v10543
    %v10580 = vunpack.c.h.b16 %v10543
    %v10581 = vunpack.c.l.b16 %v10544
    %v10582 = vunpack.c.l.b16 %v10545
    %v10583 = vunpack.c.h.b16 %v10545
    %v10584 = vunpack.c.l.b16 %v10546
    %v10585 = vunpack.c.l.b16 %v10547
    %v10586 = vunpack.c.h.b16 %v10547
    %v10587 = vunpack.c.l.b16 %v10548
    %v10588 = vunpack.c.l.b16 %v10549
    %v10589 = vunpack.c.h.b16 %v10549
    %v10590 = vunpack.c.l.b16 %v10550
    %v10591 = vunpack.c.l.b16 %v10551
    %v10592 = vunpack.c.h.b16 %v10551
    %v10593 = vunpack.c.l.b16 %v10552
    %v10594 = vunpack.c.l.b16 %v10553
    %v10595 = vunpack.c.h.b16 %v10553
    %v10596 = vunpack.c.l.b16 %v10554
    %v10597 = vunpack.c.l.b16 %v10555
    %v10598 = vunpack.c.h.b16 %v10555
    %v10599 = vunpack.c.l.b16 %v10556
    %v10600 = vunpack.c.l.b16 %v10557
    %v10601 = vunpack.c.h.b16 %v10557
    %v10602 = vunpack.c.l.b16 %v10558
    %v10603 = vpack.c.b16 %v10582, %v10579
    %v10604 = vpack.c.b16 %v10583, %v10580
    %v10605 = vpack.c.b16 %v10584, %v10581
    %v10606 = vpack.c.b16 %v10588, %v10585
    %v10607 = vpack.c.b16 %v10589, %v10586
    %v10608 = vpack.c.b16 %v10590, %v10587
    %v10609 = vpack.c.b16 %v10594, %v10591
    %v10610 = vpack.c.b16 %v10595, %v10592
    %v10611 = vpack.c.b16 %v10596, %v10593
    %v10612 = vpack.c.b16 %v10600, %v10597
    %v10613 = vpack.c.b16 %v10601, %v10598
    %v10614 = vpack.c.b16 %v10602, %v10599
    %v10628 = vsel %vm1073, %v10562, 0
    %10630 = vmatpush.bf16.msra.mxu0 0
    %10631 = vmatpush.bf16.msra.mxu0 0
    %10632 = vmatpush.bf16.msra.mxu0 0
    %10633 = vmatpush.bf16.msra.mxu0 0
    %10634 = vmatpush.bf16.msra.mxu0 %v10612
    %10635 = vmatpush.bf16.msra.mxu0 %v10609
    %10636 = vmatpush.bf16.msra.mxu0 %v10606
    %10637 = vmatpush.bf16.msra.mxu0 %v10603
    %10638 = vmatmul.bf16.gmra.mxu0 %v10628
    %v10639 = vpop.f32.mrf.mxu0
    %v10640 = vadd.f32 0.0, %v10639
    %v10641 = vpop.f32.mrf.mxu0
    %10642 = vdwg.mxu0
    %10643 = vmatpush.bf16.msra.mxu0 0
    %10644 = vmatpush.bf16.msra.mxu0 0
    %10645 = vmatpush.bf16.msra.mxu0 0
    %10646 = vmatpush.bf16.msra.mxu0 0
    %10647 = vmatpush.bf16.msra.mxu0 %v10613
    %10648 = vmatpush.bf16.msra.mxu0 %v10610
    %10649 = vmatpush.bf16.msra.mxu0 %v10607
    %10650 = vmatpush.bf16.msra.mxu0 %v10604
    %10651 = vmatmul.bf16.gmra.mxu0 %v10628
    %v10652 = vpop.f32.mrf.mxu0
    %v10653 = vadd.f32 0.0, %v10652
    %v10654 = vpop.f32.mrf.mxu0
    %10655 = vdwg.mxu0
    %10656 = vmatpush.bf16.msra.mxu0 0
    %10657 = vmatpush.bf16.msra.mxu0 0
    %10658 = vmatpush.bf16.msra.mxu0 0
    %10659 = vmatpush.bf16.msra.mxu0 0
    %10660 = vmatpush.bf16.msra.mxu0 %v10614
    %10661 = vmatpush.bf16.msra.mxu0 %v10611
    %10662 = vmatpush.bf16.msra.mxu0 %v10608
    %10663 = vmatpush.bf16.msra.mxu0 %v10605
    %10664 = vmatmul.bf16.gmra.mxu0 %v10628
    %v10665 = vpop.f32.mrf.mxu0
    %v10666 = vadd.f32 0.0, %v10665
    %v10667 = vpop.f32.mrf.mxu0
    %10668 = vdwg.mxu0
    %v10685 = vunpack.c.l.b16 %v10526
    %v10686 = vunpack.c.h.b16 %v10526
    %v10687 = vunpack.c.l.b16 %v10527
    %v10688 = vunpack.c.l.b16 %v10528
    %v10689 = vunpack.c.h.b16 %v10528
    %v10690 = vunpack.c.l.b16 %v10529
    %v10691 = vunpack.c.l.b16 %v10530
    %v10692 = vunpack.c.h.b16 %v10530
    %v10693 = vunpack.c.l.b16 %v10531
    %v10694 = vunpack.c.l.b16 %v10532
    %v10695 = vunpack.c.h.b16 %v10532
    %v10696 = vunpack.c.l.b16 %v10533
    %v10697 = vunpack.c.l.b16 %v10534
    %v10698 = vunpack.c.h.b16 %v10534
    %v10699 = vunpack.c.l.b16 %v10535
    %v10700 = vunpack.c.l.b16 %v10536
    %v10701 = vunpack.c.h.b16 %v10536
    %v10702 = vunpack.c.l.b16 %v10537
    %v10703 = vunpack.c.l.b16 %v10538
    %v10704 = vunpack.c.h.b16 %v10538
    %v10705 = vunpack.c.l.b16 %v10539
    %v10706 = vunpack.c.l.b16 %v10540
    %v10707 = vunpack.c.h.b16 %v10540
    %v10708 = vunpack.c.l.b16 %v10541
    %v10709 = vpack.c.b16 %v10688, %v10685
    %v10710 = vpack.c.b16 %v10689, %v10686
    %v10711 = vpack.c.b16 %v10690, %v10687
    %v10712 = vpack.c.b16 %v10694, %v10691
    %v10713 = vpack.c.b16 %v10695, %v10692
    %v10714 = vpack.c.b16 %v10696, %v10693
    %v10715 = vpack.c.b16 %v10700, %v10697
    %v10716 = vpack.c.b16 %v10701, %v10698
    %v10717 = vpack.c.b16 %v10702, %v10699
    %v10718 = vpack.c.b16 %v10706, %v10703
    %v10719 = vpack.c.b16 %v10707, %v10704
    %v10720 = vpack.c.b16 %v10708, %v10705
    %v10734 = vsel %vm1073, %v10523, 0
    %10736 = vmatpush.bf16.msra.mxu0 0
    %10737 = vmatpush.bf16.msra.mxu0 0
    %10738 = vmatpush.bf16.msra.mxu0 0
    %10739 = vmatpush.bf16.msra.mxu0 0
    %10740 = vmatpush.bf16.msra.mxu0 %v10718
    %10741 = vmatpush.bf16.msra.mxu0 %v10715
    %10742 = vmatpush.bf16.msra.mxu0 %v10712
    %10743 = vmatpush.bf16.msra.mxu0 %v10709
    %10744 = vmatmul.bf16.gmra.mxu0 %v10734
    %v10745 = vpop.f32.mrf.mxu0
    %v10746 = vadd.f32 %v10640, %v10745
    %v10747 = vpop.f32.mrf.mxu0
    %10748 = vdwg.mxu0
    %10749 = vmatpush.bf16.msra.mxu0 0
    %10750 = vmatpush.bf16.msra.mxu0 0
    %10751 = vmatpush.bf16.msra.mxu0 0
    %10752 = vmatpush.bf16.msra.mxu0 0
    %10753 = vmatpush.bf16.msra.mxu0 %v10719
    %10754 = vmatpush.bf16.msra.mxu0 %v10716
    %10755 = vmatpush.bf16.msra.mxu0 %v10713
    %10756 = vmatpush.bf16.msra.mxu0 %v10710
    %10757 = vmatmul.bf16.gmra.mxu0 %v10734
    %v10758 = vpop.f32.mrf.mxu0
    %v10759 = vadd.f32 %v10653, %v10758
    %v10760 = vpop.f32.mrf.mxu0
    %10761 = vdwg.mxu0
    %10762 = vmatpush.bf16.msra.mxu0 0
    %10763 = vmatpush.bf16.msra.mxu0 0
    %10764 = vmatpush.bf16.msra.mxu0 0
    %10765 = vmatpush.bf16.msra.mxu0 0
    %10766 = vmatpush.bf16.msra.mxu0 %v10720
    %10767 = vmatpush.bf16.msra.mxu0 %v10717
    %10768 = vmatpush.bf16.msra.mxu0 %v10714
    %10769 = vmatpush.bf16.msra.mxu0 %v10711
    %10770 = vmatmul.bf16.gmra.mxu0 %v10734
    %v10771 = vpop.f32.mrf.mxu0
    %v10772 = vadd.f32 %v10666, %v10771
    %v10773 = vpop.f32.mrf.mxu0
    %10774 = vdwg.mxu0
    %s10775 = scalar_lea.vmem %s6, 192
    %v10776 = vld [vmem:[%s10775] sm:$0xff]
    %v10777 = vld [vmem:[%s10775 + $0x8] sm:$0xf]
    %v10778 = vld [vmem:[%s10775 + $0xc] sm:$0xff]
    %v10779 = vld [vmem:[%s10775 + $0x14] sm:$0xf]
    %v10780 = vld [vmem:[%s10775 + $0x18] sm:$0xff]
    %v10781 = vld [vmem:[%s10775 + $0x20] sm:$0xf]
    %v10782 = vld [vmem:[%s10775 + $0x24] sm:$0xff]
    %v10783 = vld [vmem:[%s10775 + $0x2c] sm:$0xf]
    %v10784 = vld [vmem:[%s10775 + $0x30] sm:$0xff]
    %v10785 = vld [vmem:[%s10775 + $0x38] sm:$0xf]
    %v10786 = vld [vmem:[%s10775 + $0x3c] sm:$0xff]
    %v10787 = vld [vmem:[%s10775 + $0x44] sm:$0xf]
    %v10788 = vld [vmem:[%s10775 + $0x48] sm:$0xff]
    %v10789 = vld [vmem:[%s10775 + $0x50] sm:$0xf]
    %v10790 = vld [vmem:[%s10775 + $0x54] sm:$0xff]
    %v10791 = vld [vmem:[%s10775 + $0x5c] sm:$0xf]
    %v10792 = vrot.slane %v10561, 2
    %v10809 = vunpack.c.l.b16 %v10776
    %v10810 = vunpack.c.h.b16 %v10776
    %v10811 = vunpack.c.l.b16 %v10777
    %v10812 = vunpack.c.l.b16 %v10778
    %v10813 = vunpack.c.h.b16 %v10778
    %v10814 = vunpack.c.l.b16 %v10779
    %v10815 = vunpack.c.l.b16 %v10780
    %v10816 = vunpack.c.h.b16 %v10780
    %v10817 = vunpack.c.l.b16 %v10781
    %v10818 = vunpack.c.l.b16 %v10782
    %v10819 = vunpack.c.h.b16 %v10782
    %v10820 = vunpack.c.l.b16 %v10783
    %v10821 = vunpack.c.l.b16 %v10784
    %v10822 = vunpack.c.h.b16 %v10784
    %v10823 = vunpack.c.l.b16 %v10785
    %v10824 = vunpack.c.l.b16 %v10786
    %v10825 = vunpack.c.h.b16 %v10786
    %v10826 = vunpack.c.l.b16 %v10787
    %v10827 = vunpack.c.l.b16 %v10788
    %v10828 = vunpack.c.h.b16 %v10788
    %v10829 = vunpack.c.l.b16 %v10789
    %v10830 = vunpack.c.l.b16 %v10790
    %v10831 = vunpack.c.h.b16 %v10790
    %v10832 = vunpack.c.l.b16 %v10791
    %v10833 = vpack.c.b16 %v10812, %v10809
    %v10834 = vpack.c.b16 %v10813, %v10810
    %v10835 = vpack.c.b16 %v10814, %v10811
    %v10836 = vpack.c.b16 %v10818, %v10815
    %v10837 = vpack.c.b16 %v10819, %v10816
    %v10838 = vpack.c.b16 %v10820, %v10817
    %v10839 = vpack.c.b16 %v10824, %v10821
    %v10840 = vpack.c.b16 %v10825, %v10822
    %v10841 = vpack.c.b16 %v10826, %v10823
    %v10842 = vpack.c.b16 %v10830, %v10827
    %v10843 = vpack.c.b16 %v10831, %v10828
    %v10844 = vpack.c.b16 %v10832, %v10829
    %v10858 = vsel %vm1073, %v10792, 0
    %10860 = vmatpush.bf16.msra.mxu0 0
    %10861 = vmatpush.bf16.msra.mxu0 0
    %10862 = vmatpush.bf16.msra.mxu0 0
    %10863 = vmatpush.bf16.msra.mxu0 0
    %10864 = vmatpush.bf16.msra.mxu0 %v10842
    %10865 = vmatpush.bf16.msra.mxu0 %v10839
    %10866 = vmatpush.bf16.msra.mxu0 %v10836
    %10867 = vmatpush.bf16.msra.mxu0 %v10833
    %10868 = vmatmul.bf16.gmra.mxu0 %v10858
    %v10869 = vpop.f32.mrf.mxu0
    %v10870 = vadd.f32 0.0, %v10869
    %v10871 = vpop.f32.mrf.mxu0
    %10872 = vdwg.mxu0
    %10873 = vmatpush.bf16.msra.mxu0 0
    %10874 = vmatpush.bf16.msra.mxu0 0
    %10875 = vmatpush.bf16.msra.mxu0 0
    %10876 = vmatpush.bf16.msra.mxu0 0
    %10877 = vmatpush.bf16.msra.mxu0 %v10843
    %10878 = vmatpush.bf16.msra.mxu0 %v10840
    %10879 = vmatpush.bf16.msra.mxu0 %v10837
    %10880 = vmatpush.bf16.msra.mxu0 %v10834
    %10881 = vmatmul.bf16.gmra.mxu0 %v10858
    %v10882 = vpop.f32.mrf.mxu0
    %v10883 = vadd.f32 0.0, %v10882
    %v10884 = vpop.f32.mrf.mxu0
    %10885 = vdwg.mxu0
    %10886 = vmatpush.bf16.msra.mxu0 0
    %10887 = vmatpush.bf16.msra.mxu0 0
    %10888 = vmatpush.bf16.msra.mxu0 0
    %10889 = vmatpush.bf16.msra.mxu0 0
    %10890 = vmatpush.bf16.msra.mxu0 %v10844
    %10891 = vmatpush.bf16.msra.mxu0 %v10841
    %10892 = vmatpush.bf16.msra.mxu0 %v10838
    %10893 = vmatpush.bf16.msra.mxu0 %v10835
    %10894 = vmatmul.bf16.gmra.mxu0 %v10858
    %v10895 = vpop.f32.mrf.mxu0
    %v10896 = vadd.f32 0.0, %v10895
    %v10897 = vpop.f32.mrf.mxu0
    %10898 = vdwg.mxu0
    %v10899 = vadd.f32 %v10746, %v10870
    %v10900 = vadd.f32 %v10759, %v10883
    %v10901 = vadd.f32 %v10772, %v10896
    %s10902 = scalar_lea.vmem %s6, 288
    %v10903 = vld [vmem:[%s10902] sm:$0xff]
    %v10904 = vld [vmem:[%s10902 + $0x8] sm:$0xf]
    %v10905 = vld [vmem:[%s10902 + $0xc] sm:$0xff]
    %v10906 = vld [vmem:[%s10902 + $0x14] sm:$0xf]
    %v10907 = vld [vmem:[%s10902 + $0x18] sm:$0xff]
    %v10908 = vld [vmem:[%s10902 + $0x20] sm:$0xf]
    %v10909 = vld [vmem:[%s10902 + $0x24] sm:$0xff]
    %v10910 = vld [vmem:[%s10902 + $0x2c] sm:$0xf]
    %v10911 = vld [vmem:[%s10902 + $0x30] sm:$0xff]
    %v10912 = vld [vmem:[%s10902 + $0x38] sm:$0xf]
    %v10913 = vld [vmem:[%s10902 + $0x3c] sm:$0xff]
    %v10914 = vld [vmem:[%s10902 + $0x44] sm:$0xf]
    %v10915 = vld [vmem:[%s10902 + $0x48] sm:$0xff]
    %v10916 = vld [vmem:[%s10902 + $0x50] sm:$0xf]
    %v10917 = vld [vmem:[%s10902 + $0x54] sm:$0xff]
    %v10918 = vld [vmem:[%s10902 + $0x5c] sm:$0xf]
    %v10919 = vrot.slane %v10561, 3
    %v10936 = vunpack.c.l.b16 %v10903
    %v10937 = vunpack.c.h.b16 %v10903
    %v10938 = vunpack.c.l.b16 %v10904
    %v10939 = vunpack.c.l.b16 %v10905
    %v10940 = vunpack.c.h.b16 %v10905
    %v10941 = vunpack.c.l.b16 %v10906
    %v10942 = vunpack.c.l.b16 %v10907
    %v10943 = vunpack.c.h.b16 %v10907
    %v10944 = vunpack.c.l.b16 %v10908
    %v10945 = vunpack.c.l.b16 %v10909
    %v10946 = vunpack.c.h.b16 %v10909
    %v10947 = vunpack.c.l.b16 %v10910
    %v10948 = vunpack.c.l.b16 %v10911
    %v10949 = vunpack.c.h.b16 %v10911
    %v10950 = vunpack.c.l.b16 %v10912
    %v10951 = vunpack.c.l.b16 %v10913
    %v10952 = vunpack.c.h.b16 %v10913
    %v10953 = vunpack.c.l.b16 %v10914
    %v10954 = vunpack.c.l.b16 %v10915
    %v10955 = vunpack.c.h.b16 %v10915
    %v10956 = vunpack.c.l.b16 %v10916
    %v10957 = vunpack.c.l.b16 %v10917
    %v10958 = vunpack.c.h.b16 %v10917
    %v10959 = vunpack.c.l.b16 %v10918
    %v10960 = vpack.c.b16 %v10939, %v10936
    %v10961 = vpack.c.b16 %v10940, %v10937
    %v10962 = vpack.c.b16 %v10941, %v10938
    %v10963 = vpack.c.b16 %v10945, %v10942
    %v10964 = vpack.c.b16 %v10946, %v10943
    %v10965 = vpack.c.b16 %v10947, %v10944
    %v10966 = vpack.c.b16 %v10951, %v10948
    %v10967 = vpack.c.b16 %v10952, %v10949
    %v10968 = vpack.c.b16 %v10953, %v10950
    %v10969 = vpack.c.b16 %v10957, %v10954
    %v10970 = vpack.c.b16 %v10958, %v10955
    %v10971 = vpack.c.b16 %v10959, %v10956
    %v10985 = vsel %vm1073, %v10919, 0
    %10987 = vmatpush.bf16.msra.mxu0 0
    %10988 = vmatpush.bf16.msra.mxu0 0
    %10989 = vmatpush.bf16.msra.mxu0 0
    %10990 = vmatpush.bf16.msra.mxu0 0
    %10991 = vmatpush.bf16.msra.mxu0 %v10969
    %10992 = vmatpush.bf16.msra.mxu0 %v10966
    %10993 = vmatpush.bf16.msra.mxu0 %v10963
    %10994 = vmatpush.bf16.msra.mxu0 %v10960
    %10995 = vmatmul.bf16.gmra.mxu0 %v10985
    %v10996 = vpop.f32.mrf.mxu0
    %v10997 = vadd.f32 0.0, %v10996
    %v10998 = vpop.f32.mrf.mxu0
    %10999 = vdwg.mxu0
    %11000 = vmatpush.bf16.msra.mxu0 0
    %11001 = vmatpush.bf16.msra.mxu0 0
    %11002 = vmatpush.bf16.msra.mxu0 0
    %11003 = vmatpush.bf16.msra.mxu0 0
    %11004 = vmatpush.bf16.msra.mxu0 %v10970
    %11005 = vmatpush.bf16.msra.mxu0 %v10967
    %11006 = vmatpush.bf16.msra.mxu0 %v10964
    %11007 = vmatpush.bf16.msra.mxu0 %v10961
    %11008 = vmatmul.bf16.gmra.mxu0 %v10985
    %v11009 = vpop.f32.mrf.mxu0
    %v11010 = vadd.f32 0.0, %v11009
    %v11011 = vpop.f32.mrf.mxu0
    %11012 = vdwg.mxu0
    %11013 = vmatpush.bf16.msra.mxu0 0
    %11014 = vmatpush.bf16.msra.mxu0 0
    %11015 = vmatpush.bf16.msra.mxu0 0
    %11016 = vmatpush.bf16.msra.mxu0 0
    %11017 = vmatpush.bf16.msra.mxu0 %v10971
    %11018 = vmatpush.bf16.msra.mxu0 %v10968
    %11019 = vmatpush.bf16.msra.mxu0 %v10965
    %11020 = vmatpush.bf16.msra.mxu0 %v10962
    %11021 = vmatmul.bf16.gmra.mxu0 %v10985
    %v11022 = vpop.f32.mrf.mxu0
    %v11023 = vadd.f32 0.0, %v11022
    %v11024 = vpop.f32.mrf.mxu0
    %11025 = vdwg.mxu0
    %v11026 = vadd.f32 %v10899, %v10997
    %v11027 = vadd.f32 %v10900, %v11010
    %v11028 = vadd.f32 %v10901, %v11023
    %s11029 = scalar_lea.vmem %s6, 384
    %v11030 = vld [vmem:[%s11029] sm:$0xff]
    %v11031 = vld [vmem:[%s11029 + $0x8] sm:$0xf]
    %v11032 = vld [vmem:[%s11029 + $0xc] sm:$0xff]
    %v11033 = vld [vmem:[%s11029 + $0x14] sm:$0xf]
    %v11034 = vld [vmem:[%s11029 + $0x18] sm:$0xff]
    %v11035 = vld [vmem:[%s11029 + $0x20] sm:$0xf]
    %v11036 = vld [vmem:[%s11029 + $0x24] sm:$0xff]
    %v11037 = vld [vmem:[%s11029 + $0x2c] sm:$0xf]
    %v11038 = vld [vmem:[%s11029 + $0x30] sm:$0xff]
    %v11039 = vld [vmem:[%s11029 + $0x38] sm:$0xf]
    %v11040 = vld [vmem:[%s11029 + $0x3c] sm:$0xff]
    %v11041 = vld [vmem:[%s11029 + $0x44] sm:$0xf]
    %v11042 = vld [vmem:[%s11029 + $0x48] sm:$0xff]
    %v11043 = vld [vmem:[%s11029 + $0x50] sm:$0xf]
    %v11044 = vld [vmem:[%s11029 + $0x54] sm:$0xff]
    %v11045 = vld [vmem:[%s11029 + $0x5c] sm:$0xf]
    %v11062 = vunpack.c.l.b16 %v11030
    %v11063 = vunpack.c.h.b16 %v11030
    %v11064 = vunpack.c.l.b16 %v11031
    %v11065 = vunpack.c.l.b16 %v11032
    %v11066 = vunpack.c.h.b16 %v11032
    %v11067 = vunpack.c.l.b16 %v11033
    %v11068 = vunpack.c.l.b16 %v11034
    %v11069 = vunpack.c.h.b16 %v11034
    %v11070 = vunpack.c.l.b16 %v11035
    %v11071 = vunpack.c.l.b16 %v11036
    %v11072 = vunpack.c.h.b16 %v11036
    %v11073 = vunpack.c.l.b16 %v11037
    %v11074 = vunpack.c.l.b16 %v11038
    %v11075 = vunpack.c.h.b16 %v11038
    %v11076 = vunpack.c.l.b16 %v11039
    %v11077 = vunpack.c.l.b16 %v11040
    %v11078 = vunpack.c.h.b16 %v11040
    %v11079 = vunpack.c.l.b16 %v11041
    %v11080 = vunpack.c.l.b16 %v11042
    %v11081 = vunpack.c.h.b16 %v11042
    %v11082 = vunpack.c.l.b16 %v11043
    %v11083 = vunpack.c.l.b16 %v11044
    %v11084 = vunpack.c.h.b16 %v11044
    %v11085 = vunpack.c.l.b16 %v11045
    %v11086 = vpack.c.b16 %v11065, %v11062
    %v11087 = vpack.c.b16 %v11066, %v11063
    %v11088 = vpack.c.b16 %v11067, %v11064
    %v11089 = vpack.c.b16 %v11071, %v11068
    %v11090 = vpack.c.b16 %v11072, %v11069
    %v11091 = vpack.c.b16 %v11073, %v11070
    %v11092 = vpack.c.b16 %v11077, %v11074
    %v11093 = vpack.c.b16 %v11078, %v11075
    %v11094 = vpack.c.b16 %v11079, %v11076
    %v11095 = vpack.c.b16 %v11083, %v11080
    %v11096 = vpack.c.b16 %v11084, %v11081
    %v11097 = vpack.c.b16 %v11085, %v11082
    %v11111 = vsel %vm1073, %v10524, 0
    %11113 = vmatpush.bf16.msra.mxu0 0
    %11114 = vmatpush.bf16.msra.mxu0 0
    %11115 = vmatpush.bf16.msra.mxu0 0
    %11116 = vmatpush.bf16.msra.mxu0 0
    %11117 = vmatpush.bf16.msra.mxu0 %v11095
    %11118 = vmatpush.bf16.msra.mxu0 %v11092
    %11119 = vmatpush.bf16.msra.mxu0 %v11089
    %11120 = vmatpush.bf16.msra.mxu0 %v11086
    %11121 = vmatmul.bf16.gmra.mxu0 %v11111
    %v11122 = vpop.f32.mrf.mxu0
    %v11123 = vadd.f32 0.0, %v11122
    %v11124 = vpop.f32.mrf.mxu0
    %11125 = vdwg.mxu0
    %11126 = vmatpush.bf16.msra.mxu0 0
    %11127 = vmatpush.bf16.msra.mxu0 0
    %11128 = vmatpush.bf16.msra.mxu0 0
    %11129 = vmatpush.bf16.msra.mxu0 0
    %11130 = vmatpush.bf16.msra.mxu0 %v11096
    %11131 = vmatpush.bf16.msra.mxu0 %v11093
    %11132 = vmatpush.bf16.msra.mxu0 %v11090
    %11133 = vmatpush.bf16.msra.mxu0 %v11087
    %11134 = vmatmul.bf16.gmra.mxu0 %v11111
    %v11135 = vpop.f32.mrf.mxu0
    %v11136 = vadd.f32 0.0, %v11135
    %v11137 = vpop.f32.mrf.mxu0
    %11138 = vdwg.mxu0
    %11139 = vmatpush.bf16.msra.mxu0 0
    %11140 = vmatpush.bf16.msra.mxu0 0
    %11141 = vmatpush.bf16.msra.mxu0 0
    %11142 = vmatpush.bf16.msra.mxu0 0
    %11143 = vmatpush.bf16.msra.mxu0 %v11097
    %11144 = vmatpush.bf16.msra.mxu0 %v11094
    %11145 = vmatpush.bf16.msra.mxu0 %v11091
    %11146 = vmatpush.bf16.msra.mxu0 %v11088
    %11147 = vmatmul.bf16.gmra.mxu0 %v11111
    %v11148 = vpop.f32.mrf.mxu0
    %v11149 = vadd.f32 0.0, %v11148
    %v11150 = vpop.f32.mrf.mxu0
    %11151 = vdwg.mxu0
    %v11152 = vadd.f32 %v11026, %v11123
    %v11153 = vadd.f32 %v11027, %v11136
    %v11154 = vadd.f32 %v11028, %v11149
    %s11155 = scalar_lea.vmem %s6, 480
    %v11156 = vld [vmem:[%s11155] sm:$0xff]
    %v11157 = vld [vmem:[%s11155 + $0x8] sm:$0xf]
    %v11158 = vld [vmem:[%s11155 + $0xc] sm:$0xff]
    %v11159 = vld [vmem:[%s11155 + $0x14] sm:$0xf]
    %v11160 = vld [vmem:[%s11155 + $0x18] sm:$0xff]
    %v11161 = vld [vmem:[%s11155 + $0x20] sm:$0xf]
    %v11162 = vld [vmem:[%s11155 + $0x24] sm:$0xff]
    %v11163 = vld [vmem:[%s11155 + $0x2c] sm:$0xf]
    %v11164 = vld [vmem:[%s11155 + $0x30] sm:$0xff]
    %v11165 = vld [vmem:[%s11155 + $0x38] sm:$0xf]
    %v11166 = vld [vmem:[%s11155 + $0x3c] sm:$0xff]
    %v11167 = vld [vmem:[%s11155 + $0x44] sm:$0xf]
    %v11168 = vld [vmem:[%s11155 + $0x48] sm:$0xff]
    %v11169 = vld [vmem:[%s11155 + $0x50] sm:$0xf]
    %v11170 = vld [vmem:[%s11155 + $0x54] sm:$0xff]
    %v11171 = vld [vmem:[%s11155 + $0x5c] sm:$0xf]
    %v11173 = vunpack.c.l.b16 %v10524
    %v11174 = vpack.c.b16 %v11173, %v11173
    %v11175 = vrot.slane %v11174, 1
    %v11192 = vunpack.c.l.b16 %v11156
    %v11193 = vunpack.c.h.b16 %v11156
    %v11194 = vunpack.c.l.b16 %v11157
    %v11195 = vunpack.c.l.b16 %v11158
    %v11196 = vunpack.c.h.b16 %v11158
    %v11197 = vunpack.c.l.b16 %v11159
    %v11198 = vunpack.c.l.b16 %v11160
    %v11199 = vunpack.c.h.b16 %v11160
    %v11200 = vunpack.c.l.b16 %v11161
    %v11201 = vunpack.c.l.b16 %v11162
    %v11202 = vunpack.c.h.b16 %v11162
    %v11203 = vunpack.c.l.b16 %v11163
    %v11204 = vunpack.c.l.b16 %v11164
    %v11205 = vunpack.c.h.b16 %v11164
    %v11206 = vunpack.c.l.b16 %v11165
    %v11207 = vunpack.c.l.b16 %v11166
    %v11208 = vunpack.c.h.b16 %v11166
    %v11209 = vunpack.c.l.b16 %v11167
    %v11210 = vunpack.c.l.b16 %v11168
    %v11211 = vunpack.c.h.b16 %v11168
    %v11212 = vunpack.c.l.b16 %v11169
    %v11213 = vunpack.c.l.b16 %v11170
    %v11214 = vunpack.c.h.b16 %v11170
    %v11215 = vunpack.c.l.b16 %v11171
    %v11216 = vpack.c.b16 %v11195, %v11192
    %v11217 = vpack.c.b16 %v11196, %v11193
    %v11218 = vpack.c.b16 %v11197, %v11194
    %v11219 = vpack.c.b16 %v11201, %v11198
    %v11220 = vpack.c.b16 %v11202, %v11199
    %v11221 = vpack.c.b16 %v11203, %v11200
    %v11222 = vpack.c.b16 %v11207, %v11204
    %v11223 = vpack.c.b16 %v11208, %v11205
    %v11224 = vpack.c.b16 %v11209, %v11206
    %v11225 = vpack.c.b16 %v11213, %v11210
    %v11226 = vpack.c.b16 %v11214, %v11211
    %v11227 = vpack.c.b16 %v11215, %v11212
    %v11241 = vsel %vm1073, %v11175, 0
    %11243 = vmatpush.bf16.msra.mxu0 0
    %11244 = vmatpush.bf16.msra.mxu0 0
    %11245 = vmatpush.bf16.msra.mxu0 0
    %11246 = vmatpush.bf16.msra.mxu0 0
    %11247 = vmatpush.bf16.msra.mxu0 %v11225
    %11248 = vmatpush.bf16.msra.mxu0 %v11222
    %11249 = vmatpush.bf16.msra.mxu0 %v11219
    %11250 = vmatpush.bf16.msra.mxu0 %v11216
    %11251 = vmatmul.bf16.gmra.mxu0 %v11241
    %v11252 = vpop.f32.mrf.mxu0
    %v11253 = vadd.f32 0.0, %v11252
    %v11254 = vpop.f32.mrf.mxu0
    %11255 = vdwg.mxu0
    %11256 = vmatpush.bf16.msra.mxu0 0
    %11257 = vmatpush.bf16.msra.mxu0 0
    %11258 = vmatpush.bf16.msra.mxu0 0
    %11259 = vmatpush.bf16.msra.mxu0 0
    %11260 = vmatpush.bf16.msra.mxu0 %v11226
    %11261 = vmatpush.bf16.msra.mxu0 %v11223
    %11262 = vmatpush.bf16.msra.mxu0 %v11220
    %11263 = vmatpush.bf16.msra.mxu0 %v11217
    %11264 = vmatmul.bf16.gmra.mxu0 %v11241
    %v11265 = vpop.f32.mrf.mxu0
    %v11266 = vadd.f32 0.0, %v11265
    %v11267 = vpop.f32.mrf.mxu0
    %11268 = vdwg.mxu0
    %11269 = vmatpush.bf16.msra.mxu0 0
    %11270 = vmatpush.bf16.msra.mxu0 0
    %11271 = vmatpush.bf16.msra.mxu0 0
    %11272 = vmatpush.bf16.msra.mxu0 0
    %11273 = vmatpush.bf16.msra.mxu0 %v11227
    %11274 = vmatpush.bf16.msra.mxu0 %v11224
    %11275 = vmatpush.bf16.msra.mxu0 %v11221
    %11276 = vmatpush.bf16.msra.mxu0 %v11218
    %11277 = vmatmul.bf16.gmra.mxu0 %v11241
    %v11278 = vpop.f32.mrf.mxu0
    %v11279 = vadd.f32 0.0, %v11278
    %v11280 = vpop.f32.mrf.mxu0
    %11281 = vdwg.mxu0
    %v11282 = vadd.f32 %v11152, %v11253
    %v11283 = vadd.f32 %v11153, %v11266
    %v11284 = vadd.f32 %v11154, %v11279
    %s11285 = scalar_lea.vmem %s6, 576
    %v11286 = vld [vmem:[%s11285] sm:$0xff]
    %v11287 = vld [vmem:[%s11285 + $0x8] sm:$0xf]
    %v11288 = vld [vmem:[%s11285 + $0xc] sm:$0xff]
    %v11289 = vld [vmem:[%s11285 + $0x14] sm:$0xf]
    %v11290 = vld [vmem:[%s11285 + $0x18] sm:$0xff]
    %v11291 = vld [vmem:[%s11285 + $0x20] sm:$0xf]
    %v11292 = vld [vmem:[%s11285 + $0x24] sm:$0xff]
    %v11293 = vld [vmem:[%s11285 + $0x2c] sm:$0xf]
    %v11294 = vld [vmem:[%s11285 + $0x30] sm:$0xff]
    %v11295 = vld [vmem:[%s11285 + $0x38] sm:$0xf]
    %v11296 = vld [vmem:[%s11285 + $0x3c] sm:$0xff]
    %v11297 = vld [vmem:[%s11285 + $0x44] sm:$0xf]
    %v11298 = vld [vmem:[%s11285 + $0x48] sm:$0xff]
    %v11299 = vld [vmem:[%s11285 + $0x50] sm:$0xf]
    %v11300 = vld [vmem:[%s11285 + $0x54] sm:$0xff]
    %v11301 = vld [vmem:[%s11285 + $0x5c] sm:$0xf]
    %v11302 = vrot.slane %v11174, 2
    %v11319 = vunpack.c.l.b16 %v11286
    %v11320 = vunpack.c.h.b16 %v11286
    %v11321 = vunpack.c.l.b16 %v11287
    %v11322 = vunpack.c.l.b16 %v11288
    %v11323 = vunpack.c.h.b16 %v11288
    %v11324 = vunpack.c.l.b16 %v11289
    %v11325 = vunpack.c.l.b16 %v11290
    %v11326 = vunpack.c.h.b16 %v11290
    %v11327 = vunpack.c.l.b16 %v11291
    %v11328 = vunpack.c.l.b16 %v11292
    %v11329 = vunpack.c.h.b16 %v11292
    %v11330 = vunpack.c.l.b16 %v11293
    %v11331 = vunpack.c.l.b16 %v11294
    %v11332 = vunpack.c.h.b16 %v11294
    %v11333 = vunpack.c.l.b16 %v11295
    %v11334 = vunpack.c.l.b16 %v11296
    %v11335 = vunpack.c.h.b16 %v11296
    %v11336 = vunpack.c.l.b16 %v11297
    %v11337 = vunpack.c.l.b16 %v11298
    %v11338 = vunpack.c.h.b16 %v11298
    %v11339 = vunpack.c.l.b16 %v11299
    %v11340 = vunpack.c.l.b16 %v11300
    %v11341 = vunpack.c.h.b16 %v11300
    %v11342 = vunpack.c.l.b16 %v11301
    %v11343 = vpack.c.b16 %v11322, %v11319
    %v11344 = vpack.c.b16 %v11323, %v11320
    %v11345 = vpack.c.b16 %v11324, %v11321
    %v11346 = vpack.c.b16 %v11328, %v11325
    %v11347 = vpack.c.b16 %v11329, %v11326
    %v11348 = vpack.c.b16 %v11330, %v11327
    %v11349 = vpack.c.b16 %v11334, %v11331
    %v11350 = vpack.c.b16 %v11335, %v11332
    %v11351 = vpack.c.b16 %v11336, %v11333
    %v11352 = vpack.c.b16 %v11340, %v11337
    %v11353 = vpack.c.b16 %v11341, %v11338
    %v11354 = vpack.c.b16 %v11342, %v11339
    %v11368 = vsel %vm1073, %v11302, 0
    %11370 = vmatpush.bf16.msra.mxu0 0
    %11371 = vmatpush.bf16.msra.mxu0 0
    %11372 = vmatpush.bf16.msra.mxu0 0
    %11373 = vmatpush.bf16.msra.mxu0 0
    %11374 = vmatpush.bf16.msra.mxu0 %v11352
    %11375 = vmatpush.bf16.msra.mxu0 %v11349
    %11376 = vmatpush.bf16.msra.mxu0 %v11346
    %11377 = vmatpush.bf16.msra.mxu0 %v11343
    %11378 = vmatmul.bf16.gmra.mxu0 %v11368
    %v11379 = vpop.f32.mrf.mxu0
    %v11380 = vadd.f32 0.0, %v11379
    %v11381 = vpop.f32.mrf.mxu0
    %11382 = vdwg.mxu0
    %11383 = vmatpush.bf16.msra.mxu0 0
    %11384 = vmatpush.bf16.msra.mxu0 0
    %11385 = vmatpush.bf16.msra.mxu0 0
    %11386 = vmatpush.bf16.msra.mxu0 0
    %11387 = vmatpush.bf16.msra.mxu0 %v11353
    %11388 = vmatpush.bf16.msra.mxu0 %v11350
    %11389 = vmatpush.bf16.msra.mxu0 %v11347
    %11390 = vmatpush.bf16.msra.mxu0 %v11344
    %11391 = vmatmul.bf16.gmra.mxu0 %v11368
    %v11392 = vpop.f32.mrf.mxu0
    %v11393 = vadd.f32 0.0, %v11392
    %v11394 = vpop.f32.mrf.mxu0
    %11395 = vdwg.mxu0
    %11396 = vmatpush.bf16.msra.mxu0 0
    %11397 = vmatpush.bf16.msra.mxu0 0
    %11398 = vmatpush.bf16.msra.mxu0 0
    %11399 = vmatpush.bf16.msra.mxu0 0
    %11400 = vmatpush.bf16.msra.mxu0 %v11354
    %11401 = vmatpush.bf16.msra.mxu0 %v11351
    %11402 = vmatpush.bf16.msra.mxu0 %v11348
    %11403 = vmatpush.bf16.msra.mxu0 %v11345
    %11404 = vmatmul.bf16.gmra.mxu0 %v11368
    %v11405 = vpop.f32.mrf.mxu0
    %v11406 = vadd.f32 0.0, %v11405
    %v11407 = vpop.f32.mrf.mxu0
    %11408 = vdwg.mxu0
    %v11409 = vadd.f32 %v11282, %v11380
    %v11410 = vadd.f32 %v11283, %v11393
    %v11411 = vadd.f32 %v11284, %v11406
    %s11412 = scalar_lea.vmem %s6, 672
    %v11413 = vld [vmem:[%s11412] sm:$0xff]
    %v11414 = vld [vmem:[%s11412 + $0x8] sm:$0xf]
    %v11415 = vld [vmem:[%s11412 + $0xc] sm:$0xff]
    %v11416 = vld [vmem:[%s11412 + $0x14] sm:$0xf]
    %v11417 = vld [vmem:[%s11412 + $0x18] sm:$0xff]
    %v11418 = vld [vmem:[%s11412 + $0x20] sm:$0xf]
    %v11419 = vld [vmem:[%s11412 + $0x24] sm:$0xff]
    %v11420 = vld [vmem:[%s11412 + $0x2c] sm:$0xf]
    %v11421 = vld [vmem:[%s11412 + $0x30] sm:$0xff]
    %v11422 = vld [vmem:[%s11412 + $0x38] sm:$0xf]
    %v11423 = vld [vmem:[%s11412 + $0x3c] sm:$0xff]
    %v11424 = vld [vmem:[%s11412 + $0x44] sm:$0xf]
    %v11425 = vld [vmem:[%s11412 + $0x48] sm:$0xff]
    %v11426 = vld [vmem:[%s11412 + $0x50] sm:$0xf]
    %v11427 = vld [vmem:[%s11412 + $0x54] sm:$0xff]
    %v11428 = vld [vmem:[%s11412 + $0x5c] sm:$0xf]
    %v11429 = vrot.slane %v11174, 3
    %v11446 = vunpack.c.l.b16 %v11413
    %v11447 = vunpack.c.h.b16 %v11413
    %v11448 = vunpack.c.l.b16 %v11414
    %v11449 = vunpack.c.l.b16 %v11415
    %v11450 = vunpack.c.h.b16 %v11415
    %v11451 = vunpack.c.l.b16 %v11416
    %v11452 = vunpack.c.l.b16 %v11417
    %v11453 = vunpack.c.h.b16 %v11417
    %v11454 = vunpack.c.l.b16 %v11418
    %v11455 = vunpack.c.l.b16 %v11419
    %v11456 = vunpack.c.h.b16 %v11419
    %v11457 = vunpack.c.l.b16 %v11420
    %v11458 = vunpack.c.l.b16 %v11421
    %v11459 = vunpack.c.h.b16 %v11421
    %v11460 = vunpack.c.l.b16 %v11422
    %v11461 = vunpack.c.l.b16 %v11423
    %v11462 = vunpack.c.h.b16 %v11423
    %v11463 = vunpack.c.l.b16 %v11424
    %v11464 = vunpack.c.l.b16 %v11425
    %v11465 = vunpack.c.h.b16 %v11425
    %v11466 = vunpack.c.l.b16 %v11426
    %v11467 = vunpack.c.l.b16 %v11427
    %v11468 = vunpack.c.h.b16 %v11427
    %v11469 = vunpack.c.l.b16 %v11428
    %v11470 = vpack.c.b16 %v11449, %v11446
    %v11471 = vpack.c.b16 %v11450, %v11447
    %v11472 = vpack.c.b16 %v11451, %v11448
    %v11473 = vpack.c.b16 %v11455, %v11452
    %v11474 = vpack.c.b16 %v11456, %v11453
    %v11475 = vpack.c.b16 %v11457, %v11454
    %v11476 = vpack.c.b16 %v11461, %v11458
    %v11477 = vpack.c.b16 %v11462, %v11459
    %v11478 = vpack.c.b16 %v11463, %v11460
    %v11479 = vpack.c.b16 %v11467, %v11464
    %v11480 = vpack.c.b16 %v11468, %v11465
    %v11481 = vpack.c.b16 %v11469, %v11466
    %v11495 = vsel %vm1073, %v11429, 0
    %11497 = vmatpush.bf16.msra.mxu0 0
    %11498 = vmatpush.bf16.msra.mxu0 0
    %11499 = vmatpush.bf16.msra.mxu0 0
    %11500 = vmatpush.bf16.msra.mxu0 0
    %11501 = vmatpush.bf16.msra.mxu0 %v11479
    %11502 = vmatpush.bf16.msra.mxu0 %v11476
    %11503 = vmatpush.bf16.msra.mxu0 %v11473
    %11504 = vmatpush.bf16.msra.mxu0 %v11470
    %11505 = vmatmul.bf16.gmra.mxu0 %v11495
    %v11506 = vpop.f32.mrf.mxu0
    %v11507 = vadd.f32 0.0, %v11506
    %v11508 = vpop.f32.mrf.mxu0
    %11509 = vdwg.mxu0
    %11510 = vmatpush.bf16.msra.mxu0 0
    %11511 = vmatpush.bf16.msra.mxu0 0
    %11512 = vmatpush.bf16.msra.mxu0 0
    %11513 = vmatpush.bf16.msra.mxu0 0
    %11514 = vmatpush.bf16.msra.mxu0 %v11480
    %11515 = vmatpush.bf16.msra.mxu0 %v11477
    %11516 = vmatpush.bf16.msra.mxu0 %v11474
    %11517 = vmatpush.bf16.msra.mxu0 %v11471
    %11518 = vmatmul.bf16.gmra.mxu0 %v11495
    %v11519 = vpop.f32.mrf.mxu0
    %v11520 = vadd.f32 0.0, %v11519
    %v11521 = vpop.f32.mrf.mxu0
    %11522 = vdwg.mxu0
    %11523 = vmatpush.bf16.msra.mxu0 0
    %11524 = vmatpush.bf16.msra.mxu0 0
    %11525 = vmatpush.bf16.msra.mxu0 0
    %11526 = vmatpush.bf16.msra.mxu0 0
    %11527 = vmatpush.bf16.msra.mxu0 %v11481
    %11528 = vmatpush.bf16.msra.mxu0 %v11478
    %11529 = vmatpush.bf16.msra.mxu0 %v11475
    %11530 = vmatpush.bf16.msra.mxu0 %v11472
    %11531 = vmatmul.bf16.gmra.mxu0 %v11495
    %v11532 = vpop.f32.mrf.mxu0
    %v11533 = vadd.f32 0.0, %v11532
    %v11534 = vpop.f32.mrf.mxu0
    %11535 = vdwg.mxu0
    %v11536 = vadd.f32 %v11409, %v11507
    %v11537 = vadd.f32 %v11410, %v11520
    %v11538 = vadd.f32 %v11411, %v11533
    %s11539 = scalar_lea.vmem %s6, 768
    %v11540 = vld [vmem:[%s11539] sm:$0xff]
    %v11541 = vld [vmem:[%s11539 + $0x8] sm:$0xf]
    %v11542 = vld [vmem:[%s11539 + $0xc] sm:$0xff]
    %v11543 = vld [vmem:[%s11539 + $0x14] sm:$0xf]
    %v11544 = vld [vmem:[%s11539 + $0x18] sm:$0xff]
    %v11545 = vld [vmem:[%s11539 + $0x20] sm:$0xf]
    %v11546 = vld [vmem:[%s11539 + $0x24] sm:$0xff]
    %v11547 = vld [vmem:[%s11539 + $0x2c] sm:$0xf]
    %v11548 = vld [vmem:[%s11539 + $0x30] sm:$0xff]
    %v11549 = vld [vmem:[%s11539 + $0x38] sm:$0xf]
    %v11550 = vld [vmem:[%s11539 + $0x3c] sm:$0xff]
    %v11551 = vld [vmem:[%s11539 + $0x44] sm:$0xf]
    %v11552 = vld [vmem:[%s11539 + $0x48] sm:$0xff]
    %v11553 = vld [vmem:[%s11539 + $0x50] sm:$0xf]
    %v11554 = vld [vmem:[%s11539 + $0x54] sm:$0xff]
    %v11555 = vld [vmem:[%s11539 + $0x5c] sm:$0xf]
    %v11572 = vunpack.c.l.b16 %v11540
    %v11573 = vunpack.c.h.b16 %v11540
    %v11574 = vunpack.c.l.b16 %v11541
    %v11575 = vunpack.c.l.b16 %v11542
    %v11576 = vunpack.c.h.b16 %v11542
    %v11577 = vunpack.c.l.b16 %v11543
    %v11578 = vunpack.c.l.b16 %v11544
    %v11579 = vunpack.c.h.b16 %v11544
    %v11580 = vunpack.c.l.b16 %v11545
    %v11581 = vunpack.c.l.b16 %v11546
    %v11582 = vunpack.c.h.b16 %v11546
    %v11583 = vunpack.c.l.b16 %v11547
    %v11584 = vunpack.c.l.b16 %v11548
    %v11585 = vunpack.c.h.b16 %v11548
    %v11586 = vunpack.c.l.b16 %v11549
    %v11587 = vunpack.c.l.b16 %v11550
    %v11588 = vunpack.c.h.b16 %v11550
    %v11589 = vunpack.c.l.b16 %v11551
    %v11590 = vunpack.c.l.b16 %v11552
    %v11591 = vunpack.c.h.b16 %v11552
    %v11592 = vunpack.c.l.b16 %v11553
    %v11593 = vunpack.c.l.b16 %v11554
    %v11594 = vunpack.c.h.b16 %v11554
    %v11595 = vunpack.c.l.b16 %v11555
    %v11596 = vpack.c.b16 %v11575, %v11572
    %v11597 = vpack.c.b16 %v11576, %v11573
    %v11598 = vpack.c.b16 %v11577, %v11574
    %v11599 = vpack.c.b16 %v11581, %v11578
    %v11600 = vpack.c.b16 %v11582, %v11579
    %v11601 = vpack.c.b16 %v11583, %v11580
    %v11602 = vpack.c.b16 %v11587, %v11584
    %v11603 = vpack.c.b16 %v11588, %v11585
    %v11604 = vpack.c.b16 %v11589, %v11586
    %v11605 = vpack.c.b16 %v11593, %v11590
    %v11606 = vpack.c.b16 %v11594, %v11591
    %v11607 = vpack.c.b16 %v11595, %v11592
    %v11621 = vsel %vm1073, %v10525, 0
    %11623 = vmatpush.bf16.msra.mxu0 0
    %11624 = vmatpush.bf16.msra.mxu0 0
    %11625 = vmatpush.bf16.msra.mxu0 0
    %11626 = vmatpush.bf16.msra.mxu0 0
    %11627 = vmatpush.bf16.msra.mxu0 %v11605
    %11628 = vmatpush.bf16.msra.mxu0 %v11602
    %11629 = vmatpush.bf16.msra.mxu0 %v11599
    %11630 = vmatpush.bf16.msra.mxu0 %v11596
    %11631 = vmatmul.bf16.gmra.mxu0 %v11621
    %v11632 = vpop.f32.mrf.mxu0
    %v11633 = vadd.f32 0.0, %v11632
    %v11634 = vpop.f32.mrf.mxu0
    %11635 = vdwg.mxu0
    %11636 = vmatpush.bf16.msra.mxu0 0
    %11637 = vmatpush.bf16.msra.mxu0 0
    %11638 = vmatpush.bf16.msra.mxu0 0
    %11639 = vmatpush.bf16.msra.mxu0 0
    %11640 = vmatpush.bf16.msra.mxu0 %v11606
    %11641 = vmatpush.bf16.msra.mxu0 %v11603
    %11642 = vmatpush.bf16.msra.mxu0 %v11600
    %11643 = vmatpush.bf16.msra.mxu0 %v11597
    %11644 = vmatmul.bf16.gmra.mxu0 %v11621
    %v11645 = vpop.f32.mrf.mxu0
    %v11646 = vadd.f32 0.0, %v11645
    %v11647 = vpop.f32.mrf.mxu0
    %11648 = vdwg.mxu0
    %11649 = vmatpush.bf16.msra.mxu0 0
    %11650 = vmatpush.bf16.msra.mxu0 0
    %11651 = vmatpush.bf16.msra.mxu0 0
    %11652 = vmatpush.bf16.msra.mxu0 0
    %11653 = vmatpush.bf16.msra.mxu0 %v11607
    %11654 = vmatpush.bf16.msra.mxu0 %v11604
    %11655 = vmatpush.bf16.msra.mxu0 %v11601
    %11656 = vmatpush.bf16.msra.mxu0 %v11598
    %11657 = vmatmul.bf16.gmra.mxu0 %v11621
    %v11658 = vpop.f32.mrf.mxu0
    %v11659 = vadd.f32 0.0, %v11658
    %v11660 = vpop.f32.mrf.mxu0
    %11661 = vdwg.mxu0
    %v11662 = vadd.f32 %v11536, %v11633
    %v11663 = vadd.f32 %v11537, %v11646
    %v11664 = vadd.f32 %v11538, %v11659
    %v11665 = vld [vmem:[%s7] sm:$0x7]
    %v11667 = vperm.slane %v11665, 0
    %v11668 = vperm.slane %v11665, 1
    %v11669 = vperm.slane %v11665, 2
    %v11673 = vadd.f32 %v11662, %v11667
    %v11674 = vadd.f32 %v11663, %v11668
    %v11675 = vadd.f32 %v11664, %v11669
    %v11676 = vmax.f32 %v11673, 0.0
    %v11677 = vmax.f32 %v11674, 0.0
    %v11678 = vmax.f32 %v11675, 0.0
    %v11679 = vpack.c.bf16 %v11676, %v11676
    %v11680 = vpack.c.bf16 %v11677, %v11677
    %v11681 = vpack.c.bf16 %v11678, %v11678
    %v11682 = vld [vmem:[%s8] sm:$0xff]
    %v11683 = vld [vmem:[%s8 + $0x8] sm:$0xff]
    %v11684 = vld [vmem:[%s8 + $0x10] sm:$0xff]
    %v11685 = vld [vmem:[%s8 + $0x18] sm:$0xff]
    %v11686 = vld [vmem:[%s8 + $0x20] sm:$0xff]
    %v11687 = vld [vmem:[%s8 + $0x28] sm:$0xff]
    %v11688 = vld [vmem:[%s8 + $0x30] sm:$0xff]
    %v11689 = vld [vmem:[%s8 + $0x38] sm:$0xff]
    %v11690 = vld [vmem:[%s8 + $0x40] sm:$0xff]
    %v11691 = vld [vmem:[%s8 + $0x48] sm:$0xff]
    %v11692 = vld [vmem:[%s8 + $0x50] sm:$0xff]
    %v11693 = vld [vmem:[%s8 + $0x58] sm:$0xff]
    %v11694 = vld [vmem:[%s8 + $0x60] sm:$0xff]
    %v11695 = vld [vmem:[%s8 + $0x68] sm:$0xff]
    %v11696 = vld [vmem:[%s8 + $0x70] sm:$0xff]
    %v11697 = vld [vmem:[%s8 + $0x78] sm:$0xff]
    %v11698 = vld [vmem:[%s8 + $0x80] sm:$0xff]
    %v11699 = vld [vmem:[%s8 + $0x88] sm:$0xff]
    %v11700 = vld [vmem:[%s8 + $0x90] sm:$0xff]
    %v11701 = vld [vmem:[%s8 + $0x98] sm:$0xff]
    %v11702 = vld [vmem:[%s8 + $0xa0] sm:$0xff]
    %v11703 = vld [vmem:[%s8 + $0xa8] sm:$0xff]
    %v11704 = vld [vmem:[%s8 + $0xb0] sm:$0xff]
    %v11705 = vld [vmem:[%s8 + $0xb8] sm:$0xff]
    %v11706 = vld [vmem:[%s8 + $0xc0] sm:$0xff]
    %v11707 = vld [vmem:[%s8 + $0xc8] sm:$0xff]
    %v11708 = vld [vmem:[%s8 + $0xd0] sm:$0xff]
    %v11709 = vld [vmem:[%s8 + $0xd8] sm:$0xff]
    %v11710 = vld [vmem:[%s8 + $0xe0] sm:$0xff]
    %v11711 = vld [vmem:[%s8 + $0xe8] sm:$0xff]
    %v11712 = vld [vmem:[%s8 + $0xf0] sm:$0xff]
    %v11713 = vld [vmem:[%s8 + $0xf8] sm:$0xff]
    %v11714 = vld [vmem:[%s8 + $0x100] sm:$0xff]
    %v11715 = vld [vmem:[%s8 + $0x108] sm:$0xff]
    %v11716 = vld [vmem:[%s8 + $0x110] sm:$0xff]
    %v11717 = vld [vmem:[%s8 + $0x118] sm:$0xff]
    %v11718 = vld [vmem:[%s8 + $0x120] sm:$0xff]
    %v11719 = vld [vmem:[%s8 + $0x128] sm:$0xff]
    %v11720 = vld [vmem:[%s8 + $0x130] sm:$0xff]
    %v11721 = vld [vmem:[%s8 + $0x138] sm:$0xff]
    %v11722 = vld [vmem:[%s8 + $0x140] sm:$0xff]
    %v11723 = vld [vmem:[%s8 + $0x148] sm:$0xff]
    %v11724 = vld [vmem:[%s8 + $0x150] sm:$0xff]
    %v11725 = vld [vmem:[%s8 + $0x158] sm:$0xff]
    %v11726 = vld [vmem:[%s8 + $0x160] sm:$0xff]
    %v11727 = vld [vmem:[%s8 + $0x168] sm:$0xff]
    %v11728 = vld [vmem:[%s8 + $0x170] sm:$0xff]
    %v11729 = vld [vmem:[%s8 + $0x178] sm:$0xff]
    %v11730 = vld [vmem:[%s9] sm:$0x3]
    %v11732 = vperm.slane %v11730, 0
    %v11733 = vperm.slane %v11730, 1
    %v11784 = vunpack.c.l.b16 %v11682
    %v11785 = vunpack.c.h.b16 %v11682
    %v11786 = vunpack.c.l.b16 %v11683
    %v11787 = vunpack.c.h.b16 %v11683
    %v11788 = vunpack.c.l.b16 %v11684
    %v11789 = vunpack.c.h.b16 %v11684
    %v11790 = vunpack.c.l.b16 %v11685
    %v11791 = vunpack.c.h.b16 %v11685
    %v11792 = vunpack.c.l.b16 %v11686
    %v11793 = vunpack.c.h.b16 %v11686
    %v11794 = vunpack.c.l.b16 %v11687
    %v11795 = vunpack.c.h.b16 %v11687
    %v11796 = vunpack.c.l.b16 %v11688
    %v11797 = vunpack.c.h.b16 %v11688
    %v11798 = vunpack.c.l.b16 %v11689
    %v11799 = vunpack.c.h.b16 %v11689
    %v11800 = vunpack.c.l.b16 %v11690
    %v11801 = vunpack.c.h.b16 %v11690
    %v11802 = vunpack.c.l.b16 %v11691
    %v11803 = vunpack.c.h.b16 %v11691
    %v11804 = vunpack.c.l.b16 %v11692
    %v11805 = vunpack.c.h.b16 %v11692
    %v11806 = vunpack.c.l.b16 %v11693
    %v11807 = vunpack.c.h.b16 %v11693
    %v11808 = vunpack.c.l.b16 %v11694
    %v11809 = vunpack.c.h.b16 %v11694
    %v11810 = vunpack.c.l.b16 %v11695
    %v11811 = vunpack.c.h.b16 %v11695
    %v11812 = vunpack.c.l.b16 %v11696
    %v11813 = vunpack.c.h.b16 %v11696
    %v11814 = vunpack.c.l.b16 %v11697
    %v11815 = vunpack.c.h.b16 %v11697
    %v11816 = vunpack.c.l.b16 %v11698
    %v11817 = vunpack.c.h.b16 %v11698
    %v11818 = vunpack.c.l.b16 %v11699
    %v11819 = vunpack.c.h.b16 %v11699
    %v11820 = vunpack.c.l.b16 %v11700
    %v11821 = vunpack.c.h.b16 %v11700
    %v11822 = vunpack.c.l.b16 %v11701
    %v11823 = vunpack.c.h.b16 %v11701
    %v11824 = vunpack.c.l.b16 %v11702
    %v11825 = vunpack.c.h.b16 %v11702
    %v11826 = vunpack.c.l.b16 %v11703
    %v11827 = vunpack.c.h.b16 %v11703
    %v11828 = vunpack.c.l.b16 %v11704
    %v11829 = vunpack.c.h.b16 %v11704
    %v11830 = vunpack.c.l.b16 %v11705
    %v11831 = vunpack.c.h.b16 %v11705
    %v11832 = vunpack.c.l.b16 %v11706
    %v11833 = vunpack.c.h.b16 %v11706
    %v11834 = vunpack.c.l.b16 %v11707
    %v11835 = vunpack.c.h.b16 %v11707
    %v11836 = vunpack.c.l.b16 %v11708
    %v11837 = vunpack.c.h.b16 %v11708
    %v11838 = vunpack.c.l.b16 %v11709
    %v11839 = vunpack.c.h.b16 %v11709
    %v11840 = vunpack.c.l.b16 %v11710
    %v11841 = vunpack.c.h.b16 %v11710
    %v11842 = vunpack.c.l.b16 %v11711
    %v11843 = vunpack.c.h.b16 %v11711
    %v11844 = vunpack.c.l.b16 %v11712
    %v11845 = vunpack.c.h.b16 %v11712
    %v11846 = vunpack.c.l.b16 %v11713
    %v11847 = vunpack.c.h.b16 %v11713
    %v11848 = vunpack.c.l.b16 %v11714
    %v11849 = vunpack.c.h.b16 %v11714
    %v11850 = vunpack.c.l.b16 %v11715
    %v11851 = vunpack.c.h.b16 %v11715
    %v11852 = vunpack.c.l.b16 %v11716
    %v11853 = vunpack.c.h.b16 %v11716
    %v11854 = vunpack.c.l.b16 %v11717
    %v11855 = vunpack.c.h.b16 %v11717
    %v11856 = vunpack.c.l.b16 %v11718
    %v11857 = vunpack.c.h.b16 %v11718
    %v11858 = vunpack.c.l.b16 %v11719
    %v11859 = vunpack.c.h.b16 %v11719
    %v11860 = vunpack.c.l.b16 %v11720
    %v11861 = vunpack.c.h.b16 %v11720
    %v11862 = vunpack.c.l.b16 %v11721
    %v11863 = vunpack.c.h.b16 %v11721
    %v11864 = vunpack.c.l.b16 %v11722
    %v11865 = vunpack.c.h.b16 %v11722
    %v11866 = vunpack.c.l.b16 %v11723
    %v11867 = vunpack.c.h.b16 %v11723
    %v11868 = vunpack.c.l.b16 %v11724
    %v11869 = vunpack.c.h.b16 %v11724
    %v11870 = vunpack.c.l.b16 %v11725
    %v11871 = vunpack.c.h.b16 %v11725
    %v11872 = vunpack.c.l.b16 %v11726
    %v11873 = vunpack.c.h.b16 %v11726
    %v11874 = vunpack.c.l.b16 %v11727
    %v11875 = vunpack.c.h.b16 %v11727
    %v11876 = vunpack.c.l.b16 %v11728
    %v11877 = vunpack.c.h.b16 %v11728
    %v11878 = vunpack.c.l.b16 %v11729
    %v11879 = vunpack.c.h.b16 %v11729
    %v11880 = vpack.c.b16 %v11786, %v11784
    %v11881 = vpack.c.b16 %v11787, %v11785
    %v11882 = vpack.c.b16 %v11790, %v11788
    %v11883 = vpack.c.b16 %v11791, %v11789
    %v11884 = vpack.c.b16 %v11794, %v11792
    %v11885 = vpack.c.b16 %v11795, %v11793
    %v11886 = vpack.c.b16 %v11798, %v11796
    %v11887 = vpack.c.b16 %v11799, %v11797
    %v11888 = vpack.c.b16 %v11802, %v11800
    %v11889 = vpack.c.b16 %v11803, %v11801
    %v11890 = vpack.c.b16 %v11806, %v11804
    %v11891 = vpack.c.b16 %v11807, %v11805
    %v11892 = vpack.c.b16 %v11810, %v11808
    %v11893 = vpack.c.b16 %v11811, %v11809
    %v11894 = vpack.c.b16 %v11814, %v11812
    %v11895 = vpack.c.b16 %v11815, %v11813
    %v11896 = vpack.c.b16 %v11818, %v11816
    %v11897 = vpack.c.b16 %v11819, %v11817
    %v11898 = vpack.c.b16 %v11822, %v11820
    %v11899 = vpack.c.b16 %v11823, %v11821
    %v11900 = vpack.c.b16 %v11826, %v11824
    %v11901 = vpack.c.b16 %v11827, %v11825
    %v11902 = vpack.c.b16 %v11830, %v11828
    %v11903 = vpack.c.b16 %v11831, %v11829
    %v11904 = vpack.c.b16 %v11834, %v11832
    %v11905 = vpack.c.b16 %v11835, %v11833
    %v11906 = vpack.c.b16 %v11838, %v11836
    %v11907 = vpack.c.b16 %v11839, %v11837
    %v11908 = vpack.c.b16 %v11842, %v11840
    %v11909 = vpack.c.b16 %v11843, %v11841
    %v11910 = vpack.c.b16 %v11846, %v11844
    %v11911 = vpack.c.b16 %v11847, %v11845
    %v11912 = vpack.c.b16 %v11850, %v11848
    %v11913 = vpack.c.b16 %v11851, %v11849
    %v11914 = vpack.c.b16 %v11854, %v11852
    %v11915 = vpack.c.b16 %v11855, %v11853
    %v11916 = vpack.c.b16 %v11858, %v11856
    %v11917 = vpack.c.b16 %v11859, %v11857
    %v11918 = vpack.c.b16 %v11862, %v11860
    %v11919 = vpack.c.b16 %v11863, %v11861
    %v11920 = vpack.c.b16 %v11866, %v11864
    %v11921 = vpack.c.b16 %v11867, %v11865
    %v11922 = vpack.c.b16 %v11870, %v11868
    %v11923 = vpack.c.b16 %v11871, %v11869
    %v11924 = vpack.c.b16 %v11874, %v11872
    %v11925 = vpack.c.b16 %v11875, %v11873
    %v11926 = vpack.c.b16 %v11878, %v11876
    %v11927 = vpack.c.b16 %v11879, %v11877
    %11976 = vmatpush.bf16.msra.mxu0 %v11894
    %11977 = vmatpush.bf16.msra.mxu0 %v11892
    %11978 = vmatpush.bf16.msra.mxu0 %v11890
    %11979 = vmatpush.bf16.msra.mxu0 %v11888
    %11980 = vmatpush.bf16.msra.mxu0 %v11886
    %11981 = vmatpush.bf16.msra.mxu0 %v11884
    %11982 = vmatpush.bf16.msra.mxu0 %v11882
    %11983 = vmatpush.bf16.msra.mxu0 %v11880
    %11984 = vmatmul.bf16.gmra.mxu0 %v11679
    %v11985 = vpop.f32.mrf.mxu0
    %v11986 = vadd.f32 %v11732, %v11985
    %v11987 = vpop.f32.mrf.mxu0
    %11988 = vdwg.mxu0
    %11989 = vmatpush.bf16.msra.mxu0 %v11910
    %11990 = vmatpush.bf16.msra.mxu0 %v11908
    %11991 = vmatpush.bf16.msra.mxu0 %v11906
    %11992 = vmatpush.bf16.msra.mxu0 %v11904
    %11993 = vmatpush.bf16.msra.mxu0 %v11902
    %11994 = vmatpush.bf16.msra.mxu0 %v11900
    %11995 = vmatpush.bf16.msra.mxu0 %v11898
    %11996 = vmatpush.bf16.msra.mxu0 %v11896
    %11997 = vmatmul.bf16.gmra.mxu0 %v11680
    %v11998 = vpop.f32.mrf.mxu0
    %v11999 = vadd.f32 %v11986, %v11998
    %v12000 = vpop.f32.mrf.mxu0
    %12001 = vdwg.mxu0
    %12002 = vmatpush.bf16.msra.mxu0 %v11926
    %12003 = vmatpush.bf16.msra.mxu0 %v11924
    %12004 = vmatpush.bf16.msra.mxu0 %v11922
    %12005 = vmatpush.bf16.msra.mxu0 %v11920
    %12006 = vmatpush.bf16.msra.mxu0 %v11918
    %12007 = vmatpush.bf16.msra.mxu0 %v11916
    %12008 = vmatpush.bf16.msra.mxu0 %v11914
    %12009 = vmatpush.bf16.msra.mxu0 %v11912
    %12010 = vmatmul.bf16.gmra.mxu0 %v11681
    %v12011 = vpop.f32.mrf.mxu0
    %v12012 = vadd.f32 %v11999, %v12011
    %v12013 = vpop.f32.mrf.mxu0
    %12014 = vdwg.mxu0
    %12015 = vmatpush.bf16.msra.mxu0 %v11895
    %12016 = vmatpush.bf16.msra.mxu0 %v11893
    %12017 = vmatpush.bf16.msra.mxu0 %v11891
    %12018 = vmatpush.bf16.msra.mxu0 %v11889
    %12019 = vmatpush.bf16.msra.mxu0 %v11887
    %12020 = vmatpush.bf16.msra.mxu0 %v11885
    %12021 = vmatpush.bf16.msra.mxu0 %v11883
    %12022 = vmatpush.bf16.msra.mxu0 %v11881
    %12023 = vmatmul.bf16.gmra.mxu0 %v11679
    %v12024 = vpop.f32.mrf.mxu0
    %v12025 = vadd.f32 %v11733, %v12024
    %v12026 = vpop.f32.mrf.mxu0
    %12027 = vdwg.mxu0
    %12028 = vmatpush.bf16.msra.mxu0 %v11911
    %12029 = vmatpush.bf16.msra.mxu0 %v11909
    %12030 = vmatpush.bf16.msra.mxu0 %v11907
    %12031 = vmatpush.bf16.msra.mxu0 %v11905
    %12032 = vmatpush.bf16.msra.mxu0 %v11903
    %12033 = vmatpush.bf16.msra.mxu0 %v11901
    %12034 = vmatpush.bf16.msra.mxu0 %v11899
    %12035 = vmatpush.bf16.msra.mxu0 %v11897
    %12036 = vmatmul.bf16.gmra.mxu0 %v11680
    %v12037 = vpop.f32.mrf.mxu0
    %v12038 = vadd.f32 %v12025, %v12037
    %v12039 = vpop.f32.mrf.mxu0
    %12040 = vdwg.mxu0
    %12041 = vmatpush.bf16.msra.mxu0 %v11927
    %12042 = vmatpush.bf16.msra.mxu0 %v11925
    %12043 = vmatpush.bf16.msra.mxu0 %v11923
    %12044 = vmatpush.bf16.msra.mxu0 %v11921
    %12045 = vmatpush.bf16.msra.mxu0 %v11919
    %12046 = vmatpush.bf16.msra.mxu0 %v11917
    %12047 = vmatpush.bf16.msra.mxu0 %v11915
    %12048 = vmatpush.bf16.msra.mxu0 %v11913
    %12049 = vmatmul.bf16.gmra.mxu0 %v11681
    %v12050 = vpop.f32.mrf.mxu0
    %v12051 = vadd.f32 %v12038, %v12050
    %v12052 = vpop.f32.mrf.mxu0
    %12053 = vdwg.mxu0
    %v12054 = vmax.f32 %v12012, 0.0
    %v12055 = vmax.f32 %v12051, 0.0
    %v12056 = vpack.c.bf16 %v12054, %v12054
    %v12057 = vpack.c.bf16 %v12055, %v12055
    %v12058 = vld [vmem:[%s10] sm:$0xf]
    %v12059 = vld [vmem:[%s10 + $0x4] sm:$0xf]
    %v12060 = vld [vmem:[%s10 + $0x8] sm:$0xf]
    %v12061 = vld [vmem:[%s10 + $0xc] sm:$0xf]
    %v12062 = vld [vmem:[%s10 + $0x10] sm:$0xf]
    %v12063 = vld [vmem:[%s10 + $0x14] sm:$0xf]
    %v12064 = vld [vmem:[%s10 + $0x18] sm:$0xf]
    %v12065 = vld [vmem:[%s10 + $0x1c] sm:$0xf]
    %v12066 = vld [vmem:[%s10 + $0x20] sm:$0xf]
    %v12067 = vld [vmem:[%s10 + $0x24] sm:$0xf]
    %v12068 = vld [vmem:[%s10 + $0x28] sm:$0xf]
    %v12069 = vld [vmem:[%s10 + $0x2c] sm:$0xf]
    %v12070 = vld [vmem:[%s10 + $0x30] sm:$0xf]
    %v12071 = vld [vmem:[%s10 + $0x34] sm:$0xf]
    %v12072 = vld [vmem:[%s10 + $0x38] sm:$0xf]
    %v12073 = vld [vmem:[%s10 + $0x3c] sm:$0xf]
    %v12074 = vld [vmem:[%s10 + $0x40] sm:$0xf]
    %v12075 = vld [vmem:[%s10 + $0x44] sm:$0xf]
    %v12076 = vld [vmem:[%s10 + $0x48] sm:$0xf]
    %v12077 = vld [vmem:[%s10 + $0x4c] sm:$0xf]
    %v12078 = vld [vmem:[%s10 + $0x50] sm:$0xf]
    %v12079 = vld [vmem:[%s10 + $0x54] sm:$0xf]
    %v12080 = vld [vmem:[%s10 + $0x58] sm:$0xf]
    %v12081 = vld [vmem:[%s10 + $0x5c] sm:$0xf]
    %v12082 = vld [vmem:[%s11] sm:$0x1]
    %v12084 = vperm.slane %v12082, 0
    %v12110 = vunpack.c.l.b16 %v12058
    %v12111 = vunpack.c.l.b16 %v12059
    %v12112 = vunpack.c.l.b16 %v12060
    %v12113 = vunpack.c.l.b16 %v12061
    %v12114 = vunpack.c.l.b16 %v12062
    %v12115 = vunpack.c.l.b16 %v12063
    %v12116 = vunpack.c.l.b16 %v12064
    %v12117 = vunpack.c.l.b16 %v12065
    %v12118 = vunpack.c.l.b16 %v12066
    %v12119 = vunpack.c.l.b16 %v12067
    %v12120 = vunpack.c.l.b16 %v12068
    %v12121 = vunpack.c.l.b16 %v12069
    %v12122 = vunpack.c.l.b16 %v12070
    %v12123 = vunpack.c.l.b16 %v12071
    %v12124 = vunpack.c.l.b16 %v12072
    %v12125 = vunpack.c.l.b16 %v12073
    %v12126 = vunpack.c.l.b16 %v12074
    %v12127 = vunpack.c.l.b16 %v12075
    %v12128 = vunpack.c.l.b16 %v12076
    %v12129 = vunpack.c.l.b16 %v12077
    %v12130 = vunpack.c.l.b16 %v12078
    %v12131 = vunpack.c.l.b16 %v12079
    %v12132 = vunpack.c.l.b16 %v12080
    %v12133 = vunpack.c.l.b16 %v12081
    %v12134 = vpack.c.b16 %v12111, %v12110
    %v12135 = vpack.c.b16 %v12113, %v12112
    %v12136 = vpack.c.b16 %v12115, %v12114
    %v12137 = vpack.c.b16 %v12117, %v12116
    %v12138 = vpack.c.b16 %v12119, %v12118
    %v12139 = vpack.c.b16 %v12121, %v12120
    %v12140 = vpack.c.b16 %v12123, %v12122
    %v12141 = vpack.c.b16 %v12125, %v12124
    %v12142 = vpack.c.b16 %v12127, %v12126
    %v12143 = vpack.c.b16 %v12129, %v12128
    %v12144 = vpack.c.b16 %v12131, %v12130
    %v12145 = vpack.c.b16 %v12133, %v12132
    %v12159 = vsel %vm1073, %v12057, 0
    %12161 = vmatpush.bf16.msra.mxu0 %v12141
    %12162 = vmatpush.bf16.msra.mxu0 %v12140
    %12163 = vmatpush.bf16.msra.mxu0 %v12139
    %12164 = vmatpush.bf16.msra.mxu0 %v12138
    %12165 = vmatpush.bf16.msra.mxu0 %v12137
    %12166 = vmatpush.bf16.msra.mxu0 %v12136
    %12167 = vmatpush.bf16.msra.mxu0 %v12135
    %12168 = vmatpush.bf16.msra.mxu0 %v12134
    %12169 = vmatmul.bf16.gmra.mxu0 %v12056
    %v12170 = vpop.f32.mrf.mxu0
    %v12171 = vadd.f32 %v12084, %v12170
    %v12172 = vpop.f32.mrf.mxu0
    %12173 = vdwg.mxu0
    %12174 = vmatpush.bf16.msra.mxu0 0
    %12175 = vmatpush.bf16.msra.mxu0 0
    %12176 = vmatpush.bf16.msra.mxu0 0
    %12177 = vmatpush.bf16.msra.mxu0 0
    %12178 = vmatpush.bf16.msra.mxu0 %v12145
    %12179 = vmatpush.bf16.msra.mxu0 %v12144
    %12180 = vmatpush.bf16.msra.mxu0 %v12143
    %12181 = vmatpush.bf16.msra.mxu0 %v12142
    %12182 = vmatmul.bf16.gmra.mxu0 %v12159
    %v12183 = vpop.f32.mrf.mxu0
    %v12184 = vadd.f32 %v12171, %v12183
    %v12185 = vpop.f32.mrf.mxu0
    %12186 = vdwg.mxu0
    %12187 = vst [vmem:[#allocation3] sm:$0x3] %v12184
    // Predicated region
    $region50: #{cnn_cifar_forward.1} parent=1 // pred_check
      _
    $region51: #{cnn_cifar_forward.1} parent=1 // pred_check_branch
      %12189 = sbr.rel (0) target = $region53
    $region52: #{cnn_cifar_forward.1} parent=1 // pred_region
      %12191 = vsyncadd [#allocation4], 0
      %s12193 = sshll.u32 [#allocation3], 4
      %s12194 = int_to_ptr.vmem [resolvable:$true] %s12193
      %s12195 = sshll.u32 %s12, 4
      %s12196 = int_to_ptr.hbm [resolvable:$true] %s12195
      %12198 = dma.vmem_to_hbm [thread:$0]  %s12194, 32, %s12196, [#allocation4]
    $region53: #{cnn_cifar_forward.1} parent=1 // pred_fallthru
      _
    // Predicated region
    $region54: #{cnn_cifar_forward.1} parent=1 // pred_check
      _
    $region55: #{cnn_cifar_forward.1} parent=1 // pred_check_branch
      %12200 = sbr.rel (0) target = $region57
    $region56: #{cnn_cifar_forward.1} parent=1 // pred_region
      %12202 = dma.done [#allocation4], 32
    $region57: #{cnn_cifar_forward.1} parent=1 // pred_fallthru
      _
    %12203 = vsyncpa [#allocation4], 1

</llo_original>
